<compile_context>
chip_gen: v5e
topology: v5e:2x2
jax: 0.10.0
libtpu: 0.0.40
codegen_flags: <defaults>
</compile_context>

<pallas_src>
import math

import jax
import jax.numpy as jnp
from jax.experimental import pallas as pl
from jax.experimental.pallas import tpu as pltpu


# ---------------------------------------------------------------------------
# Pallas kernels
# ---------------------------------------------------------------------------

def _make_conv_kernel(*, tr, cin, cout, out_w, conv_w, act_gain, use_fir,
                      neg_slope=0.2):
    """Modulated 3x3 conv over a padded channels-last block (in-kernel taps).

    tr      : output row-tile size
    out_w   : output width (= resolution)
    conv_w  : width of the conv result computed in-kernel (multiple of 8,
              >= out_w + 3 when a FIR follows, == out_w otherwise)
    use_fir : fuse a separable 4-tap FIR (resample, pad [1,1,1,1]) after the conv
    Post ops (always fused): + noise + bias, * act_gain, leaky_relu(0.2).
    """
    conv_rows = tr + 3 if use_fir else tr
    taps = [(i, j) for i in range(3) for j in range(3)]

    def kernel(x_ref, w_ref, s_ref, d_ref, *rest):
        if use_fir:
            f_ref, n_ref, b_ref, o_ref, y_ref = rest
        else:
            n_ref, b_ref, o_ref = rest
        r0 = pl.program_id(1) * tr
        s = s_ref[...]                                    # (cin, 1)   style
        d = d_ref[...]                                    # (1, cout)  demod
        acc = jnp.zeros((conv_rows * conv_w, cout), jnp.float32)
        for k, (di, dj) in enumerate(taps):               # static unroll (9 taps)
            # fold modulation + demodulation into the tap weight (tiny VPU work)
            wk = (w_ref[k] * s * d).astype(jnp.bfloat16)  # (cin, cout)
            xs = x_ref[pl.ds(r0 + di, conv_rows), dj:dj + conv_w, :]
            xs = xs.reshape(conv_rows * conv_w, cin).astype(jnp.bfloat16)
            acc = acc + jnp.dot(xs, wk, preferred_element_type=jnp.float32)
        y = acc.reshape(conv_rows, conv_w, cout)
        if use_fir:
            # separable FIR: [1,3,3,1] (x) [1,3,3,1]; horizontal then vertical,
            # gain sqrt(4) folded into each 1-D tap set (f_ref, in SMEM).
            y_ref[...] = y
            th = (y_ref[:, 0:out_w, :] * f_ref[0]
                  + y_ref[:, 1:out_w + 1, :] * f_ref[1]
                  + y_ref[:, 2:out_w + 2, :] * f_ref[2]
                  + y_ref[:, 3:out_w + 3, :] * f_ref[3])  # (tr+3, out_w, cout)
            y = (th[0:tr] * f_ref[0] + th[1:tr + 1] * f_ref[1]
                 + th[2:tr + 2] * f_ref[2] + th[3:tr + 3] * f_ref[3])
        # reference order: (+noise) (+bias) (*activation_gain) (leaky_relu 0.2)
        out = (y + n_ref[...] + b_ref[...]) * act_gain
        out = jnp.where(out >= 0.0, out, neg_slope * out)
        o_ref[...] = out.astype(o_ref.dtype)

    return kernel


def _make_torgb_kernel(*, tr, cout, img, out_w):
    """Fused: rgb upsample FIR (separable) + 1x1 modulated conv (no demod)
    + bias + skip add."""

    def kernel(x_ref, s_ref, w_ref, r_ref, f_ref, b_ref, o_ref):
        r0 = pl.program_id(1) * tr
        # --- skip path: resample(up=2, pad=[2,1,2,1], gain=4) of incoming rgb ---
        ru = r_ref[pl.ds(r0, tr + 3), :, :]               # (tr+3, out_w+3, img)
        th = (ru[:, 0:out_w, :] * f_ref[0] + ru[:, 1:out_w + 1, :] * f_ref[1]
              + ru[:, 2:out_w + 2, :] * f_ref[2] + ru[:, 3:out_w + 3, :] * f_ref[3])
        up = (th[0:tr] * f_ref[0] + th[1:tr + 1] * f_ref[1]
              + th[2:tr + 2] * f_ref[2] + th[3:tr + 3] * f_ref[3])
        # --- to_rgb: style folded into the 1x1 weight (no demodulation) ---
        wm = w_ref[...] * s_ref[...]                      # (cout, img) * (cout, 1)
        y = jnp.dot(x_ref[...].reshape(tr * out_w, cout), wm,
                    preferred_element_type=jnp.float32)
        o_ref[...] = up + y.reshape(tr, out_w, img) + b_ref[...]

    return kernel


# ---------------------------------------------------------------------------
# pallas_call wrappers
# ---------------------------------------------------------------------------

def modconv_fused(x_pad, w_taps, s, d, noise, bias, *, res, tr, act_gain,
                  fir_taps=None, out_dtype=jnp.float32):
    """Modulated 3x3 conv (+ optional fused separable FIR) + noise/bias/act.

    x_pad : (B, Hp, Wp, Cin) padded channels-last feature map (resident/batch)
    w_taps: (9, Cin, Cout) tap weights; s: (B, Cin, 1); d: (B, 1, Cout)
    noise : (res, res, 1); bias: (1, 1, Cout); grid = (B, res // tr)
    """
    B, Hp, Wp, Cin = x_pad.shape
    Cout = w_taps.shape[-1]
    use_fir = fir_taps is not None
    conv_w = ((res + 3 + 7) // 8) * 8 if use_fir else res
    kernel = _make_conv_kernel(tr=tr, cin=Cin, cout=Cout, out_w=res,
                               conv_w=conv_w, act_gain=act_gain, use_fir=use_fir)

    in_specs = [
        pl.BlockSpec((None, Hp, Wp, Cin), lambda b, t: (b, 0, 0, 0)),   # resident
        pl.BlockSpec((9, Cin, Cout), lambda b, t: (0, 0, 0)),
        pl.BlockSpec((None, Cin, 1), lambda b, t: (b, 0, 0)),
        pl.BlockSpec((None, 1, Cout), lambda b, t: (b, 0, 0)),
    ]
    args = [x_pad, w_taps, s, d]
    scratch = []
    if use_fir:
        in_specs.append(pl.BlockSpec(memory_space=pltpu.MemorySpace.SMEM))
        args.append(fir_taps)
        scratch.append(pltpu.VMEM((tr + 3, conv_w, Cout), jnp.float32))
    in_specs += [
        pl.BlockSpec((tr, res, 1), lambda b, t: (t, 0, 0)),
        pl.BlockSpec((1, 1, Cout), lambda b, t: (0, 0, 0)),
    ]
    args += [noise, bias]

    # NOTE: at real StyleGAN2 sizes, raise vmem_limit_bytes and row-tile the
    # input with a halo as well; the toy shapes here fit the default budget.
    return pl.pallas_call(
        kernel,
        out_shape=jax.ShapeDtypeStruct((B, res, res, Cout), out_dtype),
        grid=(B, res // tr),
        in_specs=in_specs,
        out_specs=pl.BlockSpec((None, tr, res, Cout), lambda b, t: (b, t, 0, 0)),
        scratch_shapes=scratch,
        compiler_params=pltpu.CompilerParams(
            dimension_semantics=("parallel", "parallel")),
    )(*args)


def torgb_fused(x, s, w, rgb_pad, fir_taps, bias, *, tr):
    B, res, _, Cout = x.shape
    img = w.shape[-1]
    kernel = _make_torgb_kernel(tr=tr, cout=Cout, img=img, out_w=res)
    return pl.pallas_call(
        kernel,
        out_shape=jax.ShapeDtypeStruct((B, res, res, img), jnp.float32),
        grid=(B, res // tr),
        in_specs=[
            pl.BlockSpec((None, tr, res, Cout), lambda b, t: (b, t, 0, 0)),
            pl.BlockSpec((None, Cout, 1), lambda b, t: (b, 0, 0)),
            pl.BlockSpec((Cout, img), lambda b, t: (0, 0)),
            pl.BlockSpec((None, res + 3, res + 3, img), lambda b, t: (b, 0, 0, 0)),
            pl.BlockSpec(memory_space=pltpu.MemorySpace.SMEM),
            pl.BlockSpec((1, 1, img), lambda b, t: (0, 0, 0)),
        ],
        out_specs=pl.BlockSpec((None, tr, res, img), lambda b, t: (b, t, 0, 0)),
        compiler_params=pltpu.CompilerParams(
            dimension_semantics=("parallel", "parallel")),
    )(x, s, w, rgb_pad, fir_taps, bias)


# ---------------------------------------------------------------------------
# Forward pass (layout, padding and parameter prep in plain JAX)
# ---------------------------------------------------------------------------

@jax.jit
def stylegan2_block_forward(net, rgb, ws, p):
    """net: [B, Cin, H, H] NCHW, rgb: [B, img, H, H] NCHW, ws: [B, 3, latent]."""
    B, Cin, H, W = net.shape
    Cout = p['w0'].shape[0]
    img = p['w2'].shape[0]
    res = 2 * H
    TR = 8 if res % 8 == 0 else res                       # output row-tile size
    sqrt2 = math.sqrt(2.0)

    x = jnp.transpose(net, (0, 2, 3, 1)).astype(jnp.float32)      # NHWC
    r = jnp.transpose(rgb, (0, 2, 3, 1)).astype(jnp.float32)

    # separable FIR: setup_filter([1,3,3,1]) = outer(f1d, f1d); each 1-D pass
    # carries sqrt(gain) = 2 for the up-by-2 paths.
    fir1d = (p['fir1d'] * 2.0).astype(jnp.float32)                # (4,) SMEM operand

    # style affines + demodulation coefficients (tiny -> plain JAX, no kernels)
    s0 = ws[:, 0] @ p['a0_wT'] + p['a0_b']                        # [B, Cin]
    s1 = ws[:, 1] @ p['a1_wT'] + p['a1_b']                        # [B, Cout]
    s2 = (ws[:, 2] @ p['a2_wT'] + p['a2_b']) / math.sqrt(Cout)    # ToRGB weight_gain
    d0 = jax.lax.rsqrt((s0 ** 2) @ jnp.sum(p['w0'] ** 2, axis=(2, 3)).T + 1e-8)
    d1 = jax.lax.rsqrt((s1 ** 2) @ jnp.sum(p['w1'] ** 2, axis=(2, 3)).T + 1e-8)

    # ------------- conv0: modulated transposed 3x3 conv (up x2) + FIR -----------
    # conv_transpose(stride=2) == zero-insert + pad(k-1) + conv with flipped
    # weights; one extra ring of padding pre-pads the conv output for the fused
    # 4x4 FIR (resample pad [1,1,1,1]); extra right columns make the in-kernel
    # conv width a multiple of 8 (lane/sublane friendly reshape).
    conv_w0 = ((res + 3 + 7) // 8) * 8
    xu = jnp.zeros((B, 2 * H - 1, 2 * W - 1, Cin), jnp.float32)
    xu = xu.at[:, ::2, ::2, :].set(x)
    xu = jnp.pad(xu, ((0, 0), (3, 3), (3, conv_w0 + 2 - (2 * W - 1) - 3), (0, 0)))
    w0_taps = jnp.transpose(p['w0'][:, :, ::-1, ::-1], (2, 3, 1, 0)).reshape(9, Cin, Cout)
    noise0 = (p['noise0'] * p['nstr0']).reshape(res, res, 1)      # const noise mode
    net0 = modconv_fused(xu, w0_taps, s0.reshape(B, Cin, 1), d0.reshape(B, 1, Cout),
                         noise0, p['b0'].reshape(1, 1, Cout),
                         res=res, tr=TR, act_gain=sqrt2, fir_taps=fir1d)

    # ------------- conv1: modulated 3x3 conv (same resolution) ------------------
    x1p = jnp.pad(net0, ((0, 0), (1, 1), (1, 1), (0, 0)))
    w1_taps = jnp.transpose(p['w1'], (2, 3, 1, 0)).reshape(9, Cout, Cout)
    noise1 = (p['noise1'] * p['nstr1']).reshape(res, res, 1)
    net1 = modconv_fused(x1p, w1_taps, s1.reshape(B, Cout, 1), d1.reshape(B, 1, Cout),
                         noise1, p['b1'].reshape(1, 1, Cout),
                         res=res, tr=TR, act_gain=sqrt2, fir_taps=None)

    # ------------- skip rgb upsample FIR + to_rgb (one fused kernel) ------------
    ru = jnp.zeros((B, 2 * H, 2 * W, img), jnp.float32).at[:, ::2, ::2, :].set(r)
    ru = jnp.pad(ru, ((0, 0), (2, 1), (2, 1), (0, 0)))            # (B, res+3, res+3, img)
    w2 = p['w2'][:, :, 0, 0].T                                    # (Cout, img)
    rgb_out = torgb_fused(net1, s2.reshape(B, Cout, 1), w2, ru,
                          fir1d, p['b2'].reshape(1, 1, img), tr=TR)

    net_out = jnp.transpose(net1, (0, 3, 1, 2))
    rgb_out = jnp.transpose(rgb_out, (0, 3, 1, 2))
    return net_out, rgb_out


def init_params(key, Cin, Cout, latent, res, img):
    ks = jax.random.split(key, 11)
    p = {}
    # FullyConnected affine: weight [C, latent] ~ N(0,1); weight_gain = 1/sqrt(latent)
    p['a0_wT'] = (jax.random.normal(ks[0], (Cin, latent), jnp.float32) / math.sqrt(latent)).T
    p['a0_b'] = jnp.ones((1, Cin), jnp.float32)                   # bias_init = 1.0
    p['w0'] = jax.random.normal(ks[1], (Cout, Cin, 3, 3), jnp.float32)
    p['noise0'] = jax.random.normal(ks[2], (res, res), jnp.float32)
    p['nstr0'] = jnp.float32(0.1)     # synthetic nonzero (module inits 0.0)
    p['b0'] = 0.05 * jax.random.normal(ks[3], (Cout,), jnp.float32)
    p['a1_wT'] = (jax.random.normal(ks[4], (Cout, latent), jnp.float32) / math.sqrt(latent)).T
    p['a1_b'] = jnp.ones((1, Cout), jnp.float32)
    p['w1'] = jax.random.normal(ks[5], (Cout, Cout, 3, 3), jnp.float32)
    p['noise1'] = jax.random.normal(ks[6], (res, res), jnp.float32)
    p['nstr1'] = jnp.float32(0.07)
    p['b1'] = 0.05 * jax.random.normal(ks[7], (Cout,), jnp.float32)
    p['a2_wT'] = (jax.random.normal(ks[8], (Cout, latent), jnp.float32) / math.sqrt(latent)).T
    p['a2_b'] = jnp.ones((1, Cout), jnp.float32)
    p['w2'] = jax.random.normal(ks[9], (img, Cout, 1, 1), jnp.float32)
    p['b2'] = 0.05 * jax.random.normal(ks[10], (img,), jnp.float32)
    # setup_filter([1,3,3,1]) is separable: outer(fir1d, fir1d) with fir1d = f/sum(f)
    f1 = jnp.array([1.0, 3.0, 3.0, 1.0], jnp.float32)
    p['fir1d'] = f1 / jnp.sum(f1)
    return p


if __name__ == "__main__":
    B, Cin, Cout, latent, img = 2, 8, 8, 32, 3
    res = 16
    Hin = res // 2
    key = jax.random.PRNGKey(0)
    k1, k2, k3, k4 = jax.random.split(key, 4)
    net = jax.random.normal(k1, (B, Cin, Hin, Hin), jnp.float32)    # NCHW, res//2
    rgb = jax.random.normal(k2, (B, img, Hin, Hin), jnp.float32)
    ws = jax.random.normal(k3, (B, 3, latent), jnp.float32)         # num_conv + num_to_rgb = 3
    params = init_params(k4, Cin, Cout, latent, res, img)

    net_out, rgb_out = stylegan2_block_forward(net, rgb, ws, params)
    jax.block_until_ready((net_out, rgb_out))

    assert net_out.shape == (B, Cout, res, res), net_out.shape
    assert rgb_out.shape == (B, img, res, res), rgb_out.shape
    assert bool(jnp.all(jnp.isfinite(net_out))) and bool(jnp.all(jnp.isfinite(rgb_out)))
    print("KERNEL_OK")
</pallas_src>

<mosaic_0001>
module attributes {stable_mosaic.version = 11 : i64} {
  func.func @kernel(%arg0: i32, %arg1: i32, %arg2: memref<1x21x26x8xf32, #tpu.memory_space<vmem>>, %arg3: memref<9x8x8xf32, #tpu.memory_space<vmem>>, %arg4: memref<1x8x1xf32, #tpu.memory_space<vmem>>, %arg5: memref<1x1x8xf32, #tpu.memory_space<vmem>>, %arg6: memref<4xf32, #tpu.memory_space<smem>>, %arg7: memref<8x16x1xf32, #tpu.memory_space<vmem>>, %arg8: memref<1x1x8xf32, #tpu.memory_space<vmem>>, %arg9: memref<1x8x16x8xf32, #tpu.memory_space<vmem>>, %arg10: memref<11x24x8xf32, #tpu.memory_space<vmem>>) attributes {dimension_semantics = [#tpu.dimension_semantics<parallel>, #tpu.dimension_semantics<parallel>], iteration_bounds = array<i64: 2, 2>, scalar_prefetch = 0 : i64, scratch_operands = 1 : i64, tpu.core_type = #tpu.core_type<tc>, window_params = [{transform_indices = @transform_0, window_bounds = array<i64: 1, 21, 26, 8>}, {pipeline_mode = #tpu.pipeline_mode<synchronous>, transform_indices = @transform_1, window_bounds = array<i64: 9, 8, 8>}, {transform_indices = @transform_2, window_bounds = array<i64: 1, 8, 1>}, {transform_indices = @transform_3, window_bounds = array<i64: 1, 1, 8>}, {transform_indices = @transform_4, window_bounds = array<i64: 4>}, {transform_indices = @transform_5, window_bounds = array<i64: 8, 16, 1>}, {pipeline_mode = #tpu.pipeline_mode<synchronous>, transform_indices = @transform_6, window_bounds = array<i64: 1, 1, 8>}, {transform_indices = @transform_7, window_bounds = array<i64: 1, 8, 16, 8>}]} {
    %c8_i32 = arith.constant 8 : i32
    %0 = arith.muli %arg1, %c8_i32 : i32
    %c0 = arith.constant 0 : index
    %c0_0 = arith.constant 0 : index
    %c0_1 = arith.constant 0 : index
    %1 = vector.load %arg4[%c0, %c0_0, %c0_1] : memref<1x8x1xf32, #tpu.memory_space<vmem>>, vector<1x8x1xf32>
    %2 = vector.shape_cast %1 : vector<1x8x1xf32> to vector<8x1xf32>
    %c0_2 = arith.constant 0 : index
    %c0_3 = arith.constant 0 : index
    %c0_4 = arith.constant 0 : index
    %3 = vector.load %arg5[%c0_2, %c0_3, %c0_4] : memref<1x1x8xf32, #tpu.memory_space<vmem>>, vector<1x1x8xf32>
    %4 = vector.shape_cast %3 : vector<1x1x8xf32> to vector<1x8xf32>
    %cst = arith.constant 0.000000e+00 : f32
    %5 = vector.broadcast %cst : f32 to vector<264x8xf32>
    %c0_5 = arith.constant 0 : index
    %c0_6 = arith.constant 0 : index
    %c0_7 = arith.constant 0 : index
    %6 = vector.load %arg3[%c0_5, %c0_6, %c0_7] : memref<9x8x8xf32, #tpu.memory_space<vmem>>, vector<1x8x8xf32>
    %7 = vector.shape_cast %6 : vector<1x8x8xf32> to vector<8x8xf32>
    %8 = vector.broadcast %2 : vector<8x1xf32> to vector<8x8xf32>
    %9 = arith.mulf %7, %8 : vector<8x8xf32>
    %10 = vector.broadcast %4 : vector<1x8xf32> to vector<8x8xf32>
    %11 = arith.mulf %9, %10 : vector<8x8xf32>
    %12 = arith.truncf %11 : vector<8x8xf32> to vector<8x8xbf16>
    %c0_i32 = arith.constant 0 : i32
    %13 = arith.addi %0, %c0_i32 : i32
    %c0_8 = arith.constant 0 : index
    %14 = arith.index_cast %13 : i32 to index
    %c0_9 = arith.constant 0 : index
    %c0_10 = arith.constant 0 : index
    %15 = vector.load %arg2[%c0_8, %14, %c0_9, %c0_10] : memref<1x21x26x8xf32, #tpu.memory_space<vmem>>, vector<1x11x24x8xf32>
    %16 = vector.shape_cast %15 : vector<1x11x24x8xf32> to vector<11x24x8xf32>
    %17 = vector.shape_cast %16 : vector<11x24x8xf32> to vector<264x8xf32>
    %18 = arith.truncf %17 : vector<264x8xf32> to vector<264x8xbf16>
    %cst_11 = arith.constant dense<0.000000e+00> : vector<264x8xf32>
    %19 = tpu.matmul %18, %12, %cst_11 {dimension_numbers = #tpu.dot_dimension_numbers<[1], [0], [0], [1], [0, 0, 1, 1], [], []>} : vector<264x8xbf16>, vector<8x8xbf16>, vector<264x8xf32> -> vector<264x8xf32>
    %20 = arith.addf %5, %19 : vector<264x8xf32>
    %c1 = arith.constant 1 : index
    %c0_12 = arith.constant 0 : index
    %c0_13 = arith.constant 0 : index
    %21 = vector.load %arg3[%c1, %c0_12, %c0_13] : memref<9x8x8xf32, #tpu.memory_space<vmem>>, vector<1x8x8xf32>
    %22 = vector.shape_cast %21 : vector<1x8x8xf32> to vector<8x8xf32>
    %23 = vector.broadcast %2 : vector<8x1xf32> to vector<8x8xf32>
    %24 = arith.mulf %22, %23 : vector<8x8xf32>
    %25 = vector.broadcast %4 : vector<1x8xf32> to vector<8x8xf32>
    %26 = arith.mulf %24, %25 : vector<8x8xf32>
    %27 = arith.truncf %26 : vector<8x8xf32> to vector<8x8xbf16>
    %c0_i32_14 = arith.constant 0 : i32
    %28 = arith.addi %0, %c0_i32_14 : i32
    %c0_15 = arith.constant 0 : index
    %29 = arith.index_cast %28 : i32 to index
    %c1_16 = arith.constant 1 : index
    %c0_17 = arith.constant 0 : index
    %30 = vector.load %arg2[%c0_15, %29, %c1_16, %c0_17] : memref<1x21x26x8xf32, #tpu.memory_space<vmem>>, vector<1x11x24x8xf32>
    %31 = vector.shape_cast %30 : vector<1x11x24x8xf32> to vector<11x24x8xf32>
    %32 = vector.shape_cast %31 : vector<11x24x8xf32> to vector<264x8xf32>
    %33 = arith.truncf %32 : vector<264x8xf32> to vector<264x8xbf16>
    %cst_18 = arith.constant dense<0.000000e+00> : vector<264x8xf32>
    %34 = tpu.matmul %33, %27, %cst_18 {dimension_numbers = #tpu.dot_dimension_numbers<[1], [0], [0], [1], [0, 0, 1, 1], [], []>} : vector<264x8xbf16>, vector<8x8xbf16>, vector<264x8xf32> -> vector<264x8xf32>
    %35 = arith.addf %20, %34 : vector<264x8xf32>
    %c2 = arith.constant 2 : index
    %c0_19 = arith.constant 0 : index
    %c0_20 = arith.constant 0 : index
    %36 = vector.load %arg3[%c2, %c0_19, %c0_20] : memref<9x8x8xf32, #tpu.memory_space<vmem>>, vector<1x8x8xf32>
    %37 = vector.shape_cast %36 : vector<1x8x8xf32> to vector<8x8xf32>
    %38 = vector.broadcast %2 : vector<8x1xf32> to vector<8x8xf32>
    %39 = arith.mulf %37, %38 : vector<8x8xf32>
    %40 = vector.broadcast %4 : vector<1x8xf32> to vector<8x8xf32>
    %41 = arith.mulf %39, %40 : vector<8x8xf32>
    %42 = arith.truncf %41 : vector<8x8xf32> to vector<8x8xbf16>
    %c0_i32_21 = arith.constant 0 : i32
    %43 = arith.addi %0, %c0_i32_21 : i32
    %c0_22 = arith.constant 0 : index
    %44 = arith.index_cast %43 : i32 to index
    %c2_23 = arith.constant 2 : index
    %c0_24 = arith.constant 0 : index
    %45 = vector.load %arg2[%c0_22, %44, %c2_23, %c0_24] : memref<1x21x26x8xf32, #tpu.memory_space<vmem>>, vector<1x11x24x8xf32>
    %46 = vector.shape_cast %45 : vector<1x11x24x8xf32> to vector<11x24x8xf32>
    %47 = vector.shape_cast %46 : vector<11x24x8xf32> to vector<264x8xf32>
    %48 = arith.truncf %47 : vector<264x8xf32> to vector<264x8xbf16>
    %cst_25 = arith.constant dense<0.000000e+00> : vector<264x8xf32>
    %49 = tpu.matmul %48, %42, %cst_25 {dimension_numbers = #tpu.dot_dimension_numbers<[1], [0], [0], [1], [0, 0, 1, 1], [], []>} : vector<264x8xbf16>, vector<8x8xbf16>, vector<264x8xf32> -> vector<264x8xf32>
    %50 = arith.addf %35, %49 : vector<264x8xf32>
    %c3 = arith.constant 3 : index
    %c0_26 = arith.constant 0 : index
    %c0_27 = arith.constant 0 : index
    %51 = vector.load %arg3[%c3, %c0_26, %c0_27] : memref<9x8x8xf32, #tpu.memory_space<vmem>>, vector<1x8x8xf32>
    %52 = vector.shape_cast %51 : vector<1x8x8xf32> to vector<8x8xf32>
    %53 = vector.broadcast %2 : vector<8x1xf32> to vector<8x8xf32>
    %54 = arith.mulf %52, %53 : vector<8x8xf32>
    %55 = vector.broadcast %4 : vector<1x8xf32> to vector<8x8xf32>
    %56 = arith.mulf %54, %55 : vector<8x8xf32>
    %57 = arith.truncf %56 : vector<8x8xf32> to vector<8x8xbf16>
    %c1_i32 = arith.constant 1 : i32
    %58 = arith.addi %0, %c1_i32 : i32
    %c0_28 = arith.constant 0 : index
    %59 = arith.index_cast %58 : i32 to index
    %c0_29 = arith.constant 0 : index
    %c0_30 = arith.constant 0 : index
    %60 = vector.load %arg2[%c0_28, %59, %c0_29, %c0_30] : memref<1x21x26x8xf32, #tpu.memory_space<vmem>>, vector<1x11x24x8xf32>
    %61 = vector.shape_cast %60 : vector<1x11x24x8xf32> to vector<11x24x8xf32>
    %62 = vector.shape_cast %61 : vector<11x24x8xf32> to vector<264x8xf32>
    %63 = arith.truncf %62 : vector<264x8xf32> to vector<264x8xbf16>
    %cst_31 = arith.constant dense<0.000000e+00> : vector<264x8xf32>
    %64 = tpu.matmul %63, %57, %cst_31 {dimension_numbers = #tpu.dot_dimension_numbers<[1], [0], [0], [1], [0, 0, 1, 1], [], []>} : vector<264x8xbf16>, vector<8x8xbf16>, vector<264x8xf32> -> vector<264x8xf32>
    %65 = arith.addf %50, %64 : vector<264x8xf32>
    %c4 = arith.constant 4 : index
    %c0_32 = arith.constant 0 : index
    %c0_33 = arith.constant 0 : index
    %66 = vector.load %arg3[%c4, %c0_32, %c0_33] : memref<9x8x8xf32, #tpu.memory_space<vmem>>, vector<1x8x8xf32>
    %67 = vector.shape_cast %66 : vector<1x8x8xf32> to vector<8x8xf32>
    %68 = vector.broadcast %2 : vector<8x1xf32> to vector<8x8xf32>
    %69 = arith.mulf %67, %68 : vector<8x8xf32>
    %70 = vector.broadcast %4 : vector<1x8xf32> to vector<8x8xf32>
    %71 = arith.mulf %69, %70 : vector<8x8xf32>
    %72 = arith.truncf %71 : vector<8x8xf32> to vector<8x8xbf16>
    %c1_i32_34 = arith.constant 1 : i32
    %73 = arith.addi %0, %c1_i32_34 : i32
    %c0_35 = arith.constant 0 : index
    %74 = arith.index_cast %73 : i32 to index
    %c1_36 = arith.constant 1 : index
    %c0_37 = arith.constant 0 : index
    %75 = vector.load %arg2[%c0_35, %74, %c1_36, %c0_37] : memref<1x21x26x8xf32, #tpu.memory_space<vmem>>, vector<1x11x24x8xf32>
    %76 = vector.shape_cast %75 : vector<1x11x24x8xf32> to vector<11x24x8xf32>
    %77 = vector.shape_cast %76 : vector<11x24x8xf32> to vector<264x8xf32>
    %78 = arith.truncf %77 : vector<264x8xf32> to vector<264x8xbf16>
    %cst_38 = arith.constant dense<0.000000e+00> : vector<264x8xf32>
    %79 = tpu.matmul %78, %72, %cst_38 {dimension_numbers = #tpu.dot_dimension_numbers<[1], [0], [0], [1], [0, 0, 1, 1], [], []>} : vector<264x8xbf16>, vector<8x8xbf16>, vector<264x8xf32> -> vector<264x8xf32>
    %80 = arith.addf %65, %79 : vector<264x8xf32>
    %c5 = arith.constant 5 : index
    %c0_39 = arith.constant 0 : index
    %c0_40 = arith.constant 0 : index
    %81 = vector.load %arg3[%c5, %c0_39, %c0_40] : memref<9x8x8xf32, #tpu.memory_space<vmem>>, vector<1x8x8xf32>
    %82 = vector.shape_cast %81 : vector<1x8x8xf32> to vector<8x8xf32>
    %83 = vector.broadcast %2 : vector<8x1xf32> to vector<8x8xf32>
    %84 = arith.mulf %82, %83 : vector<8x8xf32>
    %85 = vector.broadcast %4 : vector<1x8xf32> to vector<8x8xf32>
    %86 = arith.mulf %84, %85 : vector<8x8xf32>
    %87 = arith.truncf %86 : vector<8x8xf32> to vector<8x8xbf16>
    %c1_i32_41 = arith.constant 1 : i32
    %88 = arith.addi %0, %c1_i32_41 : i32
    %c0_42 = arith.constant 0 : index
    %89 = arith.index_cast %88 : i32 to index
    %c2_43 = arith.constant 2 : index
    %c0_44 = arith.constant 0 : index
    %90 = vector.load %arg2[%c0_42, %89, %c2_43, %c0_44] : memref<1x21x26x8xf32, #tpu.memory_space<vmem>>, vector<1x11x24x8xf32>
    %91 = vector.shape_cast %90 : vector<1x11x24x8xf32> to vector<11x24x8xf32>
    %92 = vector.shape_cast %91 : vector<11x24x8xf32> to vector<264x8xf32>
    %93 = arith.truncf %92 : vector<264x8xf32> to vector<264x8xbf16>
    %cst_45 = arith.constant dense<0.000000e+00> : vector<264x8xf32>
    %94 = tpu.matmul %93, %87, %cst_45 {dimension_numbers = #tpu.dot_dimension_numbers<[1], [0], [0], [1], [0, 0, 1, 1], [], []>} : vector<264x8xbf16>, vector<8x8xbf16>, vector<264x8xf32> -> vector<264x8xf32>
    %95 = arith.addf %80, %94 : vector<264x8xf32>
    %c6 = arith.constant 6 : index
    %c0_46 = arith.constant 0 : index
    %c0_47 = arith.constant 0 : index
    %96 = vector.load %arg3[%c6, %c0_46, %c0_47] : memref<9x8x8xf32, #tpu.memory_space<vmem>>, vector<1x8x8xf32>
    %97 = vector.shape_cast %96 : vector<1x8x8xf32> to vector<8x8xf32>
    %98 = vector.broadcast %2 : vector<8x1xf32> to vector<8x8xf32>
    %99 = arith.mulf %97, %98 : vector<8x8xf32>
    %100 = vector.broadcast %4 : vector<1x8xf32> to vector<8x8xf32>
    %101 = arith.mulf %99, %100 : vector<8x8xf32>
    %102 = arith.truncf %101 : vector<8x8xf32> to vector<8x8xbf16>
    %c2_i32 = arith.constant 2 : i32
    %103 = arith.addi %0, %c2_i32 : i32
    %c0_48 = arith.constant 0 : index
    %104 = arith.index_cast %103 : i32 to index
    %c0_49 = arith.constant 0 : index
    %c0_50 = arith.constant 0 : index
    %105 = vector.load %arg2[%c0_48, %104, %c0_49, %c0_50] : memref<1x21x26x8xf32, #tpu.memory_space<vmem>>, vector<1x11x24x8xf32>
    %106 = vector.shape_cast %105 : vector<1x11x24x8xf32> to vector<11x24x8xf32>
    %107 = vector.shape_cast %106 : vector<11x24x8xf32> to vector<264x8xf32>
    %108 = arith.truncf %107 : vector<264x8xf32> to vector<264x8xbf16>
    %cst_51 = arith.constant dense<0.000000e+00> : vector<264x8xf32>
    %109 = tpu.matmul %108, %102, %cst_51 {dimension_numbers = #tpu.dot_dimension_numbers<[1], [0], [0], [1], [0, 0, 1, 1], [], []>} : vector<264x8xbf16>, vector<8x8xbf16>, vector<264x8xf32> -> vector<264x8xf32>
    %110 = arith.addf %95, %109 : vector<264x8xf32>
    %c7 = arith.constant 7 : index
    %c0_52 = arith.constant 0 : index
    %c0_53 = arith.constant 0 : index
    %111 = vector.load %arg3[%c7, %c0_52, %c0_53] : memref<9x8x8xf32, #tpu.memory_space<vmem>>, vector<1x8x8xf32>
    %112 = vector.shape_cast %111 : vector<1x8x8xf32> to vector<8x8xf32>
    %113 = vector.broadcast %2 : vector<8x1xf32> to vector<8x8xf32>
    %114 = arith.mulf %112, %113 : vector<8x8xf32>
    %115 = vector.broadcast %4 : vector<1x8xf32> to vector<8x8xf32>
    %116 = arith.mulf %114, %115 : vector<8x8xf32>
    %117 = arith.truncf %116 : vector<8x8xf32> to vector<8x8xbf16>
    %c2_i32_54 = arith.constant 2 : i32
    %118 = arith.addi %0, %c2_i32_54 : i32
    %c0_55 = arith.constant 0 : index
    %119 = arith.index_cast %118 : i32 to index
    %c1_56 = arith.constant 1 : index
    %c0_57 = arith.constant 0 : index
    %120 = vector.load %arg2[%c0_55, %119, %c1_56, %c0_57] : memref<1x21x26x8xf32, #tpu.memory_space<vmem>>, vector<1x11x24x8xf32>
    %121 = vector.shape_cast %120 : vector<1x11x24x8xf32> to vector<11x24x8xf32>
    %122 = vector.shape_cast %121 : vector<11x24x8xf32> to vector<264x8xf32>
    %123 = arith.truncf %122 : vector<264x8xf32> to vector<264x8xbf16>
    %cst_58 = arith.constant dense<0.000000e+00> : vector<264x8xf32>
    %124 = tpu.matmul %123, %117, %cst_58 {dimension_numbers = #tpu.dot_dimension_numbers<[1], [0], [0], [1], [0, 0, 1, 1], [], []>} : vector<264x8xbf16>, vector<8x8xbf16>, vector<264x8xf32> -> vector<264x8xf32>
    %125 = arith.addf %110, %124 : vector<264x8xf32>
    %c8 = arith.constant 8 : index
    %c0_59 = arith.constant 0 : index
    %c0_60 = arith.constant 0 : index
    %126 = vector.load %arg3[%c8, %c0_59, %c0_60] : memref<9x8x8xf32, #tpu.memory_space<vmem>>, vector<1x8x8xf32>
    %127 = vector.shape_cast %126 : vector<1x8x8xf32> to vector<8x8xf32>
    %128 = vector.broadcast %2 : vector<8x1xf32> to vector<8x8xf32>
    %129 = arith.mulf %127, %128 : vector<8x8xf32>
    %130 = vector.broadcast %4 : vector<1x8xf32> to vector<8x8xf32>
    %131 = arith.mulf %129, %130 : vector<8x8xf32>
    %132 = arith.truncf %131 : vector<8x8xf32> to vector<8x8xbf16>
    %c2_i32_61 = arith.constant 2 : i32
    %133 = arith.addi %0, %c2_i32_61 : i32
    %c0_62 = arith.constant 0 : index
    %134 = arith.index_cast %133 : i32 to index
    %c2_63 = arith.constant 2 : index
    %c0_64 = arith.constant 0 : index
    %135 = vector.load %arg2[%c0_62, %134, %c2_63, %c0_64] : memref<1x21x26x8xf32, #tpu.memory_space<vmem>>, vector<1x11x24x8xf32>
    %136 = vector.shape_cast %135 : vector<1x11x24x8xf32> to vector<11x24x8xf32>
    %137 = vector.shape_cast %136 : vector<11x24x8xf32> to vector<264x8xf32>
    %138 = arith.truncf %137 : vector<264x8xf32> to vector<264x8xbf16>
    %cst_65 = arith.constant dense<0.000000e+00> : vector<264x8xf32>
    %139 = tpu.matmul %138, %132, %cst_65 {dimension_numbers = #tpu.dot_dimension_numbers<[1], [0], [0], [1], [0, 0, 1, 1], [], []>} : vector<264x8xbf16>, vector<8x8xbf16>, vector<264x8xf32> -> vector<264x8xf32>
    %140 = arith.addf %125, %139 : vector<264x8xf32>
    %141 = vector.shape_cast %140 : vector<264x8xf32> to vector<11x24x8xf32>
    %c0_66 = arith.constant 0 : index
    %c0_67 = arith.constant 0 : index
    %c0_68 = arith.constant 0 : index
    %142 = vector.load %arg10[%c0_66, %c0_67, %c0_68] : memref<11x24x8xf32, #tpu.memory_space<vmem>>, vector<11x24x8xf32>
    tpu.vector_store %arg10[%c0_66, %c0_67, %c0_68], %141 {strides = array<i32>} : memref<11x24x8xf32, #tpu.memory_space<vmem>>, vector<11x24x8xf32>,
    %c0_69 = arith.constant 0 : index
    %c0_70 = arith.constant 0 : index
    %c0_71 = arith.constant 0 : index
    %143 = vector.load %arg10[%c0_69, %c0_70, %c0_71] : memref<11x24x8xf32, #tpu.memory_space<vmem>>, vector<11x16x8xf32>
    %c0_72 = arith.constant 0 : index
    %144 = memref.load %arg6[%c0_72] : memref<4xf32, #tpu.memory_space<smem>>
    %145 = vector.broadcast %144 : f32 to vector<11x16x8xf32>
    %146 = arith.mulf %143, %145 : vector<11x16x8xf32>
    %c0_73 = arith.constant 0 : index
    %c1_74 = arith.constant 1 : index
    %c0_75 = arith.constant 0 : index
    %147 = vector.load %arg10[%c0_73, %c1_74, %c0_75] : memref<11x24x8xf32, #tpu.memory_space<vmem>>, vector<11x16x8xf32>
    %c1_76 = arith.constant 1 : index
    %148 = memref.load %arg6[%c1_76] : memref<4xf32, #tpu.memory_space<smem>>
    %149 = vector.broadcast %148 : f32 to vector<11x16x8xf32>
    %150 = arith.mulf %147, %149 : vector<11x16x8xf32>
    %151 = arith.addf %146, %150 : vector<11x16x8xf32>
    %c0_77 = arith.constant 0 : index
    %c2_78 = arith.constant 2 : index
    %c0_79 = arith.constant 0 : index
    %152 = vector.load %arg10[%c0_77, %c2_78, %c0_79] : memref<11x24x8xf32, #tpu.memory_space<vmem>>, vector<11x16x8xf32>
    %c2_80 = arith.constant 2 : index
    %153 = memref.load %arg6[%c2_80] : memref<4xf32, #tpu.memory_space<smem>>
    %154 = vector.broadcast %153 : f32 to vector<11x16x8xf32>
    %155 = arith.mulf %152, %154 : vector<11x16x8xf32>
    %156 = arith.addf %151, %155 : vector<11x16x8xf32>
    %c0_81 = arith.constant 0 : index
    %c3_82 = arith.constant 3 : index
    %c0_83 = arith.constant 0 : index
    %157 = vector.load %arg10[%c0_81, %c3_82, %c0_83] : memref<11x24x8xf32, #tpu.memory_space<vmem>>, vector<11x16x8xf32>
    %c3_84 = arith.constant 3 : index
    %158 = memref.load %arg6[%c3_84] : memref<4xf32, #tpu.memory_space<smem>>
    %159 = vector.broadcast %158 : f32 to vector<11x16x8xf32>
    %160 = arith.mulf %157, %159 : vector<11x16x8xf32>
    %161 = arith.addf %156, %160 : vector<11x16x8xf32>
    %162 = vector.extract_strided_slice %161 {offsets = [0, 0, 0], sizes = [8, 16, 8], strides = [1, 1, 1]} : vector<11x16x8xf32> to vector<8x16x8xf32>
    %c0_85 = arith.constant 0 : index
    %163 = memref.load %arg6[%c0_85] : memref<4xf32, #tpu.memory_space<smem>>
    %164 = vector.broadcast %163 : f32 to vector<8x16x8xf32>
    %165 = arith.mulf %162, %164 : vector<8x16x8xf32>
    %166 = vector.extract_strided_slice %161 {offsets = [1, 0, 0], sizes = [8, 16, 8], strides = [1, 1, 1]} : vector<11x16x8xf32> to vector<8x16x8xf32>
    %c1_86 = arith.constant 1 : index
    %167 = memref.load %arg6[%c1_86] : memref<4xf32, #tpu.memory_space<smem>>
    %168 = vector.broadcast %167 : f32 to vector<8x16x8xf32>
    %169 = arith.mulf %166, %168 : vector<8x16x8xf32>
    %170 = arith.addf %165, %169 : vector<8x16x8xf32>
    %171 = vector.extract_strided_slice %161 {offsets = [2, 0, 0], sizes = [8, 16, 8], strides = [1, 1, 1]} : vector<11x16x8xf32> to vector<8x16x8xf32>
    %c2_87 = arith.constant 2 : index
    %172 = memref.load %arg6[%c2_87] : memref<4xf32, #tpu.memory_space<smem>>
    %173 = vector.broadcast %172 : f32 to vector<8x16x8xf32>
    %174 = arith.mulf %171, %173 : vector<8x16x8xf32>
    %175 = arith.addf %170, %174 : vector<8x16x8xf32>
    %176 = vector.extract_strided_slice %161 {offsets = [3, 0, 0], sizes = [8, 16, 8], strides = [1, 1, 1]} : vector<11x16x8xf32> to vector<8x16x8xf32>
    %c3_88 = arith.constant 3 : index
    %177 = memref.load %arg6[%c3_88] : memref<4xf32, #tpu.memory_space<smem>>
    %178 = vector.broadcast %177 : f32 to vector<8x16x8xf32>
    %179 = arith.mulf %176, %178 : vector<8x16x8xf32>
    %180 = arith.addf %175, %179 : vector<8x16x8xf32>
    %c0_89 = arith.constant 0 : index
    %c0_90 = arith.constant 0 : index
    %c0_91 = arith.constant 0 : index
    %181 = vector.load %arg7[%c0_89, %c0_90, %c0_91] : memref<8x16x1xf32, #tpu.memory_space<vmem>>, vector<8x16x1xf32>
    %182 = vector.broadcast %181 : vector<8x16x1xf32> to vector<8x16x8xf32>
    %183 = arith.addf %180, %182 : vector<8x16x8xf32>
    %c0_92 = arith.constant 0 : index
    %c0_93 = arith.constant 0 : index
    %c0_94 = arith.constant 0 : index
    %184 = vector.load %arg8[%c0_92, %c0_93, %c0_94] : memref<1x1x8xf32, #tpu.memory_space<vmem>>, vector<1x1x8xf32>
    %185 = vector.broadcast %184 : vector<1x1x8xf32> to vector<8x16x8xf32>
    %186 = arith.addf %183, %185 : vector<8x16x8xf32>
    %cst_95 = arith.constant 1.41421354 : f32
    %187 = vector.broadcast %cst_95 : f32 to vector<8x16x8xf32>
    %188 = arith.mulf %186, %187 : vector<8x16x8xf32>
    %cst_96 = arith.constant 0.000000e+00 : f32
    %189 = vector.broadcast %cst_96 : f32 to vector<8x16x8xf32>
    %190 = arith.cmpf oge, %188, %189 : vector<8x16x8xf32>
    %cst_97 = arith.constant 2.000000e-01 : f32
    %191 = vector.broadcast %cst_97 : f32 to vector<8x16x8xf32>
    %192 = arith.mulf %191, %188 : vector<8x16x8xf32>
    %193 = arith.select %190, %188, %192 : vector<8x16x8xi1>, vector<8x16x8xf32>
    %c0_98 = arith.constant 0 : index
    %c0_99 = arith.constant 0 : index
    %c0_100 = arith.constant 0 : index
    %c0_101 = arith.constant 0 : index
    %194 = vector.load %arg9[%c0_98, %c0_99, %c0_100, %c0_101] : memref<1x8x16x8xf32, #tpu.memory_space<vmem>>, vector<1x8x16x8xf32>
    %195 = vector.shape_cast %194 : vector<1x8x16x8xf32> to vector<8x16x8xf32>
    %196 = vector.shape_cast %193 : vector<8x16x8xf32> to vector<1x8x16x8xf32>
    tpu.vector_store %arg9[%c0_98, %c0_99, %c0_100, %c0_101], %196 {strides = array<i32>} : memref<1x8x16x8xf32, #tpu.memory_space<vmem>>, vector<1x8x16x8xf32>,
    return
  }
  func.func @transform_0(%arg0: i32, %arg1: i32) -> (i32, i32, i32, i32) {
    %c0_i32 = arith.constant 0 : i32
    %c0_i32_0 = arith.constant 0 : i32
    %c0_i32_1 = arith.constant 0 : i32
    %c0_i32_2 = arith.constant 0 : i32
    return %arg0, %c0_i32, %c0_i32_0, %c0_i32_1 : i32, i32, i32, i32
  }
  func.func @transform_1(%arg0: i32, %arg1: i32) -> (i32, i32, i32) {
    %c0_i32 = arith.constant 0 : i32
    %c0_i32_0 = arith.constant 0 : i32
    %c0_i32_1 = arith.constant 0 : i32
    %c0_i32_2 = arith.constant 0 : i32
    return %c0_i32, %c0_i32_0, %c0_i32_1 : i32, i32, i32
  }
  func.func @transform_2(%arg0: i32, %arg1: i32) -> (i32, i32, i32) {
    %c0_i32 = arith.constant 0 : i32
    %c0_i32_0 = arith.constant 0 : i32
    %c0_i32_1 = arith.constant 0 : i32
    return %arg0, %c0_i32, %c0_i32_0 : i32, i32, i32
  }
  func.func @transform_3(%arg0: i32, %arg1: i32) -> (i32, i32, i32) {
    %c0_i32 = arith.constant 0 : i32
    %c0_i32_0 = arith.constant 0 : i32
    %c0_i32_1 = arith.constant 0 : i32
    return %arg0, %c0_i32, %c0_i32_0 : i32, i32, i32
  }
  func.func @transform_4(%arg0: i32, %arg1: i32) -> i32 {
    %c0_i32 = arith.constant 0 : i32
    %c0_i32_0 = arith.constant 0 : i32
    return %c0_i32 : i32
  }
  func.func @transform_5(%arg0: i32, %arg1: i32) -> (i32, i32, i32) {
    %c0_i32 = arith.constant 0 : i32
    %c0_i32_0 = arith.constant 0 : i32
    %c0_i32_1 = arith.constant 0 : i32
    return %arg1, %c0_i32, %c0_i32_0 : i32, i32, i32
  }
  func.func @transform_6(%arg0: i32, %arg1: i32) -> (i32, i32, i32) {
    %c0_i32 = arith.constant 0 : i32
    %c0_i32_0 = arith.constant 0 : i32
    %c0_i32_1 = arith.constant 0 : i32
    %c0_i32_2 = arith.constant 0 : i32
    return %c0_i32, %c0_i32_0, %c0_i32_1 : i32, i32, i32
  }
  func.func @transform_7(%arg0: i32, %arg1: i32) -> (i32, i32, i32, i32) {
    %c0_i32 = arith.constant 0 : i32
    %c0_i32_0 = arith.constant 0 : i32
    %c0_i32_1 = arith.constant 0 : i32
    return %arg0, %arg1, %c0_i32, %c0_i32_0 : i32, i32, i32, i32
  }
}

module attributes {stable_mosaic.version = 11 : i64} {
  func.func @kernel(%arg0: i32, %arg1: i32, %arg2: memref<1x18x18x8xf32, #tpu.memory_space<vmem>>, %arg3: memref<9x8x8xf32, #tpu.memory_space<vmem>>, %arg4: memref<1x8x1xf32, #tpu.memory_space<vmem>>, %arg5: memref<1x1x8xf32, #tpu.memory_space<vmem>>, %arg6: memref<8x16x1xf32, #tpu.memory_space<vmem>>, %arg7: memref<1x1x8xf32, #tpu.memory_space<vmem>>, %arg8: memref<1x8x16x8xf32, #tpu.memory_space<vmem>>) attributes {dimension_semantics = [#tpu.dimension_semantics<parallel>, #tpu.dimension_semantics<parallel>], iteration_bounds = array<i64: 2, 2>, scalar_prefetch = 0 : i64, scratch_operands = 0 : i64, tpu.core_type = #tpu.core_type<tc>, window_params = [{transform_indices = @transform_0, window_bounds = array<i64: 1, 18, 18, 8>}, {pipeline_mode = #tpu.pipeline_mode<synchronous>, transform_indices = @transform_1, window_bounds = array<i64: 9, 8, 8>}, {transform_indices = @transform_2, window_bounds = array<i64: 1, 8, 1>}, {transform_indices = @transform_3, window_bounds = array<i64: 1, 1, 8>}, {transform_indices = @transform_4, window_bounds = array<i64: 8, 16, 1>}, {pipeline_mode = #tpu.pipeline_mode<synchronous>, transform_indices = @transform_5, window_bounds = array<i64: 1, 1, 8>}, {transform_indices = @transform_6, window_bounds = array<i64: 1, 8, 16, 8>}]} {
    %c8_i32 = arith.constant 8 : i32
    %0 = arith.muli %arg1, %c8_i32 : i32
    %c0 = arith.constant 0 : index
    %c0_0 = arith.constant 0 : index
    %c0_1 = arith.constant 0 : index
    %1 = vector.load %arg4[%c0, %c0_0, %c0_1] : memref<1x8x1xf32, #tpu.memory_space<vmem>>, vector<1x8x1xf32>
    %2 = vector.shape_cast %1 : vector<1x8x1xf32> to vector<8x1xf32>
    %c0_2 = arith.constant 0 : index
    %c0_3 = arith.constant 0 : index
    %c0_4 = arith.constant 0 : index
    %3 = vector.load %arg5[%c0_2, %c0_3, %c0_4] : memref<1x1x8xf32, #tpu.memory_space<vmem>>, vector<1x1x8xf32>
    %4 = vector.shape_cast %3 : vector<1x1x8xf32> to vector<1x8xf32>
    %cst = arith.constant 0.000000e+00 : f32
    %5 = vector.broadcast %cst : f32 to vector<128x8xf32>
    %c0_5 = arith.constant 0 : index
    %c0_6 = arith.constant 0 : index
    %c0_7 = arith.constant 0 : index
    %6 = vector.load %arg3[%c0_5, %c0_6, %c0_7] : memref<9x8x8xf32, #tpu.memory_space<vmem>>, vector<1x8x8xf32>
    %7 = vector.shape_cast %6 : vector<1x8x8xf32> to vector<8x8xf32>
    %8 = vector.broadcast %2 : vector<8x1xf32> to vector<8x8xf32>
    %9 = arith.mulf %7, %8 : vector<8x8xf32>
    %10 = vector.broadcast %4 : vector<1x8xf32> to vector<8x8xf32>
    %11 = arith.mulf %9, %10 : vector<8x8xf32>
    %12 = arith.truncf %11 : vector<8x8xf32> to vector<8x8xbf16>
    %c0_i32 = arith.constant 0 : i32
    %13 = arith.addi %0, %c0_i32 : i32
    %c0_8 = arith.constant 0 : index
    %14 = arith.index_cast %13 : i32 to index
    %c0_9 = arith.constant 0 : index
    %c0_10 = arith.constant 0 : index
    %15 = vector.load %arg2[%c0_8, %14, %c0_9, %c0_10] : memref<1x18x18x8xf32, #tpu.memory_space<vmem>>, vector<1x8x16x8xf32>
    %16 = vector.shape_cast %15 : vector<1x8x16x8xf32> to vector<8x16x8xf32>
    %17 = vector.shape_cast %16 : vector<8x16x8xf32> to vector<128x8xf32>
    %18 = arith.truncf %17 : vector<128x8xf32> to vector<128x8xbf16>
    %cst_11 = arith.constant dense<0.000000e+00> : vector<128x8xf32>
    %19 = tpu.matmul %18, %12, %cst_11 {dimension_numbers = #tpu.dot_dimension_numbers<[1], [0], [0], [1], [0, 0, 1, 1], [], []>} : vector<128x8xbf16>, vector<8x8xbf16>, vector<128x8xf32> -> vector<128x8xf32>
    %20 = arith.addf %5, %19 : vector<128x8xf32>
    %c1 = arith.constant 1 : index
    %c0_12 = arith.constant 0 : index
    %c0_13 = arith.constant 0 : index
    %21 = vector.load %arg3[%c1, %c0_12, %c0_13] : memref<9x8x8xf32, #tpu.memory_space<vmem>>, vector<1x8x8xf32>
    %22 = vector.shape_cast %21 : vector<1x8x8xf32> to vector<8x8xf32>
    %23 = vector.broadcast %2 : vector<8x1xf32> to vector<8x8xf32>
    %24 = arith.mulf %22, %23 : vector<8x8xf32>
    %25 = vector.broadcast %4 : vector<1x8xf32> to vector<8x8xf32>
    %26 = arith.mulf %24, %25 : vector<8x8xf32>
    %27 = arith.truncf %26 : vector<8x8xf32> to vector<8x8xbf16>
    %c0_i32_14 = arith.constant 0 : i32
    %28 = arith.addi %0, %c0_i32_14 : i32
    %c0_15 = arith.constant 0 : index
    %29 = arith.index_cast %28 : i32 to index
    %c1_16 = arith.constant 1 : index
    %c0_17 = arith.constant 0 : index
    %30 = vector.load %arg2[%c0_15, %29, %c1_16, %c0_17] : memref<1x18x18x8xf32, #tpu.memory_space<vmem>>, vector<1x8x16x8xf32>
    %31 = vector.shape_cast %30 : vector<1x8x16x8xf32> to vector<8x16x8xf32>
    %32 = vector.shape_cast %31 : vector<8x16x8xf32> to vector<128x8xf32>
    %33 = arith.truncf %32 : vector<128x8xf32> to vector<128x8xbf16>
    %cst_18 = arith.constant dense<0.000000e+00> : vector<128x8xf32>
    %34 = tpu.matmul %33, %27, %cst_18 {dimension_numbers = #tpu.dot_dimension_numbers<[1], [0], [0], [1], [0, 0, 1, 1], [], []>} : vector<128x8xbf16>, vector<8x8xbf16>, vector<128x8xf32> -> vector<128x8xf32>
    %35 = arith.addf %20, %34 : vector<128x8xf32>
    %c2 = arith.constant 2 : index
    %c0_19 = arith.constant 0 : index
    %c0_20 = arith.constant 0 : index
    %36 = vector.load %arg3[%c2, %c0_19, %c0_20] : memref<9x8x8xf32, #tpu.memory_space<vmem>>, vector<1x8x8xf32>
    %37 = vector.shape_cast %36 : vector<1x8x8xf32> to vector<8x8xf32>
    %38 = vector.broadcast %2 : vector<8x1xf32> to vector<8x8xf32>
    %39 = arith.mulf %37, %38 : vector<8x8xf32>
    %40 = vector.broadcast %4 : vector<1x8xf32> to vector<8x8xf32>
    %41 = arith.mulf %39, %40 : vector<8x8xf32>
    %42 = arith.truncf %41 : vector<8x8xf32> to vector<8x8xbf16>
    %c0_i32_21 = arith.constant 0 : i32
    %43 = arith.addi %0, %c0_i32_21 : i32
    %c0_22 = arith.constant 0 : index
    %44 = arith.index_cast %43 : i32 to index
    %c2_23 = arith.constant 2 : index
    %c0_24 = arith.constant 0 : index
    %45 = vector.load %arg2[%c0_22, %44, %c2_23, %c0_24] : memref<1x18x18x8xf32, #tpu.memory_space<vmem>>, vector<1x8x16x8xf32>
    %46 = vector.shape_cast %45 : vector<1x8x16x8xf32> to vector<8x16x8xf32>
    %47 = vector.shape_cast %46 : vector<8x16x8xf32> to vector<128x8xf32>
    %48 = arith.truncf %47 : vector<128x8xf32> to vector<128x8xbf16>
    %cst_25 = arith.constant dense<0.000000e+00> : vector<128x8xf32>
    %49 = tpu.matmul %48, %42, %cst_25 {dimension_numbers = #tpu.dot_dimension_numbers<[1], [0], [0], [1], [0, 0, 1, 1], [], []>} : vector<128x8xbf16>, vector<8x8xbf16>, vector<128x8xf32> -> vector<128x8xf32>
    %50 = arith.addf %35, %49 : vector<128x8xf32>
    %c3 = arith.constant 3 : index
    %c0_26 = arith.constant 0 : index
    %c0_27 = arith.constant 0 : index
    %51 = vector.load %arg3[%c3, %c0_26, %c0_27] : memref<9x8x8xf32, #tpu.memory_space<vmem>>, vector<1x8x8xf32>
    %52 = vector.shape_cast %51 : vector<1x8x8xf32> to vector<8x8xf32>
    %53 = vector.broadcast %2 : vector<8x1xf32> to vector<8x8xf32>
    %54 = arith.mulf %52, %53 : vector<8x8xf32>
    %55 = vector.broadcast %4 : vector<1x8xf32> to vector<8x8xf32>
    %56 = arith.mulf %54, %55 : vector<8x8xf32>
    %57 = arith.truncf %56 : vector<8x8xf32> to vector<8x8xbf16>
    %c1_i32 = arith.constant 1 : i32
    %58 = arith.addi %0, %c1_i32 : i32
    %c0_28 = arith.constant 0 : index
    %59 = arith.index_cast %58 : i32 to index
    %c0_29 = arith.constant 0 : index
    %c0_30 = arith.constant 0 : index
    %60 = vector.load %arg2[%c0_28, %59, %c0_29, %c0_30] : memref<1x18x18x8xf32, #tpu.memory_space<vmem>>, vector<1x8x16x8xf32>
    %61 = vector.shape_cast %60 : vector<1x8x16x8xf32> to vector<8x16x8xf32>
    %62 = vector.shape_cast %61 : vector<8x16x8xf32> to vector<128x8xf32>
    %63 = arith.truncf %62 : vector<128x8xf32> to vector<128x8xbf16>
    %cst_31 = arith.constant dense<0.000000e+00> : vector<128x8xf32>
    %64 = tpu.matmul %63, %57, %cst_31 {dimension_numbers = #tpu.dot_dimension_numbers<[1], [0], [0], [1], [0, 0, 1, 1], [], []>} : vector<128x8xbf16>, vector<8x8xbf16>, vector<128x8xf32> -> vector<128x8xf32>
    %65 = arith.addf %50, %64 : vector<128x8xf32>
    %c4 = arith.constant 4 : index
    %c0_32 = arith.constant 0 : index
    %c0_33 = arith.constant 0 : index
    %66 = vector.load %arg3[%c4, %c0_32, %c0_33] : memref<9x8x8xf32, #tpu.memory_space<vmem>>, vector<1x8x8xf32>
    %67 = vector.shape_cast %66 : vector<1x8x8xf32> to vector<8x8xf32>
    %68 = vector.broadcast %2 : vector<8x1xf32> to vector<8x8xf32>
    %69 = arith.mulf %67, %68 : vector<8x8xf32>
    %70 = vector.broadcast %4 : vector<1x8xf32> to vector<8x8xf32>
    %71 = arith.mulf %69, %70 : vector<8x8xf32>
    %72 = arith.truncf %71 : vector<8x8xf32> to vector<8x8xbf16>
    %c1_i32_34 = arith.constant 1 : i32
    %73 = arith.addi %0, %c1_i32_34 : i32
    %c0_35 = arith.constant 0 : index
    %74 = arith.index_cast %73 : i32 to index
    %c1_36 = arith.constant 1 : index
    %c0_37 = arith.constant 0 : index
    %75 = vector.load %arg2[%c0_35, %74, %c1_36, %c0_37] : memref<1x18x18x8xf32, #tpu.memory_space<vmem>>, vector<1x8x16x8xf32>
    %76 = vector.shape_cast %75 : vector<1x8x16x8xf32> to vector<8x16x8xf32>
    %77 = vector.shape_cast %76 : vector<8x16x8xf32> to vector<128x8xf32>
    %78 = arith.truncf %77 : vector<128x8xf32> to vector<128x8xbf16>
    %cst_38 = arith.constant dense<0.000000e+00> : vector<128x8xf32>
    %79 = tpu.matmul %78, %72, %cst_38 {dimension_numbers = #tpu.dot_dimension_numbers<[1], [0], [0], [1], [0, 0, 1, 1], [], []>} : vector<128x8xbf16>, vector<8x8xbf16>, vector<128x8xf32> -> vector<128x8xf32>
    %80 = arith.addf %65, %79 : vector<128x8xf32>
    %c5 = arith.constant 5 : index
    %c0_39 = arith.constant 0 : index
    %c0_40 = arith.constant 0 : index
    %81 = vector.load %arg3[%c5, %c0_39, %c0_40] : memref<9x8x8xf32, #tpu.memory_space<vmem>>, vector<1x8x8xf32>
    %82 = vector.shape_cast %81 : vector<1x8x8xf32> to vector<8x8xf32>
    %83 = vector.broadcast %2 : vector<8x1xf32> to vector<8x8xf32>
    %84 = arith.mulf %82, %83 : vector<8x8xf32>
    %85 = vector.broadcast %4 : vector<1x8xf32> to vector<8x8xf32>
    %86 = arith.mulf %84, %85 : vector<8x8xf32>
    %87 = arith.truncf %86 : vector<8x8xf32> to vector<8x8xbf16>
    %c1_i32_41 = arith.constant 1 : i32
    %88 = arith.addi %0, %c1_i32_41 : i32
    %c0_42 = arith.constant 0 : index
    %89 = arith.index_cast %88 : i32 to index
    %c2_43 = arith.constant 2 : index
    %c0_44 = arith.constant 0 : index
    %90 = vector.load %arg2[%c0_42, %89, %c2_43, %c0_44] : memref<1x18x18x8xf32, #tpu.memory_space<vmem>>, vector<1x8x16x8xf32>
    %91 = vector.shape_cast %90 : vector<1x8x16x8xf32> to vector<8x16x8xf32>
    %92 = vector.shape_cast %91 : vector<8x16x8xf32> to vector<128x8xf32>
    %93 = arith.truncf %92 : vector<128x8xf32> to vector<128x8xbf16>
    %cst_45 = arith.constant dense<0.000000e+00> : vector<128x8xf32>
    %94 = tpu.matmul %93, %87, %cst_45 {dimension_numbers = #tpu.dot_dimension_numbers<[1], [0], [0], [1], [0, 0, 1, 1], [], []>} : vector<128x8xbf16>, vector<8x8xbf16>, vector<128x8xf32> -> vector<128x8xf32>
    %95 = arith.addf %80, %94 : vector<128x8xf32>
    %c6 = arith.constant 6 : index
    %c0_46 = arith.constant 0 : index
    %c0_47 = arith.constant 0 : index
    %96 = vector.load %arg3[%c6, %c0_46, %c0_47] : memref<9x8x8xf32, #tpu.memory_space<vmem>>, vector<1x8x8xf32>
    %97 = vector.shape_cast %96 : vector<1x8x8xf32> to vector<8x8xf32>
    %98 = vector.broadcast %2 : vector<8x1xf32> to vector<8x8xf32>
    %99 = arith.mulf %97, %98 : vector<8x8xf32>
    %100 = vector.broadcast %4 : vector<1x8xf32> to vector<8x8xf32>
    %101 = arith.mulf %99, %100 : vector<8x8xf32>
    %102 = arith.truncf %101 : vector<8x8xf32> to vector<8x8xbf16>
    %c2_i32 = arith.constant 2 : i32
    %103 = arith.addi %0, %c2_i32 : i32
    %c0_48 = arith.constant 0 : index
    %104 = arith.index_cast %103 : i32 to index
    %c0_49 = arith.constant 0 : index
    %c0_50 = arith.constant 0 : index
    %105 = vector.load %arg2[%c0_48, %104, %c0_49, %c0_50] : memref<1x18x18x8xf32, #tpu.memory_space<vmem>>, vector<1x8x16x8xf32>
    %106 = vector.shape_cast %105 : vector<1x8x16x8xf32> to vector<8x16x8xf32>
    %107 = vector.shape_cast %106 : vector<8x16x8xf32> to vector<128x8xf32>
    %108 = arith.truncf %107 : vector<128x8xf32> to vector<128x8xbf16>
    %cst_51 = arith.constant dense<0.000000e+00> : vector<128x8xf32>
    %109 = tpu.matmul %108, %102, %cst_51 {dimension_numbers = #tpu.dot_dimension_numbers<[1], [0], [0], [1], [0, 0, 1, 1], [], []>} : vector<128x8xbf16>, vector<8x8xbf16>, vector<128x8xf32> -> vector<128x8xf32>
    %110 = arith.addf %95, %109 : vector<128x8xf32>
    %c7 = arith.constant 7 : index
    %c0_52 = arith.constant 0 : index
    %c0_53 = arith.constant 0 : index
    %111 = vector.load %arg3[%c7, %c0_52, %c0_53] : memref<9x8x8xf32, #tpu.memory_space<vmem>>, vector<1x8x8xf32>
    %112 = vector.shape_cast %111 : vector<1x8x8xf32> to vector<8x8xf32>
    %113 = vector.broadcast %2 : vector<8x1xf32> to vector<8x8xf32>
    %114 = arith.mulf %112, %113 : vector<8x8xf32>
    %115 = vector.broadcast %4 : vector<1x8xf32> to vector<8x8xf32>
    %116 = arith.mulf %114, %115 : vector<8x8xf32>
    %117 = arith.truncf %116 : vector<8x8xf32> to vector<8x8xbf16>
    %c2_i32_54 = arith.constant 2 : i32
    %118 = arith.addi %0, %c2_i32_54 : i32
    %c0_55 = arith.constant 0 : index
    %119 = arith.index_cast %118 : i32 to index
    %c1_56 = arith.constant 1 : index
    %c0_57 = arith.constant 0 : index
    %120 = vector.load %arg2[%c0_55, %119, %c1_56, %c0_57] : memref<1x18x18x8xf32, #tpu.memory_space<vmem>>, vector<1x8x16x8xf32>
    %121 = vector.shape_cast %120 : vector<1x8x16x8xf32> to vector<8x16x8xf32>
    %122 = vector.shape_cast %121 : vector<8x16x8xf32> to vector<128x8xf32>
    %123 = arith.truncf %122 : vector<128x8xf32> to vector<128x8xbf16>
    %cst_58 = arith.constant dense<0.000000e+00> : vector<128x8xf32>
    %124 = tpu.matmul %123, %117, %cst_58 {dimension_numbers = #tpu.dot_dimension_numbers<[1], [0], [0], [1], [0, 0, 1, 1], [], []>} : vector<128x8xbf16>, vector<8x8xbf16>, vector<128x8xf32> -> vector<128x8xf32>
    %125 = arith.addf %110, %124 : vector<128x8xf32>
    %c8 = arith.constant 8 : index
    %c0_59 = arith.constant 0 : index
    %c0_60 = arith.constant 0 : index
    %126 = vector.load %arg3[%c8, %c0_59, %c0_60] : memref<9x8x8xf32, #tpu.memory_space<vmem>>, vector<1x8x8xf32>
    %127 = vector.shape_cast %126 : vector<1x8x8xf32> to vector<8x8xf32>
    %128 = vector.broadcast %2 : vector<8x1xf32> to vector<8x8xf32>
    %129 = arith.mulf %127, %128 : vector<8x8xf32>
    %130 = vector.broadcast %4 : vector<1x8xf32> to vector<8x8xf32>
    %131 = arith.mulf %129, %130 : vector<8x8xf32>
    %132 = arith.truncf %131 : vector<8x8xf32> to vector<8x8xbf16>
    %c2_i32_61 = arith.constant 2 : i32
    %133 = arith.addi %0, %c2_i32_61 : i32
    %c0_62 = arith.constant 0 : index
    %134 = arith.index_cast %133 : i32 to index
    %c2_63 = arith.constant 2 : index
    %c0_64 = arith.constant 0 : index
    %135 = vector.load %arg2[%c0_62, %134, %c2_63, %c0_64] : memref<1x18x18x8xf32, #tpu.memory_space<vmem>>, vector<1x8x16x8xf32>
    %136 = vector.shape_cast %135 : vector<1x8x16x8xf32> to vector<8x16x8xf32>
    %137 = vector.shape_cast %136 : vector<8x16x8xf32> to vector<128x8xf32>
    %138 = arith.truncf %137 : vector<128x8xf32> to vector<128x8xbf16>
    %cst_65 = arith.constant dense<0.000000e+00> : vector<128x8xf32>
    %139 = tpu.matmul %138, %132, %cst_65 {dimension_numbers = #tpu.dot_dimension_numbers<[1], [0], [0], [1], [0, 0, 1, 1], [], []>} : vector<128x8xbf16>, vector<8x8xbf16>, vector<128x8xf32> -> vector<128x8xf32>
    %140 = arith.addf %125, %139 : vector<128x8xf32>
    %141 = vector.shape_cast %140 : vector<128x8xf32> to vector<8x16x8xf32>
    %c0_66 = arith.constant 0 : index
    %c0_67 = arith.constant 0 : index
    %c0_68 = arith.constant 0 : index
    %142 = vector.load %arg6[%c0_66, %c0_67, %c0_68] : memref<8x16x1xf32, #tpu.memory_space<vmem>>, vector<8x16x1xf32>
    %143 = vector.broadcast %142 : vector<8x16x1xf32> to vector<8x16x8xf32>
    %144 = arith.addf %141, %143 : vector<8x16x8xf32>
    %c0_69 = arith.constant 0 : index
    %c0_70 = arith.constant 0 : index
    %c0_71 = arith.constant 0 : index
    %145 = vector.load %arg7[%c0_69, %c0_70, %c0_71] : memref<1x1x8xf32, #tpu.memory_space<vmem>>, vector<1x1x8xf32>
    %146 = vector.broadcast %145 : vector<1x1x8xf32> to vector<8x16x8xf32>
    %147 = arith.addf %144, %146 : vector<8x16x8xf32>
    %cst_72 = arith.constant 1.41421354 : f32
    %148 = vector.broadcast %cst_72 : f32 to vector<8x16x8xf32>
    %149 = arith.mulf %147, %148 : vector<8x16x8xf32>
    %cst_73 = arith.constant 0.000000e+00 : f32
    %150 = vector.broadcast %cst_73 : f32 to vector<8x16x8xf32>
    %151 = arith.cmpf oge, %149, %150 : vector<8x16x8xf32>
    %cst_74 = arith.constant 2.000000e-01 : f32
    %152 = vector.broadcast %cst_74 : f32 to vector<8x16x8xf32>
    %153 = arith.mulf %152, %149 : vector<8x16x8xf32>
    %154 = arith.select %151, %149, %153 : vector<8x16x8xi1>, vector<8x16x8xf32>
    %c0_75 = arith.constant 0 : index
    %c0_76 = arith.constant 0 : index
    %c0_77 = arith.constant 0 : index
    %c0_78 = arith.constant 0 : index
    %155 = vector.load %arg8[%c0_75, %c0_76, %c0_77, %c0_78] : memref<1x8x16x8xf32, #tpu.memory_space<vmem>>, vector<1x8x16x8xf32>
    %156 = vector.shape_cast %155 : vector<1x8x16x8xf32> to vector<8x16x8xf32>
    %157 = vector.shape_cast %154 : vector<8x16x8xf32> to vector<1x8x16x8xf32>
    tpu.vector_store %arg8[%c0_75, %c0_76, %c0_77, %c0_78], %157 {strides = array<i32>} : memref<1x8x16x8xf32, #tpu.memory_space<vmem>>, vector<1x8x16x8xf32>,
    return
  }
  func.func @transform_0(%arg0: i32, %arg1: i32) -> (i32, i32, i32, i32) {
    %c0_i32 = arith.constant 0 : i32
    %c0_i32_0 = arith.constant 0 : i32
    %c0_i32_1 = arith.constant 0 : i32
    %c0_i32_2 = arith.constant 0 : i32
    return %arg0, %c0_i32, %c0_i32_0, %c0_i32_1 : i32, i32, i32, i32
  }
  func.func @transform_1(%arg0: i32, %arg1: i32) -> (i32, i32, i32) {
    %c0_i32 = arith.constant 0 : i32
    %c0_i32_0 = arith.constant 0 : i32
    %c0_i32_1 = arith.constant 0 : i32
    %c0_i32_2 = arith.constant 0 : i32
    return %c0_i32, %c0_i32_0, %c0_i32_1 : i32, i32, i32
  }
  func.func @transform_2(%arg0: i32, %arg1: i32) -> (i32, i32, i32) {
    %c0_i32 = arith.constant 0 : i32
    %c0_i32_0 = arith.constant 0 : i32
    %c0_i32_1 = arith.constant 0 : i32
    return %arg0, %c0_i32, %c0_i32_0 : i32, i32, i32
  }
  func.func @transform_3(%arg0: i32, %arg1: i32) -> (i32, i32, i32) {
    %c0_i32 = arith.constant 0 : i32
    %c0_i32_0 = arith.constant 0 : i32
    %c0_i32_1 = arith.constant 0 : i32
    return %arg0, %c0_i32, %c0_i32_0 : i32, i32, i32
  }
  func.func @transform_4(%arg0: i32, %arg1: i32) -> (i32, i32, i32) {
    %c0_i32 = arith.constant 0 : i32
    %c0_i32_0 = arith.constant 0 : i32
    %c0_i32_1 = arith.constant 0 : i32
    return %arg1, %c0_i32, %c0_i32_0 : i32, i32, i32
  }
  func.func @transform_5(%arg0: i32, %arg1: i32) -> (i32, i32, i32) {
    %c0_i32 = arith.constant 0 : i32
    %c0_i32_0 = arith.constant 0 : i32
    %c0_i32_1 = arith.constant 0 : i32
    %c0_i32_2 = arith.constant 0 : i32
    return %c0_i32, %c0_i32_0, %c0_i32_1 : i32, i32, i32
  }
  func.func @transform_6(%arg0: i32, %arg1: i32) -> (i32, i32, i32, i32) {
    %c0_i32 = arith.constant 0 : i32
    %c0_i32_0 = arith.constant 0 : i32
    %c0_i32_1 = arith.constant 0 : i32
    return %arg0, %arg1, %c0_i32, %c0_i32_0 : i32, i32, i32, i32
  }
}

module attributes {stable_mosaic.version = 11 : i64} {
  func.func @kernel(%arg0: i32, %arg1: i32, %arg2: memref<1x8x16x8xf32, #tpu.memory_space<vmem>>, %arg3: memref<1x8x1xf32, #tpu.memory_space<vmem>>, %arg4: memref<8x3xf32, #tpu.memory_space<vmem>>, %arg5: memref<1x19x19x3xf32, #tpu.memory_space<vmem>>, %arg6: memref<4xf32, #tpu.memory_space<smem>>, %arg7: memref<1x1x3xf32, #tpu.memory_space<vmem>>, %arg8: memref<1x8x16x3xf32, #tpu.memory_space<vmem>>) attributes {dimension_semantics = [#tpu.dimension_semantics<parallel>, #tpu.dimension_semantics<parallel>], iteration_bounds = array<i64: 2, 2>, scalar_prefetch = 0 : i64, scratch_operands = 0 : i64, tpu.core_type = #tpu.core_type<tc>, window_params = [{transform_indices = @transform_0, window_bounds = array<i64: 1, 8, 16, 8>}, {transform_indices = @transform_1, window_bounds = array<i64: 1, 8, 1>}, {pipeline_mode = #tpu.pipeline_mode<synchronous>, transform_indices = @transform_2, window_bounds = array<i64: 8, 3>}, {transform_indices = @transform_3, window_bounds = array<i64: 1, 19, 19, 3>}, {transform_indices = @transform_4, window_bounds = array<i64: 4>}, {pipeline_mode = #tpu.pipeline_mode<synchronous>, transform_indices = @transform_5, window_bounds = array<i64: 1, 1, 3>}, {transform_indices = @transform_6, window_bounds = array<i64: 1, 8, 16, 3>}]} {
    %c8_i32 = arith.constant 8 : i32
    %0 = arith.muli %arg1, %c8_i32 : i32
    %c0 = arith.constant 0 : index
    %1 = arith.index_cast %0 : i32 to index
    %c0_0 = arith.constant 0 : index
    %c0_1 = arith.constant 0 : index
    %2 = vector.load %arg5[%c0, %1, %c0_0, %c0_1] : memref<1x19x19x3xf32, #tpu.memory_space<vmem>>, vector<1x11x19x3xf32>
    %3 = vector.shape_cast %2 : vector<1x11x19x3xf32> to vector<11x19x3xf32>
    %4 = vector.extract_strided_slice %3 {offsets = [0, 0, 0], sizes = [11, 16, 3], strides = [1, 1, 1]} : vector<11x19x3xf32> to vector<11x16x3xf32>
    %c0_2 = arith.constant 0 : index
    %5 = memref.load %arg6[%c0_2] : memref<4xf32, #tpu.memory_space<smem>>
    %6 = vector.broadcast %5 : f32 to vector<11x16x3xf32>
    %7 = arith.mulf %4, %6 : vector<11x16x3xf32>
    %8 = vector.extract_strided_slice %3 {offsets = [0, 1, 0], sizes = [11, 16, 3], strides = [1, 1, 1]} : vector<11x19x3xf32> to vector<11x16x3xf32>
    %c1 = arith.constant 1 : index
    %9 = memref.load %arg6[%c1] : memref<4xf32, #tpu.memory_space<smem>>
    %10 = vector.broadcast %9 : f32 to vector<11x16x3xf32>
    %11 = arith.mulf %8, %10 : vector<11x16x3xf32>
    %12 = arith.addf %7, %11 : vector<11x16x3xf32>
    %13 = vector.extract_strided_slice %3 {offsets = [0, 2, 0], sizes = [11, 16, 3], strides = [1, 1, 1]} : vector<11x19x3xf32> to vector<11x16x3xf32>
    %c2 = arith.constant 2 : index
    %14 = memref.load %arg6[%c2] : memref<4xf32, #tpu.memory_space<smem>>
    %15 = vector.broadcast %14 : f32 to vector<11x16x3xf32>
    %16 = arith.mulf %13, %15 : vector<11x16x3xf32>
    %17 = arith.addf %12, %16 : vector<11x16x3xf32>
    %18 = vector.extract_strided_slice %3 {offsets = [0, 3, 0], sizes = [11, 16, 3], strides = [1, 1, 1]} : vector<11x19x3xf32> to vector<11x16x3xf32>
    %c3 = arith.constant 3 : index
    %19 = memref.load %arg6[%c3] : memref<4xf32, #tpu.memory_space<smem>>
    %20 = vector.broadcast %19 : f32 to vector<11x16x3xf32>
    %21 = arith.mulf %18, %20 : vector<11x16x3xf32>
    %22 = arith.addf %17, %21 : vector<11x16x3xf32>
    %23 = vector.extract_strided_slice %22 {offsets = [0, 0, 0], sizes = [8, 16, 3], strides = [1, 1, 1]} : vector<11x16x3xf32> to vector<8x16x3xf32>
    %c0_3 = arith.constant 0 : index
    %24 = memref.load %arg6[%c0_3] : memref<4xf32, #tpu.memory_space<smem>>
    %25 = vector.broadcast %24 : f32 to vector<8x16x3xf32>
    %26 = arith.mulf %23, %25 : vector<8x16x3xf32>
    %27 = vector.extract_strided_slice %22 {offsets = [1, 0, 0], sizes = [8, 16, 3], strides = [1, 1, 1]} : vector<11x16x3xf32> to vector<8x16x3xf32>
    %c1_4 = arith.constant 1 : index
    %28 = memref.load %arg6[%c1_4] : memref<4xf32, #tpu.memory_space<smem>>
    %29 = vector.broadcast %28 : f32 to vector<8x16x3xf32>
    %30 = arith.mulf %27, %29 : vector<8x16x3xf32>
    %31 = arith.addf %26, %30 : vector<8x16x3xf32>
    %32 = vector.extract_strided_slice %22 {offsets = [2, 0, 0], sizes = [8, 16, 3], strides = [1, 1, 1]} : vector<11x16x3xf32> to vector<8x16x3xf32>
    %c2_5 = arith.constant 2 : index
    %33 = memref.load %arg6[%c2_5] : memref<4xf32, #tpu.memory_space<smem>>
    %34 = vector.broadcast %33 : f32 to vector<8x16x3xf32>
    %35 = arith.mulf %32, %34 : vector<8x16x3xf32>
    %36 = arith.addf %31, %35 : vector<8x16x3xf32>
    %37 = vector.extract_strided_slice %22 {offsets = [3, 0, 0], sizes = [8, 16, 3], strides = [1, 1, 1]} : vector<11x16x3xf32> to vector<8x16x3xf32>
    %c3_6 = arith.constant 3 : index
    %38 = memref.load %arg6[%c3_6] : memref<4xf32, #tpu.memory_space<smem>>
    %39 = vector.broadcast %38 : f32 to vector<8x16x3xf32>
    %40 = arith.mulf %37, %39 : vector<8x16x3xf32>
    %41 = arith.addf %36, %40 : vector<8x16x3xf32>
    %c0_7 = arith.constant 0 : index
    %c0_8 = arith.constant 0 : index
    %42 = vector.load %arg4[%c0_7, %c0_8] : memref<8x3xf32, #tpu.memory_space<vmem>>, vector<8x3xf32>
    %c0_9 = arith.constant 0 : index
    %c0_10 = arith.constant 0 : index
    %c0_11 = arith.constant 0 : index
    %43 = vector.load %arg3[%c0_9, %c0_10, %c0_11] : memref<1x8x1xf32, #tpu.memory_space<vmem>>, vector<1x8x1xf32>
    %44 = vector.shape_cast %43 : vector<1x8x1xf32> to vector<8x1xf32>
    %45 = vector.broadcast %44 : vector<8x1xf32> to vector<8x3xf32>
    %46 = arith.mulf %42, %45 : vector<8x3xf32>
    %c0_12 = arith.constant 0 : index
    %c0_13 = arith.constant 0 : index
    %c0_14 = arith.constant 0 : index
    %c0_15 = arith.constant 0 : index
    %47 = vector.load %arg2[%c0_12, %c0_13, %c0_14, %c0_15] : memref<1x8x16x8xf32, #tpu.memory_space<vmem>>, vector<1x8x16x8xf32>
    %48 = vector.shape_cast %47 : vector<1x8x16x8xf32> to vector<8x16x8xf32>
    %49 = vector.shape_cast %48 : vector<8x16x8xf32> to vector<128x8xf32>
    %cst = arith.constant dense<0.000000e+00> : vector<128x3xf32>
    %50 = tpu.matmul %49, %46, %cst {dimension_numbers = #tpu.dot_dimension_numbers<[1], [0], [0], [1], [0, 0, 1, 1], [], []>} : vector<128x8xf32>, vector<8x3xf32>, vector<128x3xf32> -> vector<128x3xf32>
    %51 = vector.shape_cast %50 : vector<128x3xf32> to vector<8x16x3xf32>
    %52 = arith.addf %41, %51 : vector<8x16x3xf32>
    %c0_16 = arith.constant 0 : index
    %c0_17 = arith.constant 0 : index
    %c0_18 = arith.constant 0 : index
    %53 = vector.load %arg7[%c0_16, %c0_17, %c0_18] : memref<1x1x3xf32, #tpu.memory_space<vmem>>, vector<1x1x3xf32>
    %54 = vector.broadcast %53 : vector<1x1x3xf32> to vector<8x16x3xf32>
    %55 = arith.addf %52, %54 : vector<8x16x3xf32>
    %c0_19 = arith.constant 0 : index
    %c0_20 = arith.constant 0 : index
    %c0_21 = arith.constant 0 : index
    %c0_22 = arith.constant 0 : index
    %56 = vector.load %arg8[%c0_19, %c0_20, %c0_21, %c0_22] : memref<1x8x16x3xf32, #tpu.memory_space<vmem>>, vector<1x8x16x3xf32>
    %57 = vector.shape_cast %56 : vector<1x8x16x3xf32> to vector<8x16x3xf32>
    %58 = vector.shape_cast %55 : vector<8x16x3xf32> to vector<1x8x16x3xf32>
    tpu.vector_store %arg8[%c0_19, %c0_20, %c0_21, %c0_22], %58 {strides = array<i32>} : memref<1x8x16x3xf32, #tpu.memory_space<vmem>>, vector<1x8x16x3xf32>,
    return
  }
  func.func @transform_0(%arg0: i32, %arg1: i32) -> (i32, i32, i32, i32) {
    %c0_i32 = arith.constant 0 : i32
    %c0_i32_0 = arith.constant 0 : i32
    %c0_i32_1 = arith.constant 0 : i32
    return %arg0, %arg1, %c0_i32, %c0_i32_0 : i32, i32, i32, i32
  }
  func.func @transform_1(%arg0: i32, %arg1: i32) -> (i32, i32, i32) {
    %c0_i32 = arith.constant 0 : i32
    %c0_i32_0 = arith.constant 0 : i32
    %c0_i32_1 = arith.constant 0 : i32
    return %arg0, %c0_i32, %c0_i32_0 : i32, i32, i32
  }
  func.func @transform_2(%arg0: i32, %arg1: i32) -> (i32, i32) {
    %c0_i32 = arith.constant 0 : i32
    %c0_i32_0 = arith.constant 0 : i32
    %c0_i32_1 = arith.constant 0 : i32
    return %c0_i32, %c0_i32_0 : i32, i32
  }
  func.func @transform_3(%arg0: i32, %arg1: i32) -> (i32, i32, i32, i32) {
    %c0_i32 = arith.constant 0 : i32
    %c0_i32_0 = arith.constant 0 : i32
    %c0_i32_1 = arith.constant 0 : i32
    %c0_i32_2 = arith.constant 0 : i32
    return %arg0, %c0_i32, %c0_i32_0, %c0_i32_1 : i32, i32, i32, i32
  }
  func.func @transform_4(%arg0: i32, %arg1: i32) -> i32 {
    %c0_i32 = arith.constant 0 : i32
    %c0_i32_0 = arith.constant 0 : i32
    return %c0_i32 : i32
  }
  func.func @transform_5(%arg0: i32, %arg1: i32) -> (i32, i32, i32) {
    %c0_i32 = arith.constant 0 : i32
    %c0_i32_0 = arith.constant 0 : i32
    %c0_i32_1 = arith.constant 0 : i32
    %c0_i32_2 = arith.constant 0 : i32
    return %c0_i32, %c0_i32_0, %c0_i32_1 : i32, i32, i32
  }
  func.func @transform_6(%arg0: i32, %arg1: i32) -> (i32, i32, i32, i32) {
    %c0_i32 = arith.constant 0 : i32
    %c0_i32_0 = arith.constant 0 : i32
    %c0_i32_1 = arith.constant 0 : i32
    return %arg0, %arg1, %c0_i32, %c0_i32_0 : i32, i32, i32, i32
  }
}

</mosaic_0001>

<llo_original>
// kernel: stylegan2_block_forward.4
$region0: #{stylegan2_block_forward.4}
  #allocation0 [shape = 'u32[]', space=smem, size = 0x4, offset = 0x4, fixed_abs, tag = 'smem constant byte address 0x4 - core index']
  #allocation1 [shape = 'u32[72,128]{1,0:T(1,128)}', space=vmem, size = 0x9000, scoped, tag = 'internal scratch']
  %s0 = inlined_call_operand.vmem [shape: f32[2,18,18,8], index: 0, kind: input, shape index: {}]
  %s1 = inlined_call_operand.vmem [shape: f32[9,8,8], index: 1, kind: input, shape index: {}]
  %s2 = inlined_call_operand.vmem [shape: f32[2,8,1], index: 2, kind: input, shape index: {}]
  %s3 = inlined_call_operand.vmem [shape: f32[2,1,8], index: 3, kind: input, shape index: {}]
  %s4 = inlined_call_operand.vmem [shape: f32[16,16,1], index: 4, kind: input, shape index: {}]
  %s5 = inlined_call_operand.vmem [shape: f32[1,1,8], index: 5, kind: input, shape index: {}]
  %s6 = inlined_call_operand.vmem [shape: f32[2,16,16,8], index: 6, kind: output, shape index: {}]
  %s7 = sld [smem:[#allocation0]]
  $region57: #{stylegan2_block_forward.4} parent=0
    _
  %s9 = ssub.s32 1, %s7
  %s10 = scalar_select 0, %s9, %s7
  loop: start=0, step=1, limit=6
  $region2: #{stylegan2_block_forward.4} parent=0 // loop_pre_header
    _
  $region3: #{stylegan2_block_forward.4} parent=0 // loop_header
    %s12 = sphi 0, %s16
    %p13 = scmp.ge.s32.totalorder %s12, 6
    %s19 = sphi 0, %s31
    %s20 = sphi 0, %s27
    %s21 = sphi 0, %s19
    %s22 = sphi 0, %s20
    %s23 = sphi 0, %s21
    %s24 = sphi 0, %s22
    %s34 = sphi 0, %s36
    %s37 = sphi 0, %s34
    %s38 = sphi 0, %s37
    %s54 = sphi 0, %s38
    %s58 = sphi 0, %s58
    %s60 = sphi 0, %s58
    %s61 = sphi 0, %s60
    %s75 = sphi 0, %s61
    %s81 = sphi 0, %s83
    %s84 = sphi 0, %s81
    %s85 = sphi 0, %s84
    %s101 = sphi 0, %s85
    %s107 = sphi 0, %s109
    %s110 = sphi 0, %s107
    %s111 = sphi 0, %s110
    %s127 = sphi 0, %s111
    %s133 = sphi 0, %s135
    %s136 = sphi 0, %s133
    %s137 = sphi 0, %s136
    %s153 = sphi 0, %s137
    %s157 = sphi 0, %s157
    %s159 = sphi 0, %s157
    %s160 = sphi 0, %s159
    %s174 = sphi 0, %s160
    %s182 = sphi 0, %s184
    %s185 = sphi 0, %s182
    %s186 = sphi 0, %s185
    %s202 = sphi 0, %s186
  $region4: #{stylegan2_block_forward.4} parent=0 // loop_header_branch
    %15 = sbr.rel (%p13) target = $region8
  $region5: #{stylegan2_block_forward.4} parent=0 // loop_body
    %s17 = ssub.s32 %s12, 1
    %s18 = ssub.s32 %s12, 2
    %s25 = sadd.s32 1, %s20
    %p26 = scmp.ge.s32.totalorder %s25, 2
    %s27 = scalar_select %p26, 0, %s25
    %s28 = sadd.s32 1, %s19
    %s29 = scalar_select %p26, %s28, %s19
    %p30 = scmp.ge.s32.totalorder %s29, 2
    %s31 = scalar_select %p30, 0, %s29
    %s32 = ssub.s32 %s19, %s31
    %p33 = scmp.eq.s32.totalorder %s32, 0
    %s35 = sadd.s32 %s34, 1
    %s36 = scalar_select %p33, %s34, %s35
    %p39 = pneg %p33
    %p40 = scmp.eq.s32.totalorder %s12, 3
    %p41 = por %p39, %p40
    %p42 = scmp.ne.s32.totalorder %s34, %s37
    %p43 = scmp.eq.s32.totalorder %s12, 0
    %p44 = por %p42, %p43
    %p45 = scmp.ne.s32.totalorder %s34, %s37
    %p46 = scmp.eq.s32.totalorder %s17, 3
    %p47 = por %p45, %p46
    %p48 = scmp.ne.s32.totalorder %s37, %s38
    %p49 = scmp.eq.s32.totalorder %s17, 0
    %p50 = por %p48, %p49
    %p51 = scmp.ne.s32.totalorder %s37, %s38
    %p52 = scmp.eq.s32.totalorder %s18, 3
    %p53 = por %p51, %p52
    %p55 = scmp.ne.s32.totalorder %s38, %s54
    %p56 = scmp.eq.s32.totalorder %s18, 0
    %p57 = por %p55, %p56
    %s59 = sadd.s32 %s58, 1
    %p62 = scmp.eq.s32.totalorder %s12, 3
    %p63 = scmp.ne.s32.totalorder %s58, %s60
    %p64 = scmp.eq.s32.totalorder %s12, 0
    %p65 = por %p63, %p64
    %p66 = scmp.ne.s32.totalorder %s58, %s60
    %p67 = scmp.eq.s32.totalorder %s17, 3
    %p68 = por %p66, %p67
    %p69 = scmp.ne.s32.totalorder %s60, %s61
    %p70 = scmp.eq.s32.totalorder %s17, 0
    %p71 = por %p69, %p70
    %p72 = scmp.ne.s32.totalorder %s60, %s61
    %p73 = scmp.eq.s32.totalorder %s18, 3
    %p74 = por %p72, %p73
    %p76 = scmp.ne.s32.totalorder %s61, %s75
    %p77 = scmp.eq.s32.totalorder %s18, 0
    %p78 = por %p76, %p77
    %s79 = ssub.s32 %s19, %s31
    %p80 = scmp.eq.s32.totalorder %s79, 0
    %s82 = sadd.s32 %s81, 1
    %s83 = scalar_select %p80, %s81, %s82
    %p86 = pneg %p80
    %p87 = scmp.eq.s32.totalorder %s12, 3
    %p88 = por %p86, %p87
    %p89 = scmp.ne.s32.totalorder %s81, %s84
    %p90 = scmp.eq.s32.totalorder %s12, 0
    %p91 = por %p89, %p90
    %p92 = scmp.ne.s32.totalorder %s81, %s84
    %p93 = scmp.eq.s32.totalorder %s17, 3
    %p94 = por %p92, %p93
    %p95 = scmp.ne.s32.totalorder %s84, %s85
    %p96 = scmp.eq.s32.totalorder %s17, 0
    %p97 = por %p95, %p96
    %p98 = scmp.ne.s32.totalorder %s84, %s85
    %p99 = scmp.eq.s32.totalorder %s18, 3
    %p100 = por %p98, %p99
    %p102 = scmp.ne.s32.totalorder %s85, %s101
    %p103 = scmp.eq.s32.totalorder %s18, 0
    %p104 = por %p102, %p103
    %s105 = ssub.s32 %s19, %s31
    %p106 = scmp.eq.s32.totalorder %s105, 0
    %s108 = sadd.s32 %s107, 1
    %s109 = scalar_select %p106, %s107, %s108
    %p112 = pneg %p106
    %p113 = scmp.eq.s32.totalorder %s12, 3
    %p114 = por %p112, %p113
    %p115 = scmp.ne.s32.totalorder %s107, %s110
    %p116 = scmp.eq.s32.totalorder %s12, 0
    %p117 = por %p115, %p116
    %p118 = scmp.ne.s32.totalorder %s107, %s110
    %p119 = scmp.eq.s32.totalorder %s17, 3
    %p120 = por %p118, %p119
    %p121 = scmp.ne.s32.totalorder %s110, %s111
    %p122 = scmp.eq.s32.totalorder %s17, 0
    %p123 = por %p121, %p122
    %p124 = scmp.ne.s32.totalorder %s110, %s111
    %p125 = scmp.eq.s32.totalorder %s18, 3
    %p126 = por %p124, %p125
    %p128 = scmp.ne.s32.totalorder %s111, %s127
    %p129 = scmp.eq.s32.totalorder %s18, 0
    %p130 = por %p128, %p129
    %s131 = ssub.s32 %s20, %s27
    %p132 = scmp.eq.s32.totalorder %s131, 0
    %s134 = sadd.s32 %s133, 1
    %s135 = scalar_select %p132, %s133, %s134
    %p138 = pneg %p132
    %p139 = scmp.eq.s32.totalorder %s12, 3
    %p140 = por %p138, %p139
    %p141 = scmp.ne.s32.totalorder %s133, %s136
    %p142 = scmp.eq.s32.totalorder %s12, 0
    %p143 = por %p141, %p142
    %p144 = scmp.ne.s32.totalorder %s133, %s136
    %p145 = scmp.eq.s32.totalorder %s17, 3
    %p146 = por %p144, %p145
    %p147 = scmp.ne.s32.totalorder %s136, %s137
    %p148 = scmp.eq.s32.totalorder %s17, 0
    %p149 = por %p147, %p148
    %p150 = scmp.ne.s32.totalorder %s136, %s137
    %p151 = scmp.eq.s32.totalorder %s18, 3
    %p152 = por %p150, %p151
    %p154 = scmp.ne.s32.totalorder %s137, %s153
    %p155 = scmp.eq.s32.totalorder %s18, 0
    %p156 = por %p154, %p155
    %s158 = sadd.s32 %s157, 1
    %p161 = scmp.eq.s32.totalorder %s12, 3
    %p162 = scmp.ne.s32.totalorder %s157, %s159
    %p163 = scmp.eq.s32.totalorder %s12, 0
    %p164 = por %p162, %p163
    %p165 = scmp.ne.s32.totalorder %s157, %s159
    %p166 = scmp.eq.s32.totalorder %s17, 3
    %p167 = por %p165, %p166
    %p168 = scmp.ne.s32.totalorder %s159, %s160
    %p169 = scmp.eq.s32.totalorder %s17, 0
    %p170 = por %p168, %p169
    %p171 = scmp.ne.s32.totalorder %s159, %s160
    %p172 = scmp.eq.s32.totalorder %s18, 3
    %p173 = por %p171, %p172
    %p175 = scmp.ne.s32.totalorder %s160, %s174
    %p176 = scmp.eq.s32.totalorder %s18, 0
    %p177 = por %p175, %p176
    %s178 = ssub.s32 %s19, %s31
    %s179 = ssub.s32 %s20, %s27
    %s180 = sor.u32 %s178, %s179
    %p181 = scmp.eq.s32.totalorder %s180, 0
    %s183 = sadd.s32 %s182, 1
    %s184 = scalar_select %p181, %s182, %s183
    %p187 = pneg %p181
    %p188 = scmp.eq.s32.totalorder %s12, 3
    %p189 = por %p187, %p188
    %p190 = scmp.ne.s32.totalorder %s182, %s185
    %p191 = scmp.eq.s32.totalorder %s12, 0
    %p192 = por %p190, %p191
    %p193 = scmp.ne.s32.totalorder %s182, %s185
    %p194 = scmp.eq.s32.totalorder %s17, 3
    %p195 = por %p193, %p194
    %p196 = scmp.ne.s32.totalorder %s185, %s186
    %p197 = scmp.eq.s32.totalorder %s17, 0
    %p198 = por %p196, %p197
    %p199 = scmp.ne.s32.totalorder %s185, %s186
    %p200 = scmp.eq.s32.totalorder %s18, 3
    %p201 = por %p199, %p200
    %p203 = scmp.ne.s32.totalorder %s186, %s202
    %p204 = scmp.eq.s32.totalorder %s18, 0
    %p205 = por %p203, %p204
    %p206 = scmp.le.s32.totalorder 1, %s12
    %p207 = scmp.lt.s32.totalorder %s12, 5
    %p208 = pnand %p206, %p207
    %p209 = pneg %p208
    // Predicated region
    $region9: #{stylegan2_block_forward.4} parent=5 // pred_check
      _
    $region10: #{stylegan2_block_forward.4} parent=5 // pred_check_branch
      %211 = sbr.rel (%p208) target = $region12
    $region11: #{stylegan2_block_forward.4} parent=5 // pred_region
      %s212 = ssub.s32 %s12, 1
      // Predicated region
      $region13: #{stylegan2_block_forward.4} parent=11 // pred_check
        %p213 = pneg %p71
      $region14: #{stylegan2_block_forward.4} parent=11 // pred_check_branch
        %215 = sbr.rel (%p213) target = $region16
      $region15: #{stylegan2_block_forward.4} parent=11 // pred_region
        _
      $region16: #{stylegan2_block_forward.4} parent=11 // pred_fallthru
        _
      // Predicated region
      $region17: #{stylegan2_block_forward.4} parent=11 // pred_check
        %p216 = pneg %p170
      $region18: #{stylegan2_block_forward.4} parent=11 // pred_check_branch
        %218 = sbr.rel (%p216) target = $region20
      $region19: #{stylegan2_block_forward.4} parent=11 // pred_region
        _
      $region20: #{stylegan2_block_forward.4} parent=11 // pred_fallthru
        _
    $region12: #{stylegan2_block_forward.4} parent=5 // pred_fallthru
      _
    %p219 = scmp.lt.s32.totalorder %s12, 4
    // Predicated region
    $region21: #{stylegan2_block_forward.4} parent=5 // pred_check
      %p220 = pneg %p219
    $region22: #{stylegan2_block_forward.4} parent=5 // pred_check_branch
      %222 = sbr.rel (%p220) target = $region24
    $region23: #{stylegan2_block_forward.4} parent=5 // pred_region
      // Predicated region
      $region25: #{stylegan2_block_forward.4} parent=23 // pred_check
        %p223 = pneg %p44
      $region26: #{stylegan2_block_forward.4} parent=23 // pred_check_branch
        %225 = sbr.rel (%p223) target = $region28
      $region27: #{stylegan2_block_forward.4} parent=23 // pred_region
        %p226 = scmp.lt.s32.totalorder %s19, 1
        %s227 = scalar_select %p226, %s19, 1
        %s228 = smul.addr %s227, 54
        %s229 = smul.addr %s228, 8
        %s230 = scalar_lea.vmem %s0, %s229
      $region28: #{stylegan2_block_forward.4} parent=23 // pred_fallthru
        _
      // Predicated region
      $region29: #{stylegan2_block_forward.4} parent=23 // pred_check
        %p231 = pneg %p91
      $region30: #{stylegan2_block_forward.4} parent=23 // pred_check_branch
        %233 = sbr.rel (%p231) target = $region32
      $region31: #{stylegan2_block_forward.4} parent=23 // pred_region
        %p234 = scmp.lt.s32.totalorder %s19, 1
        %s235 = scalar_select %p234, %s19, 1
        %s236 = smul.addr %s235, 8
        %s237 = scalar_lea.vmem %s2, %s236
      $region32: #{stylegan2_block_forward.4} parent=23 // pred_fallthru
        _
      // Predicated region
      $region33: #{stylegan2_block_forward.4} parent=23 // pred_check
        %p238 = pneg %p117
      $region34: #{stylegan2_block_forward.4} parent=23 // pred_check_branch
        %240 = sbr.rel (%p238) target = $region36
      $region35: #{stylegan2_block_forward.4} parent=23 // pred_region
        %p241 = scmp.lt.s32.totalorder %s19, 1
        %s242 = scalar_select %p241, %s19, 1
        %s243 = scalar_lea.vmem %s3, %s242
      $region36: #{stylegan2_block_forward.4} parent=23 // pred_fallthru
        _
      // Predicated region
      $region37: #{stylegan2_block_forward.4} parent=23 // pred_check
        %p244 = pneg %p143
      $region38: #{stylegan2_block_forward.4} parent=23 // pred_check_branch
        %246 = sbr.rel (%p244) target = $region40
      $region39: #{stylegan2_block_forward.4} parent=23 // pred_region
        %s247 = smul.u32 8, %s20
        %p248 = scmp.lt.s32.totalorder %s247, 15
        %s249 = scalar_select %p248, %s247, 15
        %s250 = smul.addr %s249, 2
        %s251 = smul.addr %s250, 8
        %s252 = scalar_lea.vmem %s4, %s251
        %s253 = smul.u32 8, %s20
      $region40: #{stylegan2_block_forward.4} parent=23 // pred_fallthru
        _
    $region24: #{stylegan2_block_forward.4} parent=5 // pred_fallthru
      _
    %p254 = scmp.le.s32.totalorder 1, %s12
    %p255 = scmp.lt.s32.totalorder %s12, 5
    %p256 = pnand %p254, %p255
    %p257 = pneg %p256
    // Predicated region
    $region41: #{stylegan2_block_forward.4} parent=5 // pred_check
      _
    $region42: #{stylegan2_block_forward.4} parent=5 // pred_check_branch
      %259 = sbr.rel (%p256) target = $region44
    $region43: #{stylegan2_block_forward.4} parent=5 // pred_region
      %s260 = ssub.s32 %s12, 1
      %p261 = scmp.lt.s32.totalorder %s21, 1
      %s262 = scalar_select %p261, %s21, 1
      %s263 = smul.addr %s262, 54
      %s264 = smul.addr %s263, 8
      %s265 = scalar_lea.vmem %s0, %s264
      %p266 = pneg %p50
      %p267 = pneg %p47
      %p268 = pneg %p71
      %p269 = pneg %p68
      %p270 = scmp.lt.s32.totalorder %s21, 1
      %s271 = scalar_select %p270, %s21, 1
      %s272 = smul.addr %s271, 8
      %s273 = scalar_lea.vmem %s2, %s272
      %p274 = pneg %p97
      %p275 = pneg %p94
      %p276 = scmp.lt.s32.totalorder %s21, 1
      %s277 = scalar_select %p276, %s21, 1
      %s278 = scalar_lea.vmem %s3, %s277
      %p279 = pneg %p123
      %p280 = pneg %p120
      %s281 = smul.u32 8, %s22
      %p282 = scmp.lt.s32.totalorder %s281, 15
      %s283 = scalar_select %p282, %s281, 15
      %s284 = smul.addr %s283, 2
      %s285 = smul.addr %s284, 8
      %s286 = scalar_lea.vmem %s4, %s285
      %p287 = pneg %p149
      %p288 = pneg %p146
      %p289 = pneg %p170
      %p290 = pneg %p167
      %p291 = pneg %p198
      %p292 = pneg %p195
      %s293 = smul.u32 8, %s22
      %p294 = scmp.lt.s32.totalorder %s21, 1
      %s295 = scalar_select %p294, %s21, 1
      %p296 = scmp.lt.s32.totalorder %s293, 15
      %s297 = scalar_select %p296, %s293, 15
      %s298 = smul.addr %s297, 2
      %s299 = smul.addr %s295, 32
      %s300 = sadd.s32 %s298, %s299
      %s301 = smul.addr %s300, 8
      %s302 = scalar_lea.vmem %s6, %s301
      %p303 = scmp.lt.s32.totalorder %s21, 1
      %s304 = scalar_select %p303, %s21, 1
      %s305 = smul.addr %s304, 54
      %s306 = smul.addr %s305, 8
      %s307 = scalar_lea.vmem %s0, %s306
      %p308 = scmp.lt.s32.totalorder %s21, 1
      %s309 = scalar_select %p308, %s21, 1
      %s310 = smul.addr %s309, 8
      %s311 = scalar_lea.vmem %s2, %s310
      %p312 = scmp.lt.s32.totalorder %s21, 1
      %s313 = scalar_select %p312, %s21, 1
      %s314 = scalar_lea.vmem %s3, %s313
      %s315 = smul.u32 8, %s22
      %p316 = scmp.lt.s32.totalorder %s315, 15
      %s317 = scalar_select %p316, %s315, 15
      %s318 = smul.addr %s317, 2
      %s319 = smul.addr %s318, 8
      %s320 = scalar_lea.vmem %s4, %s319
      %s321 = smul.u32 8, %s22
      %s322 = smul.u32 8, %s22
      %p323 = scmp.lt.s32.totalorder %s21, 1
      %s324 = scalar_select %p323, %s21, 1
      %p325 = scmp.lt.s32.totalorder %s322, 15
      %s326 = scalar_select %p325, %s322, 15
      %s327 = smul.addr %s326, 2
      %s328 = smul.addr %s324, 32
      %s329 = sadd.s32 %s327, %s328
      %s330 = smul.addr %s329, 8
      %s331 = scalar_lea.vmem %s6, %s330
      %s332 = smul.u32 8, %s22
      %s334 = smul.u32 %s22, 8
      %v335 = vld [vmem:[%s311] sm:$0xff]
      %v336 = vld [vmem:[%s314] sm:$0x1]
      %v337 = vld [vmem:[%s1] sm:$0xff]
      %339 = vset.pattern.permute.xlu0 0
      %340 = vperm.xlu0 %339, %v335
      %v341 = vpop.permute.xlu0 %340
      %v343 = vmul.f32 %v337, %v341
      %v345 = vperm.slane %v336, 0
      %v347 = vmul.f32 %v343, %v345
      %v348 = vpack.c.bf16 %v347, %v347
      %s349 = smul.u32 %s334, 24
      %s350 = scalar_lea.vmem %s307, %s349
      %v351 = vld [vmem:[%s350] sm:$0xff]
      %v352 = vld [vmem:[%s350 + $0x8] sm:$0xff]
      %v353 = vld [vmem:[%s350 + $0x18] sm:$0xff]
      %v354 = vld [vmem:[%s350 + $0x20] sm:$0xff]
      %v355 = vld [vmem:[%s350 + $0x30] sm:$0xff]
      %v356 = vld [vmem:[%s350 + $0x38] sm:$0xff]
      %v357 = vld [vmem:[%s350 + $0x48] sm:$0xff]
      %v358 = vld [vmem:[%s350 + $0x50] sm:$0xff]
      %v359 = vld [vmem:[%s350 + $0x60] sm:$0xff]
      %v360 = vld [vmem:[%s350 + $0x68] sm:$0xff]
      %v361 = vld [vmem:[%s350 + $0x78] sm:$0xff]
      %v362 = vld [vmem:[%s350 + $0x80] sm:$0xff]
      %v363 = vld [vmem:[%s350 + $0x90] sm:$0xff]
      %v364 = vld [vmem:[%s350 + $0x98] sm:$0xff]
      %v365 = vld [vmem:[%s350 + $0xa8] sm:$0xff]
      %v366 = vld [vmem:[%s350 + $0xb0] sm:$0xff]
      %v367 = vpack.c.bf16 %v352, %v351
      %v368 = vpack.c.bf16 %v354, %v353
      %v369 = vpack.c.bf16 %v356, %v355
      %v370 = vpack.c.bf16 %v358, %v357
      %v371 = vpack.c.bf16 %v360, %v359
      %v372 = vpack.c.bf16 %v362, %v361
      %v373 = vpack.c.bf16 %v364, %v363
      %v374 = vpack.c.bf16 %v366, %v365
      %s375 = scalar_lea.vmem %s1, 8
      %v376 = vld [vmem:[%s375] sm:$0xff]
      %v377 = vmul.f32 %v376, %v341
      %v378 = vmul.f32 %v377, %v345
      %v379 = vpack.c.bf16 %v378, %v378
      %v380 = vld [vmem:[%s350 + $0x1] sm:$0xff]
      %v381 = vld [vmem:[%s350 + $0x9] sm:$0xff]
      %v382 = vld [vmem:[%s350 + $0x19] sm:$0xff]
      %v383 = vld [vmem:[%s350 + $0x21] sm:$0xff]
      %v384 = vld [vmem:[%s350 + $0x31] sm:$0xff]
      %v385 = vld [vmem:[%s350 + $0x39] sm:$0xff]
      %v386 = vld [vmem:[%s350 + $0x49] sm:$0xff]
      %v387 = vld [vmem:[%s350 + $0x51] sm:$0xff]
      %v388 = vld [vmem:[%s350 + $0x61] sm:$0xff]
      %v389 = vld [vmem:[%s350 + $0x69] sm:$0xff]
      %v390 = vld [vmem:[%s350 + $0x79] sm:$0xff]
      %v391 = vld [vmem:[%s350 + $0x81] sm:$0xff]
      %v392 = vld [vmem:[%s350 + $0x91] sm:$0xff]
      %v393 = vld [vmem:[%s350 + $0x99] sm:$0xff]
      %v394 = vld [vmem:[%s350 + $0xa9] sm:$0xff]
      %v395 = vld [vmem:[%s350 + $0xb1] sm:$0xff]
      %v396 = vpack.c.bf16 %v381, %v380
      %v397 = vpack.c.bf16 %v383, %v382
      %v398 = vpack.c.bf16 %v385, %v384
      %v399 = vpack.c.bf16 %v387, %v386
      %v400 = vpack.c.bf16 %v389, %v388
      %v401 = vpack.c.bf16 %v391, %v390
      %v402 = vpack.c.bf16 %v393, %v392
      %v403 = vpack.c.bf16 %v395, %v394
      %vm404 = vcmask 64512
      %v406 = vsel %vm404, %v396, 0
      %v409 = vsel %vm404, %v397, 0
      %v412 = vsel %vm404, %v398, 0
      %v415 = vsel %vm404, %v399, 0
      %v418 = vsel %vm404, %v400, 0
      %v421 = vsel %vm404, %v401, 0
      %v424 = vsel %vm404, %v402, 0
      %v427 = vsel %vm404, %v403, 0
      %vm429 = vcmask 1043456
      %v431 = vsel %vm429, %v379, 0
      %433 = vmatpush.bf16.msra.mxu0 0
      %434 = vmatpush.bf16.msra.mxu0 0
      %435 = vmatpush.bf16.msra.mxu0 0
      %436 = vmatpush.bf16.msra.mxu0 0
      %437 = vmatpush.bf16.msra.mxu0 0
      %438 = vmatpush.bf16.msra.mxu0 0
      %439 = vmatpush.bf16.msra.mxu0 0
      %440 = vmatpush.bf16.msra.mxu0 %v431
      %441 = vmatmul.bf16.gmra.mxu0 %v406
      %v442 = vpop.f32.mrf.mxu0
      %v443 = vadd.f32 0.0, %v442
      %v444 = vpop.f32.mrf.mxu0
      %v445 = vadd.f32 0.0, %v444
      %446 = vmatmul.bf16.gmra.mxu0 %v409
      %v447 = vpop.f32.mrf.mxu0
      %v448 = vadd.f32 0.0, %v447
      %v449 = vpop.f32.mrf.mxu0
      %v450 = vadd.f32 0.0, %v449
      %451 = vmatmul.bf16.gmra.mxu0 %v412
      %v452 = vpop.f32.mrf.mxu0
      %v453 = vadd.f32 0.0, %v452
      %v454 = vpop.f32.mrf.mxu0
      %v455 = vadd.f32 0.0, %v454
      %456 = vmatmul.bf16.gmra.mxu0 %v415
      %v457 = vpop.f32.mrf.mxu0
      %v458 = vadd.f32 0.0, %v457
      %v459 = vpop.f32.mrf.mxu0
      %v460 = vadd.f32 0.0, %v459
      %461 = vmatmul.bf16.gmra.mxu0 %v418
      %v462 = vpop.f32.mrf.mxu0
      %v463 = vadd.f32 0.0, %v462
      %v464 = vpop.f32.mrf.mxu0
      %v465 = vadd.f32 0.0, %v464
      %466 = vmatmul.bf16.gmra.mxu0 %v421
      %v467 = vpop.f32.mrf.mxu0
      %v468 = vadd.f32 0.0, %v467
      %v469 = vpop.f32.mrf.mxu0
      %v470 = vadd.f32 0.0, %v469
      %471 = vmatmul.bf16.gmra.mxu0 %v424
      %v472 = vpop.f32.mrf.mxu0
      %v473 = vadd.f32 0.0, %v472
      %v474 = vpop.f32.mrf.mxu0
      %v475 = vadd.f32 0.0, %v474
      %476 = vmatmul.bf16.gmra.mxu0 %v427
      %v477 = vpop.f32.mrf.mxu0
      %v478 = vadd.f32 0.0, %v477
      %v479 = vpop.f32.mrf.mxu0
      %v480 = vadd.f32 0.0, %v479
      %481 = vdwg.mxu0
      %v483 = vsel %vm404, %v367, 0
      %v486 = vsel %vm404, %v368, 0
      %v489 = vsel %vm404, %v369, 0
      %v492 = vsel %vm404, %v370, 0
      %v495 = vsel %vm404, %v371, 0
      %v498 = vsel %vm404, %v372, 0
      %v501 = vsel %vm404, %v373, 0
      %v504 = vsel %vm404, %v374, 0
      %v507 = vsel %vm429, %v348, 0
      %509 = vmatpush.bf16.msra.mxu0 0
      %510 = vmatpush.bf16.msra.mxu0 0
      %511 = vmatpush.bf16.msra.mxu0 0
      %512 = vmatpush.bf16.msra.mxu0 0
      %513 = vmatpush.bf16.msra.mxu0 0
      %514 = vmatpush.bf16.msra.mxu0 0
      %515 = vmatpush.bf16.msra.mxu0 0
      %516 = vmatpush.bf16.msra.mxu0 %v507
      %517 = vmatmul.bf16.gmra.mxu0 %v483
      %v518 = vpop.f32.mrf.mxu0
      %v519 = vadd.f32 %v443, %v518
      %v520 = vpop.f32.mrf.mxu0
      %v521 = vadd.f32 %v445, %v520
      %522 = vmatmul.bf16.gmra.mxu0 %v486
      %v523 = vpop.f32.mrf.mxu0
      %v524 = vadd.f32 %v448, %v523
      %v525 = vpop.f32.mrf.mxu0
      %v526 = vadd.f32 %v450, %v525
      %527 = vmatmul.bf16.gmra.mxu0 %v489
      %v528 = vpop.f32.mrf.mxu0
      %v529 = vadd.f32 %v453, %v528
      %v530 = vpop.f32.mrf.mxu0
      %v531 = vadd.f32 %v455, %v530
      %532 = vmatmul.bf16.gmra.mxu0 %v492
      %v533 = vpop.f32.mrf.mxu0
      %v534 = vadd.f32 %v458, %v533
      %v535 = vpop.f32.mrf.mxu0
      %v536 = vadd.f32 %v460, %v535
      %537 = vmatmul.bf16.gmra.mxu0 %v495
      %v538 = vpop.f32.mrf.mxu0
      %v539 = vadd.f32 %v463, %v538
      %v540 = vpop.f32.mrf.mxu0
      %v541 = vadd.f32 %v465, %v540
      %542 = vmatmul.bf16.gmra.mxu0 %v498
      %v543 = vpop.f32.mrf.mxu0
      %v544 = vadd.f32 %v468, %v543
      %v545 = vpop.f32.mrf.mxu0
      %v546 = vadd.f32 %v470, %v545
      %547 = vmatmul.bf16.gmra.mxu0 %v501
      %v548 = vpop.f32.mrf.mxu0
      %v549 = vadd.f32 %v473, %v548
      %v550 = vpop.f32.mrf.mxu0
      %v551 = vadd.f32 %v475, %v550
      %552 = vmatmul.bf16.gmra.mxu0 %v504
      %v553 = vpop.f32.mrf.mxu0
      %v554 = vadd.f32 %v478, %v553
      %v555 = vpop.f32.mrf.mxu0
      %v556 = vadd.f32 %v480, %v555
      %557 = vdwg.mxu0
      %s558 = scalar_lea.vmem %s1, 16
      %v559 = vld [vmem:[%s558] sm:$0xff]
      %v560 = vmul.f32 %v559, %v341
      %v561 = vmul.f32 %v560, %v345
      %v562 = vpack.c.bf16 %v561, %v561
      %v563 = vld [vmem:[%s350 + $0x2] sm:$0xff]
      %v564 = vld [vmem:[%s350 + $0xa] sm:$0xff]
      %v565 = vld [vmem:[%s350 + $0x1a] sm:$0xff]
      %v566 = vld [vmem:[%s350 + $0x22] sm:$0xff]
      %v567 = vld [vmem:[%s350 + $0x32] sm:$0xff]
      %v568 = vld [vmem:[%s350 + $0x3a] sm:$0xff]
      %v569 = vld [vmem:[%s350 + $0x4a] sm:$0xff]
      %v570 = vld [vmem:[%s350 + $0x52] sm:$0xff]
      %v571 = vld [vmem:[%s350 + $0x62] sm:$0xff]
      %v572 = vld [vmem:[%s350 + $0x6a] sm:$0xff]
      %v573 = vld [vmem:[%s350 + $0x7a] sm:$0xff]
      %v574 = vld [vmem:[%s350 + $0x82] sm:$0xff]
      %v575 = vld [vmem:[%s350 + $0x92] sm:$0xff]
      %v576 = vld [vmem:[%s350 + $0x9a] sm:$0xff]
      %v577 = vld [vmem:[%s350 + $0xaa] sm:$0xff]
      %v578 = vld [vmem:[%s350 + $0xb2] sm:$0xff]
      %v579 = vpack.c.bf16 %v564, %v563
      %v580 = vpack.c.bf16 %v566, %v565
      %v581 = vpack.c.bf16 %v568, %v567
      %v582 = vpack.c.bf16 %v570, %v569
      %v583 = vpack.c.bf16 %v572, %v571
      %v584 = vpack.c.bf16 %v574, %v573
      %v585 = vpack.c.bf16 %v576, %v575
      %v586 = vpack.c.bf16 %v578, %v577
      %v588 = vsel %vm404, %v579, 0
      %v591 = vsel %vm404, %v580, 0
      %v594 = vsel %vm404, %v581, 0
      %v597 = vsel %vm404, %v582, 0
      %v600 = vsel %vm404, %v583, 0
      %v603 = vsel %vm404, %v584, 0
      %v606 = vsel %vm404, %v585, 0
      %v609 = vsel %vm404, %v586, 0
      %v612 = vsel %vm429, %v562, 0
      %614 = vmatpush.bf16.msra.mxu0 0
      %615 = vmatpush.bf16.msra.mxu0 0
      %616 = vmatpush.bf16.msra.mxu0 0
      %617 = vmatpush.bf16.msra.mxu0 0
      %618 = vmatpush.bf16.msra.mxu0 0
      %619 = vmatpush.bf16.msra.mxu0 0
      %620 = vmatpush.bf16.msra.mxu0 0
      %621 = vmatpush.bf16.msra.mxu0 %v612
      %622 = vmatmul.bf16.gmra.mxu0 %v588
      %v623 = vpop.f32.mrf.mxu0
      %v624 = vadd.f32 0.0, %v623
      %v625 = vpop.f32.mrf.mxu0
      %v626 = vadd.f32 0.0, %v625
      %627 = vmatmul.bf16.gmra.mxu0 %v591
      %v628 = vpop.f32.mrf.mxu0
      %v629 = vadd.f32 0.0, %v628
      %v630 = vpop.f32.mrf.mxu0
      %v631 = vadd.f32 0.0, %v630
      %632 = vmatmul.bf16.gmra.mxu0 %v594
      %v633 = vpop.f32.mrf.mxu0
      %v634 = vadd.f32 0.0, %v633
      %v635 = vpop.f32.mrf.mxu0
      %v636 = vadd.f32 0.0, %v635
      %637 = vmatmul.bf16.gmra.mxu0 %v597
      %v638 = vpop.f32.mrf.mxu0
      %v639 = vadd.f32 0.0, %v638
      %v640 = vpop.f32.mrf.mxu0
      %v641 = vadd.f32 0.0, %v640
      %642 = vmatmul.bf16.gmra.mxu0 %v600
      %v643 = vpop.f32.mrf.mxu0
      %v644 = vadd.f32 0.0, %v643
      %v645 = vpop.f32.mrf.mxu0
      %v646 = vadd.f32 0.0, %v645
      %647 = vmatmul.bf16.gmra.mxu0 %v603
      %v648 = vpop.f32.mrf.mxu0
      %v649 = vadd.f32 0.0, %v648
      %v650 = vpop.f32.mrf.mxu0
      %v651 = vadd.f32 0.0, %v650
      %652 = vmatmul.bf16.gmra.mxu0 %v606
      %v653 = vpop.f32.mrf.mxu0
      %v654 = vadd.f32 0.0, %v653
      %v655 = vpop.f32.mrf.mxu0
      %v656 = vadd.f32 0.0, %v655
      %657 = vmatmul.bf16.gmra.mxu0 %v609
      %v658 = vpop.f32.mrf.mxu0
      %v659 = vadd.f32 0.0, %v658
      %v660 = vpop.f32.mrf.mxu0
      %v661 = vadd.f32 0.0, %v660
      %662 = vdwg.mxu0
      %v663 = vadd.f32 %v519, %v624
      %v664 = vadd.f32 %v521, %v626
      %v665 = vadd.f32 %v524, %v629
      %v666 = vadd.f32 %v526, %v631
      %v667 = vadd.f32 %v529, %v634
      %v668 = vadd.f32 %v531, %v636
      %v669 = vadd.f32 %v534, %v639
      %v670 = vadd.f32 %v536, %v641
      %v671 = vadd.f32 %v539, %v644
      %v672 = vadd.f32 %v541, %v646
      %v673 = vadd.f32 %v544, %v649
      %v674 = vadd.f32 %v546, %v651
      %v675 = vadd.f32 %v549, %v654
      %v676 = vadd.f32 %v551, %v656
      %v677 = vadd.f32 %v554, %v659
      %v678 = vadd.f32 %v556, %v661
      %s679 = scalar_lea.vmem %s1, 24
      %v680 = vld [vmem:[%s679] sm:$0xff]
      %v681 = vmul.f32 %v680, %v341
      %v682 = vmul.f32 %v681, %v345
      %v683 = vpack.c.bf16 %v682, %v682
      %s684 = sadd.s32 %s334, 1
      %s685 = smul.u32 %s684, 24
      %s686 = scalar_lea.vmem %s307, %s685
      %v687 = vld [vmem:[%s686] sm:$0xff]
      %v688 = vld [vmem:[%s686 + $0x8] sm:$0xff]
      %v689 = vld [vmem:[%s686 + $0x18] sm:$0xff]
      %v690 = vld [vmem:[%s686 + $0x20] sm:$0xff]
      %v691 = vld [vmem:[%s686 + $0x30] sm:$0xff]
      %v692 = vld [vmem:[%s686 + $0x38] sm:$0xff]
      %v693 = vld [vmem:[%s686 + $0x48] sm:$0xff]
      %v694 = vld [vmem:[%s686 + $0x50] sm:$0xff]
      %v695 = vld [vmem:[%s686 + $0x60] sm:$0xff]
      %v696 = vld [vmem:[%s686 + $0x68] sm:$0xff]
      %v697 = vld [vmem:[%s686 + $0x78] sm:$0xff]
      %v698 = vld [vmem:[%s686 + $0x80] sm:$0xff]
      %v699 = vld [vmem:[%s686 + $0x90] sm:$0xff]
      %v700 = vld [vmem:[%s686 + $0x98] sm:$0xff]
      %v701 = vld [vmem:[%s686 + $0xa8] sm:$0xff]
      %v702 = vld [vmem:[%s686 + $0xb0] sm:$0xff]
      %v703 = vpack.c.bf16 %v688, %v687
      %v704 = vpack.c.bf16 %v690, %v689
      %v705 = vpack.c.bf16 %v692, %v691
      %v706 = vpack.c.bf16 %v694, %v693
      %v707 = vpack.c.bf16 %v696, %v695
      %v708 = vpack.c.bf16 %v698, %v697
      %v709 = vpack.c.bf16 %v700, %v699
      %v710 = vpack.c.bf16 %v702, %v701
      %v712 = vsel %vm404, %v703, 0
      %v715 = vsel %vm404, %v704, 0
      %v718 = vsel %vm404, %v705, 0
      %v721 = vsel %vm404, %v706, 0
      %v724 = vsel %vm404, %v707, 0
      %v727 = vsel %vm404, %v708, 0
      %v730 = vsel %vm404, %v709, 0
      %v733 = vsel %vm404, %v710, 0
      %v736 = vsel %vm429, %v683, 0
      %738 = vmatpush.bf16.msra.mxu0 0
      %739 = vmatpush.bf16.msra.mxu0 0
      %740 = vmatpush.bf16.msra.mxu0 0
      %741 = vmatpush.bf16.msra.mxu0 0
      %742 = vmatpush.bf16.msra.mxu0 0
      %743 = vmatpush.bf16.msra.mxu0 0
      %744 = vmatpush.bf16.msra.mxu0 0
      %745 = vmatpush.bf16.msra.mxu0 %v736
      %746 = vmatmul.bf16.gmra.mxu0 %v712
      %v747 = vpop.f32.mrf.mxu0
      %v748 = vadd.f32 0.0, %v747
      %v749 = vpop.f32.mrf.mxu0
      %v750 = vadd.f32 0.0, %v749
      %751 = vmatmul.bf16.gmra.mxu0 %v715
      %v752 = vpop.f32.mrf.mxu0
      %v753 = vadd.f32 0.0, %v752
      %v754 = vpop.f32.mrf.mxu0
      %v755 = vadd.f32 0.0, %v754
      %756 = vmatmul.bf16.gmra.mxu0 %v718
      %v757 = vpop.f32.mrf.mxu0
      %v758 = vadd.f32 0.0, %v757
      %v759 = vpop.f32.mrf.mxu0
      %v760 = vadd.f32 0.0, %v759
      %761 = vmatmul.bf16.gmra.mxu0 %v721
      %v762 = vpop.f32.mrf.mxu0
      %v763 = vadd.f32 0.0, %v762
      %v764 = vpop.f32.mrf.mxu0
      %v765 = vadd.f32 0.0, %v764
      %766 = vmatmul.bf16.gmra.mxu0 %v724
      %v767 = vpop.f32.mrf.mxu0
      %v768 = vadd.f32 0.0, %v767
      %v769 = vpop.f32.mrf.mxu0
      %v770 = vadd.f32 0.0, %v769
      %771 = vmatmul.bf16.gmra.mxu0 %v727
      %v772 = vpop.f32.mrf.mxu0
      %v773 = vadd.f32 0.0, %v772
      %v774 = vpop.f32.mrf.mxu0
      %v775 = vadd.f32 0.0, %v774
      %776 = vmatmul.bf16.gmra.mxu0 %v730
      %v777 = vpop.f32.mrf.mxu0
      %v778 = vadd.f32 0.0, %v777
      %v779 = vpop.f32.mrf.mxu0
      %v780 = vadd.f32 0.0, %v779
      %781 = vmatmul.bf16.gmra.mxu0 %v733
      %v782 = vpop.f32.mrf.mxu0
      %v783 = vadd.f32 0.0, %v782
      %v784 = vpop.f32.mrf.mxu0
      %v785 = vadd.f32 0.0, %v784
      %786 = vdwg.mxu0
      %v787 = vadd.f32 %v663, %v748
      %v788 = vadd.f32 %v664, %v750
      %v789 = vadd.f32 %v665, %v753
      %v790 = vadd.f32 %v666, %v755
      %v791 = vadd.f32 %v667, %v758
      %v792 = vadd.f32 %v668, %v760
      %v793 = vadd.f32 %v669, %v763
      %v794 = vadd.f32 %v670, %v765
      %v795 = vadd.f32 %v671, %v768
      %v796 = vadd.f32 %v672, %v770
      %v797 = vadd.f32 %v673, %v773
      %v798 = vadd.f32 %v674, %v775
      %v799 = vadd.f32 %v675, %v778
      %v800 = vadd.f32 %v676, %v780
      %v801 = vadd.f32 %v677, %v783
      %v802 = vadd.f32 %v678, %v785
      %s803 = scalar_lea.vmem %s1, 32
      %v804 = vld [vmem:[%s803] sm:$0xff]
      %v805 = vmul.f32 %v804, %v341
      %v806 = vmul.f32 %v805, %v345
      %v807 = vpack.c.bf16 %v806, %v806
      %v808 = vld [vmem:[%s686 + $0x1] sm:$0xff]
      %v809 = vld [vmem:[%s686 + $0x9] sm:$0xff]
      %v810 = vld [vmem:[%s686 + $0x19] sm:$0xff]
      %v811 = vld [vmem:[%s686 + $0x21] sm:$0xff]
      %v812 = vld [vmem:[%s686 + $0x31] sm:$0xff]
      %v813 = vld [vmem:[%s686 + $0x39] sm:$0xff]
      %v814 = vld [vmem:[%s686 + $0x49] sm:$0xff]
      %v815 = vld [vmem:[%s686 + $0x51] sm:$0xff]
      %v816 = vld [vmem:[%s686 + $0x61] sm:$0xff]
      %v817 = vld [vmem:[%s686 + $0x69] sm:$0xff]
      %v818 = vld [vmem:[%s686 + $0x79] sm:$0xff]
      %v819 = vld [vmem:[%s686 + $0x81] sm:$0xff]
      %v820 = vld [vmem:[%s686 + $0x91] sm:$0xff]
      %v821 = vld [vmem:[%s686 + $0x99] sm:$0xff]
      %v822 = vld [vmem:[%s686 + $0xa9] sm:$0xff]
      %v823 = vld [vmem:[%s686 + $0xb1] sm:$0xff]
      %v824 = vpack.c.bf16 %v809, %v808
      %v825 = vpack.c.bf16 %v811, %v810
      %v826 = vpack.c.bf16 %v813, %v812
      %v827 = vpack.c.bf16 %v815, %v814
      %v828 = vpack.c.bf16 %v817, %v816
      %v829 = vpack.c.bf16 %v819, %v818
      %v830 = vpack.c.bf16 %v821, %v820
      %v831 = vpack.c.bf16 %v823, %v822
      %v833 = vsel %vm404, %v824, 0
      %v836 = vsel %vm404, %v825, 0
      %v839 = vsel %vm404, %v826, 0
      %v842 = vsel %vm404, %v827, 0
      %v845 = vsel %vm404, %v828, 0
      %v848 = vsel %vm404, %v829, 0
      %v851 = vsel %vm404, %v830, 0
      %v854 = vsel %vm404, %v831, 0
      %v857 = vsel %vm429, %v807, 0
      %859 = vmatpush.bf16.msra.mxu0 0
      %860 = vmatpush.bf16.msra.mxu0 0
      %861 = vmatpush.bf16.msra.mxu0 0
      %862 = vmatpush.bf16.msra.mxu0 0
      %863 = vmatpush.bf16.msra.mxu0 0
      %864 = vmatpush.bf16.msra.mxu0 0
      %865 = vmatpush.bf16.msra.mxu0 0
      %866 = vmatpush.bf16.msra.mxu0 %v857
      %867 = vmatmul.bf16.gmra.mxu0 %v833
      %v868 = vpop.f32.mrf.mxu0
      %v869 = vadd.f32 0.0, %v868
      %v870 = vpop.f32.mrf.mxu0
      %v871 = vadd.f32 0.0, %v870
      %872 = vmatmul.bf16.gmra.mxu0 %v836
      %v873 = vpop.f32.mrf.mxu0
      %v874 = vadd.f32 0.0, %v873
      %v875 = vpop.f32.mrf.mxu0
      %v876 = vadd.f32 0.0, %v875
      %877 = vmatmul.bf16.gmra.mxu0 %v839
      %v878 = vpop.f32.mrf.mxu0
      %v879 = vadd.f32 0.0, %v878
      %v880 = vpop.f32.mrf.mxu0
      %v881 = vadd.f32 0.0, %v880
      %882 = vmatmul.bf16.gmra.mxu0 %v842
      %v883 = vpop.f32.mrf.mxu0
      %v884 = vadd.f32 0.0, %v883
      %v885 = vpop.f32.mrf.mxu0
      %v886 = vadd.f32 0.0, %v885
      %887 = vmatmul.bf16.gmra.mxu0 %v845
      %v888 = vpop.f32.mrf.mxu0
      %v889 = vadd.f32 0.0, %v888
      %v890 = vpop.f32.mrf.mxu0
      %v891 = vadd.f32 0.0, %v890
      %892 = vmatmul.bf16.gmra.mxu0 %v848
      %v893 = vpop.f32.mrf.mxu0
      %v894 = vadd.f32 0.0, %v893
      %v895 = vpop.f32.mrf.mxu0
      %v896 = vadd.f32 0.0, %v895
      %897 = vmatmul.bf16.gmra.mxu0 %v851
      %v898 = vpop.f32.mrf.mxu0
      %v899 = vadd.f32 0.0, %v898
      %v900 = vpop.f32.mrf.mxu0
      %v901 = vadd.f32 0.0, %v900
      %902 = vmatmul.bf16.gmra.mxu0 %v854
      %v903 = vpop.f32.mrf.mxu0
      %v904 = vadd.f32 0.0, %v903
      %v905 = vpop.f32.mrf.mxu0
      %v906 = vadd.f32 0.0, %v905
      %907 = vdwg.mxu0
      %v908 = vadd.f32 %v787, %v869
      %v909 = vadd.f32 %v788, %v871
      %v910 = vadd.f32 %v789, %v874
      %v911 = vadd.f32 %v790, %v876
      %v912 = vadd.f32 %v791, %v879
      %v913 = vadd.f32 %v792, %v881
      %v914 = vadd.f32 %v793, %v884
      %v915 = vadd.f32 %v794, %v886
      %v916 = vadd.f32 %v795, %v889
      %v917 = vadd.f32 %v796, %v891
      %v918 = vadd.f32 %v797, %v894
      %v919 = vadd.f32 %v798, %v896
      %v920 = vadd.f32 %v799, %v899
      %v921 = vadd.f32 %v800, %v901
      %v922 = vadd.f32 %v801, %v904
      %v923 = vadd.f32 %v802, %v906
      %s924 = scalar_lea.vmem %s1, 40
      %v925 = vld [vmem:[%s924] sm:$0xff]
      %v926 = vmul.f32 %v925, %v341
      %v927 = vmul.f32 %v926, %v345
      %v928 = vpack.c.bf16 %v927, %v927
      %v929 = vld [vmem:[%s686 + $0x2] sm:$0xff]
      %v930 = vld [vmem:[%s686 + $0xa] sm:$0xff]
      %v931 = vld [vmem:[%s686 + $0x1a] sm:$0xff]
      %v932 = vld [vmem:[%s686 + $0x22] sm:$0xff]
      %v933 = vld [vmem:[%s686 + $0x32] sm:$0xff]
      %v934 = vld [vmem:[%s686 + $0x3a] sm:$0xff]
      %v935 = vld [vmem:[%s686 + $0x4a] sm:$0xff]
      %v936 = vld [vmem:[%s686 + $0x52] sm:$0xff]
      %v937 = vld [vmem:[%s686 + $0x62] sm:$0xff]
      %v938 = vld [vmem:[%s686 + $0x6a] sm:$0xff]
      %v939 = vld [vmem:[%s686 + $0x7a] sm:$0xff]
      %v940 = vld [vmem:[%s686 + $0x82] sm:$0xff]
      %v941 = vld [vmem:[%s686 + $0x92] sm:$0xff]
      %v942 = vld [vmem:[%s686 + $0x9a] sm:$0xff]
      %v943 = vld [vmem:[%s686 + $0xaa] sm:$0xff]
      %v944 = vld [vmem:[%s686 + $0xb2] sm:$0xff]
      %v945 = vpack.c.bf16 %v930, %v929
      %v946 = vpack.c.bf16 %v932, %v931
      %v947 = vpack.c.bf16 %v934, %v933
      %v948 = vpack.c.bf16 %v936, %v935
      %v949 = vpack.c.bf16 %v938, %v937
      %v950 = vpack.c.bf16 %v940, %v939
      %v951 = vpack.c.bf16 %v942, %v941
      %v952 = vpack.c.bf16 %v944, %v943
      %v954 = vsel %vm404, %v945, 0
      %v957 = vsel %vm404, %v946, 0
      %v960 = vsel %vm404, %v947, 0
      %v963 = vsel %vm404, %v948, 0
      %v966 = vsel %vm404, %v949, 0
      %v969 = vsel %vm404, %v950, 0
      %v972 = vsel %vm404, %v951, 0
      %v975 = vsel %vm404, %v952, 0
      %v978 = vsel %vm429, %v928, 0
      %980 = vmatpush.bf16.msra.mxu0 0
      %981 = vmatpush.bf16.msra.mxu0 0
      %982 = vmatpush.bf16.msra.mxu0 0
      %983 = vmatpush.bf16.msra.mxu0 0
      %984 = vmatpush.bf16.msra.mxu0 0
      %985 = vmatpush.bf16.msra.mxu0 0
      %986 = vmatpush.bf16.msra.mxu0 0
      %987 = vmatpush.bf16.msra.mxu0 %v978
      %988 = vmatmul.bf16.gmra.mxu0 %v954
      %v989 = vpop.f32.mrf.mxu0
      %v990 = vadd.f32 0.0, %v989
      %v991 = vpop.f32.mrf.mxu0
      %v992 = vadd.f32 0.0, %v991
      %993 = vmatmul.bf16.gmra.mxu0 %v957
      %v994 = vpop.f32.mrf.mxu0
      %v995 = vadd.f32 0.0, %v994
      %v996 = vpop.f32.mrf.mxu0
      %v997 = vadd.f32 0.0, %v996
      %998 = vmatmul.bf16.gmra.mxu0 %v960
      %v999 = vpop.f32.mrf.mxu0
      %v1000 = vadd.f32 0.0, %v999
      %v1001 = vpop.f32.mrf.mxu0
      %v1002 = vadd.f32 0.0, %v1001
      %1003 = vmatmul.bf16.gmra.mxu0 %v963
      %v1004 = vpop.f32.mrf.mxu0
      %v1005 = vadd.f32 0.0, %v1004
      %v1006 = vpop.f32.mrf.mxu0
      %v1007 = vadd.f32 0.0, %v1006
      %1008 = vmatmul.bf16.gmra.mxu0 %v966
      %v1009 = vpop.f32.mrf.mxu0
      %v1010 = vadd.f32 0.0, %v1009
      %v1011 = vpop.f32.mrf.mxu0
      %v1012 = vadd.f32 0.0, %v1011
      %1013 = vmatmul.bf16.gmra.mxu0 %v969
      %v1014 = vpop.f32.mrf.mxu0
      %v1015 = vadd.f32 0.0, %v1014
      %v1016 = vpop.f32.mrf.mxu0
      %v1017 = vadd.f32 0.0, %v1016
      %1018 = vmatmul.bf16.gmra.mxu0 %v972
      %v1019 = vpop.f32.mrf.mxu0
      %v1020 = vadd.f32 0.0, %v1019
      %v1021 = vpop.f32.mrf.mxu0
      %v1022 = vadd.f32 0.0, %v1021
      %1023 = vmatmul.bf16.gmra.mxu0 %v975
      %v1024 = vpop.f32.mrf.mxu0
      %v1025 = vadd.f32 0.0, %v1024
      %v1026 = vpop.f32.mrf.mxu0
      %v1027 = vadd.f32 0.0, %v1026
      %1028 = vdwg.mxu0
      %v1029 = vadd.f32 %v908, %v990
      %v1030 = vadd.f32 %v909, %v992
      %v1031 = vadd.f32 %v910, %v995
      %v1032 = vadd.f32 %v911, %v997
      %v1033 = vadd.f32 %v912, %v1000
      %v1034 = vadd.f32 %v913, %v1002
      %v1035 = vadd.f32 %v914, %v1005
      %v1036 = vadd.f32 %v915, %v1007
      %v1037 = vadd.f32 %v916, %v1010
      %v1038 = vadd.f32 %v917, %v1012
      %v1039 = vadd.f32 %v918, %v1015
      %v1040 = vadd.f32 %v919, %v1017
      %v1041 = vadd.f32 %v920, %v1020
      %v1042 = vadd.f32 %v921, %v1022
      %v1043 = vadd.f32 %v922, %v1025
      %v1044 = vadd.f32 %v923, %v1027
      %s1045 = scalar_lea.vmem %s1, 48
      %v1046 = vld [vmem:[%s1045] sm:$0xff]
      %v1047 = vmul.f32 %v1046, %v341
      %v1048 = vmul.f32 %v1047, %v345
      %v1049 = vpack.c.bf16 %v1048, %v1048
      %s1050 = sadd.s32 %s334, 2
      %s1051 = smul.u32 %s1050, 24
      %s1052 = scalar_lea.vmem %s307, %s1051
      %v1053 = vld [vmem:[%s1052] sm:$0xff]
      %v1054 = vld [vmem:[%s1052 + $0x8] sm:$0xff]
      %v1055 = vld [vmem:[%s1052 + $0x18] sm:$0xff]
      %v1056 = vld [vmem:[%s1052 + $0x20] sm:$0xff]
      %v1057 = vld [vmem:[%s1052 + $0x30] sm:$0xff]
      %v1058 = vld [vmem:[%s1052 + $0x38] sm:$0xff]
      %v1059 = vld [vmem:[%s1052 + $0x48] sm:$0xff]
      %v1060 = vld [vmem:[%s1052 + $0x50] sm:$0xff]
      %v1061 = vld [vmem:[%s1052 + $0x60] sm:$0xff]
      %v1062 = vld [vmem:[%s1052 + $0x68] sm:$0xff]
      %v1063 = vld [vmem:[%s1052 + $0x78] sm:$0xff]
      %v1064 = vld [vmem:[%s1052 + $0x80] sm:$0xff]
      %v1065 = vld [vmem:[%s1052 + $0x90] sm:$0xff]
      %v1066 = vld [vmem:[%s1052 + $0x98] sm:$0xff]
      %v1067 = vld [vmem:[%s1052 + $0xa8] sm:$0xff]
      %v1068 = vld [vmem:[%s1052 + $0xb0] sm:$0xff]
      %v1069 = vpack.c.bf16 %v1054, %v1053
      %v1070 = vpack.c.bf16 %v1056, %v1055
      %v1071 = vpack.c.bf16 %v1058, %v1057
      %v1072 = vpack.c.bf16 %v1060, %v1059
      %v1073 = vpack.c.bf16 %v1062, %v1061
      %v1074 = vpack.c.bf16 %v1064, %v1063
      %v1075 = vpack.c.bf16 %v1066, %v1065
      %v1076 = vpack.c.bf16 %v1068, %v1067
      %v1078 = vsel %vm404, %v1069, 0
      %v1081 = vsel %vm404, %v1070, 0
      %v1084 = vsel %vm404, %v1071, 0
      %v1087 = vsel %vm404, %v1072, 0
      %v1090 = vsel %vm404, %v1073, 0
      %v1093 = vsel %vm404, %v1074, 0
      %v1096 = vsel %vm404, %v1075, 0
      %v1099 = vsel %vm404, %v1076, 0
      %v1102 = vsel %vm429, %v1049, 0
      %1104 = vmatpush.bf16.msra.mxu0 0
      %1105 = vmatpush.bf16.msra.mxu0 0
      %1106 = vmatpush.bf16.msra.mxu0 0
      %1107 = vmatpush.bf16.msra.mxu0 0
      %1108 = vmatpush.bf16.msra.mxu0 0
      %1109 = vmatpush.bf16.msra.mxu0 0
      %1110 = vmatpush.bf16.msra.mxu0 0
      %1111 = vmatpush.bf16.msra.mxu0 %v1102
      %1112 = vmatmul.bf16.gmra.mxu0 %v1078
      %v1113 = vpop.f32.mrf.mxu0
      %v1114 = vadd.f32 0.0, %v1113
      %v1115 = vpop.f32.mrf.mxu0
      %v1116 = vadd.f32 0.0, %v1115
      %1117 = vmatmul.bf16.gmra.mxu0 %v1081
      %v1118 = vpop.f32.mrf.mxu0
      %v1119 = vadd.f32 0.0, %v1118
      %v1120 = vpop.f32.mrf.mxu0
      %v1121 = vadd.f32 0.0, %v1120
      %1122 = vmatmul.bf16.gmra.mxu0 %v1084
      %v1123 = vpop.f32.mrf.mxu0
      %v1124 = vadd.f32 0.0, %v1123
      %v1125 = vpop.f32.mrf.mxu0
      %v1126 = vadd.f32 0.0, %v1125
      %1127 = vmatmul.bf16.gmra.mxu0 %v1087
      %v1128 = vpop.f32.mrf.mxu0
      %v1129 = vadd.f32 0.0, %v1128
      %v1130 = vpop.f32.mrf.mxu0
      %v1131 = vadd.f32 0.0, %v1130
      %1132 = vmatmul.bf16.gmra.mxu0 %v1090
      %v1133 = vpop.f32.mrf.mxu0
      %v1134 = vadd.f32 0.0, %v1133
      %v1135 = vpop.f32.mrf.mxu0
      %v1136 = vadd.f32 0.0, %v1135
      %1137 = vmatmul.bf16.gmra.mxu0 %v1093
      %v1138 = vpop.f32.mrf.mxu0
      %v1139 = vadd.f32 0.0, %v1138
      %v1140 = vpop.f32.mrf.mxu0
      %v1141 = vadd.f32 0.0, %v1140
      %1142 = vmatmul.bf16.gmra.mxu0 %v1096
      %v1143 = vpop.f32.mrf.mxu0
      %v1144 = vadd.f32 0.0, %v1143
      %v1145 = vpop.f32.mrf.mxu0
      %v1146 = vadd.f32 0.0, %v1145
      %1147 = vmatmul.bf16.gmra.mxu0 %v1099
      %v1148 = vpop.f32.mrf.mxu0
      %v1149 = vadd.f32 0.0, %v1148
      %v1150 = vpop.f32.mrf.mxu0
      %v1151 = vadd.f32 0.0, %v1150
      %1152 = vdwg.mxu0
      %v1153 = vadd.f32 %v1029, %v1114
      %v1154 = vadd.f32 %v1030, %v1116
      %v1155 = vadd.f32 %v1031, %v1119
      %v1156 = vadd.f32 %v1032, %v1121
      %v1157 = vadd.f32 %v1033, %v1124
      %v1158 = vadd.f32 %v1034, %v1126
      %v1159 = vadd.f32 %v1035, %v1129
      %v1160 = vadd.f32 %v1036, %v1131
      %v1161 = vadd.f32 %v1037, %v1134
      %v1162 = vadd.f32 %v1038, %v1136
      %v1163 = vadd.f32 %v1039, %v1139
      %v1164 = vadd.f32 %v1040, %v1141
      %v1165 = vadd.f32 %v1041, %v1144
      %v1166 = vadd.f32 %v1042, %v1146
      %v1167 = vadd.f32 %v1043, %v1149
      %v1168 = vadd.f32 %v1044, %v1151
      %s1169 = scalar_lea.vmem %s1, 56
      %v1170 = vld [vmem:[%s1169] sm:$0xff]
      %v1171 = vmul.f32 %v1170, %v341
      %v1172 = vmul.f32 %v1171, %v345
      %v1173 = vpack.c.bf16 %v1172, %v1172
      %v1174 = vld [vmem:[%s1052 + $0x1] sm:$0xff]
      %v1175 = vld [vmem:[%s1052 + $0x9] sm:$0xff]
      %v1176 = vld [vmem:[%s1052 + $0x19] sm:$0xff]
      %v1177 = vld [vmem:[%s1052 + $0x21] sm:$0xff]
      %v1178 = vld [vmem:[%s1052 + $0x31] sm:$0xff]
      %v1179 = vld [vmem:[%s1052 + $0x39] sm:$0xff]
      %v1180 = vld [vmem:[%s1052 + $0x49] sm:$0xff]
      %v1181 = vld [vmem:[%s1052 + $0x51] sm:$0xff]
      %v1182 = vld [vmem:[%s1052 + $0x61] sm:$0xff]
      %v1183 = vld [vmem:[%s1052 + $0x69] sm:$0xff]
      %v1184 = vld [vmem:[%s1052 + $0x79] sm:$0xff]
      %v1185 = vld [vmem:[%s1052 + $0x81] sm:$0xff]
      %v1186 = vld [vmem:[%s1052 + $0x91] sm:$0xff]
      %v1187 = vld [vmem:[%s1052 + $0x99] sm:$0xff]
      %v1188 = vld [vmem:[%s1052 + $0xa9] sm:$0xff]
      %v1189 = vld [vmem:[%s1052 + $0xb1] sm:$0xff]
      %v1190 = vpack.c.bf16 %v1175, %v1174
      %v1191 = vpack.c.bf16 %v1177, %v1176
      %v1192 = vpack.c.bf16 %v1179, %v1178
      %v1193 = vpack.c.bf16 %v1181, %v1180
      %v1194 = vpack.c.bf16 %v1183, %v1182
      %v1195 = vpack.c.bf16 %v1185, %v1184
      %v1196 = vpack.c.bf16 %v1187, %v1186
      %v1197 = vpack.c.bf16 %v1189, %v1188
      %v1199 = vsel %vm404, %v1190, 0
      %v1202 = vsel %vm404, %v1191, 0
      %v1205 = vsel %vm404, %v1192, 0
      %v1208 = vsel %vm404, %v1193, 0
      %v1211 = vsel %vm404, %v1194, 0
      %v1214 = vsel %vm404, %v1195, 0
      %v1217 = vsel %vm404, %v1196, 0
      %v1220 = vsel %vm404, %v1197, 0
      %v1223 = vsel %vm429, %v1173, 0
      %1225 = vmatpush.bf16.msra.mxu0 0
      %1226 = vmatpush.bf16.msra.mxu0 0
      %1227 = vmatpush.bf16.msra.mxu0 0
      %1228 = vmatpush.bf16.msra.mxu0 0
      %1229 = vmatpush.bf16.msra.mxu0 0
      %1230 = vmatpush.bf16.msra.mxu0 0
      %1231 = vmatpush.bf16.msra.mxu0 0
      %1232 = vmatpush.bf16.msra.mxu0 %v1223
      %1233 = vmatmul.bf16.gmra.mxu0 %v1199
      %v1234 = vpop.f32.mrf.mxu0
      %v1235 = vadd.f32 0.0, %v1234
      %v1236 = vpop.f32.mrf.mxu0
      %v1237 = vadd.f32 0.0, %v1236
      %1238 = vmatmul.bf16.gmra.mxu0 %v1202
      %v1239 = vpop.f32.mrf.mxu0
      %v1240 = vadd.f32 0.0, %v1239
      %v1241 = vpop.f32.mrf.mxu0
      %v1242 = vadd.f32 0.0, %v1241
      %1243 = vmatmul.bf16.gmra.mxu0 %v1205
      %v1244 = vpop.f32.mrf.mxu0
      %v1245 = vadd.f32 0.0, %v1244
      %v1246 = vpop.f32.mrf.mxu0
      %v1247 = vadd.f32 0.0, %v1246
      %1248 = vmatmul.bf16.gmra.mxu0 %v1208
      %v1249 = vpop.f32.mrf.mxu0
      %v1250 = vadd.f32 0.0, %v1249
      %v1251 = vpop.f32.mrf.mxu0
      %v1252 = vadd.f32 0.0, %v1251
      %1253 = vmatmul.bf16.gmra.mxu0 %v1211
      %v1254 = vpop.f32.mrf.mxu0
      %v1255 = vadd.f32 0.0, %v1254
      %v1256 = vpop.f32.mrf.mxu0
      %v1257 = vadd.f32 0.0, %v1256
      %1258 = vmatmul.bf16.gmra.mxu0 %v1214
      %v1259 = vpop.f32.mrf.mxu0
      %v1260 = vadd.f32 0.0, %v1259
      %v1261 = vpop.f32.mrf.mxu0
      %v1262 = vadd.f32 0.0, %v1261
      %1263 = vmatmul.bf16.gmra.mxu0 %v1217
      %v1264 = vpop.f32.mrf.mxu0
      %v1265 = vadd.f32 0.0, %v1264
      %v1266 = vpop.f32.mrf.mxu0
      %v1267 = vadd.f32 0.0, %v1266
      %1268 = vmatmul.bf16.gmra.mxu0 %v1220
      %v1269 = vpop.f32.mrf.mxu0
      %v1270 = vadd.f32 0.0, %v1269
      %v1271 = vpop.f32.mrf.mxu0
      %v1272 = vadd.f32 0.0, %v1271
      %1273 = vdwg.mxu0
      %v1274 = vadd.f32 %v1153, %v1235
      %v1275 = vadd.f32 %v1154, %v1237
      %v1276 = vadd.f32 %v1155, %v1240
      %v1277 = vadd.f32 %v1156, %v1242
      %v1278 = vadd.f32 %v1157, %v1245
      %v1279 = vadd.f32 %v1158, %v1247
      %v1280 = vadd.f32 %v1159, %v1250
      %v1281 = vadd.f32 %v1160, %v1252
      %v1282 = vadd.f32 %v1161, %v1255
      %v1283 = vadd.f32 %v1162, %v1257
      %v1284 = vadd.f32 %v1163, %v1260
      %v1285 = vadd.f32 %v1164, %v1262
      %v1286 = vadd.f32 %v1165, %v1265
      %v1287 = vadd.f32 %v1166, %v1267
      %v1288 = vadd.f32 %v1167, %v1270
      %v1289 = vadd.f32 %v1168, %v1272
      %s1290 = scalar_lea.vmem %s1, 64
      %v1291 = vld [vmem:[%s1290] sm:$0xff]
      %v1292 = vmul.f32 %v1291, %v341
      %v1293 = vmul.f32 %v1292, %v345
      %v1294 = vpack.c.bf16 %v1293, %v1293
      %v1295 = vld [vmem:[%s1052 + $0x2] sm:$0xff]
      %v1296 = vld [vmem:[%s1052 + $0xa] sm:$0xff]
      %v1297 = vld [vmem:[%s1052 + $0x1a] sm:$0xff]
      %v1298 = vld [vmem:[%s1052 + $0x22] sm:$0xff]
      %v1299 = vld [vmem:[%s1052 + $0x32] sm:$0xff]
      %v1300 = vld [vmem:[%s1052 + $0x3a] sm:$0xff]
      %v1301 = vld [vmem:[%s1052 + $0x4a] sm:$0xff]
      %v1302 = vld [vmem:[%s1052 + $0x52] sm:$0xff]
      %v1303 = vld [vmem:[%s1052 + $0x62] sm:$0xff]
      %v1304 = vld [vmem:[%s1052 + $0x6a] sm:$0xff]
      %v1305 = vld [vmem:[%s1052 + $0x7a] sm:$0xff]
      %v1306 = vld [vmem:[%s1052 + $0x82] sm:$0xff]
      %v1307 = vld [vmem:[%s1052 + $0x92] sm:$0xff]
      %v1308 = vld [vmem:[%s1052 + $0x9a] sm:$0xff]
      %v1309 = vld [vmem:[%s1052 + $0xaa] sm:$0xff]
      %v1310 = vld [vmem:[%s1052 + $0xb2] sm:$0xff]
      %v1311 = vpack.c.bf16 %v1296, %v1295
      %v1312 = vpack.c.bf16 %v1298, %v1297
      %v1313 = vpack.c.bf16 %v1300, %v1299
      %v1314 = vpack.c.bf16 %v1302, %v1301
      %v1315 = vpack.c.bf16 %v1304, %v1303
      %v1316 = vpack.c.bf16 %v1306, %v1305
      %v1317 = vpack.c.bf16 %v1308, %v1307
      %v1318 = vpack.c.bf16 %v1310, %v1309
      %v1320 = vsel %vm404, %v1311, 0
      %v1323 = vsel %vm404, %v1312, 0
      %v1326 = vsel %vm404, %v1313, 0
      %v1329 = vsel %vm404, %v1314, 0
      %v1332 = vsel %vm404, %v1315, 0
      %v1335 = vsel %vm404, %v1316, 0
      %v1338 = vsel %vm404, %v1317, 0
      %v1341 = vsel %vm404, %v1318, 0
      %v1344 = vsel %vm429, %v1294, 0
      %1346 = vmatpush.bf16.msra.mxu0 0
      %1347 = vmatpush.bf16.msra.mxu0 0
      %1348 = vmatpush.bf16.msra.mxu0 0
      %1349 = vmatpush.bf16.msra.mxu0 0
      %1350 = vmatpush.bf16.msra.mxu0 0
      %1351 = vmatpush.bf16.msra.mxu0 0
      %1352 = vmatpush.bf16.msra.mxu0 0
      %1353 = vmatpush.bf16.msra.mxu0 %v1344
      %1354 = vmatmul.bf16.gmra.mxu0 %v1320
      %v1355 = vpop.f32.mrf.mxu0
      %v1356 = vadd.f32 0.0, %v1355
      %v1357 = vpop.f32.mrf.mxu0
      %v1358 = vadd.f32 0.0, %v1357
      %1359 = vmatmul.bf16.gmra.mxu0 %v1323
      %v1360 = vpop.f32.mrf.mxu0
      %v1361 = vadd.f32 0.0, %v1360
      %v1362 = vpop.f32.mrf.mxu0
      %v1363 = vadd.f32 0.0, %v1362
      %1364 = vmatmul.bf16.gmra.mxu0 %v1326
      %v1365 = vpop.f32.mrf.mxu0
      %v1366 = vadd.f32 0.0, %v1365
      %v1367 = vpop.f32.mrf.mxu0
      %v1368 = vadd.f32 0.0, %v1367
      %1369 = vmatmul.bf16.gmra.mxu0 %v1329
      %v1370 = vpop.f32.mrf.mxu0
      %v1371 = vadd.f32 0.0, %v1370
      %v1372 = vpop.f32.mrf.mxu0
      %v1373 = vadd.f32 0.0, %v1372
      %1374 = vmatmul.bf16.gmra.mxu0 %v1332
      %v1375 = vpop.f32.mrf.mxu0
      %v1376 = vadd.f32 0.0, %v1375
      %v1377 = vpop.f32.mrf.mxu0
      %v1378 = vadd.f32 0.0, %v1377
      %1379 = vmatmul.bf16.gmra.mxu0 %v1335
      %v1380 = vpop.f32.mrf.mxu0
      %v1381 = vadd.f32 0.0, %v1380
      %v1382 = vpop.f32.mrf.mxu0
      %v1383 = vadd.f32 0.0, %v1382
      %1384 = vmatmul.bf16.gmra.mxu0 %v1338
      %v1385 = vpop.f32.mrf.mxu0
      %v1386 = vadd.f32 0.0, %v1385
      %v1387 = vpop.f32.mrf.mxu0
      %v1388 = vadd.f32 0.0, %v1387
      %1389 = vmatmul.bf16.gmra.mxu0 %v1341
      %v1390 = vpop.f32.mrf.mxu0
      %v1391 = vadd.f32 0.0, %v1390
      %v1392 = vpop.f32.mrf.mxu0
      %v1393 = vadd.f32 0.0, %v1392
      %1394 = vdwg.mxu0
      %v1395 = vadd.f32 %v1274, %v1356
      %v1396 = vadd.f32 %v1275, %v1358
      %v1397 = vadd.f32 %v1276, %v1361
      %v1398 = vadd.f32 %v1277, %v1363
      %v1399 = vadd.f32 %v1278, %v1366
      %v1400 = vadd.f32 %v1279, %v1368
      %v1401 = vadd.f32 %v1280, %v1371
      %v1402 = vadd.f32 %v1281, %v1373
      %v1403 = vadd.f32 %v1282, %v1376
      %v1404 = vadd.f32 %v1283, %v1378
      %v1405 = vadd.f32 %v1284, %v1381
      %v1406 = vadd.f32 %v1285, %v1383
      %v1407 = vadd.f32 %v1286, %v1386
      %v1408 = vadd.f32 %v1287, %v1388
      %v1409 = vadd.f32 %v1288, %v1391
      %v1410 = vadd.f32 %v1289, %v1393
      %v1411 = vld [vmem:[%s320] sm:$0xff]
      %v1412 = vld [vmem:[%s320 + $0x8] sm:$0xff]
      %v1413 = vld [vmem:[%s320 + $0x10] sm:$0xff]
      %v1414 = vld [vmem:[%s320 + $0x18] sm:$0xff]
      %v1415 = vld [vmem:[%s320 + $0x20] sm:$0xff]
      %v1416 = vld [vmem:[%s320 + $0x28] sm:$0xff]
      %v1417 = vld [vmem:[%s320 + $0x30] sm:$0xff]
      %v1418 = vld [vmem:[%s320 + $0x38] sm:$0xff]
      %v1419 = vld [vmem:[%s320 + $0x40] sm:$0xff]
      %v1420 = vld [vmem:[%s320 + $0x48] sm:$0xff]
      %v1421 = vld [vmem:[%s320 + $0x50] sm:$0xff]
      %v1422 = vld [vmem:[%s320 + $0x58] sm:$0xff]
      %v1423 = vld [vmem:[%s320 + $0x60] sm:$0xff]
      %v1424 = vld [vmem:[%s320 + $0x68] sm:$0xff]
      %v1425 = vld [vmem:[%s320 + $0x70] sm:$0xff]
      %v1426 = vld [vmem:[%s320 + $0x78] sm:$0xff]
      %1428 = vset.pattern.permute.xlu0 0
      %1429 = vperm.xlu0 %1428, %v1411
      %v1430 = vpop.permute.xlu0 %1429
      %1433 = vset.pattern.permute.xlu0 0
      %1434 = vperm.xlu0 %1433, %v1412
      %v1435 = vpop.permute.xlu0 %1434
      %1438 = vset.pattern.permute.xlu0 0
      %1439 = vperm.xlu0 %1438, %v1413
      %v1440 = vpop.permute.xlu0 %1439
      %1443 = vset.pattern.permute.xlu0 0
      %1444 = vperm.xlu0 %1443, %v1414
      %v1445 = vpop.permute.xlu0 %1444
      %1448 = vset.pattern.permute.xlu0 0
      %1449 = vperm.xlu0 %1448, %v1415
      %v1450 = vpop.permute.xlu0 %1449
      %1453 = vset.pattern.permute.xlu0 0
      %1454 = vperm.xlu0 %1453, %v1416
      %v1455 = vpop.permute.xlu0 %1454
      %1458 = vset.pattern.permute.xlu0 0
      %1459 = vperm.xlu0 %1458, %v1417
      %v1460 = vpop.permute.xlu0 %1459
      %1463 = vset.pattern.permute.xlu0 0
      %1464 = vperm.xlu0 %1463, %v1418
      %v1465 = vpop.permute.xlu0 %1464
      %1468 = vset.pattern.permute.xlu0 0
      %1469 = vperm.xlu0 %1468, %v1419
      %v1470 = vpop.permute.xlu0 %1469
      %1473 = vset.pattern.permute.xlu0 0
      %1474 = vperm.xlu0 %1473, %v1420
      %v1475 = vpop.permute.xlu0 %1474
      %1478 = vset.pattern.permute.xlu0 0
      %1479 = vperm.xlu0 %1478, %v1421
      %v1480 = vpop.permute.xlu0 %1479
      %1483 = vset.pattern.permute.xlu0 0
      %1484 = vperm.xlu0 %1483, %v1422
      %v1485 = vpop.permute.xlu0 %1484
      %1488 = vset.pattern.permute.xlu0 0
      %1489 = vperm.xlu0 %1488, %v1423
      %v1490 = vpop.permute.xlu0 %1489
      %1493 = vset.pattern.permute.xlu0 0
      %1494 = vperm.xlu0 %1493, %v1424
      %v1495 = vpop.permute.xlu0 %1494
      %1498 = vset.pattern.permute.xlu0 0
      %1499 = vperm.xlu0 %1498, %v1425
      %v1500 = vpop.permute.xlu0 %1499
      %1503 = vset.pattern.permute.xlu0 0
      %1504 = vperm.xlu0 %1503, %v1426
      %v1505 = vpop.permute.xlu0 %1504
      %v1507 = vadd.f32 %v1395, %v1430
      %v1508 = vadd.f32 %v1396, %v1435
      %v1509 = vadd.f32 %v1397, %v1440
      %v1510 = vadd.f32 %v1398, %v1445
      %v1511 = vadd.f32 %v1399, %v1450
      %v1512 = vadd.f32 %v1400, %v1455
      %v1513 = vadd.f32 %v1401, %v1460
      %v1514 = vadd.f32 %v1402, %v1465
      %v1515 = vadd.f32 %v1403, %v1470
      %v1516 = vadd.f32 %v1404, %v1475
      %v1517 = vadd.f32 %v1405, %v1480
      %v1518 = vadd.f32 %v1406, %v1485
      %v1519 = vadd.f32 %v1407, %v1490
      %v1520 = vadd.f32 %v1408, %v1495
      %v1521 = vadd.f32 %v1409, %v1500
      %v1522 = vadd.f32 %v1410, %v1505
      %v1523 = vld [vmem:[%s5] sm:$0x1]
      %v1525 = vperm.slane %v1523, 0
      %v1527 = vadd.f32 %v1507, %v1525
      %v1528 = vadd.f32 %v1508, %v1525
      %v1529 = vadd.f32 %v1509, %v1525
      %v1530 = vadd.f32 %v1510, %v1525
      %v1531 = vadd.f32 %v1511, %v1525
      %v1532 = vadd.f32 %v1512, %v1525
      %v1533 = vadd.f32 %v1513, %v1525
      %v1534 = vadd.f32 %v1514, %v1525
      %v1535 = vadd.f32 %v1515, %v1525
      %v1536 = vadd.f32 %v1516, %v1525
      %v1537 = vadd.f32 %v1517, %v1525
      %v1538 = vadd.f32 %v1518, %v1525
      %v1539 = vadd.f32 %v1519, %v1525
      %v1540 = vadd.f32 %v1520, %v1525
      %v1541 = vadd.f32 %v1521, %v1525
      %v1542 = vadd.f32 %v1522, %v1525
      %v1543 = vmul.f32 %v1527, 1.4142135
      %v1544 = vmul.f32 %v1528, 1.4142135
      %v1545 = vmul.f32 %v1529, 1.4142135
      %v1546 = vmul.f32 %v1530, 1.4142135
      %v1547 = vmul.f32 %v1531, 1.4142135
      %v1548 = vmul.f32 %v1532, 1.4142135
      %v1549 = vmul.f32 %v1533, 1.4142135
      %v1550 = vmul.f32 %v1534, 1.4142135
      %v1551 = vmul.f32 %v1535, 1.4142135
      %v1552 = vmul.f32 %v1536, 1.4142135
      %v1553 = vmul.f32 %v1537, 1.4142135
      %v1554 = vmul.f32 %v1538, 1.4142135
      %v1555 = vmul.f32 %v1539, 1.4142135
      %v1556 = vmul.f32 %v1540, 1.4142135
      %v1557 = vmul.f32 %v1541, 1.4142135
      %v1558 = vmul.f32 %v1542, 1.4142135
      %vm1559 = vcmp.ge.f32.partialorder %v1543, 0.0
      %vm1560 = vcmp.ge.f32.partialorder %v1544, 0.0
      %vm1561 = vcmp.ge.f32.partialorder %v1545, 0.0
      %vm1562 = vcmp.ge.f32.partialorder %v1546, 0.0
      %vm1563 = vcmp.ge.f32.partialorder %v1547, 0.0
      %vm1564 = vcmp.ge.f32.partialorder %v1548, 0.0
      %vm1565 = vcmp.ge.f32.partialorder %v1549, 0.0
      %vm1566 = vcmp.ge.f32.partialorder %v1550, 0.0
      %vm1567 = vcmp.ge.f32.partialorder %v1551, 0.0
      %vm1568 = vcmp.ge.f32.partialorder %v1552, 0.0
      %vm1569 = vcmp.ge.f32.partialorder %v1553, 0.0
      %vm1570 = vcmp.ge.f32.partialorder %v1554, 0.0
      %vm1571 = vcmp.ge.f32.partialorder %v1555, 0.0
      %vm1572 = vcmp.ge.f32.partialorder %v1556, 0.0
      %vm1573 = vcmp.ge.f32.partialorder %v1557, 0.0
      %vm1574 = vcmp.ge.f32.partialorder %v1558, 0.0
      %v1575 = vmul.f32 %v1543, 0.2
      %v1576 = vmul.f32 %v1544, 0.2
      %v1577 = vmul.f32 %v1545, 0.2
      %v1578 = vmul.f32 %v1546, 0.2
      %v1579 = vmul.f32 %v1547, 0.2
      %v1580 = vmul.f32 %v1548, 0.2
      %v1581 = vmul.f32 %v1549, 0.2
      %v1582 = vmul.f32 %v1550, 0.2
      %v1583 = vmul.f32 %v1551, 0.2
      %v1584 = vmul.f32 %v1552, 0.2
      %v1585 = vmul.f32 %v1553, 0.2
      %v1586 = vmul.f32 %v1554, 0.2
      %v1587 = vmul.f32 %v1555, 0.2
      %v1588 = vmul.f32 %v1556, 0.2
      %v1589 = vmul.f32 %v1557, 0.2
      %v1590 = vmul.f32 %v1558, 0.2
      %v1591 = vsel %vm1559, %v1543, %v1575
      %v1592 = vsel %vm1560, %v1544, %v1576
      %v1593 = vsel %vm1561, %v1545, %v1577
      %v1594 = vsel %vm1562, %v1546, %v1578
      %v1595 = vsel %vm1563, %v1547, %v1579
      %v1596 = vsel %vm1564, %v1548, %v1580
      %v1597 = vsel %vm1565, %v1549, %v1581
      %v1598 = vsel %vm1566, %v1550, %v1582
      %v1599 = vsel %vm1567, %v1551, %v1583
      %v1600 = vsel %vm1568, %v1552, %v1584
      %v1601 = vsel %vm1569, %v1553, %v1585
      %v1602 = vsel %vm1570, %v1554, %v1586
      %v1603 = vsel %vm1571, %v1555, %v1587
      %v1604 = vsel %vm1572, %v1556, %v1588
      %v1605 = vsel %vm1573, %v1557, %v1589
      %v1606 = vsel %vm1574, %v1558, %v1590
      %1607 = vst.msk [vmem:[%s331] sm:$0xff] %vm404, %v1591
      %1608 = vst.msk [vmem:[%s331 + $0x8] sm:$0xff] %vm404, %v1592
      %1609 = vst.msk [vmem:[%s331 + $0x10] sm:$0xff] %vm404, %v1593
      %1610 = vst.msk [vmem:[%s331 + $0x18] sm:$0xff] %vm404, %v1594
      %1611 = vst.msk [vmem:[%s331 + $0x20] sm:$0xff] %vm404, %v1595
      %1612 = vst.msk [vmem:[%s331 + $0x28] sm:$0xff] %vm404, %v1596
      %1613 = vst.msk [vmem:[%s331 + $0x30] sm:$0xff] %vm404, %v1597
      %1614 = vst.msk [vmem:[%s331 + $0x38] sm:$0xff] %vm404, %v1598
      %1615 = vst.msk [vmem:[%s331 + $0x40] sm:$0xff] %vm404, %v1599
      %1616 = vst.msk [vmem:[%s331 + $0x48] sm:$0xff] %vm404, %v1600
      %1617 = vst.msk [vmem:[%s331 + $0x50] sm:$0xff] %vm404, %v1601
      %1618 = vst.msk [vmem:[%s331 + $0x58] sm:$0xff] %vm404, %v1602
      %1619 = vst.msk [vmem:[%s331 + $0x60] sm:$0xff] %vm404, %v1603
      %1620 = vst.msk [vmem:[%s331 + $0x68] sm:$0xff] %vm404, %v1604
      %1621 = vst.msk [vmem:[%s331 + $0x70] sm:$0xff] %vm404, %v1605
      %1622 = vst.msk [vmem:[%s331 + $0x78] sm:$0xff] %vm404, %v1606
      %s1623 = smul.u32 8, %s22
      %p1624 = scmp.lt.s32.totalorder %s21, 1
      %s1625 = scalar_select %p1624, %s21, 1
      %p1626 = scmp.lt.s32.totalorder %s1623, 15
      %s1627 = scalar_select %p1626, %s1623, 15
      %s1628 = smul.addr %s1627, 2
      %s1629 = smul.addr %s1625, 32
      %s1630 = sadd.s32 %s1628, %s1629
      %s1631 = smul.addr %s1630, 8
      %s1632 = scalar_lea.vmem %s6, %s1631
      // Predicated region
      $region45: #{stylegan2_block_forward.4} parent=43 // pred_check
        %p1633 = pneg %p195
      $region46: #{stylegan2_block_forward.4} parent=43 // pred_check_branch
        %1635 = sbr.rel (%p1633) target = $region48
      $region47: #{stylegan2_block_forward.4} parent=43 // pred_region
        %s1636 = smul.u32 8, %s22
      $region48: #{stylegan2_block_forward.4} parent=43 // pred_fallthru
        _
    $region44: #{stylegan2_block_forward.4} parent=5 // pred_fallthru
      _
    %p1637 = scmp.le.s32.totalorder 2, %s12
    // Predicated region
    $region49: #{stylegan2_block_forward.4} parent=5 // pred_check
      %p1638 = pneg %p1637
    $region50: #{stylegan2_block_forward.4} parent=5 // pred_check_branch
      %1640 = sbr.rel (%p1638) target = $region52
    $region51: #{stylegan2_block_forward.4} parent=5 // pred_region
      %s1641 = ssub.s32 %s12, 2
      // Predicated region
      $region53: #{stylegan2_block_forward.4} parent=51 // pred_check
        %p1642 = pneg %p201
      $region54: #{stylegan2_block_forward.4} parent=51 // pred_check_branch
        %1644 = sbr.rel (%p1642) target = $region56
      $region55: #{stylegan2_block_forward.4} parent=51 // pred_region
        %s1645 = smul.u32 8, %s24
        %p1646 = scmp.lt.s32.totalorder %s23, 1
        %s1647 = scalar_select %p1646, %s23, 1
        %p1648 = scmp.lt.s32.totalorder %s1645, 15
        %s1649 = scalar_select %p1648, %s1645, 15
        %s1650 = smul.addr %s1649, 2
        %s1651 = smul.addr %s1647, 32
        %s1652 = sadd.s32 %s1650, %s1651
        %s1653 = smul.addr %s1652, 8
        %s1654 = scalar_lea.vmem %s6, %s1653
      $region56: #{stylegan2_block_forward.4} parent=51 // pred_fallthru
        _
    $region52: #{stylegan2_block_forward.4} parent=5 // pred_fallthru
      _
  $region6: #{stylegan2_block_forward.4} parent=0 // loop_footer
    %s16 = sadd.s32 1, %s12
  $region7: #{stylegan2_block_forward.4} parent=0 // loop_footer_branch
    %11 = sbr.rel target = $region3
  $region8: #{stylegan2_block_forward.4} parent=0 // loop_exit
    _

// kernel: stylegan2_block_forward.3
$region0: #{stylegan2_block_forward.3}
  #allocation0 [shape = 'u32[]', space=smem, size = 0x4, offset = 0x4, fixed_abs, tag = 'smem constant byte address 0x4 - core index']
  #allocation1 [shape = 'u32[72,128]{1,0:T(1,128)}', space=vmem, size = 0x9000, scoped, tag = 'internal scratch']
  #allocation2 [shape = 'f32[11,24,8]{2,1,0:T(8,128)}', space=vmem, size = 0x21000, scoped, tag = 'scratch operand']
  %s0 = inlined_call_operand.vmem [shape: f32[2,21,26,8], index: 0, kind: input, shape index: {}]
  %s1 = inlined_call_operand.vmem [shape: f32[9,8,8], index: 1, kind: input, shape index: {}]
  %s2 = inlined_call_operand.vmem [shape: f32[2,8,1], index: 2, kind: input, shape index: {}]
  %s3 = inlined_call_operand.vmem [shape: f32[2,1,8], index: 3, kind: input, shape index: {}]
  %s4 = inlined_call_operand.vmem [shape: f32[4], index: 4, kind: input, shape index: {}]
  %s5 = inlined_call_operand.vmem [shape: f32[16,16,1], index: 5, kind: input, shape index: {}]
  %s6 = inlined_call_operand.vmem [shape: f32[1,1,8], index: 6, kind: input, shape index: {}]
  %s7 = inlined_call_operand.vmem [shape: f32[2,16,16,8], index: 7, kind: output, shape index: {}]
  %s8 = sld [smem:[#allocation0]]
  $region65: #{stylegan2_block_forward.3} parent=0
    _
  %s10 = ssub.s32 1, %s8
  %s11 = scalar_select 0, %s10, %s8
  $region1: #{stylegan2_block_forward.3} parent=0
    #allocation3 [shape = 'u8[512]{0}', space=smem, size = 0x200, scoped, tag = 'input window, operand 4, single buffered']
    #allocation4 [shape = 's32[2]{0}', space=sflag, size = 0x8, scoped, tag = 'scoped memory for stylegan2_block_forward.3']
    %12 = vsyncpa [#allocation4], 0
    loop: start=0, step=1, limit=6
    $region2: #{stylegan2_block_forward.3} parent=1 // loop_pre_header
      _
    $region3: #{stylegan2_block_forward.3} parent=1 // loop_header
      %s14 = sphi 0, %s18
      %p15 = scmp.ge.s32.totalorder %s14, 6
      %s21 = sphi 0, %s33
      %s22 = sphi 0, %s29
      %s23 = sphi 0, %s21
      %s24 = sphi 0, %s22
      %s25 = sphi 0, %s23
      %s26 = sphi 0, %s24
      %s36 = sphi 0, %s38
      %s39 = sphi 0, %s36
      %s40 = sphi 0, %s39
      %s56 = sphi 0, %s40
      %s60 = sphi 0, %s60
      %s62 = sphi 0, %s60
      %s63 = sphi 0, %s62
      %s77 = sphi 0, %s63
      %s83 = sphi 0, %s85
      %s86 = sphi 0, %s83
      %s87 = sphi 0, %s86
      %s103 = sphi 0, %s87
      %s109 = sphi 0, %s111
      %s112 = sphi 0, %s109
      %s113 = sphi 0, %s112
      %s129 = sphi 0, %s113
      %s133 = sphi 0, %s133
      %s135 = sphi 0, %s133
      %s136 = sphi 0, %s135
      %s150 = sphi 0, %s136
      %s156 = sphi 0, %s158
      %s159 = sphi 0, %s156
      %s160 = sphi 0, %s159
      %s176 = sphi 0, %s160
      %s180 = sphi 0, %s180
      %s182 = sphi 0, %s180
      %s183 = sphi 0, %s182
      %s197 = sphi 0, %s183
      %s205 = sphi 0, %s207
      %s208 = sphi 0, %s205
      %s209 = sphi 0, %s208
      %s225 = sphi 0, %s209
    $region4: #{stylegan2_block_forward.3} parent=1 // loop_header_branch
      %17 = sbr.rel (%p15) target = $region8
    $region5: #{stylegan2_block_forward.3} parent=1 // loop_body
      %s19 = ssub.s32 %s14, 1
      %s20 = ssub.s32 %s14, 2
      %s27 = sadd.s32 1, %s22
      %p28 = scmp.ge.s32.totalorder %s27, 2
      %s29 = scalar_select %p28, 0, %s27
      %s30 = sadd.s32 1, %s21
      %s31 = scalar_select %p28, %s30, %s21
      %p32 = scmp.ge.s32.totalorder %s31, 2
      %s33 = scalar_select %p32, 0, %s31
      %s34 = ssub.s32 %s21, %s33
      %p35 = scmp.eq.s32.totalorder %s34, 0
      %s37 = sadd.s32 %s36, 1
      %s38 = scalar_select %p35, %s36, %s37
      %p41 = pneg %p35
      %p42 = scmp.eq.s32.totalorder %s14, 3
      %p43 = por %p41, %p42
      %p44 = scmp.ne.s32.totalorder %s36, %s39
      %p45 = scmp.eq.s32.totalorder %s14, 0
      %p46 = por %p44, %p45
      %p47 = scmp.ne.s32.totalorder %s36, %s39
      %p48 = scmp.eq.s32.totalorder %s19, 3
      %p49 = por %p47, %p48
      %p50 = scmp.ne.s32.totalorder %s39, %s40
      %p51 = scmp.eq.s32.totalorder %s19, 0
      %p52 = por %p50, %p51
      %p53 = scmp.ne.s32.totalorder %s39, %s40
      %p54 = scmp.eq.s32.totalorder %s20, 3
      %p55 = por %p53, %p54
      %p57 = scmp.ne.s32.totalorder %s40, %s56
      %p58 = scmp.eq.s32.totalorder %s20, 0
      %p59 = por %p57, %p58
      %s61 = sadd.s32 %s60, 1
      %p64 = scmp.eq.s32.totalorder %s14, 3
      %p65 = scmp.ne.s32.totalorder %s60, %s62
      %p66 = scmp.eq.s32.totalorder %s14, 0
      %p67 = por %p65, %p66
      %p68 = scmp.ne.s32.totalorder %s60, %s62
      %p69 = scmp.eq.s32.totalorder %s19, 3
      %p70 = por %p68, %p69
      %p71 = scmp.ne.s32.totalorder %s62, %s63
      %p72 = scmp.eq.s32.totalorder %s19, 0
      %p73 = por %p71, %p72
      %p74 = scmp.ne.s32.totalorder %s62, %s63
      %p75 = scmp.eq.s32.totalorder %s20, 3
      %p76 = por %p74, %p75
      %p78 = scmp.ne.s32.totalorder %s63, %s77
      %p79 = scmp.eq.s32.totalorder %s20, 0
      %p80 = por %p78, %p79
      %s81 = ssub.s32 %s21, %s33
      %p82 = scmp.eq.s32.totalorder %s81, 0
      %s84 = sadd.s32 %s83, 1
      %s85 = scalar_select %p82, %s83, %s84
      %p88 = pneg %p82
      %p89 = scmp.eq.s32.totalorder %s14, 3
      %p90 = por %p88, %p89
      %p91 = scmp.ne.s32.totalorder %s83, %s86
      %p92 = scmp.eq.s32.totalorder %s14, 0
      %p93 = por %p91, %p92
      %p94 = scmp.ne.s32.totalorder %s83, %s86
      %p95 = scmp.eq.s32.totalorder %s19, 3
      %p96 = por %p94, %p95
      %p97 = scmp.ne.s32.totalorder %s86, %s87
      %p98 = scmp.eq.s32.totalorder %s19, 0
      %p99 = por %p97, %p98
      %p100 = scmp.ne.s32.totalorder %s86, %s87
      %p101 = scmp.eq.s32.totalorder %s20, 3
      %p102 = por %p100, %p101
      %p104 = scmp.ne.s32.totalorder %s87, %s103
      %p105 = scmp.eq.s32.totalorder %s20, 0
      %p106 = por %p104, %p105
      %s107 = ssub.s32 %s21, %s33
      %p108 = scmp.eq.s32.totalorder %s107, 0
      %s110 = sadd.s32 %s109, 1
      %s111 = scalar_select %p108, %s109, %s110
      %p114 = pneg %p108
      %p115 = scmp.eq.s32.totalorder %s14, 3
      %p116 = por %p114, %p115
      %p117 = scmp.ne.s32.totalorder %s109, %s112
      %p118 = scmp.eq.s32.totalorder %s14, 0
      %p119 = por %p117, %p118
      %p120 = scmp.ne.s32.totalorder %s109, %s112
      %p121 = scmp.eq.s32.totalorder %s19, 3
      %p122 = por %p120, %p121
      %p123 = scmp.ne.s32.totalorder %s112, %s113
      %p124 = scmp.eq.s32.totalorder %s19, 0
      %p125 = por %p123, %p124
      %p126 = scmp.ne.s32.totalorder %s112, %s113
      %p127 = scmp.eq.s32.totalorder %s20, 3
      %p128 = por %p126, %p127
      %p130 = scmp.ne.s32.totalorder %s113, %s129
      %p131 = scmp.eq.s32.totalorder %s20, 0
      %p132 = por %p130, %p131
      %s134 = sadd.s32 %s133, 1
      %p137 = scmp.eq.s32.totalorder %s14, 3
      %p138 = scmp.ne.s32.totalorder %s133, %s135
      %p139 = scmp.eq.s32.totalorder %s14, 0
      %p140 = por %p138, %p139
      %p141 = scmp.ne.s32.totalorder %s133, %s135
      %p142 = scmp.eq.s32.totalorder %s19, 3
      %p143 = por %p141, %p142
      %p144 = scmp.ne.s32.totalorder %s135, %s136
      %p145 = scmp.eq.s32.totalorder %s19, 0
      %p146 = por %p144, %p145
      %p147 = scmp.ne.s32.totalorder %s135, %s136
      %p148 = scmp.eq.s32.totalorder %s20, 3
      %p149 = por %p147, %p148
      %p151 = scmp.ne.s32.totalorder %s136, %s150
      %p152 = scmp.eq.s32.totalorder %s20, 0
      %p153 = por %p151, %p152
      %s154 = ssub.s32 %s22, %s29
      %p155 = scmp.eq.s32.totalorder %s154, 0
      %s157 = sadd.s32 %s156, 1
      %s158 = scalar_select %p155, %s156, %s157
      %p161 = pneg %p155
      %p162 = scmp.eq.s32.totalorder %s14, 3
      %p163 = por %p161, %p162
      %p164 = scmp.ne.s32.totalorder %s156, %s159
      %p165 = scmp.eq.s32.totalorder %s14, 0
      %p166 = por %p164, %p165
      %p167 = scmp.ne.s32.totalorder %s156, %s159
      %p168 = scmp.eq.s32.totalorder %s19, 3
      %p169 = por %p167, %p168
      %p170 = scmp.ne.s32.totalorder %s159, %s160
      %p171 = scmp.eq.s32.totalorder %s19, 0
      %p172 = por %p170, %p171
      %p173 = scmp.ne.s32.totalorder %s159, %s160
      %p174 = scmp.eq.s32.totalorder %s20, 3
      %p175 = por %p173, %p174
      %p177 = scmp.ne.s32.totalorder %s160, %s176
      %p178 = scmp.eq.s32.totalorder %s20, 0
      %p179 = por %p177, %p178
      %s181 = sadd.s32 %s180, 1
      %p184 = scmp.eq.s32.totalorder %s14, 3
      %p185 = scmp.ne.s32.totalorder %s180, %s182
      %p186 = scmp.eq.s32.totalorder %s14, 0
      %p187 = por %p185, %p186
      %p188 = scmp.ne.s32.totalorder %s180, %s182
      %p189 = scmp.eq.s32.totalorder %s19, 3
      %p190 = por %p188, %p189
      %p191 = scmp.ne.s32.totalorder %s182, %s183
      %p192 = scmp.eq.s32.totalorder %s19, 0
      %p193 = por %p191, %p192
      %p194 = scmp.ne.s32.totalorder %s182, %s183
      %p195 = scmp.eq.s32.totalorder %s20, 3
      %p196 = por %p194, %p195
      %p198 = scmp.ne.s32.totalorder %s183, %s197
      %p199 = scmp.eq.s32.totalorder %s20, 0
      %p200 = por %p198, %p199
      %s201 = ssub.s32 %s21, %s33
      %s202 = ssub.s32 %s22, %s29
      %s203 = sor.u32 %s201, %s202
      %p204 = scmp.eq.s32.totalorder %s203, 0
      %s206 = sadd.s32 %s205, 1
      %s207 = scalar_select %p204, %s205, %s206
      %p210 = pneg %p204
      %p211 = scmp.eq.s32.totalorder %s14, 3
      %p212 = por %p210, %p211
      %p213 = scmp.ne.s32.totalorder %s205, %s208
      %p214 = scmp.eq.s32.totalorder %s14, 0
      %p215 = por %p213, %p214
      %p216 = scmp.ne.s32.totalorder %s205, %s208
      %p217 = scmp.eq.s32.totalorder %s19, 3
      %p218 = por %p216, %p217
      %p219 = scmp.ne.s32.totalorder %s208, %s209
      %p220 = scmp.eq.s32.totalorder %s19, 0
      %p221 = por %p219, %p220
      %p222 = scmp.ne.s32.totalorder %s208, %s209
      %p223 = scmp.eq.s32.totalorder %s20, 3
      %p224 = por %p222, %p223
      %p226 = scmp.ne.s32.totalorder %s209, %s225
      %p227 = scmp.eq.s32.totalorder %s20, 0
      %p228 = por %p226, %p227
      %p229 = scmp.le.s32.totalorder 1, %s14
      %p230 = scmp.lt.s32.totalorder %s14, 5
      %p231 = pnand %p229, %p230
      %p232 = pneg %p231
      // Predicated region
      $region9: #{stylegan2_block_forward.3} parent=5 // pred_check
        _
      $region10: #{stylegan2_block_forward.3} parent=5 // pred_check_branch
        %234 = sbr.rel (%p231) target = $region12
      $region11: #{stylegan2_block_forward.3} parent=5 // pred_region
        %s235 = ssub.s32 %s14, 1
        // Predicated region
        $region13: #{stylegan2_block_forward.3} parent=11 // pred_check
          %p236 = pneg %p73
        $region14: #{stylegan2_block_forward.3} parent=11 // pred_check_branch
          %238 = sbr.rel (%p236) target = $region16
        $region15: #{stylegan2_block_forward.3} parent=11 // pred_region
          _
        $region16: #{stylegan2_block_forward.3} parent=11 // pred_fallthru
          _
        // Predicated region
        $region17: #{stylegan2_block_forward.3} parent=11 // pred_check
          %p239 = pneg %p146
        $region18: #{stylegan2_block_forward.3} parent=11 // pred_check_branch
          %241 = sbr.rel (%p239) target = $region20
        $region19: #{stylegan2_block_forward.3} parent=11 // pred_region
          %243 = vsyncadd [#allocation4], 0
          %s245 = sshll.u32 %s4, 4
          %s246 = int_to_ptr.vmem [resolvable:$true] %s245
          %248 = dma.vmem_to_smem %s246, 16, [#allocation3], [#allocation4]
        $region20: #{stylegan2_block_forward.3} parent=11 // pred_fallthru
          _
        // Predicated region
        $region21: #{stylegan2_block_forward.3} parent=11 // pred_check
          %p249 = pneg %p193
        $region22: #{stylegan2_block_forward.3} parent=11 // pred_check_branch
          %251 = sbr.rel (%p249) target = $region24
        $region23: #{stylegan2_block_forward.3} parent=11 // pred_region
          _
        $region24: #{stylegan2_block_forward.3} parent=11 // pred_fallthru
          _
      $region12: #{stylegan2_block_forward.3} parent=5 // pred_fallthru
        _
      %p252 = scmp.lt.s32.totalorder %s14, 4
      // Predicated region
      $region25: #{stylegan2_block_forward.3} parent=5 // pred_check
        %p253 = pneg %p252
      $region26: #{stylegan2_block_forward.3} parent=5 // pred_check_branch
        %255 = sbr.rel (%p253) target = $region28
      $region27: #{stylegan2_block_forward.3} parent=5 // pred_region
        // Predicated region
        $region29: #{stylegan2_block_forward.3} parent=27 // pred_check
          %p256 = pneg %p46
        $region30: #{stylegan2_block_forward.3} parent=27 // pred_check_branch
          %258 = sbr.rel (%p256) target = $region32
        $region31: #{stylegan2_block_forward.3} parent=27 // pred_region
          %p259 = scmp.lt.s32.totalorder %s21, 1
          %s260 = scalar_select %p259, %s21, 1
          %s261 = smul.addr %s260, 84
          %s262 = smul.addr %s261, 8
          %s263 = scalar_lea.vmem %s0, %s262
        $region32: #{stylegan2_block_forward.3} parent=27 // pred_fallthru
          _
        // Predicated region
        $region33: #{stylegan2_block_forward.3} parent=27 // pred_check
          %p264 = pneg %p93
        $region34: #{stylegan2_block_forward.3} parent=27 // pred_check_branch
          %266 = sbr.rel (%p264) target = $region36
        $region35: #{stylegan2_block_forward.3} parent=27 // pred_region
          %p267 = scmp.lt.s32.totalorder %s21, 1
          %s268 = scalar_select %p267, %s21, 1
          %s269 = smul.addr %s268, 8
          %s270 = scalar_lea.vmem %s2, %s269
        $region36: #{stylegan2_block_forward.3} parent=27 // pred_fallthru
          _
        // Predicated region
        $region37: #{stylegan2_block_forward.3} parent=27 // pred_check
          %p271 = pneg %p119
        $region38: #{stylegan2_block_forward.3} parent=27 // pred_check_branch
          %273 = sbr.rel (%p271) target = $region40
        $region39: #{stylegan2_block_forward.3} parent=27 // pred_region
          %p274 = scmp.lt.s32.totalorder %s21, 1
          %s275 = scalar_select %p274, %s21, 1
          %s276 = scalar_lea.vmem %s3, %s275
        $region40: #{stylegan2_block_forward.3} parent=27 // pred_fallthru
          _
        // Predicated region
        $region41: #{stylegan2_block_forward.3} parent=27 // pred_check
          %p277 = pneg %p166
        $region42: #{stylegan2_block_forward.3} parent=27 // pred_check_branch
          %279 = sbr.rel (%p277) target = $region44
        $region43: #{stylegan2_block_forward.3} parent=27 // pred_region
          %s280 = smul.u32 8, %s22
          %p281 = scmp.lt.s32.totalorder %s280, 15
          %s282 = scalar_select %p281, %s280, 15
          %s283 = smul.addr %s282, 2
          %s284 = smul.addr %s283, 8
          %s285 = scalar_lea.vmem %s5, %s284
          %s286 = smul.u32 8, %s22
        $region44: #{stylegan2_block_forward.3} parent=27 // pred_fallthru
          _
      $region28: #{stylegan2_block_forward.3} parent=5 // pred_fallthru
        _
      %p287 = scmp.le.s32.totalorder 1, %s14
      %p288 = scmp.lt.s32.totalorder %s14, 5
      %p289 = pnand %p287, %p288
      %p290 = pneg %p289
      // Predicated region
      $region45: #{stylegan2_block_forward.3} parent=5 // pred_check
        _
      $region46: #{stylegan2_block_forward.3} parent=5 // pred_check_branch
        %292 = sbr.rel (%p289) target = $region48
      $region47: #{stylegan2_block_forward.3} parent=5 // pred_region
        %s293 = ssub.s32 %s14, 1
        // Predicated region
        $region49: #{stylegan2_block_forward.3} parent=47 // pred_check
          %p294 = pneg %p146
        $region50: #{stylegan2_block_forward.3} parent=47 // pred_check_branch
          %296 = sbr.rel (%p294) target = $region52
        $region51: #{stylegan2_block_forward.3} parent=47 // pred_region
          %298 = dma.done [#allocation4], 16
        $region52: #{stylegan2_block_forward.3} parent=47 // pred_fallthru
          _
        %299 = sfence
        %p300 = scmp.lt.s32.totalorder %s23, 1
        %s301 = scalar_select %p300, %s23, 1
        %s302 = smul.addr %s301, 84
        %s303 = smul.addr %s302, 8
        %s304 = scalar_lea.vmem %s0, %s303
        %p305 = pneg %p52
        %p306 = pneg %p49
        %p307 = pneg %p73
        %p308 = pneg %p70
        %p309 = scmp.lt.s32.totalorder %s23, 1
        %s310 = scalar_select %p309, %s23, 1
        %s311 = smul.addr %s310, 8
        %s312 = scalar_lea.vmem %s2, %s311
        %p313 = pneg %p99
        %p314 = pneg %p96
        %p315 = scmp.lt.s32.totalorder %s23, 1
        %s316 = scalar_select %p315, %s23, 1
        %s317 = scalar_lea.vmem %s3, %s316
        %p318 = pneg %p125
        %p319 = pneg %p122
        %p320 = pneg %p146
        %p321 = pneg %p143
        %s322 = smul.u32 8, %s24
        %p323 = scmp.lt.s32.totalorder %s322, 15
        %s324 = scalar_select %p323, %s322, 15
        %s325 = smul.addr %s324, 2
        %s326 = smul.addr %s325, 8
        %s327 = scalar_lea.vmem %s5, %s326
        %p328 = pneg %p172
        %p329 = pneg %p169
        %p330 = pneg %p193
        %p331 = pneg %p190
        %p332 = pneg %p221
        %p333 = pneg %p218
        %s334 = smul.u32 8, %s24
        %p335 = scmp.lt.s32.totalorder %s23, 1
        %s336 = scalar_select %p335, %s23, 1
        %p337 = scmp.lt.s32.totalorder %s334, 15
        %s338 = scalar_select %p337, %s334, 15
        %s339 = smul.addr %s338, 2
        %s340 = smul.addr %s336, 32
        %s341 = sadd.s32 %s339, %s340
        %s342 = smul.addr %s341, 8
        %s343 = scalar_lea.vmem %s7, %s342
        %p344 = scmp.lt.s32.totalorder %s23, 1
        %s345 = scalar_select %p344, %s23, 1
        %s346 = smul.addr %s345, 84
        %s347 = smul.addr %s346, 8
        %s348 = scalar_lea.vmem %s0, %s347
        %p349 = scmp.lt.s32.totalorder %s23, 1
        %s350 = scalar_select %p349, %s23, 1
        %s351 = smul.addr %s350, 8
        %s352 = scalar_lea.vmem %s2, %s351
        %p353 = scmp.lt.s32.totalorder %s23, 1
        %s354 = scalar_select %p353, %s23, 1
        %s355 = scalar_lea.vmem %s3, %s354
        %s356 = smul.u32 8, %s24
        %p357 = scmp.lt.s32.totalorder %s356, 15
        %s358 = scalar_select %p357, %s356, 15
        %s359 = smul.addr %s358, 2
        %s360 = smul.addr %s359, 8
        %s361 = scalar_lea.vmem %s5, %s360
        %s362 = smul.u32 8, %s24
        %s363 = smul.u32 8, %s24
        %p364 = scmp.lt.s32.totalorder %s23, 1
        %s365 = scalar_select %p364, %s23, 1
        %p366 = scmp.lt.s32.totalorder %s363, 15
        %s367 = scalar_select %p366, %s363, 15
        %s368 = smul.addr %s367, 2
        %s369 = smul.addr %s365, 32
        %s370 = sadd.s32 %s368, %s369
        %s371 = smul.addr %s370, 8
        %s372 = scalar_lea.vmem %s7, %s371
        %s373 = smul.u32 8, %s24
        %s375 = smul.u32 %s24, 8
        %v376 = vld [vmem:[%s352] sm:$0xff]
        %v377 = vld [vmem:[%s355] sm:$0x1]
        %v378 = vld [vmem:[%s1] sm:$0xff]
        %380 = vset.pattern.permute.xlu0 0
        %381 = vperm.xlu0 %380, %v376
        %v382 = vpop.permute.xlu0 %381
        %v384 = vmul.f32 %v378, %v382
        %v386 = vperm.slane %v377, 0
        %v388 = vmul.f32 %v384, %v386
        %v389 = vpack.c.bf16 %v388, %v388
        %s390 = smul.u32 %s375, 32
        %s391 = scalar_lea.vmem %s348, %s390
        %v392 = vld [vmem:[%s391] sm:$0xff]
        %v393 = vld [vmem:[%s391 + $0x8] sm:$0xff]
        %v394 = vld [vmem:[%s391 + $0x10] sm:$0xff]
        %v395 = vld [vmem:[%s391 + $0x20] sm:$0xff]
        %v396 = vld [vmem:[%s391 + $0x28] sm:$0xff]
        %v397 = vld [vmem:[%s391 + $0x30] sm:$0xff]
        %v398 = vld [vmem:[%s391 + $0x40] sm:$0xff]
        %v399 = vld [vmem:[%s391 + $0x48] sm:$0xff]
        %v400 = vld [vmem:[%s391 + $0x50] sm:$0xff]
        %v401 = vld [vmem:[%s391 + $0x60] sm:$0xff]
        %v402 = vld [vmem:[%s391 + $0x68] sm:$0xff]
        %v403 = vld [vmem:[%s391 + $0x70] sm:$0xff]
        %v404 = vld [vmem:[%s391 + $0x80] sm:$0xff]
        %v405 = vld [vmem:[%s391 + $0x88] sm:$0xff]
        %v406 = vld [vmem:[%s391 + $0x90] sm:$0xff]
        %v407 = vld [vmem:[%s391 + $0xa0] sm:$0xff]
        %v408 = vld [vmem:[%s391 + $0xa8] sm:$0xff]
        %v409 = vld [vmem:[%s391 + $0xb0] sm:$0xff]
        %v410 = vld [vmem:[%s391 + $0xc0] sm:$0xff]
        %v411 = vld [vmem:[%s391 + $0xc8] sm:$0xff]
        %v412 = vld [vmem:[%s391 + $0xd0] sm:$0xff]
        %v413 = vld [vmem:[%s391 + $0xe0] sm:$0xff]
        %v414 = vld [vmem:[%s391 + $0xe8] sm:$0xff]
        %v415 = vld [vmem:[%s391 + $0xf0] sm:$0xff]
        %v416 = vld [vmem:[%s391 + $0x100] sm:$0xff]
        %v417 = vld [vmem:[%s391 + $0x108] sm:$0xff]
        %v418 = vld [vmem:[%s391 + $0x110] sm:$0xff]
        %v419 = vld [vmem:[%s391 + $0x120] sm:$0xff]
        %v420 = vld [vmem:[%s391 + $0x128] sm:$0xff]
        %v421 = vld [vmem:[%s391 + $0x130] sm:$0xff]
        %v422 = vld [vmem:[%s391 + $0x140] sm:$0xff]
        %v423 = vld [vmem:[%s391 + $0x148] sm:$0xff]
        %v424 = vld [vmem:[%s391 + $0x150] sm:$0xff]
        %v425 = vpack.c.bf16 %v393, %v392
        %v426 = vpack.c.bf16 %v395, %v394
        %v427 = vpack.c.bf16 %v397, %v396
        %v428 = vpack.c.bf16 %v399, %v398
        %v429 = vpack.c.bf16 %v401, %v400
        %v430 = vpack.c.bf16 %v403, %v402
        %v431 = vpack.c.bf16 %v405, %v404
        %v432 = vpack.c.bf16 %v407, %v406
        %v433 = vpack.c.bf16 %v409, %v408
        %v434 = vpack.c.bf16 %v411, %v410
        %v435 = vpack.c.bf16 %v413, %v412
        %v436 = vpack.c.bf16 %v415, %v414
        %v437 = vpack.c.bf16 %v417, %v416
        %v438 = vpack.c.bf16 %v419, %v418
        %v439 = vpack.c.bf16 %v421, %v420
        %v440 = vpack.c.bf16 %v423, %v422
        %v441 = vpack.c.bf16 %v424, %v424
        %s442 = scalar_lea.vmem %s1, 8
        %v443 = vld [vmem:[%s442] sm:$0xff]
        %v444 = vmul.f32 %v443, %v382
        %v445 = vmul.f32 %v444, %v386
        %v446 = vpack.c.bf16 %v445, %v445
        %v447 = vld [vmem:[%s391 + $0x1] sm:$0xff]
        %v448 = vld [vmem:[%s391 + $0x9] sm:$0xff]
        %v449 = vld [vmem:[%s391 + $0x11] sm:$0xff]
        %v450 = vld [vmem:[%s391 + $0x21] sm:$0xff]
        %v451 = vld [vmem:[%s391 + $0x29] sm:$0xff]
        %v452 = vld [vmem:[%s391 + $0x31] sm:$0xff]
        %v453 = vld [vmem:[%s391 + $0x41] sm:$0xff]
        %v454 = vld [vmem:[%s391 + $0x49] sm:$0xff]
        %v455 = vld [vmem:[%s391 + $0x51] sm:$0xff]
        %v456 = vld [vmem:[%s391 + $0x61] sm:$0xff]
        %v457 = vld [vmem:[%s391 + $0x69] sm:$0xff]
        %v458 = vld [vmem:[%s391 + $0x71] sm:$0xff]
        %v459 = vld [vmem:[%s391 + $0x81] sm:$0xff]
        %v460 = vld [vmem:[%s391 + $0x89] sm:$0xff]
        %v461 = vld [vmem:[%s391 + $0x91] sm:$0xff]
        %v462 = vld [vmem:[%s391 + $0xa1] sm:$0xff]
        %v463 = vld [vmem:[%s391 + $0xa9] sm:$0xff]
        %v464 = vld [vmem:[%s391 + $0xb1] sm:$0xff]
        %v465 = vld [vmem:[%s391 + $0xc1] sm:$0xff]
        %v466 = vld [vmem:[%s391 + $0xc9] sm:$0xff]
        %v467 = vld [vmem:[%s391 + $0xd1] sm:$0xff]
        %v468 = vld [vmem:[%s391 + $0xe1] sm:$0xff]
        %v469 = vld [vmem:[%s391 + $0xe9] sm:$0xff]
        %v470 = vld [vmem:[%s391 + $0xf1] sm:$0xff]
        %v471 = vld [vmem:[%s391 + $0x101] sm:$0xff]
        %v472 = vld [vmem:[%s391 + $0x109] sm:$0xff]
        %v473 = vld [vmem:[%s391 + $0x111] sm:$0xff]
        %v474 = vld [vmem:[%s391 + $0x121] sm:$0xff]
        %v475 = vld [vmem:[%s391 + $0x129] sm:$0xff]
        %v476 = vld [vmem:[%s391 + $0x131] sm:$0xff]
        %v477 = vld [vmem:[%s391 + $0x141] sm:$0xff]
        %v478 = vld [vmem:[%s391 + $0x149] sm:$0xff]
        %v479 = vld [vmem:[%s391 + $0x151] sm:$0xff]
        %v480 = vpack.c.bf16 %v448, %v447
        %v481 = vpack.c.bf16 %v450, %v449
        %v482 = vpack.c.bf16 %v452, %v451
        %v483 = vpack.c.bf16 %v454, %v453
        %v484 = vpack.c.bf16 %v456, %v455
        %v485 = vpack.c.bf16 %v458, %v457
        %v486 = vpack.c.bf16 %v460, %v459
        %v487 = vpack.c.bf16 %v462, %v461
        %v488 = vpack.c.bf16 %v464, %v463
        %v489 = vpack.c.bf16 %v466, %v465
        %v490 = vpack.c.bf16 %v468, %v467
        %v491 = vpack.c.bf16 %v470, %v469
        %v492 = vpack.c.bf16 %v472, %v471
        %v493 = vpack.c.bf16 %v474, %v473
        %v494 = vpack.c.bf16 %v476, %v475
        %v495 = vpack.c.bf16 %v478, %v477
        %v496 = vpack.c.bf16 %v479, %v479
        %vm497 = vcmask 64512
        %v499 = vsel %vm497, %v480, 0
        %v502 = vsel %vm497, %v481, 0
        %v505 = vsel %vm497, %v482, 0
        %v508 = vsel %vm497, %v483, 0
        %v511 = vsel %vm497, %v484, 0
        %v514 = vsel %vm497, %v485, 0
        %v517 = vsel %vm497, %v486, 0
        %v520 = vsel %vm497, %v487, 0
        %v523 = vsel %vm497, %v488, 0
        %v526 = vsel %vm497, %v489, 0
        %v529 = vsel %vm497, %v490, 0
        %v532 = vsel %vm497, %v491, 0
        %v535 = vsel %vm497, %v492, 0
        %v538 = vsel %vm497, %v493, 0
        %v541 = vsel %vm497, %v494, 0
        %v544 = vsel %vm497, %v495, 0
        %v547 = vsel %vm497, %v496, 0
        %vm549 = vcmask 1043456
        %v551 = vsel %vm549, %v446, 0
        %553 = vmatpush.bf16.msra.mxu0 0
        %554 = vmatpush.bf16.msra.mxu0 0
        %555 = vmatpush.bf16.msra.mxu0 0
        %556 = vmatpush.bf16.msra.mxu0 0
        %557 = vmatpush.bf16.msra.mxu0 0
        %558 = vmatpush.bf16.msra.mxu0 0
        %559 = vmatpush.bf16.msra.mxu0 0
        %560 = vmatpush.bf16.msra.mxu0 %v551
        %561 = vmatmul.bf16.gmra.mxu0 %v499
        %v562 = vpop.f32.mrf.mxu0
        %v563 = vadd.f32 0.0, %v562
        %v564 = vpop.f32.mrf.mxu0
        %v565 = vadd.f32 0.0, %v564
        %566 = vmatmul.bf16.gmra.mxu0 %v502
        %v567 = vpop.f32.mrf.mxu0
        %v568 = vadd.f32 0.0, %v567
        %v569 = vpop.f32.mrf.mxu0
        %v570 = vadd.f32 0.0, %v569
        %571 = vmatmul.bf16.gmra.mxu0 %v505
        %v572 = vpop.f32.mrf.mxu0
        %v573 = vadd.f32 0.0, %v572
        %v574 = vpop.f32.mrf.mxu0
        %v575 = vadd.f32 0.0, %v574
        %576 = vmatmul.bf16.gmra.mxu0 %v508
        %v577 = vpop.f32.mrf.mxu0
        %v578 = vadd.f32 0.0, %v577
        %v579 = vpop.f32.mrf.mxu0
        %v580 = vadd.f32 0.0, %v579
        %581 = vmatmul.bf16.gmra.mxu0 %v511
        %v582 = vpop.f32.mrf.mxu0
        %v583 = vadd.f32 0.0, %v582
        %v584 = vpop.f32.mrf.mxu0
        %v585 = vadd.f32 0.0, %v584
        %586 = vmatmul.bf16.gmra.mxu0 %v514
        %v587 = vpop.f32.mrf.mxu0
        %v588 = vadd.f32 0.0, %v587
        %v589 = vpop.f32.mrf.mxu0
        %v590 = vadd.f32 0.0, %v589
        %591 = vmatmul.bf16.gmra.mxu0 %v517
        %v592 = vpop.f32.mrf.mxu0
        %v593 = vadd.f32 0.0, %v592
        %v594 = vpop.f32.mrf.mxu0
        %v595 = vadd.f32 0.0, %v594
        %596 = vmatmul.bf16.gmra.mxu0 %v520
        %v597 = vpop.f32.mrf.mxu0
        %v598 = vadd.f32 0.0, %v597
        %v599 = vpop.f32.mrf.mxu0
        %v600 = vadd.f32 0.0, %v599
        %601 = vmatmul.bf16.gmra.mxu0 %v523
        %v602 = vpop.f32.mrf.mxu0
        %v603 = vadd.f32 0.0, %v602
        %v604 = vpop.f32.mrf.mxu0
        %v605 = vadd.f32 0.0, %v604
        %606 = vmatmul.bf16.gmra.mxu0 %v526
        %v607 = vpop.f32.mrf.mxu0
        %v608 = vadd.f32 0.0, %v607
        %v609 = vpop.f32.mrf.mxu0
        %v610 = vadd.f32 0.0, %v609
        %611 = vmatmul.bf16.gmra.mxu0 %v529
        %v612 = vpop.f32.mrf.mxu0
        %v613 = vadd.f32 0.0, %v612
        %v614 = vpop.f32.mrf.mxu0
        %v615 = vadd.f32 0.0, %v614
        %616 = vmatmul.bf16.gmra.mxu0 %v532
        %v617 = vpop.f32.mrf.mxu0
        %v618 = vadd.f32 0.0, %v617
        %v619 = vpop.f32.mrf.mxu0
        %v620 = vadd.f32 0.0, %v619
        %621 = vmatmul.bf16.gmra.mxu0 %v535
        %v622 = vpop.f32.mrf.mxu0
        %v623 = vadd.f32 0.0, %v622
        %v624 = vpop.f32.mrf.mxu0
        %v625 = vadd.f32 0.0, %v624
        %626 = vmatmul.bf16.gmra.mxu0 %v538
        %v627 = vpop.f32.mrf.mxu0
        %v628 = vadd.f32 0.0, %v627
        %v629 = vpop.f32.mrf.mxu0
        %v630 = vadd.f32 0.0, %v629
        %631 = vmatmul.bf16.gmra.mxu0 %v541
        %v632 = vpop.f32.mrf.mxu0
        %v633 = vadd.f32 0.0, %v632
        %v634 = vpop.f32.mrf.mxu0
        %v635 = vadd.f32 0.0, %v634
        %636 = vmatmul.bf16.gmra.mxu0 %v544
        %v637 = vpop.f32.mrf.mxu0
        %v638 = vadd.f32 0.0, %v637
        %v639 = vpop.f32.mrf.mxu0
        %v640 = vadd.f32 0.0, %v639
        %641 = vmatmul.bf16.gmra.mxu0 %v547
        %v642 = vpop.f32.mrf.mxu0
        %v643 = vadd.f32 0.0, %v642
        %v644 = vpop.f32.mrf.mxu0
        %645 = vdwg.mxu0
        %v647 = vsel %vm497, %v425, 0
        %v650 = vsel %vm497, %v426, 0
        %v653 = vsel %vm497, %v427, 0
        %v656 = vsel %vm497, %v428, 0
        %v659 = vsel %vm497, %v429, 0
        %v662 = vsel %vm497, %v430, 0
        %v665 = vsel %vm497, %v431, 0
        %v668 = vsel %vm497, %v432, 0
        %v671 = vsel %vm497, %v433, 0
        %v674 = vsel %vm497, %v434, 0
        %v677 = vsel %vm497, %v435, 0
        %v680 = vsel %vm497, %v436, 0
        %v683 = vsel %vm497, %v437, 0
        %v686 = vsel %vm497, %v438, 0
        %v689 = vsel %vm497, %v439, 0
        %v692 = vsel %vm497, %v440, 0
        %v695 = vsel %vm497, %v441, 0
        %v698 = vsel %vm549, %v389, 0
        %700 = vmatpush.bf16.msra.mxu0 0
        %701 = vmatpush.bf16.msra.mxu0 0
        %702 = vmatpush.bf16.msra.mxu0 0
        %703 = vmatpush.bf16.msra.mxu0 0
        %704 = vmatpush.bf16.msra.mxu0 0
        %705 = vmatpush.bf16.msra.mxu0 0
        %706 = vmatpush.bf16.msra.mxu0 0
        %707 = vmatpush.bf16.msra.mxu0 %v698
        %708 = vmatmul.bf16.gmra.mxu0 %v647
        %v709 = vpop.f32.mrf.mxu0
        %v710 = vadd.f32 %v563, %v709
        %v711 = vpop.f32.mrf.mxu0
        %v712 = vadd.f32 %v565, %v711
        %713 = vmatmul.bf16.gmra.mxu0 %v650
        %v714 = vpop.f32.mrf.mxu0
        %v715 = vadd.f32 %v568, %v714
        %v716 = vpop.f32.mrf.mxu0
        %v717 = vadd.f32 %v570, %v716
        %718 = vmatmul.bf16.gmra.mxu0 %v653
        %v719 = vpop.f32.mrf.mxu0
        %v720 = vadd.f32 %v573, %v719
        %v721 = vpop.f32.mrf.mxu0
        %v722 = vadd.f32 %v575, %v721
        %723 = vmatmul.bf16.gmra.mxu0 %v656
        %v724 = vpop.f32.mrf.mxu0
        %v725 = vadd.f32 %v578, %v724
        %v726 = vpop.f32.mrf.mxu0
        %v727 = vadd.f32 %v580, %v726
        %728 = vmatmul.bf16.gmra.mxu0 %v659
        %v729 = vpop.f32.mrf.mxu0
        %v730 = vadd.f32 %v583, %v729
        %v731 = vpop.f32.mrf.mxu0
        %v732 = vadd.f32 %v585, %v731
        %733 = vmatmul.bf16.gmra.mxu0 %v662
        %v734 = vpop.f32.mrf.mxu0
        %v735 = vadd.f32 %v588, %v734
        %v736 = vpop.f32.mrf.mxu0
        %v737 = vadd.f32 %v590, %v736
        %738 = vmatmul.bf16.gmra.mxu0 %v665
        %v739 = vpop.f32.mrf.mxu0
        %v740 = vadd.f32 %v593, %v739
        %v741 = vpop.f32.mrf.mxu0
        %v742 = vadd.f32 %v595, %v741
        %743 = vmatmul.bf16.gmra.mxu0 %v668
        %v744 = vpop.f32.mrf.mxu0
        %v745 = vadd.f32 %v598, %v744
        %v746 = vpop.f32.mrf.mxu0
        %v747 = vadd.f32 %v600, %v746
        %748 = vmatmul.bf16.gmra.mxu0 %v671
        %v749 = vpop.f32.mrf.mxu0
        %v750 = vadd.f32 %v603, %v749
        %v751 = vpop.f32.mrf.mxu0
        %v752 = vadd.f32 %v605, %v751
        %753 = vmatmul.bf16.gmra.mxu0 %v674
        %v754 = vpop.f32.mrf.mxu0
        %v755 = vadd.f32 %v608, %v754
        %v756 = vpop.f32.mrf.mxu0
        %v757 = vadd.f32 %v610, %v756
        %758 = vmatmul.bf16.gmra.mxu0 %v677
        %v759 = vpop.f32.mrf.mxu0
        %v760 = vadd.f32 %v613, %v759
        %v761 = vpop.f32.mrf.mxu0
        %v762 = vadd.f32 %v615, %v761
        %763 = vmatmul.bf16.gmra.mxu0 %v680
        %v764 = vpop.f32.mrf.mxu0
        %v765 = vadd.f32 %v618, %v764
        %v766 = vpop.f32.mrf.mxu0
        %v767 = vadd.f32 %v620, %v766
        %768 = vmatmul.bf16.gmra.mxu0 %v683
        %v769 = vpop.f32.mrf.mxu0
        %v770 = vadd.f32 %v623, %v769
        %v771 = vpop.f32.mrf.mxu0
        %v772 = vadd.f32 %v625, %v771
        %773 = vmatmul.bf16.gmra.mxu0 %v686
        %v774 = vpop.f32.mrf.mxu0
        %v775 = vadd.f32 %v628, %v774
        %v776 = vpop.f32.mrf.mxu0
        %v777 = vadd.f32 %v630, %v776
        %778 = vmatmul.bf16.gmra.mxu0 %v689
        %v779 = vpop.f32.mrf.mxu0
        %v780 = vadd.f32 %v633, %v779
        %v781 = vpop.f32.mrf.mxu0
        %v782 = vadd.f32 %v635, %v781
        %783 = vmatmul.bf16.gmra.mxu0 %v692
        %v784 = vpop.f32.mrf.mxu0
        %v785 = vadd.f32 %v638, %v784
        %v786 = vpop.f32.mrf.mxu0
        %v787 = vadd.f32 %v640, %v786
        %788 = vmatmul.bf16.gmra.mxu0 %v695
        %v789 = vpop.f32.mrf.mxu0
        %v790 = vadd.f32 %v643, %v789
        %v791 = vpop.f32.mrf.mxu0
        %792 = vdwg.mxu0
        %s793 = scalar_lea.vmem %s1, 16
        %v794 = vld [vmem:[%s793] sm:$0xff]
        %v795 = vmul.f32 %v794, %v382
        %v796 = vmul.f32 %v795, %v386
        %v797 = vpack.c.bf16 %v796, %v796
        %v798 = vld [vmem:[%s391 + $0x2] sm:$0xff]
        %v799 = vld [vmem:[%s391 + $0xa] sm:$0xff]
        %v800 = vld [vmem:[%s391 + $0x12] sm:$0xff]
        %v801 = vld [vmem:[%s391 + $0x22] sm:$0xff]
        %v802 = vld [vmem:[%s391 + $0x2a] sm:$0xff]
        %v803 = vld [vmem:[%s391 + $0x32] sm:$0xff]
        %v804 = vld [vmem:[%s391 + $0x42] sm:$0xff]
        %v805 = vld [vmem:[%s391 + $0x4a] sm:$0xff]
        %v806 = vld [vmem:[%s391 + $0x52] sm:$0xff]
        %v807 = vld [vmem:[%s391 + $0x62] sm:$0xff]
        %v808 = vld [vmem:[%s391 + $0x6a] sm:$0xff]
        %v809 = vld [vmem:[%s391 + $0x72] sm:$0xff]
        %v810 = vld [vmem:[%s391 + $0x82] sm:$0xff]
        %v811 = vld [vmem:[%s391 + $0x8a] sm:$0xff]
        %v812 = vld [vmem:[%s391 + $0x92] sm:$0xff]
        %v813 = vld [vmem:[%s391 + $0xa2] sm:$0xff]
        %v814 = vld [vmem:[%s391 + $0xaa] sm:$0xff]
        %v815 = vld [vmem:[%s391 + $0xb2] sm:$0xff]
        %v816 = vld [vmem:[%s391 + $0xc2] sm:$0xff]
        %v817 = vld [vmem:[%s391 + $0xca] sm:$0xff]
        %v818 = vld [vmem:[%s391 + $0xd2] sm:$0xff]
        %v819 = vld [vmem:[%s391 + $0xe2] sm:$0xff]
        %v820 = vld [vmem:[%s391 + $0xea] sm:$0xff]
        %v821 = vld [vmem:[%s391 + $0xf2] sm:$0xff]
        %v822 = vld [vmem:[%s391 + $0x102] sm:$0xff]
        %v823 = vld [vmem:[%s391 + $0x10a] sm:$0xff]
        %v824 = vld [vmem:[%s391 + $0x112] sm:$0xff]
        %v825 = vld [vmem:[%s391 + $0x122] sm:$0xff]
        %v826 = vld [vmem:[%s391 + $0x12a] sm:$0xff]
        %v827 = vld [vmem:[%s391 + $0x132] sm:$0xff]
        %v828 = vld [vmem:[%s391 + $0x142] sm:$0xff]
        %v829 = vld [vmem:[%s391 + $0x14a] sm:$0xff]
        %v830 = vld [vmem:[%s391 + $0x152] sm:$0xff]
        %v831 = vpack.c.bf16 %v799, %v798
        %v832 = vpack.c.bf16 %v801, %v800
        %v833 = vpack.c.bf16 %v803, %v802
        %v834 = vpack.c.bf16 %v805, %v804
        %v835 = vpack.c.bf16 %v807, %v806
        %v836 = vpack.c.bf16 %v809, %v808
        %v837 = vpack.c.bf16 %v811, %v810
        %v838 = vpack.c.bf16 %v813, %v812
        %v839 = vpack.c.bf16 %v815, %v814
        %v840 = vpack.c.bf16 %v817, %v816
        %v841 = vpack.c.bf16 %v819, %v818
        %v842 = vpack.c.bf16 %v821, %v820
        %v843 = vpack.c.bf16 %v823, %v822
        %v844 = vpack.c.bf16 %v825, %v824
        %v845 = vpack.c.bf16 %v827, %v826
        %v846 = vpack.c.bf16 %v829, %v828
        %v847 = vpack.c.bf16 %v830, %v830
        %v849 = vsel %vm497, %v831, 0
        %v852 = vsel %vm497, %v832, 0
        %v855 = vsel %vm497, %v833, 0
        %v858 = vsel %vm497, %v834, 0
        %v861 = vsel %vm497, %v835, 0
        %v864 = vsel %vm497, %v836, 0
        %v867 = vsel %vm497, %v837, 0
        %v870 = vsel %vm497, %v838, 0
        %v873 = vsel %vm497, %v839, 0
        %v876 = vsel %vm497, %v840, 0
        %v879 = vsel %vm497, %v841, 0
        %v882 = vsel %vm497, %v842, 0
        %v885 = vsel %vm497, %v843, 0
        %v888 = vsel %vm497, %v844, 0
        %v891 = vsel %vm497, %v845, 0
        %v894 = vsel %vm497, %v846, 0
        %v897 = vsel %vm497, %v847, 0
        %v900 = vsel %vm549, %v797, 0
        %902 = vmatpush.bf16.msra.mxu0 0
        %903 = vmatpush.bf16.msra.mxu0 0
        %904 = vmatpush.bf16.msra.mxu0 0
        %905 = vmatpush.bf16.msra.mxu0 0
        %906 = vmatpush.bf16.msra.mxu0 0
        %907 = vmatpush.bf16.msra.mxu0 0
        %908 = vmatpush.bf16.msra.mxu0 0
        %909 = vmatpush.bf16.msra.mxu0 %v900
        %910 = vmatmul.bf16.gmra.mxu0 %v849
        %v911 = vpop.f32.mrf.mxu0
        %v912 = vadd.f32 0.0, %v911
        %v913 = vpop.f32.mrf.mxu0
        %v914 = vadd.f32 0.0, %v913
        %915 = vmatmul.bf16.gmra.mxu0 %v852
        %v916 = vpop.f32.mrf.mxu0
        %v917 = vadd.f32 0.0, %v916
        %v918 = vpop.f32.mrf.mxu0
        %v919 = vadd.f32 0.0, %v918
        %920 = vmatmul.bf16.gmra.mxu0 %v855
        %v921 = vpop.f32.mrf.mxu0
        %v922 = vadd.f32 0.0, %v921
        %v923 = vpop.f32.mrf.mxu0
        %v924 = vadd.f32 0.0, %v923
        %925 = vmatmul.bf16.gmra.mxu0 %v858
        %v926 = vpop.f32.mrf.mxu0
        %v927 = vadd.f32 0.0, %v926
        %v928 = vpop.f32.mrf.mxu0
        %v929 = vadd.f32 0.0, %v928
        %930 = vmatmul.bf16.gmra.mxu0 %v861
        %v931 = vpop.f32.mrf.mxu0
        %v932 = vadd.f32 0.0, %v931
        %v933 = vpop.f32.mrf.mxu0
        %v934 = vadd.f32 0.0, %v933
        %935 = vmatmul.bf16.gmra.mxu0 %v864
        %v936 = vpop.f32.mrf.mxu0
        %v937 = vadd.f32 0.0, %v936
        %v938 = vpop.f32.mrf.mxu0
        %v939 = vadd.f32 0.0, %v938
        %940 = vmatmul.bf16.gmra.mxu0 %v867
        %v941 = vpop.f32.mrf.mxu0
        %v942 = vadd.f32 0.0, %v941
        %v943 = vpop.f32.mrf.mxu0
        %v944 = vadd.f32 0.0, %v943
        %945 = vmatmul.bf16.gmra.mxu0 %v870
        %v946 = vpop.f32.mrf.mxu0
        %v947 = vadd.f32 0.0, %v946
        %v948 = vpop.f32.mrf.mxu0
        %v949 = vadd.f32 0.0, %v948
        %950 = vmatmul.bf16.gmra.mxu0 %v873
        %v951 = vpop.f32.mrf.mxu0
        %v952 = vadd.f32 0.0, %v951
        %v953 = vpop.f32.mrf.mxu0
        %v954 = vadd.f32 0.0, %v953
        %955 = vmatmul.bf16.gmra.mxu0 %v876
        %v956 = vpop.f32.mrf.mxu0
        %v957 = vadd.f32 0.0, %v956
        %v958 = vpop.f32.mrf.mxu0
        %v959 = vadd.f32 0.0, %v958
        %960 = vmatmul.bf16.gmra.mxu0 %v879
        %v961 = vpop.f32.mrf.mxu0
        %v962 = vadd.f32 0.0, %v961
        %v963 = vpop.f32.mrf.mxu0
        %v964 = vadd.f32 0.0, %v963
        %965 = vmatmul.bf16.gmra.mxu0 %v882
        %v966 = vpop.f32.mrf.mxu0
        %v967 = vadd.f32 0.0, %v966
        %v968 = vpop.f32.mrf.mxu0
        %v969 = vadd.f32 0.0, %v968
        %970 = vmatmul.bf16.gmra.mxu0 %v885
        %v971 = vpop.f32.mrf.mxu0
        %v972 = vadd.f32 0.0, %v971
        %v973 = vpop.f32.mrf.mxu0
        %v974 = vadd.f32 0.0, %v973
        %975 = vmatmul.bf16.gmra.mxu0 %v888
        %v976 = vpop.f32.mrf.mxu0
        %v977 = vadd.f32 0.0, %v976
        %v978 = vpop.f32.mrf.mxu0
        %v979 = vadd.f32 0.0, %v978
        %980 = vmatmul.bf16.gmra.mxu0 %v891
        %v981 = vpop.f32.mrf.mxu0
        %v982 = vadd.f32 0.0, %v981
        %v983 = vpop.f32.mrf.mxu0
        %v984 = vadd.f32 0.0, %v983
        %985 = vmatmul.bf16.gmra.mxu0 %v894
        %v986 = vpop.f32.mrf.mxu0
        %v987 = vadd.f32 0.0, %v986
        %v988 = vpop.f32.mrf.mxu0
        %v989 = vadd.f32 0.0, %v988
        %990 = vmatmul.bf16.gmra.mxu0 %v897
        %v991 = vpop.f32.mrf.mxu0
        %v992 = vadd.f32 0.0, %v991
        %v993 = vpop.f32.mrf.mxu0
        %994 = vdwg.mxu0
        %v995 = vadd.f32 %v710, %v912
        %v996 = vadd.f32 %v712, %v914
        %v997 = vadd.f32 %v715, %v917
        %v998 = vadd.f32 %v717, %v919
        %v999 = vadd.f32 %v720, %v922
        %v1000 = vadd.f32 %v722, %v924
        %v1001 = vadd.f32 %v725, %v927
        %v1002 = vadd.f32 %v727, %v929
        %v1003 = vadd.f32 %v730, %v932
        %v1004 = vadd.f32 %v732, %v934
        %v1005 = vadd.f32 %v735, %v937
        %v1006 = vadd.f32 %v737, %v939
        %v1007 = vadd.f32 %v740, %v942
        %v1008 = vadd.f32 %v742, %v944
        %v1009 = vadd.f32 %v745, %v947
        %v1010 = vadd.f32 %v747, %v949
        %v1011 = vadd.f32 %v750, %v952
        %v1012 = vadd.f32 %v752, %v954
        %v1013 = vadd.f32 %v755, %v957
        %v1014 = vadd.f32 %v757, %v959
        %v1015 = vadd.f32 %v760, %v962
        %v1016 = vadd.f32 %v762, %v964
        %v1017 = vadd.f32 %v765, %v967
        %v1018 = vadd.f32 %v767, %v969
        %v1019 = vadd.f32 %v770, %v972
        %v1020 = vadd.f32 %v772, %v974
        %v1021 = vadd.f32 %v775, %v977
        %v1022 = vadd.f32 %v777, %v979
        %v1023 = vadd.f32 %v780, %v982
        %v1024 = vadd.f32 %v782, %v984
        %v1025 = vadd.f32 %v785, %v987
        %v1026 = vadd.f32 %v787, %v989
        %v1027 = vadd.f32 %v790, %v992
        %s1028 = scalar_lea.vmem %s1, 24
        %v1029 = vld [vmem:[%s1028] sm:$0xff]
        %v1030 = vmul.f32 %v1029, %v382
        %v1031 = vmul.f32 %v1030, %v386
        %v1032 = vpack.c.bf16 %v1031, %v1031
        %s1033 = sadd.s32 %s375, 1
        %s1034 = smul.u32 %s1033, 32
        %s1035 = scalar_lea.vmem %s348, %s1034
        %v1036 = vld [vmem:[%s1035] sm:$0xff]
        %v1037 = vld [vmem:[%s1035 + $0x8] sm:$0xff]
        %v1038 = vld [vmem:[%s1035 + $0x10] sm:$0xff]
        %v1039 = vld [vmem:[%s1035 + $0x20] sm:$0xff]
        %v1040 = vld [vmem:[%s1035 + $0x28] sm:$0xff]
        %v1041 = vld [vmem:[%s1035 + $0x30] sm:$0xff]
        %v1042 = vld [vmem:[%s1035 + $0x40] sm:$0xff]
        %v1043 = vld [vmem:[%s1035 + $0x48] sm:$0xff]
        %v1044 = vld [vmem:[%s1035 + $0x50] sm:$0xff]
        %v1045 = vld [vmem:[%s1035 + $0x60] sm:$0xff]
        %v1046 = vld [vmem:[%s1035 + $0x68] sm:$0xff]
        %v1047 = vld [vmem:[%s1035 + $0x70] sm:$0xff]
        %v1048 = vld [vmem:[%s1035 + $0x80] sm:$0xff]
        %v1049 = vld [vmem:[%s1035 + $0x88] sm:$0xff]
        %v1050 = vld [vmem:[%s1035 + $0x90] sm:$0xff]
        %v1051 = vld [vmem:[%s1035 + $0xa0] sm:$0xff]
        %v1052 = vld [vmem:[%s1035 + $0xa8] sm:$0xff]
        %v1053 = vld [vmem:[%s1035 + $0xb0] sm:$0xff]
        %v1054 = vld [vmem:[%s1035 + $0xc0] sm:$0xff]
        %v1055 = vld [vmem:[%s1035 + $0xc8] sm:$0xff]
        %v1056 = vld [vmem:[%s1035 + $0xd0] sm:$0xff]
        %v1057 = vld [vmem:[%s1035 + $0xe0] sm:$0xff]
        %v1058 = vld [vmem:[%s1035 + $0xe8] sm:$0xff]
        %v1059 = vld [vmem:[%s1035 + $0xf0] sm:$0xff]
        %v1060 = vld [vmem:[%s1035 + $0x100] sm:$0xff]
        %v1061 = vld [vmem:[%s1035 + $0x108] sm:$0xff]
        %v1062 = vld [vmem:[%s1035 + $0x110] sm:$0xff]
        %v1063 = vld [vmem:[%s1035 + $0x120] sm:$0xff]
        %v1064 = vld [vmem:[%s1035 + $0x128] sm:$0xff]
        %v1065 = vld [vmem:[%s1035 + $0x130] sm:$0xff]
        %v1066 = vld [vmem:[%s1035 + $0x140] sm:$0xff]
        %v1067 = vld [vmem:[%s1035 + $0x148] sm:$0xff]
        %v1068 = vld [vmem:[%s1035 + $0x150] sm:$0xff]
        %v1069 = vpack.c.bf16 %v1037, %v1036
        %v1070 = vpack.c.bf16 %v1039, %v1038
        %v1071 = vpack.c.bf16 %v1041, %v1040
        %v1072 = vpack.c.bf16 %v1043, %v1042
        %v1073 = vpack.c.bf16 %v1045, %v1044
        %v1074 = vpack.c.bf16 %v1047, %v1046
        %v1075 = vpack.c.bf16 %v1049, %v1048
        %v1076 = vpack.c.bf16 %v1051, %v1050
        %v1077 = vpack.c.bf16 %v1053, %v1052
        %v1078 = vpack.c.bf16 %v1055, %v1054
        %v1079 = vpack.c.bf16 %v1057, %v1056
        %v1080 = vpack.c.bf16 %v1059, %v1058
        %v1081 = vpack.c.bf16 %v1061, %v1060
        %v1082 = vpack.c.bf16 %v1063, %v1062
        %v1083 = vpack.c.bf16 %v1065, %v1064
        %v1084 = vpack.c.bf16 %v1067, %v1066
        %v1085 = vpack.c.bf16 %v1068, %v1068
        %v1087 = vsel %vm497, %v1069, 0
        %v1090 = vsel %vm497, %v1070, 0
        %v1093 = vsel %vm497, %v1071, 0
        %v1096 = vsel %vm497, %v1072, 0
        %v1099 = vsel %vm497, %v1073, 0
        %v1102 = vsel %vm497, %v1074, 0
        %v1105 = vsel %vm497, %v1075, 0
        %v1108 = vsel %vm497, %v1076, 0
        %v1111 = vsel %vm497, %v1077, 0
        %v1114 = vsel %vm497, %v1078, 0
        %v1117 = vsel %vm497, %v1079, 0
        %v1120 = vsel %vm497, %v1080, 0
        %v1123 = vsel %vm497, %v1081, 0
        %v1126 = vsel %vm497, %v1082, 0
        %v1129 = vsel %vm497, %v1083, 0
        %v1132 = vsel %vm497, %v1084, 0
        %v1135 = vsel %vm497, %v1085, 0
        %v1138 = vsel %vm549, %v1032, 0
        %1140 = vmatpush.bf16.msra.mxu0 0
        %1141 = vmatpush.bf16.msra.mxu0 0
        %1142 = vmatpush.bf16.msra.mxu0 0
        %1143 = vmatpush.bf16.msra.mxu0 0
        %1144 = vmatpush.bf16.msra.mxu0 0
        %1145 = vmatpush.bf16.msra.mxu0 0
        %1146 = vmatpush.bf16.msra.mxu0 0
        %1147 = vmatpush.bf16.msra.mxu0 %v1138
        %1148 = vmatmul.bf16.gmra.mxu0 %v1087
        %v1149 = vpop.f32.mrf.mxu0
        %v1150 = vadd.f32 0.0, %v1149
        %v1151 = vpop.f32.mrf.mxu0
        %v1152 = vadd.f32 0.0, %v1151
        %1153 = vmatmul.bf16.gmra.mxu0 %v1090
        %v1154 = vpop.f32.mrf.mxu0
        %v1155 = vadd.f32 0.0, %v1154
        %v1156 = vpop.f32.mrf.mxu0
        %v1157 = vadd.f32 0.0, %v1156
        %1158 = vmatmul.bf16.gmra.mxu0 %v1093
        %v1159 = vpop.f32.mrf.mxu0
        %v1160 = vadd.f32 0.0, %v1159
        %v1161 = vpop.f32.mrf.mxu0
        %v1162 = vadd.f32 0.0, %v1161
        %1163 = vmatmul.bf16.gmra.mxu0 %v1096
        %v1164 = vpop.f32.mrf.mxu0
        %v1165 = vadd.f32 0.0, %v1164
        %v1166 = vpop.f32.mrf.mxu0
        %v1167 = vadd.f32 0.0, %v1166
        %1168 = vmatmul.bf16.gmra.mxu0 %v1099
        %v1169 = vpop.f32.mrf.mxu0
        %v1170 = vadd.f32 0.0, %v1169
        %v1171 = vpop.f32.mrf.mxu0
        %v1172 = vadd.f32 0.0, %v1171
        %1173 = vmatmul.bf16.gmra.mxu0 %v1102
        %v1174 = vpop.f32.mrf.mxu0
        %v1175 = vadd.f32 0.0, %v1174
        %v1176 = vpop.f32.mrf.mxu0
        %v1177 = vadd.f32 0.0, %v1176
        %1178 = vmatmul.bf16.gmra.mxu0 %v1105
        %v1179 = vpop.f32.mrf.mxu0
        %v1180 = vadd.f32 0.0, %v1179
        %v1181 = vpop.f32.mrf.mxu0
        %v1182 = vadd.f32 0.0, %v1181
        %1183 = vmatmul.bf16.gmra.mxu0 %v1108
        %v1184 = vpop.f32.mrf.mxu0
        %v1185 = vadd.f32 0.0, %v1184
        %v1186 = vpop.f32.mrf.mxu0
        %v1187 = vadd.f32 0.0, %v1186
        %1188 = vmatmul.bf16.gmra.mxu0 %v1111
        %v1189 = vpop.f32.mrf.mxu0
        %v1190 = vadd.f32 0.0, %v1189
        %v1191 = vpop.f32.mrf.mxu0
        %v1192 = vadd.f32 0.0, %v1191
        %1193 = vmatmul.bf16.gmra.mxu0 %v1114
        %v1194 = vpop.f32.mrf.mxu0
        %v1195 = vadd.f32 0.0, %v1194
        %v1196 = vpop.f32.mrf.mxu0
        %v1197 = vadd.f32 0.0, %v1196
        %1198 = vmatmul.bf16.gmra.mxu0 %v1117
        %v1199 = vpop.f32.mrf.mxu0
        %v1200 = vadd.f32 0.0, %v1199
        %v1201 = vpop.f32.mrf.mxu0
        %v1202 = vadd.f32 0.0, %v1201
        %1203 = vmatmul.bf16.gmra.mxu0 %v1120
        %v1204 = vpop.f32.mrf.mxu0
        %v1205 = vadd.f32 0.0, %v1204
        %v1206 = vpop.f32.mrf.mxu0
        %v1207 = vadd.f32 0.0, %v1206
        %1208 = vmatmul.bf16.gmra.mxu0 %v1123
        %v1209 = vpop.f32.mrf.mxu0
        %v1210 = vadd.f32 0.0, %v1209
        %v1211 = vpop.f32.mrf.mxu0
        %v1212 = vadd.f32 0.0, %v1211
        %1213 = vmatmul.bf16.gmra.mxu0 %v1126
        %v1214 = vpop.f32.mrf.mxu0
        %v1215 = vadd.f32 0.0, %v1214
        %v1216 = vpop.f32.mrf.mxu0
        %v1217 = vadd.f32 0.0, %v1216
        %1218 = vmatmul.bf16.gmra.mxu0 %v1129
        %v1219 = vpop.f32.mrf.mxu0
        %v1220 = vadd.f32 0.0, %v1219
        %v1221 = vpop.f32.mrf.mxu0
        %v1222 = vadd.f32 0.0, %v1221
        %1223 = vmatmul.bf16.gmra.mxu0 %v1132
        %v1224 = vpop.f32.mrf.mxu0
        %v1225 = vadd.f32 0.0, %v1224
        %v1226 = vpop.f32.mrf.mxu0
        %v1227 = vadd.f32 0.0, %v1226
        %1228 = vmatmul.bf16.gmra.mxu0 %v1135
        %v1229 = vpop.f32.mrf.mxu0
        %v1230 = vadd.f32 0.0, %v1229
        %v1231 = vpop.f32.mrf.mxu0
        %1232 = vdwg.mxu0
        %v1233 = vadd.f32 %v995, %v1150
        %v1234 = vadd.f32 %v996, %v1152
        %v1235 = vadd.f32 %v997, %v1155
        %v1236 = vadd.f32 %v998, %v1157
        %v1237 = vadd.f32 %v999, %v1160
        %v1238 = vadd.f32 %v1000, %v1162
        %v1239 = vadd.f32 %v1001, %v1165
        %v1240 = vadd.f32 %v1002, %v1167
        %v1241 = vadd.f32 %v1003, %v1170
        %v1242 = vadd.f32 %v1004, %v1172
        %v1243 = vadd.f32 %v1005, %v1175
        %v1244 = vadd.f32 %v1006, %v1177
        %v1245 = vadd.f32 %v1007, %v1180
        %v1246 = vadd.f32 %v1008, %v1182
        %v1247 = vadd.f32 %v1009, %v1185
        %v1248 = vadd.f32 %v1010, %v1187
        %v1249 = vadd.f32 %v1011, %v1190
        %v1250 = vadd.f32 %v1012, %v1192
        %v1251 = vadd.f32 %v1013, %v1195
        %v1252 = vadd.f32 %v1014, %v1197
        %v1253 = vadd.f32 %v1015, %v1200
        %v1254 = vadd.f32 %v1016, %v1202
        %v1255 = vadd.f32 %v1017, %v1205
        %v1256 = vadd.f32 %v1018, %v1207
        %v1257 = vadd.f32 %v1019, %v1210
        %v1258 = vadd.f32 %v1020, %v1212
        %v1259 = vadd.f32 %v1021, %v1215
        %v1260 = vadd.f32 %v1022, %v1217
        %v1261 = vadd.f32 %v1023, %v1220
        %v1262 = vadd.f32 %v1024, %v1222
        %v1263 = vadd.f32 %v1025, %v1225
        %v1264 = vadd.f32 %v1026, %v1227
        %v1265 = vadd.f32 %v1027, %v1230
        %s1266 = scalar_lea.vmem %s1, 32
        %v1267 = vld [vmem:[%s1266] sm:$0xff]
        %v1268 = vmul.f32 %v1267, %v382
        %v1269 = vmul.f32 %v1268, %v386
        %v1270 = vpack.c.bf16 %v1269, %v1269
        %v1271 = vld [vmem:[%s1035 + $0x1] sm:$0xff]
        %v1272 = vld [vmem:[%s1035 + $0x9] sm:$0xff]
        %v1273 = vld [vmem:[%s1035 + $0x11] sm:$0xff]
        %v1274 = vld [vmem:[%s1035 + $0x21] sm:$0xff]
        %v1275 = vld [vmem:[%s1035 + $0x29] sm:$0xff]
        %v1276 = vld [vmem:[%s1035 + $0x31] sm:$0xff]
        %v1277 = vld [vmem:[%s1035 + $0x41] sm:$0xff]
        %v1278 = vld [vmem:[%s1035 + $0x49] sm:$0xff]
        %v1279 = vld [vmem:[%s1035 + $0x51] sm:$0xff]
        %v1280 = vld [vmem:[%s1035 + $0x61] sm:$0xff]
        %v1281 = vld [vmem:[%s1035 + $0x69] sm:$0xff]
        %v1282 = vld [vmem:[%s1035 + $0x71] sm:$0xff]
        %v1283 = vld [vmem:[%s1035 + $0x81] sm:$0xff]
        %v1284 = vld [vmem:[%s1035 + $0x89] sm:$0xff]
        %v1285 = vld [vmem:[%s1035 + $0x91] sm:$0xff]
        %v1286 = vld [vmem:[%s1035 + $0xa1] sm:$0xff]
        %v1287 = vld [vmem:[%s1035 + $0xa9] sm:$0xff]
        %v1288 = vld [vmem:[%s1035 + $0xb1] sm:$0xff]
        %v1289 = vld [vmem:[%s1035 + $0xc1] sm:$0xff]
        %v1290 = vld [vmem:[%s1035 + $0xc9] sm:$0xff]
        %v1291 = vld [vmem:[%s1035 + $0xd1] sm:$0xff]
        %v1292 = vld [vmem:[%s1035 + $0xe1] sm:$0xff]
        %v1293 = vld [vmem:[%s1035 + $0xe9] sm:$0xff]
        %v1294 = vld [vmem:[%s1035 + $0xf1] sm:$0xff]
        %v1295 = vld [vmem:[%s1035 + $0x101] sm:$0xff]
        %v1296 = vld [vmem:[%s1035 + $0x109] sm:$0xff]
        %v1297 = vld [vmem:[%s1035 + $0x111] sm:$0xff]
        %v1298 = vld [vmem:[%s1035 + $0x121] sm:$0xff]
        %v1299 = vld [vmem:[%s1035 + $0x129] sm:$0xff]
        %v1300 = vld [vmem:[%s1035 + $0x131] sm:$0xff]
        %v1301 = vld [vmem:[%s1035 + $0x141] sm:$0xff]
        %v1302 = vld [vmem:[%s1035 + $0x149] sm:$0xff]
        %v1303 = vld [vmem:[%s1035 + $0x151] sm:$0xff]
        %v1304 = vpack.c.bf16 %v1272, %v1271
        %v1305 = vpack.c.bf16 %v1274, %v1273
        %v1306 = vpack.c.bf16 %v1276, %v1275
        %v1307 = vpack.c.bf16 %v1278, %v1277
        %v1308 = vpack.c.bf16 %v1280, %v1279
        %v1309 = vpack.c.bf16 %v1282, %v1281
        %v1310 = vpack.c.bf16 %v1284, %v1283
        %v1311 = vpack.c.bf16 %v1286, %v1285
        %v1312 = vpack.c.bf16 %v1288, %v1287
        %v1313 = vpack.c.bf16 %v1290, %v1289
        %v1314 = vpack.c.bf16 %v1292, %v1291
        %v1315 = vpack.c.bf16 %v1294, %v1293
        %v1316 = vpack.c.bf16 %v1296, %v1295
        %v1317 = vpack.c.bf16 %v1298, %v1297
        %v1318 = vpack.c.bf16 %v1300, %v1299
        %v1319 = vpack.c.bf16 %v1302, %v1301
        %v1320 = vpack.c.bf16 %v1303, %v1303
        %v1322 = vsel %vm497, %v1304, 0
        %v1325 = vsel %vm497, %v1305, 0
        %v1328 = vsel %vm497, %v1306, 0
        %v1331 = vsel %vm497, %v1307, 0
        %v1334 = vsel %vm497, %v1308, 0
        %v1337 = vsel %vm497, %v1309, 0
        %v1340 = vsel %vm497, %v1310, 0
        %v1343 = vsel %vm497, %v1311, 0
        %v1346 = vsel %vm497, %v1312, 0
        %v1349 = vsel %vm497, %v1313, 0
        %v1352 = vsel %vm497, %v1314, 0
        %v1355 = vsel %vm497, %v1315, 0
        %v1358 = vsel %vm497, %v1316, 0
        %v1361 = vsel %vm497, %v1317, 0
        %v1364 = vsel %vm497, %v1318, 0
        %v1367 = vsel %vm497, %v1319, 0
        %v1370 = vsel %vm497, %v1320, 0
        %v1373 = vsel %vm549, %v1270, 0
        %1375 = vmatpush.bf16.msra.mxu0 0
        %1376 = vmatpush.bf16.msra.mxu0 0
        %1377 = vmatpush.bf16.msra.mxu0 0
        %1378 = vmatpush.bf16.msra.mxu0 0
        %1379 = vmatpush.bf16.msra.mxu0 0
        %1380 = vmatpush.bf16.msra.mxu0 0
        %1381 = vmatpush.bf16.msra.mxu0 0
        %1382 = vmatpush.bf16.msra.mxu0 %v1373
        %1383 = vmatmul.bf16.gmra.mxu0 %v1322
        %v1384 = vpop.f32.mrf.mxu0
        %v1385 = vadd.f32 0.0, %v1384
        %v1386 = vpop.f32.mrf.mxu0
        %v1387 = vadd.f32 0.0, %v1386
        %1388 = vmatmul.bf16.gmra.mxu0 %v1325
        %v1389 = vpop.f32.mrf.mxu0
        %v1390 = vadd.f32 0.0, %v1389
        %v1391 = vpop.f32.mrf.mxu0
        %v1392 = vadd.f32 0.0, %v1391
        %1393 = vmatmul.bf16.gmra.mxu0 %v1328
        %v1394 = vpop.f32.mrf.mxu0
        %v1395 = vadd.f32 0.0, %v1394
        %v1396 = vpop.f32.mrf.mxu0
        %v1397 = vadd.f32 0.0, %v1396
        %1398 = vmatmul.bf16.gmra.mxu0 %v1331
        %v1399 = vpop.f32.mrf.mxu0
        %v1400 = vadd.f32 0.0, %v1399
        %v1401 = vpop.f32.mrf.mxu0
        %v1402 = vadd.f32 0.0, %v1401
        %1403 = vmatmul.bf16.gmra.mxu0 %v1334
        %v1404 = vpop.f32.mrf.mxu0
        %v1405 = vadd.f32 0.0, %v1404
        %v1406 = vpop.f32.mrf.mxu0
        %v1407 = vadd.f32 0.0, %v1406
        %1408 = vmatmul.bf16.gmra.mxu0 %v1337
        %v1409 = vpop.f32.mrf.mxu0
        %v1410 = vadd.f32 0.0, %v1409
        %v1411 = vpop.f32.mrf.mxu0
        %v1412 = vadd.f32 0.0, %v1411
        %1413 = vmatmul.bf16.gmra.mxu0 %v1340
        %v1414 = vpop.f32.mrf.mxu0
        %v1415 = vadd.f32 0.0, %v1414
        %v1416 = vpop.f32.mrf.mxu0
        %v1417 = vadd.f32 0.0, %v1416
        %1418 = vmatmul.bf16.gmra.mxu0 %v1343
        %v1419 = vpop.f32.mrf.mxu0
        %v1420 = vadd.f32 0.0, %v1419
        %v1421 = vpop.f32.mrf.mxu0
        %v1422 = vadd.f32 0.0, %v1421
        %1423 = vmatmul.bf16.gmra.mxu0 %v1346
        %v1424 = vpop.f32.mrf.mxu0
        %v1425 = vadd.f32 0.0, %v1424
        %v1426 = vpop.f32.mrf.mxu0
        %v1427 = vadd.f32 0.0, %v1426
        %1428 = vmatmul.bf16.gmra.mxu0 %v1349
        %v1429 = vpop.f32.mrf.mxu0
        %v1430 = vadd.f32 0.0, %v1429
        %v1431 = vpop.f32.mrf.mxu0
        %v1432 = vadd.f32 0.0, %v1431
        %1433 = vmatmul.bf16.gmra.mxu0 %v1352
        %v1434 = vpop.f32.mrf.mxu0
        %v1435 = vadd.f32 0.0, %v1434
        %v1436 = vpop.f32.mrf.mxu0
        %v1437 = vadd.f32 0.0, %v1436
        %1438 = vmatmul.bf16.gmra.mxu0 %v1355
        %v1439 = vpop.f32.mrf.mxu0
        %v1440 = vadd.f32 0.0, %v1439
        %v1441 = vpop.f32.mrf.mxu0
        %v1442 = vadd.f32 0.0, %v1441
        %1443 = vmatmul.bf16.gmra.mxu0 %v1358
        %v1444 = vpop.f32.mrf.mxu0
        %v1445 = vadd.f32 0.0, %v1444
        %v1446 = vpop.f32.mrf.mxu0
        %v1447 = vadd.f32 0.0, %v1446
        %1448 = vmatmul.bf16.gmra.mxu0 %v1361
        %v1449 = vpop.f32.mrf.mxu0
        %v1450 = vadd.f32 0.0, %v1449
        %v1451 = vpop.f32.mrf.mxu0
        %v1452 = vadd.f32 0.0, %v1451
        %1453 = vmatmul.bf16.gmra.mxu0 %v1364
        %v1454 = vpop.f32.mrf.mxu0
        %v1455 = vadd.f32 0.0, %v1454
        %v1456 = vpop.f32.mrf.mxu0
        %v1457 = vadd.f32 0.0, %v1456
        %1458 = vmatmul.bf16.gmra.mxu0 %v1367
        %v1459 = vpop.f32.mrf.mxu0
        %v1460 = vadd.f32 0.0, %v1459
        %v1461 = vpop.f32.mrf.mxu0
        %v1462 = vadd.f32 0.0, %v1461
        %1463 = vmatmul.bf16.gmra.mxu0 %v1370
        %v1464 = vpop.f32.mrf.mxu0
        %v1465 = vadd.f32 0.0, %v1464
        %v1466 = vpop.f32.mrf.mxu0
        %1467 = vdwg.mxu0
        %v1468 = vadd.f32 %v1233, %v1385
        %v1469 = vadd.f32 %v1234, %v1387
        %v1470 = vadd.f32 %v1235, %v1390
        %v1471 = vadd.f32 %v1236, %v1392
        %v1472 = vadd.f32 %v1237, %v1395
        %v1473 = vadd.f32 %v1238, %v1397
        %v1474 = vadd.f32 %v1239, %v1400
        %v1475 = vadd.f32 %v1240, %v1402
        %v1476 = vadd.f32 %v1241, %v1405
        %v1477 = vadd.f32 %v1242, %v1407
        %v1478 = vadd.f32 %v1243, %v1410
        %v1479 = vadd.f32 %v1244, %v1412
        %v1480 = vadd.f32 %v1245, %v1415
        %v1481 = vadd.f32 %v1246, %v1417
        %v1482 = vadd.f32 %v1247, %v1420
        %v1483 = vadd.f32 %v1248, %v1422
        %v1484 = vadd.f32 %v1249, %v1425
        %v1485 = vadd.f32 %v1250, %v1427
        %v1486 = vadd.f32 %v1251, %v1430
        %v1487 = vadd.f32 %v1252, %v1432
        %v1488 = vadd.f32 %v1253, %v1435
        %v1489 = vadd.f32 %v1254, %v1437
        %v1490 = vadd.f32 %v1255, %v1440
        %v1491 = vadd.f32 %v1256, %v1442
        %v1492 = vadd.f32 %v1257, %v1445
        %v1493 = vadd.f32 %v1258, %v1447
        %v1494 = vadd.f32 %v1259, %v1450
        %v1495 = vadd.f32 %v1260, %v1452
        %v1496 = vadd.f32 %v1261, %v1455
        %v1497 = vadd.f32 %v1262, %v1457
        %v1498 = vadd.f32 %v1263, %v1460
        %v1499 = vadd.f32 %v1264, %v1462
        %v1500 = vadd.f32 %v1265, %v1465
        %s1501 = scalar_lea.vmem %s1, 40
        %v1502 = vld [vmem:[%s1501] sm:$0xff]
        %v1503 = vmul.f32 %v1502, %v382
        %v1504 = vmul.f32 %v1503, %v386
        %v1505 = vpack.c.bf16 %v1504, %v1504
        %v1506 = vld [vmem:[%s1035 + $0x2] sm:$0xff]
        %v1507 = vld [vmem:[%s1035 + $0xa] sm:$0xff]
        %v1508 = vld [vmem:[%s1035 + $0x12] sm:$0xff]
        %v1509 = vld [vmem:[%s1035 + $0x22] sm:$0xff]
        %v1510 = vld [vmem:[%s1035 + $0x2a] sm:$0xff]
        %v1511 = vld [vmem:[%s1035 + $0x32] sm:$0xff]
        %v1512 = vld [vmem:[%s1035 + $0x42] sm:$0xff]
        %v1513 = vld [vmem:[%s1035 + $0x4a] sm:$0xff]
        %v1514 = vld [vmem:[%s1035 + $0x52] sm:$0xff]
        %v1515 = vld [vmem:[%s1035 + $0x62] sm:$0xff]
        %v1516 = vld [vmem:[%s1035 + $0x6a] sm:$0xff]
        %v1517 = vld [vmem:[%s1035 + $0x72] sm:$0xff]
        %v1518 = vld [vmem:[%s1035 + $0x82] sm:$0xff]
        %v1519 = vld [vmem:[%s1035 + $0x8a] sm:$0xff]
        %v1520 = vld [vmem:[%s1035 + $0x92] sm:$0xff]
        %v1521 = vld [vmem:[%s1035 + $0xa2] sm:$0xff]
        %v1522 = vld [vmem:[%s1035 + $0xaa] sm:$0xff]
        %v1523 = vld [vmem:[%s1035 + $0xb2] sm:$0xff]
        %v1524 = vld [vmem:[%s1035 + $0xc2] sm:$0xff]
        %v1525 = vld [vmem:[%s1035 + $0xca] sm:$0xff]
        %v1526 = vld [vmem:[%s1035 + $0xd2] sm:$0xff]
        %v1527 = vld [vmem:[%s1035 + $0xe2] sm:$0xff]
        %v1528 = vld [vmem:[%s1035 + $0xea] sm:$0xff]
        %v1529 = vld [vmem:[%s1035 + $0xf2] sm:$0xff]
        %v1530 = vld [vmem:[%s1035 + $0x102] sm:$0xff]
        %v1531 = vld [vmem:[%s1035 + $0x10a] sm:$0xff]
        %v1532 = vld [vmem:[%s1035 + $0x112] sm:$0xff]
        %v1533 = vld [vmem:[%s1035 + $0x122] sm:$0xff]
        %v1534 = vld [vmem:[%s1035 + $0x12a] sm:$0xff]
        %v1535 = vld [vmem:[%s1035 + $0x132] sm:$0xff]
        %v1536 = vld [vmem:[%s1035 + $0x142] sm:$0xff]
        %v1537 = vld [vmem:[%s1035 + $0x14a] sm:$0xff]
        %v1538 = vld [vmem:[%s1035 + $0x152] sm:$0xff]
        %v1539 = vpack.c.bf16 %v1507, %v1506
        %v1540 = vpack.c.bf16 %v1509, %v1508
        %v1541 = vpack.c.bf16 %v1511, %v1510
        %v1542 = vpack.c.bf16 %v1513, %v1512
        %v1543 = vpack.c.bf16 %v1515, %v1514
        %v1544 = vpack.c.bf16 %v1517, %v1516
        %v1545 = vpack.c.bf16 %v1519, %v1518
        %v1546 = vpack.c.bf16 %v1521, %v1520
        %v1547 = vpack.c.bf16 %v1523, %v1522
        %v1548 = vpack.c.bf16 %v1525, %v1524
        %v1549 = vpack.c.bf16 %v1527, %v1526
        %v1550 = vpack.c.bf16 %v1529, %v1528
        %v1551 = vpack.c.bf16 %v1531, %v1530
        %v1552 = vpack.c.bf16 %v1533, %v1532
        %v1553 = vpack.c.bf16 %v1535, %v1534
        %v1554 = vpack.c.bf16 %v1537, %v1536
        %v1555 = vpack.c.bf16 %v1538, %v1538
        %v1557 = vsel %vm497, %v1539, 0
        %v1560 = vsel %vm497, %v1540, 0
        %v1563 = vsel %vm497, %v1541, 0
        %v1566 = vsel %vm497, %v1542, 0
        %v1569 = vsel %vm497, %v1543, 0
        %v1572 = vsel %vm497, %v1544, 0
        %v1575 = vsel %vm497, %v1545, 0
        %v1578 = vsel %vm497, %v1546, 0
        %v1581 = vsel %vm497, %v1547, 0
        %v1584 = vsel %vm497, %v1548, 0
        %v1587 = vsel %vm497, %v1549, 0
        %v1590 = vsel %vm497, %v1550, 0
        %v1593 = vsel %vm497, %v1551, 0
        %v1596 = vsel %vm497, %v1552, 0
        %v1599 = vsel %vm497, %v1553, 0
        %v1602 = vsel %vm497, %v1554, 0
        %v1605 = vsel %vm497, %v1555, 0
        %v1608 = vsel %vm549, %v1505, 0
        %1610 = vmatpush.bf16.msra.mxu0 0
        %1611 = vmatpush.bf16.msra.mxu0 0
        %1612 = vmatpush.bf16.msra.mxu0 0
        %1613 = vmatpush.bf16.msra.mxu0 0
        %1614 = vmatpush.bf16.msra.mxu0 0
        %1615 = vmatpush.bf16.msra.mxu0 0
        %1616 = vmatpush.bf16.msra.mxu0 0
        %1617 = vmatpush.bf16.msra.mxu0 %v1608
        %1618 = vmatmul.bf16.gmra.mxu0 %v1557
        %v1619 = vpop.f32.mrf.mxu0
        %v1620 = vadd.f32 0.0, %v1619
        %v1621 = vpop.f32.mrf.mxu0
        %v1622 = vadd.f32 0.0, %v1621
        %1623 = vmatmul.bf16.gmra.mxu0 %v1560
        %v1624 = vpop.f32.mrf.mxu0
        %v1625 = vadd.f32 0.0, %v1624
        %v1626 = vpop.f32.mrf.mxu0
        %v1627 = vadd.f32 0.0, %v1626
        %1628 = vmatmul.bf16.gmra.mxu0 %v1563
        %v1629 = vpop.f32.mrf.mxu0
        %v1630 = vadd.f32 0.0, %v1629
        %v1631 = vpop.f32.mrf.mxu0
        %v1632 = vadd.f32 0.0, %v1631
        %1633 = vmatmul.bf16.gmra.mxu0 %v1566
        %v1634 = vpop.f32.mrf.mxu0
        %v1635 = vadd.f32 0.0, %v1634
        %v1636 = vpop.f32.mrf.mxu0
        %v1637 = vadd.f32 0.0, %v1636
        %1638 = vmatmul.bf16.gmra.mxu0 %v1569
        %v1639 = vpop.f32.mrf.mxu0
        %v1640 = vadd.f32 0.0, %v1639
        %v1641 = vpop.f32.mrf.mxu0
        %v1642 = vadd.f32 0.0, %v1641
        %1643 = vmatmul.bf16.gmra.mxu0 %v1572
        %v1644 = vpop.f32.mrf.mxu0
        %v1645 = vadd.f32 0.0, %v1644
        %v1646 = vpop.f32.mrf.mxu0
        %v1647 = vadd.f32 0.0, %v1646
        %1648 = vmatmul.bf16.gmra.mxu0 %v1575
        %v1649 = vpop.f32.mrf.mxu0
        %v1650 = vadd.f32 0.0, %v1649
        %v1651 = vpop.f32.mrf.mxu0
        %v1652 = vadd.f32 0.0, %v1651
        %1653 = vmatmul.bf16.gmra.mxu0 %v1578
        %v1654 = vpop.f32.mrf.mxu0
        %v1655 = vadd.f32 0.0, %v1654
        %v1656 = vpop.f32.mrf.mxu0
        %v1657 = vadd.f32 0.0, %v1656
        %1658 = vmatmul.bf16.gmra.mxu0 %v1581
        %v1659 = vpop.f32.mrf.mxu0
        %v1660 = vadd.f32 0.0, %v1659
        %v1661 = vpop.f32.mrf.mxu0
        %v1662 = vadd.f32 0.0, %v1661
        %1663 = vmatmul.bf16.gmra.mxu0 %v1584
        %v1664 = vpop.f32.mrf.mxu0
        %v1665 = vadd.f32 0.0, %v1664
        %v1666 = vpop.f32.mrf.mxu0
        %v1667 = vadd.f32 0.0, %v1666
        %1668 = vmatmul.bf16.gmra.mxu0 %v1587
        %v1669 = vpop.f32.mrf.mxu0
        %v1670 = vadd.f32 0.0, %v1669
        %v1671 = vpop.f32.mrf.mxu0
        %v1672 = vadd.f32 0.0, %v1671
        %1673 = vmatmul.bf16.gmra.mxu0 %v1590
        %v1674 = vpop.f32.mrf.mxu0
        %v1675 = vadd.f32 0.0, %v1674
        %v1676 = vpop.f32.mrf.mxu0
        %v1677 = vadd.f32 0.0, %v1676
        %1678 = vmatmul.bf16.gmra.mxu0 %v1593
        %v1679 = vpop.f32.mrf.mxu0
        %v1680 = vadd.f32 0.0, %v1679
        %v1681 = vpop.f32.mrf.mxu0
        %v1682 = vadd.f32 0.0, %v1681
        %1683 = vmatmul.bf16.gmra.mxu0 %v1596
        %v1684 = vpop.f32.mrf.mxu0
        %v1685 = vadd.f32 0.0, %v1684
        %v1686 = vpop.f32.mrf.mxu0
        %v1687 = vadd.f32 0.0, %v1686
        %1688 = vmatmul.bf16.gmra.mxu0 %v1599
        %v1689 = vpop.f32.mrf.mxu0
        %v1690 = vadd.f32 0.0, %v1689
        %v1691 = vpop.f32.mrf.mxu0
        %v1692 = vadd.f32 0.0, %v1691
        %1693 = vmatmul.bf16.gmra.mxu0 %v1602
        %v1694 = vpop.f32.mrf.mxu0
        %v1695 = vadd.f32 0.0, %v1694
        %v1696 = vpop.f32.mrf.mxu0
        %v1697 = vadd.f32 0.0, %v1696
        %1698 = vmatmul.bf16.gmra.mxu0 %v1605
        %v1699 = vpop.f32.mrf.mxu0
        %v1700 = vadd.f32 0.0, %v1699
        %v1701 = vpop.f32.mrf.mxu0
        %1702 = vdwg.mxu0
        %v1703 = vadd.f32 %v1468, %v1620
        %v1704 = vadd.f32 %v1469, %v1622
        %v1705 = vadd.f32 %v1470, %v1625
        %v1706 = vadd.f32 %v1471, %v1627
        %v1707 = vadd.f32 %v1472, %v1630
        %v1708 = vadd.f32 %v1473, %v1632
        %v1709 = vadd.f32 %v1474, %v1635
        %v1710 = vadd.f32 %v1475, %v1637
        %v1711 = vadd.f32 %v1476, %v1640
        %v1712 = vadd.f32 %v1477, %v1642
        %v1713 = vadd.f32 %v1478, %v1645
        %v1714 = vadd.f32 %v1479, %v1647
        %v1715 = vadd.f32 %v1480, %v1650
        %v1716 = vadd.f32 %v1481, %v1652
        %v1717 = vadd.f32 %v1482, %v1655
        %v1718 = vadd.f32 %v1483, %v1657
        %v1719 = vadd.f32 %v1484, %v1660
        %v1720 = vadd.f32 %v1485, %v1662
        %v1721 = vadd.f32 %v1486, %v1665
        %v1722 = vadd.f32 %v1487, %v1667
        %v1723 = vadd.f32 %v1488, %v1670
        %v1724 = vadd.f32 %v1489, %v1672
        %v1725 = vadd.f32 %v1490, %v1675
        %v1726 = vadd.f32 %v1491, %v1677
        %v1727 = vadd.f32 %v1492, %v1680
        %v1728 = vadd.f32 %v1493, %v1682
        %v1729 = vadd.f32 %v1494, %v1685
        %v1730 = vadd.f32 %v1495, %v1687
        %v1731 = vadd.f32 %v1496, %v1690
        %v1732 = vadd.f32 %v1497, %v1692
        %v1733 = vadd.f32 %v1498, %v1695
        %v1734 = vadd.f32 %v1499, %v1697
        %v1735 = vadd.f32 %v1500, %v1700
        %s1736 = scalar_lea.vmem %s1, 48
        %v1737 = vld [vmem:[%s1736] sm:$0xff]
        %v1738 = vmul.f32 %v1737, %v382
        %v1739 = vmul.f32 %v1738, %v386
        %v1740 = vpack.c.bf16 %v1739, %v1739
        %s1741 = sadd.s32 %s375, 2
        %s1742 = smul.u32 %s1741, 32
        %s1743 = scalar_lea.vmem %s348, %s1742
        %v1744 = vld [vmem:[%s1743] sm:$0xff]
        %v1745 = vld [vmem:[%s1743 + $0x8] sm:$0xff]
        %v1746 = vld [vmem:[%s1743 + $0x10] sm:$0xff]
        %v1747 = vld [vmem:[%s1743 + $0x20] sm:$0xff]
        %v1748 = vld [vmem:[%s1743 + $0x28] sm:$0xff]
        %v1749 = vld [vmem:[%s1743 + $0x30] sm:$0xff]
        %v1750 = vld [vmem:[%s1743 + $0x40] sm:$0xff]
        %v1751 = vld [vmem:[%s1743 + $0x48] sm:$0xff]
        %v1752 = vld [vmem:[%s1743 + $0x50] sm:$0xff]
        %v1753 = vld [vmem:[%s1743 + $0x60] sm:$0xff]
        %v1754 = vld [vmem:[%s1743 + $0x68] sm:$0xff]
        %v1755 = vld [vmem:[%s1743 + $0x70] sm:$0xff]
        %v1756 = vld [vmem:[%s1743 + $0x80] sm:$0xff]
        %v1757 = vld [vmem:[%s1743 + $0x88] sm:$0xff]
        %v1758 = vld [vmem:[%s1743 + $0x90] sm:$0xff]
        %v1759 = vld [vmem:[%s1743 + $0xa0] sm:$0xff]
        %v1760 = vld [vmem:[%s1743 + $0xa8] sm:$0xff]
        %v1761 = vld [vmem:[%s1743 + $0xb0] sm:$0xff]
        %v1762 = vld [vmem:[%s1743 + $0xc0] sm:$0xff]
        %v1763 = vld [vmem:[%s1743 + $0xc8] sm:$0xff]
        %v1764 = vld [vmem:[%s1743 + $0xd0] sm:$0xff]
        %v1765 = vld [vmem:[%s1743 + $0xe0] sm:$0xff]
        %v1766 = vld [vmem:[%s1743 + $0xe8] sm:$0xff]
        %v1767 = vld [vmem:[%s1743 + $0xf0] sm:$0xff]
        %v1768 = vld [vmem:[%s1743 + $0x100] sm:$0xff]
        %v1769 = vld [vmem:[%s1743 + $0x108] sm:$0xff]
        %v1770 = vld [vmem:[%s1743 + $0x110] sm:$0xff]
        %v1771 = vld [vmem:[%s1743 + $0x120] sm:$0xff]
        %v1772 = vld [vmem:[%s1743 + $0x128] sm:$0xff]
        %v1773 = vld [vmem:[%s1743 + $0x130] sm:$0xff]
        %v1774 = vld [vmem:[%s1743 + $0x140] sm:$0xff]
        %v1775 = vld [vmem:[%s1743 + $0x148] sm:$0xff]
        %v1776 = vld [vmem:[%s1743 + $0x150] sm:$0xff]
        %v1777 = vpack.c.bf16 %v1745, %v1744
        %v1778 = vpack.c.bf16 %v1747, %v1746
        %v1779 = vpack.c.bf16 %v1749, %v1748
        %v1780 = vpack.c.bf16 %v1751, %v1750
        %v1781 = vpack.c.bf16 %v1753, %v1752
        %v1782 = vpack.c.bf16 %v1755, %v1754
        %v1783 = vpack.c.bf16 %v1757, %v1756
        %v1784 = vpack.c.bf16 %v1759, %v1758
        %v1785 = vpack.c.bf16 %v1761, %v1760
        %v1786 = vpack.c.bf16 %v1763, %v1762
        %v1787 = vpack.c.bf16 %v1765, %v1764
        %v1788 = vpack.c.bf16 %v1767, %v1766
        %v1789 = vpack.c.bf16 %v1769, %v1768
        %v1790 = vpack.c.bf16 %v1771, %v1770
        %v1791 = vpack.c.bf16 %v1773, %v1772
        %v1792 = vpack.c.bf16 %v1775, %v1774
        %v1793 = vpack.c.bf16 %v1776, %v1776
        %v1795 = vsel %vm497, %v1777, 0
        %v1798 = vsel %vm497, %v1778, 0
        %v1801 = vsel %vm497, %v1779, 0
        %v1804 = vsel %vm497, %v1780, 0
        %v1807 = vsel %vm497, %v1781, 0
        %v1810 = vsel %vm497, %v1782, 0
        %v1813 = vsel %vm497, %v1783, 0
        %v1816 = vsel %vm497, %v1784, 0
        %v1819 = vsel %vm497, %v1785, 0
        %v1822 = vsel %vm497, %v1786, 0
        %v1825 = vsel %vm497, %v1787, 0
        %v1828 = vsel %vm497, %v1788, 0
        %v1831 = vsel %vm497, %v1789, 0
        %v1834 = vsel %vm497, %v1790, 0
        %v1837 = vsel %vm497, %v1791, 0
        %v1840 = vsel %vm497, %v1792, 0
        %v1843 = vsel %vm497, %v1793, 0
        %v1846 = vsel %vm549, %v1740, 0
        %1848 = vmatpush.bf16.msra.mxu0 0
        %1849 = vmatpush.bf16.msra.mxu0 0
        %1850 = vmatpush.bf16.msra.mxu0 0
        %1851 = vmatpush.bf16.msra.mxu0 0
        %1852 = vmatpush.bf16.msra.mxu0 0
        %1853 = vmatpush.bf16.msra.mxu0 0
        %1854 = vmatpush.bf16.msra.mxu0 0
        %1855 = vmatpush.bf16.msra.mxu0 %v1846
        %1856 = vmatmul.bf16.gmra.mxu0 %v1795
        %v1857 = vpop.f32.mrf.mxu0
        %v1858 = vadd.f32 0.0, %v1857
        %v1859 = vpop.f32.mrf.mxu0
        %v1860 = vadd.f32 0.0, %v1859
        %1861 = vmatmul.bf16.gmra.mxu0 %v1798
        %v1862 = vpop.f32.mrf.mxu0
        %v1863 = vadd.f32 0.0, %v1862
        %v1864 = vpop.f32.mrf.mxu0
        %v1865 = vadd.f32 0.0, %v1864
        %1866 = vmatmul.bf16.gmra.mxu0 %v1801
        %v1867 = vpop.f32.mrf.mxu0
        %v1868 = vadd.f32 0.0, %v1867
        %v1869 = vpop.f32.mrf.mxu0
        %v1870 = vadd.f32 0.0, %v1869
        %1871 = vmatmul.bf16.gmra.mxu0 %v1804
        %v1872 = vpop.f32.mrf.mxu0
        %v1873 = vadd.f32 0.0, %v1872
        %v1874 = vpop.f32.mrf.mxu0
        %v1875 = vadd.f32 0.0, %v1874
        %1876 = vmatmul.bf16.gmra.mxu0 %v1807
        %v1877 = vpop.f32.mrf.mxu0
        %v1878 = vadd.f32 0.0, %v1877
        %v1879 = vpop.f32.mrf.mxu0
        %v1880 = vadd.f32 0.0, %v1879
        %1881 = vmatmul.bf16.gmra.mxu0 %v1810
        %v1882 = vpop.f32.mrf.mxu0
        %v1883 = vadd.f32 0.0, %v1882
        %v1884 = vpop.f32.mrf.mxu0
        %v1885 = vadd.f32 0.0, %v1884
        %1886 = vmatmul.bf16.gmra.mxu0 %v1813
        %v1887 = vpop.f32.mrf.mxu0
        %v1888 = vadd.f32 0.0, %v1887
        %v1889 = vpop.f32.mrf.mxu0
        %v1890 = vadd.f32 0.0, %v1889
        %1891 = vmatmul.bf16.gmra.mxu0 %v1816
        %v1892 = vpop.f32.mrf.mxu0
        %v1893 = vadd.f32 0.0, %v1892
        %v1894 = vpop.f32.mrf.mxu0
        %v1895 = vadd.f32 0.0, %v1894
        %1896 = vmatmul.bf16.gmra.mxu0 %v1819
        %v1897 = vpop.f32.mrf.mxu0
        %v1898 = vadd.f32 0.0, %v1897
        %v1899 = vpop.f32.mrf.mxu0
        %v1900 = vadd.f32 0.0, %v1899
        %1901 = vmatmul.bf16.gmra.mxu0 %v1822
        %v1902 = vpop.f32.mrf.mxu0
        %v1903 = vadd.f32 0.0, %v1902
        %v1904 = vpop.f32.mrf.mxu0
        %v1905 = vadd.f32 0.0, %v1904
        %1906 = vmatmul.bf16.gmra.mxu0 %v1825
        %v1907 = vpop.f32.mrf.mxu0
        %v1908 = vadd.f32 0.0, %v1907
        %v1909 = vpop.f32.mrf.mxu0
        %v1910 = vadd.f32 0.0, %v1909
        %1911 = vmatmul.bf16.gmra.mxu0 %v1828
        %v1912 = vpop.f32.mrf.mxu0
        %v1913 = vadd.f32 0.0, %v1912
        %v1914 = vpop.f32.mrf.mxu0
        %v1915 = vadd.f32 0.0, %v1914
        %1916 = vmatmul.bf16.gmra.mxu0 %v1831
        %v1917 = vpop.f32.mrf.mxu0
        %v1918 = vadd.f32 0.0, %v1917
        %v1919 = vpop.f32.mrf.mxu0
        %v1920 = vadd.f32 0.0, %v1919
        %1921 = vmatmul.bf16.gmra.mxu0 %v1834
        %v1922 = vpop.f32.mrf.mxu0
        %v1923 = vadd.f32 0.0, %v1922
        %v1924 = vpop.f32.mrf.mxu0
        %v1925 = vadd.f32 0.0, %v1924
        %1926 = vmatmul.bf16.gmra.mxu0 %v1837
        %v1927 = vpop.f32.mrf.mxu0
        %v1928 = vadd.f32 0.0, %v1927
        %v1929 = vpop.f32.mrf.mxu0
        %v1930 = vadd.f32 0.0, %v1929
        %1931 = vmatmul.bf16.gmra.mxu0 %v1840
        %v1932 = vpop.f32.mrf.mxu0
        %v1933 = vadd.f32 0.0, %v1932
        %v1934 = vpop.f32.mrf.mxu0
        %v1935 = vadd.f32 0.0, %v1934
        %1936 = vmatmul.bf16.gmra.mxu0 %v1843
        %v1937 = vpop.f32.mrf.mxu0
        %v1938 = vadd.f32 0.0, %v1937
        %v1939 = vpop.f32.mrf.mxu0
        %1940 = vdwg.mxu0
        %v1941 = vadd.f32 %v1703, %v1858
        %v1942 = vadd.f32 %v1704, %v1860
        %v1943 = vadd.f32 %v1705, %v1863
        %v1944 = vadd.f32 %v1706, %v1865
        %v1945 = vadd.f32 %v1707, %v1868
        %v1946 = vadd.f32 %v1708, %v1870
        %v1947 = vadd.f32 %v1709, %v1873
        %v1948 = vadd.f32 %v1710, %v1875
        %v1949 = vadd.f32 %v1711, %v1878
        %v1950 = vadd.f32 %v1712, %v1880
        %v1951 = vadd.f32 %v1713, %v1883
        %v1952 = vadd.f32 %v1714, %v1885
        %v1953 = vadd.f32 %v1715, %v1888
        %v1954 = vadd.f32 %v1716, %v1890
        %v1955 = vadd.f32 %v1717, %v1893
        %v1956 = vadd.f32 %v1718, %v1895
        %v1957 = vadd.f32 %v1719, %v1898
        %v1958 = vadd.f32 %v1720, %v1900
        %v1959 = vadd.f32 %v1721, %v1903
        %v1960 = vadd.f32 %v1722, %v1905
        %v1961 = vadd.f32 %v1723, %v1908
        %v1962 = vadd.f32 %v1724, %v1910
        %v1963 = vadd.f32 %v1725, %v1913
        %v1964 = vadd.f32 %v1726, %v1915
        %v1965 = vadd.f32 %v1727, %v1918
        %v1966 = vadd.f32 %v1728, %v1920
        %v1967 = vadd.f32 %v1729, %v1923
        %v1968 = vadd.f32 %v1730, %v1925
        %v1969 = vadd.f32 %v1731, %v1928
        %v1970 = vadd.f32 %v1732, %v1930
        %v1971 = vadd.f32 %v1733, %v1933
        %v1972 = vadd.f32 %v1734, %v1935
        %v1973 = vadd.f32 %v1735, %v1938
        %s1974 = scalar_lea.vmem %s1, 56
        %v1975 = vld [vmem:[%s1974] sm:$0xff]
        %v1976 = vmul.f32 %v1975, %v382
        %v1977 = vmul.f32 %v1976, %v386
        %v1978 = vpack.c.bf16 %v1977, %v1977
        %v1979 = vld [vmem:[%s1743 + $0x1] sm:$0xff]
        %v1980 = vld [vmem:[%s1743 + $0x9] sm:$0xff]
        %v1981 = vld [vmem:[%s1743 + $0x11] sm:$0xff]
        %v1982 = vld [vmem:[%s1743 + $0x21] sm:$0xff]
        %v1983 = vld [vmem:[%s1743 + $0x29] sm:$0xff]
        %v1984 = vld [vmem:[%s1743 + $0x31] sm:$0xff]
        %v1985 = vld [vmem:[%s1743 + $0x41] sm:$0xff]
        %v1986 = vld [vmem:[%s1743 + $0x49] sm:$0xff]
        %v1987 = vld [vmem:[%s1743 + $0x51] sm:$0xff]
        %v1988 = vld [vmem:[%s1743 + $0x61] sm:$0xff]
        %v1989 = vld [vmem:[%s1743 + $0x69] sm:$0xff]
        %v1990 = vld [vmem:[%s1743 + $0x71] sm:$0xff]
        %v1991 = vld [vmem:[%s1743 + $0x81] sm:$0xff]
        %v1992 = vld [vmem:[%s1743 + $0x89] sm:$0xff]
        %v1993 = vld [vmem:[%s1743 + $0x91] sm:$0xff]
        %v1994 = vld [vmem:[%s1743 + $0xa1] sm:$0xff]
        %v1995 = vld [vmem:[%s1743 + $0xa9] sm:$0xff]
        %v1996 = vld [vmem:[%s1743 + $0xb1] sm:$0xff]
        %v1997 = vld [vmem:[%s1743 + $0xc1] sm:$0xff]
        %v1998 = vld [vmem:[%s1743 + $0xc9] sm:$0xff]
        %v1999 = vld [vmem:[%s1743 + $0xd1] sm:$0xff]
        %v2000 = vld [vmem:[%s1743 + $0xe1] sm:$0xff]
        %v2001 = vld [vmem:[%s1743 + $0xe9] sm:$0xff]
        %v2002 = vld [vmem:[%s1743 + $0xf1] sm:$0xff]
        %v2003 = vld [vmem:[%s1743 + $0x101] sm:$0xff]
        %v2004 = vld [vmem:[%s1743 + $0x109] sm:$0xff]
        %v2005 = vld [vmem:[%s1743 + $0x111] sm:$0xff]
        %v2006 = vld [vmem:[%s1743 + $0x121] sm:$0xff]
        %v2007 = vld [vmem:[%s1743 + $0x129] sm:$0xff]
        %v2008 = vld [vmem:[%s1743 + $0x131] sm:$0xff]
        %v2009 = vld [vmem:[%s1743 + $0x141] sm:$0xff]
        %v2010 = vld [vmem:[%s1743 + $0x149] sm:$0xff]
        %v2011 = vld [vmem:[%s1743 + $0x151] sm:$0xff]
        %v2012 = vpack.c.bf16 %v1980, %v1979
        %v2013 = vpack.c.bf16 %v1982, %v1981
        %v2014 = vpack.c.bf16 %v1984, %v1983
        %v2015 = vpack.c.bf16 %v1986, %v1985
        %v2016 = vpack.c.bf16 %v1988, %v1987
        %v2017 = vpack.c.bf16 %v1990, %v1989
        %v2018 = vpack.c.bf16 %v1992, %v1991
        %v2019 = vpack.c.bf16 %v1994, %v1993
        %v2020 = vpack.c.bf16 %v1996, %v1995
        %v2021 = vpack.c.bf16 %v1998, %v1997
        %v2022 = vpack.c.bf16 %v2000, %v1999
        %v2023 = vpack.c.bf16 %v2002, %v2001
        %v2024 = vpack.c.bf16 %v2004, %v2003
        %v2025 = vpack.c.bf16 %v2006, %v2005
        %v2026 = vpack.c.bf16 %v2008, %v2007
        %v2027 = vpack.c.bf16 %v2010, %v2009
        %v2028 = vpack.c.bf16 %v2011, %v2011
        %v2030 = vsel %vm497, %v2012, 0
        %v2033 = vsel %vm497, %v2013, 0
        %v2036 = vsel %vm497, %v2014, 0
        %v2039 = vsel %vm497, %v2015, 0
        %v2042 = vsel %vm497, %v2016, 0
        %v2045 = vsel %vm497, %v2017, 0
        %v2048 = vsel %vm497, %v2018, 0
        %v2051 = vsel %vm497, %v2019, 0
        %v2054 = vsel %vm497, %v2020, 0
        %v2057 = vsel %vm497, %v2021, 0
        %v2060 = vsel %vm497, %v2022, 0
        %v2063 = vsel %vm497, %v2023, 0
        %v2066 = vsel %vm497, %v2024, 0
        %v2069 = vsel %vm497, %v2025, 0
        %v2072 = vsel %vm497, %v2026, 0
        %v2075 = vsel %vm497, %v2027, 0
        %v2078 = vsel %vm497, %v2028, 0
        %v2081 = vsel %vm549, %v1978, 0
        %2083 = vmatpush.bf16.msra.mxu0 0
        %2084 = vmatpush.bf16.msra.mxu0 0
        %2085 = vmatpush.bf16.msra.mxu0 0
        %2086 = vmatpush.bf16.msra.mxu0 0
        %2087 = vmatpush.bf16.msra.mxu0 0
        %2088 = vmatpush.bf16.msra.mxu0 0
        %2089 = vmatpush.bf16.msra.mxu0 0
        %2090 = vmatpush.bf16.msra.mxu0 %v2081
        %2091 = vmatmul.bf16.gmra.mxu0 %v2030
        %v2092 = vpop.f32.mrf.mxu0
        %v2093 = vadd.f32 0.0, %v2092
        %v2094 = vpop.f32.mrf.mxu0
        %v2095 = vadd.f32 0.0, %v2094
        %2096 = vmatmul.bf16.gmra.mxu0 %v2033
        %v2097 = vpop.f32.mrf.mxu0
        %v2098 = vadd.f32 0.0, %v2097
        %v2099 = vpop.f32.mrf.mxu0
        %v2100 = vadd.f32 0.0, %v2099
        %2101 = vmatmul.bf16.gmra.mxu0 %v2036
        %v2102 = vpop.f32.mrf.mxu0
        %v2103 = vadd.f32 0.0, %v2102
        %v2104 = vpop.f32.mrf.mxu0
        %v2105 = vadd.f32 0.0, %v2104
        %2106 = vmatmul.bf16.gmra.mxu0 %v2039
        %v2107 = vpop.f32.mrf.mxu0
        %v2108 = vadd.f32 0.0, %v2107
        %v2109 = vpop.f32.mrf.mxu0
        %v2110 = vadd.f32 0.0, %v2109
        %2111 = vmatmul.bf16.gmra.mxu0 %v2042
        %v2112 = vpop.f32.mrf.mxu0
        %v2113 = vadd.f32 0.0, %v2112
        %v2114 = vpop.f32.mrf.mxu0
        %v2115 = vadd.f32 0.0, %v2114
        %2116 = vmatmul.bf16.gmra.mxu0 %v2045
        %v2117 = vpop.f32.mrf.mxu0
        %v2118 = vadd.f32 0.0, %v2117
        %v2119 = vpop.f32.mrf.mxu0
        %v2120 = vadd.f32 0.0, %v2119
        %2121 = vmatmul.bf16.gmra.mxu0 %v2048
        %v2122 = vpop.f32.mrf.mxu0
        %v2123 = vadd.f32 0.0, %v2122
        %v2124 = vpop.f32.mrf.mxu0
        %v2125 = vadd.f32 0.0, %v2124
        %2126 = vmatmul.bf16.gmra.mxu0 %v2051
        %v2127 = vpop.f32.mrf.mxu0
        %v2128 = vadd.f32 0.0, %v2127
        %v2129 = vpop.f32.mrf.mxu0
        %v2130 = vadd.f32 0.0, %v2129
        %2131 = vmatmul.bf16.gmra.mxu0 %v2054
        %v2132 = vpop.f32.mrf.mxu0
        %v2133 = vadd.f32 0.0, %v2132
        %v2134 = vpop.f32.mrf.mxu0
        %v2135 = vadd.f32 0.0, %v2134
        %2136 = vmatmul.bf16.gmra.mxu0 %v2057
        %v2137 = vpop.f32.mrf.mxu0
        %v2138 = vadd.f32 0.0, %v2137
        %v2139 = vpop.f32.mrf.mxu0
        %v2140 = vadd.f32 0.0, %v2139
        %2141 = vmatmul.bf16.gmra.mxu0 %v2060
        %v2142 = vpop.f32.mrf.mxu0
        %v2143 = vadd.f32 0.0, %v2142
        %v2144 = vpop.f32.mrf.mxu0
        %v2145 = vadd.f32 0.0, %v2144
        %2146 = vmatmul.bf16.gmra.mxu0 %v2063
        %v2147 = vpop.f32.mrf.mxu0
        %v2148 = vadd.f32 0.0, %v2147
        %v2149 = vpop.f32.mrf.mxu0
        %v2150 = vadd.f32 0.0, %v2149
        %2151 = vmatmul.bf16.gmra.mxu0 %v2066
        %v2152 = vpop.f32.mrf.mxu0
        %v2153 = vadd.f32 0.0, %v2152
        %v2154 = vpop.f32.mrf.mxu0
        %v2155 = vadd.f32 0.0, %v2154
        %2156 = vmatmul.bf16.gmra.mxu0 %v2069
        %v2157 = vpop.f32.mrf.mxu0
        %v2158 = vadd.f32 0.0, %v2157
        %v2159 = vpop.f32.mrf.mxu0
        %v2160 = vadd.f32 0.0, %v2159
        %2161 = vmatmul.bf16.gmra.mxu0 %v2072
        %v2162 = vpop.f32.mrf.mxu0
        %v2163 = vadd.f32 0.0, %v2162
        %v2164 = vpop.f32.mrf.mxu0
        %v2165 = vadd.f32 0.0, %v2164
        %2166 = vmatmul.bf16.gmra.mxu0 %v2075
        %v2167 = vpop.f32.mrf.mxu0
        %v2168 = vadd.f32 0.0, %v2167
        %v2169 = vpop.f32.mrf.mxu0
        %v2170 = vadd.f32 0.0, %v2169
        %2171 = vmatmul.bf16.gmra.mxu0 %v2078
        %v2172 = vpop.f32.mrf.mxu0
        %v2173 = vadd.f32 0.0, %v2172
        %v2174 = vpop.f32.mrf.mxu0
        %2175 = vdwg.mxu0
        %v2176 = vadd.f32 %v1941, %v2093
        %v2177 = vadd.f32 %v1942, %v2095
        %v2178 = vadd.f32 %v1943, %v2098
        %v2179 = vadd.f32 %v1944, %v2100
        %v2180 = vadd.f32 %v1945, %v2103
        %v2181 = vadd.f32 %v1946, %v2105
        %v2182 = vadd.f32 %v1947, %v2108
        %v2183 = vadd.f32 %v1948, %v2110
        %v2184 = vadd.f32 %v1949, %v2113
        %v2185 = vadd.f32 %v1950, %v2115
        %v2186 = vadd.f32 %v1951, %v2118
        %v2187 = vadd.f32 %v1952, %v2120
        %v2188 = vadd.f32 %v1953, %v2123
        %v2189 = vadd.f32 %v1954, %v2125
        %v2190 = vadd.f32 %v1955, %v2128
        %v2191 = vadd.f32 %v1956, %v2130
        %v2192 = vadd.f32 %v1957, %v2133
        %v2193 = vadd.f32 %v1958, %v2135
        %v2194 = vadd.f32 %v1959, %v2138
        %v2195 = vadd.f32 %v1960, %v2140
        %v2196 = vadd.f32 %v1961, %v2143
        %v2197 = vadd.f32 %v1962, %v2145
        %v2198 = vadd.f32 %v1963, %v2148
        %v2199 = vadd.f32 %v1964, %v2150
        %v2200 = vadd.f32 %v1965, %v2153
        %v2201 = vadd.f32 %v1966, %v2155
        %v2202 = vadd.f32 %v1967, %v2158
        %v2203 = vadd.f32 %v1968, %v2160
        %v2204 = vadd.f32 %v1969, %v2163
        %v2205 = vadd.f32 %v1970, %v2165
        %v2206 = vadd.f32 %v1971, %v2168
        %v2207 = vadd.f32 %v1972, %v2170
        %v2208 = vadd.f32 %v1973, %v2173
        %s2209 = scalar_lea.vmem %s1, 64
        %v2210 = vld [vmem:[%s2209] sm:$0xff]
        %v2211 = vmul.f32 %v2210, %v382
        %v2212 = vmul.f32 %v2211, %v386
        %v2213 = vpack.c.bf16 %v2212, %v2212
        %v2214 = vld [vmem:[%s1743 + $0x2] sm:$0xff]
        %v2215 = vld [vmem:[%s1743 + $0xa] sm:$0xff]
        %v2216 = vld [vmem:[%s1743 + $0x12] sm:$0xff]
        %v2217 = vld [vmem:[%s1743 + $0x22] sm:$0xff]
        %v2218 = vld [vmem:[%s1743 + $0x2a] sm:$0xff]
        %v2219 = vld [vmem:[%s1743 + $0x32] sm:$0xff]
        %v2220 = vld [vmem:[%s1743 + $0x42] sm:$0xff]
        %v2221 = vld [vmem:[%s1743 + $0x4a] sm:$0xff]
        %v2222 = vld [vmem:[%s1743 + $0x52] sm:$0xff]
        %v2223 = vld [vmem:[%s1743 + $0x62] sm:$0xff]
        %v2224 = vld [vmem:[%s1743 + $0x6a] sm:$0xff]
        %v2225 = vld [vmem:[%s1743 + $0x72] sm:$0xff]
        %v2226 = vld [vmem:[%s1743 + $0x82] sm:$0xff]
        %v2227 = vld [vmem:[%s1743 + $0x8a] sm:$0xff]
        %v2228 = vld [vmem:[%s1743 + $0x92] sm:$0xff]
        %v2229 = vld [vmem:[%s1743 + $0xa2] sm:$0xff]
        %v2230 = vld [vmem:[%s1743 + $0xaa] sm:$0xff]
        %v2231 = vld [vmem:[%s1743 + $0xb2] sm:$0xff]
        %v2232 = vld [vmem:[%s1743 + $0xc2] sm:$0xff]
        %v2233 = vld [vmem:[%s1743 + $0xca] sm:$0xff]
        %v2234 = vld [vmem:[%s1743 + $0xd2] sm:$0xff]
        %v2235 = vld [vmem:[%s1743 + $0xe2] sm:$0xff]
        %v2236 = vld [vmem:[%s1743 + $0xea] sm:$0xff]
        %v2237 = vld [vmem:[%s1743 + $0xf2] sm:$0xff]
        %v2238 = vld [vmem:[%s1743 + $0x102] sm:$0xff]
        %v2239 = vld [vmem:[%s1743 + $0x10a] sm:$0xff]
        %v2240 = vld [vmem:[%s1743 + $0x112] sm:$0xff]
        %v2241 = vld [vmem:[%s1743 + $0x122] sm:$0xff]
        %v2242 = vld [vmem:[%s1743 + $0x12a] sm:$0xff]
        %v2243 = vld [vmem:[%s1743 + $0x132] sm:$0xff]
        %v2244 = vld [vmem:[%s1743 + $0x142] sm:$0xff]
        %v2245 = vld [vmem:[%s1743 + $0x14a] sm:$0xff]
        %v2246 = vld [vmem:[%s1743 + $0x152] sm:$0xff]
        %v2247 = vpack.c.bf16 %v2215, %v2214
        %v2248 = vpack.c.bf16 %v2217, %v2216
        %v2249 = vpack.c.bf16 %v2219, %v2218
        %v2250 = vpack.c.bf16 %v2221, %v2220
        %v2251 = vpack.c.bf16 %v2223, %v2222
        %v2252 = vpack.c.bf16 %v2225, %v2224
        %v2253 = vpack.c.bf16 %v2227, %v2226
        %v2254 = vpack.c.bf16 %v2229, %v2228
        %v2255 = vpack.c.bf16 %v2231, %v2230
        %v2256 = vpack.c.bf16 %v2233, %v2232
        %v2257 = vpack.c.bf16 %v2235, %v2234
        %v2258 = vpack.c.bf16 %v2237, %v2236
        %v2259 = vpack.c.bf16 %v2239, %v2238
        %v2260 = vpack.c.bf16 %v2241, %v2240
        %v2261 = vpack.c.bf16 %v2243, %v2242
        %v2262 = vpack.c.bf16 %v2245, %v2244
        %v2263 = vpack.c.bf16 %v2246, %v2246
        %v2265 = vsel %vm497, %v2247, 0
        %v2268 = vsel %vm497, %v2248, 0
        %v2271 = vsel %vm497, %v2249, 0
        %v2274 = vsel %vm497, %v2250, 0
        %v2277 = vsel %vm497, %v2251, 0
        %v2280 = vsel %vm497, %v2252, 0
        %v2283 = vsel %vm497, %v2253, 0
        %v2286 = vsel %vm497, %v2254, 0
        %v2289 = vsel %vm497, %v2255, 0
        %v2292 = vsel %vm497, %v2256, 0
        %v2295 = vsel %vm497, %v2257, 0
        %v2298 = vsel %vm497, %v2258, 0
        %v2301 = vsel %vm497, %v2259, 0
        %v2304 = vsel %vm497, %v2260, 0
        %v2307 = vsel %vm497, %v2261, 0
        %v2310 = vsel %vm497, %v2262, 0
        %v2313 = vsel %vm497, %v2263, 0
        %v2316 = vsel %vm549, %v2213, 0
        %2318 = vmatpush.bf16.msra.mxu0 0
        %2319 = vmatpush.bf16.msra.mxu0 0
        %2320 = vmatpush.bf16.msra.mxu0 0
        %2321 = vmatpush.bf16.msra.mxu0 0
        %2322 = vmatpush.bf16.msra.mxu0 0
        %2323 = vmatpush.bf16.msra.mxu0 0
        %2324 = vmatpush.bf16.msra.mxu0 0
        %2325 = vmatpush.bf16.msra.mxu0 %v2316
        %2326 = vmatmul.bf16.gmra.mxu0 %v2265
        %v2327 = vpop.f32.mrf.mxu0
        %v2328 = vadd.f32 0.0, %v2327
        %v2329 = vpop.f32.mrf.mxu0
        %v2330 = vadd.f32 0.0, %v2329
        %2331 = vmatmul.bf16.gmra.mxu0 %v2268
        %v2332 = vpop.f32.mrf.mxu0
        %v2333 = vadd.f32 0.0, %v2332
        %v2334 = vpop.f32.mrf.mxu0
        %v2335 = vadd.f32 0.0, %v2334
        %2336 = vmatmul.bf16.gmra.mxu0 %v2271
        %v2337 = vpop.f32.mrf.mxu0
        %v2338 = vadd.f32 0.0, %v2337
        %v2339 = vpop.f32.mrf.mxu0
        %v2340 = vadd.f32 0.0, %v2339
        %2341 = vmatmul.bf16.gmra.mxu0 %v2274
        %v2342 = vpop.f32.mrf.mxu0
        %v2343 = vadd.f32 0.0, %v2342
        %v2344 = vpop.f32.mrf.mxu0
        %v2345 = vadd.f32 0.0, %v2344
        %2346 = vmatmul.bf16.gmra.mxu0 %v2277
        %v2347 = vpop.f32.mrf.mxu0
        %v2348 = vadd.f32 0.0, %v2347
        %v2349 = vpop.f32.mrf.mxu0
        %v2350 = vadd.f32 0.0, %v2349
        %2351 = vmatmul.bf16.gmra.mxu0 %v2280
        %v2352 = vpop.f32.mrf.mxu0
        %v2353 = vadd.f32 0.0, %v2352
        %v2354 = vpop.f32.mrf.mxu0
        %v2355 = vadd.f32 0.0, %v2354
        %2356 = vmatmul.bf16.gmra.mxu0 %v2283
        %v2357 = vpop.f32.mrf.mxu0
        %v2358 = vadd.f32 0.0, %v2357
        %v2359 = vpop.f32.mrf.mxu0
        %v2360 = vadd.f32 0.0, %v2359
        %2361 = vmatmul.bf16.gmra.mxu0 %v2286
        %v2362 = vpop.f32.mrf.mxu0
        %v2363 = vadd.f32 0.0, %v2362
        %v2364 = vpop.f32.mrf.mxu0
        %v2365 = vadd.f32 0.0, %v2364
        %2366 = vmatmul.bf16.gmra.mxu0 %v2289
        %v2367 = vpop.f32.mrf.mxu0
        %v2368 = vadd.f32 0.0, %v2367
        %v2369 = vpop.f32.mrf.mxu0
        %v2370 = vadd.f32 0.0, %v2369
        %2371 = vmatmul.bf16.gmra.mxu0 %v2292
        %v2372 = vpop.f32.mrf.mxu0
        %v2373 = vadd.f32 0.0, %v2372
        %v2374 = vpop.f32.mrf.mxu0
        %v2375 = vadd.f32 0.0, %v2374
        %2376 = vmatmul.bf16.gmra.mxu0 %v2295
        %v2377 = vpop.f32.mrf.mxu0
        %v2378 = vadd.f32 0.0, %v2377
        %v2379 = vpop.f32.mrf.mxu0
        %v2380 = vadd.f32 0.0, %v2379
        %2381 = vmatmul.bf16.gmra.mxu0 %v2298
        %v2382 = vpop.f32.mrf.mxu0
        %v2383 = vadd.f32 0.0, %v2382
        %v2384 = vpop.f32.mrf.mxu0
        %v2385 = vadd.f32 0.0, %v2384
        %2386 = vmatmul.bf16.gmra.mxu0 %v2301
        %v2387 = vpop.f32.mrf.mxu0
        %v2388 = vadd.f32 0.0, %v2387
        %v2389 = vpop.f32.mrf.mxu0
        %v2390 = vadd.f32 0.0, %v2389
        %2391 = vmatmul.bf16.gmra.mxu0 %v2304
        %v2392 = vpop.f32.mrf.mxu0
        %v2393 = vadd.f32 0.0, %v2392
        %v2394 = vpop.f32.mrf.mxu0
        %v2395 = vadd.f32 0.0, %v2394
        %2396 = vmatmul.bf16.gmra.mxu0 %v2307
        %v2397 = vpop.f32.mrf.mxu0
        %v2398 = vadd.f32 0.0, %v2397
        %v2399 = vpop.f32.mrf.mxu0
        %v2400 = vadd.f32 0.0, %v2399
        %2401 = vmatmul.bf16.gmra.mxu0 %v2310
        %v2402 = vpop.f32.mrf.mxu0
        %v2403 = vadd.f32 0.0, %v2402
        %v2404 = vpop.f32.mrf.mxu0
        %v2405 = vadd.f32 0.0, %v2404
        %2406 = vmatmul.bf16.gmra.mxu0 %v2313
        %v2407 = vpop.f32.mrf.mxu0
        %v2408 = vadd.f32 0.0, %v2407
        %v2409 = vpop.f32.mrf.mxu0
        %2410 = vdwg.mxu0
        %v2411 = vadd.f32 %v2176, %v2328
        %v2412 = vadd.f32 %v2177, %v2330
        %v2413 = vadd.f32 %v2178, %v2333
        %v2414 = vadd.f32 %v2179, %v2335
        %v2415 = vadd.f32 %v2180, %v2338
        %v2416 = vadd.f32 %v2181, %v2340
        %v2417 = vadd.f32 %v2182, %v2343
        %v2418 = vadd.f32 %v2183, %v2345
        %v2419 = vadd.f32 %v2184, %v2348
        %v2420 = vadd.f32 %v2185, %v2350
        %v2421 = vadd.f32 %v2186, %v2353
        %v2422 = vadd.f32 %v2187, %v2355
        %v2423 = vadd.f32 %v2188, %v2358
        %v2424 = vadd.f32 %v2189, %v2360
        %v2425 = vadd.f32 %v2190, %v2363
        %v2426 = vadd.f32 %v2191, %v2365
        %v2427 = vadd.f32 %v2192, %v2368
        %v2428 = vadd.f32 %v2193, %v2370
        %v2429 = vadd.f32 %v2194, %v2373
        %v2430 = vadd.f32 %v2195, %v2375
        %v2431 = vadd.f32 %v2196, %v2378
        %v2432 = vadd.f32 %v2197, %v2380
        %v2433 = vadd.f32 %v2198, %v2383
        %v2434 = vadd.f32 %v2199, %v2385
        %v2435 = vadd.f32 %v2200, %v2388
        %v2436 = vadd.f32 %v2201, %v2390
        %v2437 = vadd.f32 %v2202, %v2393
        %v2438 = vadd.f32 %v2203, %v2395
        %v2439 = vadd.f32 %v2204, %v2398
        %v2440 = vadd.f32 %v2205, %v2400
        %v2441 = vadd.f32 %v2206, %v2403
        %v2442 = vadd.f32 %v2207, %v2405
        %v2443 = vadd.f32 %v2208, %v2408
        %2444 = vst.msk [vmem:[#allocation2] sm:$0xff] %vm497, %v2411
        %2445 = vst.msk [vmem:[#allocation2 + $0x8] sm:$0xff] %vm497, %v2412
        %2446 = vst.msk [vmem:[#allocation2 + $0x10] sm:$0xff] %vm497, %v2413
        %2447 = vst.msk [vmem:[#allocation2 + $0x18] sm:$0xff] %vm497, %v2414
        %2448 = vst.msk [vmem:[#allocation2 + $0x20] sm:$0xff] %vm497, %v2415
        %2449 = vst.msk [vmem:[#allocation2 + $0x28] sm:$0xff] %vm497, %v2416
        %2450 = vst.msk [vmem:[#allocation2 + $0x30] sm:$0xff] %vm497, %v2417
        %2451 = vst.msk [vmem:[#allocation2 + $0x38] sm:$0xff] %vm497, %v2418
        %2452 = vst.msk [vmem:[#allocation2 + $0x40] sm:$0xff] %vm497, %v2419
        %2453 = vst.msk [vmem:[#allocation2 + $0x48] sm:$0xff] %vm497, %v2420
        %2454 = vst.msk [vmem:[#allocation2 + $0x50] sm:$0xff] %vm497, %v2421
        %2455 = vst.msk [vmem:[#allocation2 + $0x58] sm:$0xff] %vm497, %v2422
        %2456 = vst.msk [vmem:[#allocation2 + $0x60] sm:$0xff] %vm497, %v2423
        %2457 = vst.msk [vmem:[#allocation2 + $0x68] sm:$0xff] %vm497, %v2424
        %2458 = vst.msk [vmem:[#allocation2 + $0x70] sm:$0xff] %vm497, %v2425
        %2459 = vst.msk [vmem:[#allocation2 + $0x78] sm:$0xff] %vm497, %v2426
        %2460 = vst.msk [vmem:[#allocation2 + $0x80] sm:$0xff] %vm497, %v2427
        %2461 = vst.msk [vmem:[#allocation2 + $0x88] sm:$0xff] %vm497, %v2428
        %2462 = vst.msk [vmem:[#allocation2 + $0x90] sm:$0xff] %vm497, %v2429
        %2463 = vst.msk [vmem:[#allocation2 + $0x98] sm:$0xff] %vm497, %v2430
        %2464 = vst.msk [vmem:[#allocation2 + $0xa0] sm:$0xff] %vm497, %v2431
        %2465 = vst.msk [vmem:[#allocation2 + $0xa8] sm:$0xff] %vm497, %v2432
        %2466 = vst.msk [vmem:[#allocation2 + $0xb0] sm:$0xff] %vm497, %v2433
        %2467 = vst.msk [vmem:[#allocation2 + $0xb8] sm:$0xff] %vm497, %v2434
        %2468 = vst.msk [vmem:[#allocation2 + $0xc0] sm:$0xff] %vm497, %v2435
        %2469 = vst.msk [vmem:[#allocation2 + $0xc8] sm:$0xff] %vm497, %v2436
        %2470 = vst.msk [vmem:[#allocation2 + $0xd0] sm:$0xff] %vm497, %v2437
        %2471 = vst.msk [vmem:[#allocation2 + $0xd8] sm:$0xff] %vm497, %v2438
        %2472 = vst.msk [vmem:[#allocation2 + $0xe0] sm:$0xff] %vm497, %v2439
        %2473 = vst.msk [vmem:[#allocation2 + $0xe8] sm:$0xff] %vm497, %v2440
        %2474 = vst.msk [vmem:[#allocation2 + $0xf0] sm:$0xff] %vm497, %v2441
        %2475 = vst.msk [vmem:[#allocation2 + $0xf8] sm:$0xff] %vm497, %v2442
        %2476 = vst.msk [vmem:[#allocation2 + $0x100] sm:$0xff] %vm497, %v2443
        %v2477 = vld [vmem:[#allocation2] sm:$0xff]
        %v2478 = vld [vmem:[#allocation2 + $0x8] sm:$0xff]
        %v2479 = vld [vmem:[#allocation2 + $0x18] sm:$0xff]
        %v2480 = vld [vmem:[#allocation2 + $0x20] sm:$0xff]
        %v2481 = vld [vmem:[#allocation2 + $0x30] sm:$0xff]
        %v2482 = vld [vmem:[#allocation2 + $0x38] sm:$0xff]
        %v2483 = vld [vmem:[#allocation2 + $0x48] sm:$0xff]
        %v2484 = vld [vmem:[#allocation2 + $0x50] sm:$0xff]
        %v2485 = vld [vmem:[#allocation2 + $0x60] sm:$0xff]
        %v2486 = vld [vmem:[#allocation2 + $0x68] sm:$0xff]
        %v2487 = vld [vmem:[#allocation2 + $0x78] sm:$0xff]
        %v2488 = vld [vmem:[#allocation2 + $0x80] sm:$0xff]
        %v2489 = vld [vmem:[#allocation2 + $0x90] sm:$0xff]
        %v2490 = vld [vmem:[#allocation2 + $0x98] sm:$0xff]
        %v2491 = vld [vmem:[#allocation2 + $0xa8] sm:$0xff]
        %v2492 = vld [vmem:[#allocation2 + $0xb0] sm:$0xff]
        %v2493 = vld [vmem:[#allocation2 + $0xc0] sm:$0xff]
        %v2494 = vld [vmem:[#allocation2 + $0xc8] sm:$0xff]
        %v2495 = vld [vmem:[#allocation2 + $0xd8] sm:$0xff]
        %v2496 = vld [vmem:[#allocation2 + $0xe0] sm:$0xff]
        %v2497 = vld [vmem:[#allocation2 + $0xf0] sm:$0xff]
        %v2498 = vld [vmem:[#allocation2 + $0xf8] sm:$0xff]
        %s2499 = sld [smem:[#allocation3]]
        %v2500 = vstv %s2499
        %v2501 = vmul.f32 %v2477, %v2500
        %v2502 = vmul.f32 %v2478, %v2500
        %v2503 = vmul.f32 %v2479, %v2500
        %v2504 = vmul.f32 %v2480, %v2500
        %v2505 = vmul.f32 %v2481, %v2500
        %v2506 = vmul.f32 %v2482, %v2500
        %v2507 = vmul.f32 %v2483, %v2500
        %v2508 = vmul.f32 %v2484, %v2500
        %v2509 = vmul.f32 %v2485, %v2500
        %v2510 = vmul.f32 %v2486, %v2500
        %v2511 = vmul.f32 %v2487, %v2500
        %v2512 = vmul.f32 %v2488, %v2500
        %v2513 = vmul.f32 %v2489, %v2500
        %v2514 = vmul.f32 %v2490, %v2500
        %v2515 = vmul.f32 %v2491, %v2500
        %v2516 = vmul.f32 %v2492, %v2500
        %v2517 = vmul.f32 %v2493, %v2500
        %v2518 = vmul.f32 %v2494, %v2500
        %v2519 = vmul.f32 %v2495, %v2500
        %v2520 = vmul.f32 %v2496, %v2500
        %v2521 = vmul.f32 %v2497, %v2500
        %v2522 = vmul.f32 %v2498, %v2500
        %v2523 = vld [vmem:[#allocation2 + $0x1] sm:$0xff]
        %v2524 = vld [vmem:[#allocation2 + $0x9] sm:$0xff]
        %v2525 = vld [vmem:[#allocation2 + $0x19] sm:$0xff]
        %v2526 = vld [vmem:[#allocation2 + $0x21] sm:$0xff]
        %v2527 = vld [vmem:[#allocation2 + $0x31] sm:$0xff]
        %v2528 = vld [vmem:[#allocation2 + $0x39] sm:$0xff]
        %v2529 = vld [vmem:[#allocation2 + $0x49] sm:$0xff]
        %v2530 = vld [vmem:[#allocation2 + $0x51] sm:$0xff]
        %v2531 = vld [vmem:[#allocation2 + $0x61] sm:$0xff]
        %v2532 = vld [vmem:[#allocation2 + $0x69] sm:$0xff]
        %v2533 = vld [vmem:[#allocation2 + $0x79] sm:$0xff]
        %v2534 = vld [vmem:[#allocation2 + $0x81] sm:$0xff]
        %v2535 = vld [vmem:[#allocation2 + $0x91] sm:$0xff]
        %v2536 = vld [vmem:[#allocation2 + $0x99] sm:$0xff]
        %v2537 = vld [vmem:[#allocation2 + $0xa9] sm:$0xff]
        %v2538 = vld [vmem:[#allocation2 + $0xb1] sm:$0xff]
        %v2539 = vld [vmem:[#allocation2 + $0xc1] sm:$0xff]
        %v2540 = vld [vmem:[#allocation2 + $0xc9] sm:$0xff]
        %v2541 = vld [vmem:[#allocation2 + $0xd9] sm:$0xff]
        %v2542 = vld [vmem:[#allocation2 + $0xe1] sm:$0xff]
        %v2543 = vld [vmem:[#allocation2 + $0xf1] sm:$0xff]
        %v2544 = vld [vmem:[#allocation2 + $0xf9] sm:$0xff]
        %s2545 = sld [smem:[#allocation3 + $0x1]]
        %v2546 = vstv %s2545
        %v2547 = vmul.f32 %v2523, %v2546
        %v2548 = vmul.f32 %v2524, %v2546
        %v2549 = vmul.f32 %v2525, %v2546
        %v2550 = vmul.f32 %v2526, %v2546
        %v2551 = vmul.f32 %v2527, %v2546
        %v2552 = vmul.f32 %v2528, %v2546
        %v2553 = vmul.f32 %v2529, %v2546
        %v2554 = vmul.f32 %v2530, %v2546
        %v2555 = vmul.f32 %v2531, %v2546
        %v2556 = vmul.f32 %v2532, %v2546
        %v2557 = vmul.f32 %v2533, %v2546
        %v2558 = vmul.f32 %v2534, %v2546
        %v2559 = vmul.f32 %v2535, %v2546
        %v2560 = vmul.f32 %v2536, %v2546
        %v2561 = vmul.f32 %v2537, %v2546
        %v2562 = vmul.f32 %v2538, %v2546
        %v2563 = vmul.f32 %v2539, %v2546
        %v2564 = vmul.f32 %v2540, %v2546
        %v2565 = vmul.f32 %v2541, %v2546
        %v2566 = vmul.f32 %v2542, %v2546
        %v2567 = vmul.f32 %v2543, %v2546
        %v2568 = vmul.f32 %v2544, %v2546
        %v2569 = vadd.f32 %v2501, %v2547
        %v2570 = vadd.f32 %v2502, %v2548
        %v2571 = vadd.f32 %v2503, %v2549
        %v2572 = vadd.f32 %v2504, %v2550
        %v2573 = vadd.f32 %v2505, %v2551
        %v2574 = vadd.f32 %v2506, %v2552
        %v2575 = vadd.f32 %v2507, %v2553
        %v2576 = vadd.f32 %v2508, %v2554
        %v2577 = vadd.f32 %v2509, %v2555
        %v2578 = vadd.f32 %v2510, %v2556
        %v2579 = vadd.f32 %v2511, %v2557
        %v2580 = vadd.f32 %v2512, %v2558
        %v2581 = vadd.f32 %v2513, %v2559
        %v2582 = vadd.f32 %v2514, %v2560
        %v2583 = vadd.f32 %v2515, %v2561
        %v2584 = vadd.f32 %v2516, %v2562
        %v2585 = vadd.f32 %v2517, %v2563
        %v2586 = vadd.f32 %v2518, %v2564
        %v2587 = vadd.f32 %v2519, %v2565
        %v2588 = vadd.f32 %v2520, %v2566
        %v2589 = vadd.f32 %v2521, %v2567
        %v2590 = vadd.f32 %v2522, %v2568
        %v2591 = vld [vmem:[#allocation2 + $0x2] sm:$0xff]
        %v2592 = vld [vmem:[#allocation2 + $0xa] sm:$0xff]
        %v2593 = vld [vmem:[#allocation2 + $0x1a] sm:$0xff]
        %v2594 = vld [vmem:[#allocation2 + $0x22] sm:$0xff]
        %v2595 = vld [vmem:[#allocation2 + $0x32] sm:$0xff]
        %v2596 = vld [vmem:[#allocation2 + $0x3a] sm:$0xff]
        %v2597 = vld [vmem:[#allocation2 + $0x4a] sm:$0xff]
        %v2598 = vld [vmem:[#allocation2 + $0x52] sm:$0xff]
        %v2599 = vld [vmem:[#allocation2 + $0x62] sm:$0xff]
        %v2600 = vld [vmem:[#allocation2 + $0x6a] sm:$0xff]
        %v2601 = vld [vmem:[#allocation2 + $0x7a] sm:$0xff]
        %v2602 = vld [vmem:[#allocation2 + $0x82] sm:$0xff]
        %v2603 = vld [vmem:[#allocation2 + $0x92] sm:$0xff]
        %v2604 = vld [vmem:[#allocation2 + $0x9a] sm:$0xff]
        %v2605 = vld [vmem:[#allocation2 + $0xaa] sm:$0xff]
        %v2606 = vld [vmem:[#allocation2 + $0xb2] sm:$0xff]
        %v2607 = vld [vmem:[#allocation2 + $0xc2] sm:$0xff]
        %v2608 = vld [vmem:[#allocation2 + $0xca] sm:$0xff]
        %v2609 = vld [vmem:[#allocation2 + $0xda] sm:$0xff]
        %v2610 = vld [vmem:[#allocation2 + $0xe2] sm:$0xff]
        %v2611 = vld [vmem:[#allocation2 + $0xf2] sm:$0xff]
        %v2612 = vld [vmem:[#allocation2 + $0xfa] sm:$0xff]
        %s2613 = sld [smem:[#allocation3 + $0x2]]
        %v2614 = vstv %s2613
        %v2615 = vmul.f32 %v2591, %v2614
        %v2616 = vmul.f32 %v2592, %v2614
        %v2617 = vmul.f32 %v2593, %v2614
        %v2618 = vmul.f32 %v2594, %v2614
        %v2619 = vmul.f32 %v2595, %v2614
        %v2620 = vmul.f32 %v2596, %v2614
        %v2621 = vmul.f32 %v2597, %v2614
        %v2622 = vmul.f32 %v2598, %v2614
        %v2623 = vmul.f32 %v2599, %v2614
        %v2624 = vmul.f32 %v2600, %v2614
        %v2625 = vmul.f32 %v2601, %v2614
        %v2626 = vmul.f32 %v2602, %v2614
        %v2627 = vmul.f32 %v2603, %v2614
        %v2628 = vmul.f32 %v2604, %v2614
        %v2629 = vmul.f32 %v2605, %v2614
        %v2630 = vmul.f32 %v2606, %v2614
        %v2631 = vmul.f32 %v2607, %v2614
        %v2632 = vmul.f32 %v2608, %v2614
        %v2633 = vmul.f32 %v2609, %v2614
        %v2634 = vmul.f32 %v2610, %v2614
        %v2635 = vmul.f32 %v2611, %v2614
        %v2636 = vmul.f32 %v2612, %v2614
        %v2637 = vadd.f32 %v2569, %v2615
        %v2638 = vadd.f32 %v2570, %v2616
        %v2639 = vadd.f32 %v2571, %v2617
        %v2640 = vadd.f32 %v2572, %v2618
        %v2641 = vadd.f32 %v2573, %v2619
        %v2642 = vadd.f32 %v2574, %v2620
        %v2643 = vadd.f32 %v2575, %v2621
        %v2644 = vadd.f32 %v2576, %v2622
        %v2645 = vadd.f32 %v2577, %v2623
        %v2646 = vadd.f32 %v2578, %v2624
        %v2647 = vadd.f32 %v2579, %v2625
        %v2648 = vadd.f32 %v2580, %v2626
        %v2649 = vadd.f32 %v2581, %v2627
        %v2650 = vadd.f32 %v2582, %v2628
        %v2651 = vadd.f32 %v2583, %v2629
        %v2652 = vadd.f32 %v2584, %v2630
        %v2653 = vadd.f32 %v2585, %v2631
        %v2654 = vadd.f32 %v2586, %v2632
        %v2655 = vadd.f32 %v2587, %v2633
        %v2656 = vadd.f32 %v2588, %v2634
        %v2657 = vadd.f32 %v2589, %v2635
        %v2658 = vadd.f32 %v2590, %v2636
        %v2659 = vld [vmem:[#allocation2 + $0x3] sm:$0xff]
        %v2660 = vld [vmem:[#allocation2 + $0xb] sm:$0xff]
        %v2661 = vld [vmem:[#allocation2 + $0x1b] sm:$0xff]
        %v2662 = vld [vmem:[#allocation2 + $0x23] sm:$0xff]
        %v2663 = vld [vmem:[#allocation2 + $0x33] sm:$0xff]
        %v2664 = vld [vmem:[#allocation2 + $0x3b] sm:$0xff]
        %v2665 = vld [vmem:[#allocation2 + $0x4b] sm:$0xff]
        %v2666 = vld [vmem:[#allocation2 + $0x53] sm:$0xff]
        %v2667 = vld [vmem:[#allocation2 + $0x63] sm:$0xff]
        %v2668 = vld [vmem:[#allocation2 + $0x6b] sm:$0xff]
        %v2669 = vld [vmem:[#allocation2 + $0x7b] sm:$0xff]
        %v2670 = vld [vmem:[#allocation2 + $0x83] sm:$0xff]
        %v2671 = vld [vmem:[#allocation2 + $0x93] sm:$0xff]
        %v2672 = vld [vmem:[#allocation2 + $0x9b] sm:$0xff]
        %v2673 = vld [vmem:[#allocation2 + $0xab] sm:$0xff]
        %v2674 = vld [vmem:[#allocation2 + $0xb3] sm:$0xff]
        %v2675 = vld [vmem:[#allocation2 + $0xc3] sm:$0xff]
        %v2676 = vld [vmem:[#allocation2 + $0xcb] sm:$0xff]
        %v2677 = vld [vmem:[#allocation2 + $0xdb] sm:$0xff]
        %v2678 = vld [vmem:[#allocation2 + $0xe3] sm:$0xff]
        %v2679 = vld [vmem:[#allocation2 + $0xf3] sm:$0xff]
        %v2680 = vld [vmem:[#allocation2 + $0xfb] sm:$0xff]
        %s2681 = sld [smem:[#allocation3 + $0x3]]
        %v2682 = vstv %s2681
        %v2683 = vmul.f32 %v2659, %v2682
        %v2684 = vmul.f32 %v2660, %v2682
        %v2685 = vmul.f32 %v2661, %v2682
        %v2686 = vmul.f32 %v2662, %v2682
        %v2687 = vmul.f32 %v2663, %v2682
        %v2688 = vmul.f32 %v2664, %v2682
        %v2689 = vmul.f32 %v2665, %v2682
        %v2690 = vmul.f32 %v2666, %v2682
        %v2691 = vmul.f32 %v2667, %v2682
        %v2692 = vmul.f32 %v2668, %v2682
        %v2693 = vmul.f32 %v2669, %v2682
        %v2694 = vmul.f32 %v2670, %v2682
        %v2695 = vmul.f32 %v2671, %v2682
        %v2696 = vmul.f32 %v2672, %v2682
        %v2697 = vmul.f32 %v2673, %v2682
        %v2698 = vmul.f32 %v2674, %v2682
        %v2699 = vmul.f32 %v2675, %v2682
        %v2700 = vmul.f32 %v2676, %v2682
        %v2701 = vmul.f32 %v2677, %v2682
        %v2702 = vmul.f32 %v2678, %v2682
        %v2703 = vmul.f32 %v2679, %v2682
        %v2704 = vmul.f32 %v2680, %v2682
        %v2705 = vadd.f32 %v2637, %v2683
        %v2706 = vadd.f32 %v2638, %v2684
        %v2707 = vadd.f32 %v2639, %v2685
        %v2708 = vadd.f32 %v2640, %v2686
        %v2709 = vadd.f32 %v2641, %v2687
        %v2710 = vadd.f32 %v2642, %v2688
        %v2711 = vadd.f32 %v2643, %v2689
        %v2712 = vadd.f32 %v2644, %v2690
        %v2713 = vadd.f32 %v2645, %v2691
        %v2714 = vadd.f32 %v2646, %v2692
        %v2715 = vadd.f32 %v2647, %v2693
        %v2716 = vadd.f32 %v2648, %v2694
        %v2717 = vadd.f32 %v2649, %v2695
        %v2718 = vadd.f32 %v2650, %v2696
        %v2719 = vadd.f32 %v2651, %v2697
        %v2720 = vadd.f32 %v2652, %v2698
        %v2721 = vadd.f32 %v2653, %v2699
        %v2722 = vadd.f32 %v2654, %v2700
        %v2723 = vadd.f32 %v2655, %v2701
        %v2724 = vadd.f32 %v2656, %v2702
        %v2725 = vadd.f32 %v2657, %v2703
        %v2726 = vadd.f32 %v2658, %v2704
        %v2727 = vmul.f32 %v2705, %v2500
        %v2728 = vmul.f32 %v2706, %v2500
        %v2729 = vmul.f32 %v2707, %v2500
        %v2730 = vmul.f32 %v2708, %v2500
        %v2731 = vmul.f32 %v2709, %v2500
        %v2732 = vmul.f32 %v2710, %v2500
        %v2733 = vmul.f32 %v2711, %v2500
        %v2734 = vmul.f32 %v2712, %v2500
        %v2735 = vmul.f32 %v2713, %v2500
        %v2736 = vmul.f32 %v2714, %v2500
        %v2737 = vmul.f32 %v2715, %v2500
        %v2738 = vmul.f32 %v2716, %v2500
        %v2739 = vmul.f32 %v2717, %v2500
        %v2740 = vmul.f32 %v2718, %v2500
        %v2741 = vmul.f32 %v2719, %v2500
        %v2742 = vmul.f32 %v2720, %v2500
        %v2743 = vmul.f32 %v2707, %v2546
        %v2744 = vmul.f32 %v2708, %v2546
        %v2745 = vmul.f32 %v2709, %v2546
        %v2746 = vmul.f32 %v2710, %v2546
        %v2747 = vmul.f32 %v2711, %v2546
        %v2748 = vmul.f32 %v2712, %v2546
        %v2749 = vmul.f32 %v2713, %v2546
        %v2750 = vmul.f32 %v2714, %v2546
        %v2751 = vmul.f32 %v2715, %v2546
        %v2752 = vmul.f32 %v2716, %v2546
        %v2753 = vmul.f32 %v2717, %v2546
        %v2754 = vmul.f32 %v2718, %v2546
        %v2755 = vmul.f32 %v2719, %v2546
        %v2756 = vmul.f32 %v2720, %v2546
        %v2757 = vmul.f32 %v2721, %v2546
        %v2758 = vmul.f32 %v2722, %v2546
        %v2759 = vadd.f32 %v2727, %v2743
        %v2760 = vadd.f32 %v2728, %v2744
        %v2761 = vadd.f32 %v2729, %v2745
        %v2762 = vadd.f32 %v2730, %v2746
        %v2763 = vadd.f32 %v2731, %v2747
        %v2764 = vadd.f32 %v2732, %v2748
        %v2765 = vadd.f32 %v2733, %v2749
        %v2766 = vadd.f32 %v2734, %v2750
        %v2767 = vadd.f32 %v2735, %v2751
        %v2768 = vadd.f32 %v2736, %v2752
        %v2769 = vadd.f32 %v2737, %v2753
        %v2770 = vadd.f32 %v2738, %v2754
        %v2771 = vadd.f32 %v2739, %v2755
        %v2772 = vadd.f32 %v2740, %v2756
        %v2773 = vadd.f32 %v2741, %v2757
        %v2774 = vadd.f32 %v2742, %v2758
        %v2775 = vmul.f32 %v2709, %v2614
        %v2776 = vmul.f32 %v2710, %v2614
        %v2777 = vmul.f32 %v2711, %v2614
        %v2778 = vmul.f32 %v2712, %v2614
        %v2779 = vmul.f32 %v2713, %v2614
        %v2780 = vmul.f32 %v2714, %v2614
        %v2781 = vmul.f32 %v2715, %v2614
        %v2782 = vmul.f32 %v2716, %v2614
        %v2783 = vmul.f32 %v2717, %v2614
        %v2784 = vmul.f32 %v2718, %v2614
        %v2785 = vmul.f32 %v2719, %v2614
        %v2786 = vmul.f32 %v2720, %v2614
        %v2787 = vmul.f32 %v2721, %v2614
        %v2788 = vmul.f32 %v2722, %v2614
        %v2789 = vmul.f32 %v2723, %v2614
        %v2790 = vmul.f32 %v2724, %v2614
        %v2791 = vadd.f32 %v2759, %v2775
        %v2792 = vadd.f32 %v2760, %v2776
        %v2793 = vadd.f32 %v2761, %v2777
        %v2794 = vadd.f32 %v2762, %v2778
        %v2795 = vadd.f32 %v2763, %v2779
        %v2796 = vadd.f32 %v2764, %v2780
        %v2797 = vadd.f32 %v2765, %v2781
        %v2798 = vadd.f32 %v2766, %v2782
        %v2799 = vadd.f32 %v2767, %v2783
        %v2800 = vadd.f32 %v2768, %v2784
        %v2801 = vadd.f32 %v2769, %v2785
        %v2802 = vadd.f32 %v2770, %v2786
        %v2803 = vadd.f32 %v2771, %v2787
        %v2804 = vadd.f32 %v2772, %v2788
        %v2805 = vadd.f32 %v2773, %v2789
        %v2806 = vadd.f32 %v2774, %v2790
        %v2807 = vmul.f32 %v2711, %v2682
        %v2808 = vmul.f32 %v2712, %v2682
        %v2809 = vmul.f32 %v2713, %v2682
        %v2810 = vmul.f32 %v2714, %v2682
        %v2811 = vmul.f32 %v2715, %v2682
        %v2812 = vmul.f32 %v2716, %v2682
        %v2813 = vmul.f32 %v2717, %v2682
        %v2814 = vmul.f32 %v2718, %v2682
        %v2815 = vmul.f32 %v2719, %v2682
        %v2816 = vmul.f32 %v2720, %v2682
        %v2817 = vmul.f32 %v2721, %v2682
        %v2818 = vmul.f32 %v2722, %v2682
        %v2819 = vmul.f32 %v2723, %v2682
        %v2820 = vmul.f32 %v2724, %v2682
        %v2821 = vmul.f32 %v2725, %v2682
        %v2822 = vmul.f32 %v2726, %v2682
        %v2823 = vadd.f32 %v2791, %v2807
        %v2824 = vadd.f32 %v2792, %v2808
        %v2825 = vadd.f32 %v2793, %v2809
        %v2826 = vadd.f32 %v2794, %v2810
        %v2827 = vadd.f32 %v2795, %v2811
        %v2828 = vadd.f32 %v2796, %v2812
        %v2829 = vadd.f32 %v2797, %v2813
        %v2830 = vadd.f32 %v2798, %v2814
        %v2831 = vadd.f32 %v2799, %v2815
        %v2832 = vadd.f32 %v2800, %v2816
        %v2833 = vadd.f32 %v2801, %v2817
        %v2834 = vadd.f32 %v2802, %v2818
        %v2835 = vadd.f32 %v2803, %v2819
        %v2836 = vadd.f32 %v2804, %v2820
        %v2837 = vadd.f32 %v2805, %v2821
        %v2838 = vadd.f32 %v2806, %v2822
        %v2839 = vld [vmem:[%s361] sm:$0xff]
        %v2840 = vld [vmem:[%s361 + $0x8] sm:$0xff]
        %v2841 = vld [vmem:[%s361 + $0x10] sm:$0xff]
        %v2842 = vld [vmem:[%s361 + $0x18] sm:$0xff]
        %v2843 = vld [vmem:[%s361 + $0x20] sm:$0xff]
        %v2844 = vld [vmem:[%s361 + $0x28] sm:$0xff]
        %v2845 = vld [vmem:[%s361 + $0x30] sm:$0xff]
        %v2846 = vld [vmem:[%s361 + $0x38] sm:$0xff]
        %v2847 = vld [vmem:[%s361 + $0x40] sm:$0xff]
        %v2848 = vld [vmem:[%s361 + $0x48] sm:$0xff]
        %v2849 = vld [vmem:[%s361 + $0x50] sm:$0xff]
        %v2850 = vld [vmem:[%s361 + $0x58] sm:$0xff]
        %v2851 = vld [vmem:[%s361 + $0x60] sm:$0xff]
        %v2852 = vld [vmem:[%s361 + $0x68] sm:$0xff]
        %v2853 = vld [vmem:[%s361 + $0x70] sm:$0xff]
        %v2854 = vld [vmem:[%s361 + $0x78] sm:$0xff]
        %2856 = vset.pattern.permute.xlu0 0
        %2857 = vperm.xlu0 %2856, %v2839
        %v2858 = vpop.permute.xlu0 %2857
        %2861 = vset.pattern.permute.xlu0 0
        %2862 = vperm.xlu0 %2861, %v2840
        %v2863 = vpop.permute.xlu0 %2862
        %2866 = vset.pattern.permute.xlu0 0
        %2867 = vperm.xlu0 %2866, %v2841
        %v2868 = vpop.permute.xlu0 %2867
        %2871 = vset.pattern.permute.xlu0 0
        %2872 = vperm.xlu0 %2871, %v2842
        %v2873 = vpop.permute.xlu0 %2872
        %2876 = vset.pattern.permute.xlu0 0
        %2877 = vperm.xlu0 %2876, %v2843
        %v2878 = vpop.permute.xlu0 %2877
        %2881 = vset.pattern.permute.xlu0 0
        %2882 = vperm.xlu0 %2881, %v2844
        %v2883 = vpop.permute.xlu0 %2882
        %2886 = vset.pattern.permute.xlu0 0
        %2887 = vperm.xlu0 %2886, %v2845
        %v2888 = vpop.permute.xlu0 %2887
        %2891 = vset.pattern.permute.xlu0 0
        %2892 = vperm.xlu0 %2891, %v2846
        %v2893 = vpop.permute.xlu0 %2892
        %2896 = vset.pattern.permute.xlu0 0
        %2897 = vperm.xlu0 %2896, %v2847
        %v2898 = vpop.permute.xlu0 %2897
        %2901 = vset.pattern.permute.xlu0 0
        %2902 = vperm.xlu0 %2901, %v2848
        %v2903 = vpop.permute.xlu0 %2902
        %2906 = vset.pattern.permute.xlu0 0
        %2907 = vperm.xlu0 %2906, %v2849
        %v2908 = vpop.permute.xlu0 %2907
        %2911 = vset.pattern.permute.xlu0 0
        %2912 = vperm.xlu0 %2911, %v2850
        %v2913 = vpop.permute.xlu0 %2912
        %2916 = vset.pattern.permute.xlu0 0
        %2917 = vperm.xlu0 %2916, %v2851
        %v2918 = vpop.permute.xlu0 %2917
        %2921 = vset.pattern.permute.xlu0 0
        %2922 = vperm.xlu0 %2921, %v2852
        %v2923 = vpop.permute.xlu0 %2922
        %2926 = vset.pattern.permute.xlu0 0
        %2927 = vperm.xlu0 %2926, %v2853
        %v2928 = vpop.permute.xlu0 %2927
        %2931 = vset.pattern.permute.xlu0 0
        %2932 = vperm.xlu0 %2931, %v2854
        %v2933 = vpop.permute.xlu0 %2932
        %v2935 = vadd.f32 %v2823, %v2858
        %v2936 = vadd.f32 %v2824, %v2863
        %v2937 = vadd.f32 %v2825, %v2868
        %v2938 = vadd.f32 %v2826, %v2873
        %v2939 = vadd.f32 %v2827, %v2878
        %v2940 = vadd.f32 %v2828, %v2883
        %v2941 = vadd.f32 %v2829, %v2888
        %v2942 = vadd.f32 %v2830, %v2893
        %v2943 = vadd.f32 %v2831, %v2898
        %v2944 = vadd.f32 %v2832, %v2903
        %v2945 = vadd.f32 %v2833, %v2908
        %v2946 = vadd.f32 %v2834, %v2913
        %v2947 = vadd.f32 %v2835, %v2918
        %v2948 = vadd.f32 %v2836, %v2923
        %v2949 = vadd.f32 %v2837, %v2928
        %v2950 = vadd.f32 %v2838, %v2933
        %v2951 = vld [vmem:[%s6] sm:$0x1]
        %v2953 = vperm.slane %v2951, 0
        %v2955 = vadd.f32 %v2935, %v2953
        %v2956 = vadd.f32 %v2936, %v2953
        %v2957 = vadd.f32 %v2937, %v2953
        %v2958 = vadd.f32 %v2938, %v2953
        %v2959 = vadd.f32 %v2939, %v2953
        %v2960 = vadd.f32 %v2940, %v2953
        %v2961 = vadd.f32 %v2941, %v2953
        %v2962 = vadd.f32 %v2942, %v2953
        %v2963 = vadd.f32 %v2943, %v2953
        %v2964 = vadd.f32 %v2944, %v2953
        %v2965 = vadd.f32 %v2945, %v2953
        %v2966 = vadd.f32 %v2946, %v2953
        %v2967 = vadd.f32 %v2947, %v2953
        %v2968 = vadd.f32 %v2948, %v2953
        %v2969 = vadd.f32 %v2949, %v2953
        %v2970 = vadd.f32 %v2950, %v2953
        %v2971 = vmul.f32 %v2955, 1.4142135
        %v2972 = vmul.f32 %v2956, 1.4142135
        %v2973 = vmul.f32 %v2957, 1.4142135
        %v2974 = vmul.f32 %v2958, 1.4142135
        %v2975 = vmul.f32 %v2959, 1.4142135
        %v2976 = vmul.f32 %v2960, 1.4142135
        %v2977 = vmul.f32 %v2961, 1.4142135
        %v2978 = vmul.f32 %v2962, 1.4142135
        %v2979 = vmul.f32 %v2963, 1.4142135
        %v2980 = vmul.f32 %v2964, 1.4142135
        %v2981 = vmul.f32 %v2965, 1.4142135
        %v2982 = vmul.f32 %v2966, 1.4142135
        %v2983 = vmul.f32 %v2967, 1.4142135
        %v2984 = vmul.f32 %v2968, 1.4142135
        %v2985 = vmul.f32 %v2969, 1.4142135
        %v2986 = vmul.f32 %v2970, 1.4142135
        %vm2987 = vcmp.ge.f32.partialorder %v2971, 0.0
        %vm2988 = vcmp.ge.f32.partialorder %v2972, 0.0
        %vm2989 = vcmp.ge.f32.partialorder %v2973, 0.0
        %vm2990 = vcmp.ge.f32.partialorder %v2974, 0.0
        %vm2991 = vcmp.ge.f32.partialorder %v2975, 0.0
        %vm2992 = vcmp.ge.f32.partialorder %v2976, 0.0
        %vm2993 = vcmp.ge.f32.partialorder %v2977, 0.0
        %vm2994 = vcmp.ge.f32.partialorder %v2978, 0.0
        %vm2995 = vcmp.ge.f32.partialorder %v2979, 0.0
        %vm2996 = vcmp.ge.f32.partialorder %v2980, 0.0
        %vm2997 = vcmp.ge.f32.partialorder %v2981, 0.0
        %vm2998 = vcmp.ge.f32.partialorder %v2982, 0.0
        %vm2999 = vcmp.ge.f32.partialorder %v2983, 0.0
        %vm3000 = vcmp.ge.f32.partialorder %v2984, 0.0
        %vm3001 = vcmp.ge.f32.partialorder %v2985, 0.0
        %vm3002 = vcmp.ge.f32.partialorder %v2986, 0.0
        %v3003 = vmul.f32 %v2971, 0.2
        %v3004 = vmul.f32 %v2972, 0.2
        %v3005 = vmul.f32 %v2973, 0.2
        %v3006 = vmul.f32 %v2974, 0.2
        %v3007 = vmul.f32 %v2975, 0.2
        %v3008 = vmul.f32 %v2976, 0.2
        %v3009 = vmul.f32 %v2977, 0.2
        %v3010 = vmul.f32 %v2978, 0.2
        %v3011 = vmul.f32 %v2979, 0.2
        %v3012 = vmul.f32 %v2980, 0.2
        %v3013 = vmul.f32 %v2981, 0.2
        %v3014 = vmul.f32 %v2982, 0.2
        %v3015 = vmul.f32 %v2983, 0.2
        %v3016 = vmul.f32 %v2984, 0.2
        %v3017 = vmul.f32 %v2985, 0.2
        %v3018 = vmul.f32 %v2986, 0.2
        %v3019 = vsel %vm2987, %v2971, %v3003
        %v3020 = vsel %vm2988, %v2972, %v3004
        %v3021 = vsel %vm2989, %v2973, %v3005
        %v3022 = vsel %vm2990, %v2974, %v3006
        %v3023 = vsel %vm2991, %v2975, %v3007
        %v3024 = vsel %vm2992, %v2976, %v3008
        %v3025 = vsel %vm2993, %v2977, %v3009
        %v3026 = vsel %vm2994, %v2978, %v3010
        %v3027 = vsel %vm2995, %v2979, %v3011
        %v3028 = vsel %vm2996, %v2980, %v3012
        %v3029 = vsel %vm2997, %v2981, %v3013
        %v3030 = vsel %vm2998, %v2982, %v3014
        %v3031 = vsel %vm2999, %v2983, %v3015
        %v3032 = vsel %vm3000, %v2984, %v3016
        %v3033 = vsel %vm3001, %v2985, %v3017
        %v3034 = vsel %vm3002, %v2986, %v3018
        %3035 = vst.msk [vmem:[%s372] sm:$0xff] %vm497, %v3019
        %3036 = vst.msk [vmem:[%s372 + $0x8] sm:$0xff] %vm497, %v3020
        %3037 = vst.msk [vmem:[%s372 + $0x10] sm:$0xff] %vm497, %v3021
        %3038 = vst.msk [vmem:[%s372 + $0x18] sm:$0xff] %vm497, %v3022
        %3039 = vst.msk [vmem:[%s372 + $0x20] sm:$0xff] %vm497, %v3023
        %3040 = vst.msk [vmem:[%s372 + $0x28] sm:$0xff] %vm497, %v3024
        %3041 = vst.msk [vmem:[%s372 + $0x30] sm:$0xff] %vm497, %v3025
        %3042 = vst.msk [vmem:[%s372 + $0x38] sm:$0xff] %vm497, %v3026
        %3043 = vst.msk [vmem:[%s372 + $0x40] sm:$0xff] %vm497, %v3027
        %3044 = vst.msk [vmem:[%s372 + $0x48] sm:$0xff] %vm497, %v3028
        %3045 = vst.msk [vmem:[%s372 + $0x50] sm:$0xff] %vm497, %v3029
        %3046 = vst.msk [vmem:[%s372 + $0x58] sm:$0xff] %vm497, %v3030
        %3047 = vst.msk [vmem:[%s372 + $0x60] sm:$0xff] %vm497, %v3031
        %3048 = vst.msk [vmem:[%s372 + $0x68] sm:$0xff] %vm497, %v3032
        %3049 = vst.msk [vmem:[%s372 + $0x70] sm:$0xff] %vm497, %v3033
        %3050 = vst.msk [vmem:[%s372 + $0x78] sm:$0xff] %vm497, %v3034
        %s3051 = smul.u32 8, %s24
        %p3052 = scmp.lt.s32.totalorder %s23, 1
        %s3053 = scalar_select %p3052, %s23, 1
        %p3054 = scmp.lt.s32.totalorder %s3051, 15
        %s3055 = scalar_select %p3054, %s3051, 15
        %s3056 = smul.addr %s3055, 2
        %s3057 = smul.addr %s3053, 32
        %s3058 = sadd.s32 %s3056, %s3057
        %s3059 = smul.addr %s3058, 8
        %s3060 = scalar_lea.vmem %s7, %s3059
        // Predicated region
        $region53: #{stylegan2_block_forward.3} parent=47 // pred_check
          %p3061 = pneg %p218
        $region54: #{stylegan2_block_forward.3} parent=47 // pred_check_branch
          %3063 = sbr.rel (%p3061) target = $region56
        $region55: #{stylegan2_block_forward.3} parent=47 // pred_region
          %s3064 = smul.u32 8, %s24
        $region56: #{stylegan2_block_forward.3} parent=47 // pred_fallthru
          _
      $region48: #{stylegan2_block_forward.3} parent=5 // pred_fallthru
        _
      %p3065 = scmp.le.s32.totalorder 2, %s14
      // Predicated region
      $region57: #{stylegan2_block_forward.3} parent=5 // pred_check
        %p3066 = pneg %p3065
      $region58: #{stylegan2_block_forward.3} parent=5 // pred_check_branch
        %3068 = sbr.rel (%p3066) target = $region60
      $region59: #{stylegan2_block_forward.3} parent=5 // pred_region
        %s3069 = ssub.s32 %s14, 2
        // Predicated region
        $region61: #{stylegan2_block_forward.3} parent=59 // pred_check
          %p3070 = pneg %p224
        $region62: #{stylegan2_block_forward.3} parent=59 // pred_check_branch
          %3072 = sbr.rel (%p3070) target = $region64
        $region63: #{stylegan2_block_forward.3} parent=59 // pred_region
          %s3073 = smul.u32 8, %s26
          %p3074 = scmp.lt.s32.totalorder %s25, 1
          %s3075 = scalar_select %p3074, %s25, 1
          %p3076 = scmp.lt.s32.totalorder %s3073, 15
          %s3077 = scalar_select %p3076, %s3073, 15
          %s3078 = smul.addr %s3077, 2
          %s3079 = smul.addr %s3075, 32
          %s3080 = sadd.s32 %s3078, %s3079
          %s3081 = smul.addr %s3080, 8
          %s3082 = scalar_lea.vmem %s7, %s3081
        $region64: #{stylegan2_block_forward.3} parent=59 // pred_fallthru
          _
      $region60: #{stylegan2_block_forward.3} parent=5 // pred_fallthru
        _
    $region6: #{stylegan2_block_forward.3} parent=1 // loop_footer
      %s18 = sadd.s32 1, %s14
    $region7: #{stylegan2_block_forward.3} parent=1 // loop_footer_branch
      %13 = sbr.rel target = $region3
    $region8: #{stylegan2_block_forward.3} parent=1 // loop_exit
      _
    %3083 = vsyncpa [#allocation4], 1
    %s3084 = scalar_lea.sflag [#allocation4], 1
    %3085 = vsyncpa %s3084, 1

// kernel: stylegan2_block_forward.5
$region0: #{stylegan2_block_forward.5}
  #allocation0 [shape = 'u32[]', space=smem, size = 0x4, offset = 0x4, fixed_abs, tag = 'smem constant byte address 0x4 - core index']
  #allocation1 [shape = 'u32[72,128]{1,0:T(1,128)}', space=vmem, size = 0x9000, scoped, tag = 'internal scratch']
  %s0 = inlined_call_operand.vmem [shape: f32[2,16,16,8], index: 0, kind: input, shape index: {}]
  %s1 = inlined_call_operand.vmem [shape: f32[2,8,1], index: 1, kind: input, shape index: {}]
  %s2 = inlined_call_operand.vmem [shape: f32[8,3], index: 2, kind: input, shape index: {}]
  %s3 = inlined_call_operand.vmem [shape: f32[2,19,19,3], index: 3, kind: input, shape index: {}]
  %s4 = inlined_call_operand.vmem [shape: f32[4], index: 4, kind: input, shape index: {}]
  %s5 = inlined_call_operand.vmem [shape: f32[1,1,3], index: 5, kind: input, shape index: {}]
  %s6 = inlined_call_operand.vmem [shape: f32[2,16,16,3], index: 6, kind: output, shape index: {}]
  %s7 = sld [smem:[#allocation0]]
  $region61: #{stylegan2_block_forward.5} parent=0
    _
  %s9 = ssub.s32 1, %s7
  %s10 = scalar_select 0, %s9, %s7
  $region1: #{stylegan2_block_forward.5} parent=0
    #allocation2 [shape = 'u8[512]{0}', space=smem, size = 0x200, scoped, tag = 'input window, operand 4, single buffered']
    #allocation3 [shape = 's32[2]{0}', space=sflag, size = 0x8, scoped, tag = 'scoped memory for stylegan2_block_forward.5']
    %11 = vsyncpa [#allocation3], 0
    loop: start=0, step=1, limit=6
    $region2: #{stylegan2_block_forward.5} parent=1 // loop_pre_header
      _
    $region3: #{stylegan2_block_forward.5} parent=1 // loop_header
      %s13 = sphi 0, %s17
      %p14 = scmp.ge.s32.totalorder %s13, 6
      %s20 = sphi 0, %s32
      %s21 = sphi 0, %s28
      %s22 = sphi 0, %s20
      %s23 = sphi 0, %s21
      %s24 = sphi 0, %s22
      %s25 = sphi 0, %s23
      %s37 = sphi 0, %s39
      %s40 = sphi 0, %s37
      %s41 = sphi 0, %s40
      %s57 = sphi 0, %s41
      %s63 = sphi 0, %s65
      %s66 = sphi 0, %s63
      %s67 = sphi 0, %s66
      %s83 = sphi 0, %s67
      %s87 = sphi 0, %s87
      %s89 = sphi 0, %s87
      %s90 = sphi 0, %s89
      %s104 = sphi 0, %s90
      %s110 = sphi 0, %s112
      %s113 = sphi 0, %s110
      %s114 = sphi 0, %s113
      %s130 = sphi 0, %s114
      %s134 = sphi 0, %s134
      %s136 = sphi 0, %s134
      %s137 = sphi 0, %s136
      %s151 = sphi 0, %s137
      %s155 = sphi 0, %s155
      %s157 = sphi 0, %s155
      %s158 = sphi 0, %s157
      %s172 = sphi 0, %s158
      %s180 = sphi 0, %s182
      %s183 = sphi 0, %s180
      %s184 = sphi 0, %s183
      %s200 = sphi 0, %s184
    $region4: #{stylegan2_block_forward.5} parent=1 // loop_header_branch
      %16 = sbr.rel (%p14) target = $region8
    $region5: #{stylegan2_block_forward.5} parent=1 // loop_body
      %s18 = ssub.s32 %s13, 1
      %s19 = ssub.s32 %s13, 2
      %s26 = sadd.s32 1, %s21
      %p27 = scmp.ge.s32.totalorder %s26, 2
      %s28 = scalar_select %p27, 0, %s26
      %s29 = sadd.s32 1, %s20
      %s30 = scalar_select %p27, %s29, %s20
      %p31 = scmp.ge.s32.totalorder %s30, 2
      %s32 = scalar_select %p31, 0, %s30
      %s33 = ssub.s32 %s20, %s32
      %s34 = ssub.s32 %s21, %s28
      %s35 = sor.u32 %s33, %s34
      %p36 = scmp.eq.s32.totalorder %s35, 0
      %s38 = sadd.s32 %s37, 1
      %s39 = scalar_select %p36, %s37, %s38
      %p42 = pneg %p36
      %p43 = scmp.eq.s32.totalorder %s13, 3
      %p44 = por %p42, %p43
      %p45 = scmp.ne.s32.totalorder %s37, %s40
      %p46 = scmp.eq.s32.totalorder %s13, 0
      %p47 = por %p45, %p46
      %p48 = scmp.ne.s32.totalorder %s37, %s40
      %p49 = scmp.eq.s32.totalorder %s18, 3
      %p50 = por %p48, %p49
      %p51 = scmp.ne.s32.totalorder %s40, %s41
      %p52 = scmp.eq.s32.totalorder %s18, 0
      %p53 = por %p51, %p52
      %p54 = scmp.ne.s32.totalorder %s40, %s41
      %p55 = scmp.eq.s32.totalorder %s19, 3
      %p56 = por %p54, %p55
      %p58 = scmp.ne.s32.totalorder %s41, %s57
      %p59 = scmp.eq.s32.totalorder %s19, 0
      %p60 = por %p58, %p59
      %s61 = ssub.s32 %s20, %s32
      %p62 = scmp.eq.s32.totalorder %s61, 0
      %s64 = sadd.s32 %s63, 1
      %s65 = scalar_select %p62, %s63, %s64
      %p68 = pneg %p62
      %p69 = scmp.eq.s32.totalorder %s13, 3
      %p70 = por %p68, %p69
      %p71 = scmp.ne.s32.totalorder %s63, %s66
      %p72 = scmp.eq.s32.totalorder %s13, 0
      %p73 = por %p71, %p72
      %p74 = scmp.ne.s32.totalorder %s63, %s66
      %p75 = scmp.eq.s32.totalorder %s18, 3
      %p76 = por %p74, %p75
      %p77 = scmp.ne.s32.totalorder %s66, %s67
      %p78 = scmp.eq.s32.totalorder %s18, 0
      %p79 = por %p77, %p78
      %p80 = scmp.ne.s32.totalorder %s66, %s67
      %p81 = scmp.eq.s32.totalorder %s19, 3
      %p82 = por %p80, %p81
      %p84 = scmp.ne.s32.totalorder %s67, %s83
      %p85 = scmp.eq.s32.totalorder %s19, 0
      %p86 = por %p84, %p85
      %s88 = sadd.s32 %s87, 1
      %p91 = scmp.eq.s32.totalorder %s13, 3
      %p92 = scmp.ne.s32.totalorder %s87, %s89
      %p93 = scmp.eq.s32.totalorder %s13, 0
      %p94 = por %p92, %p93
      %p95 = scmp.ne.s32.totalorder %s87, %s89
      %p96 = scmp.eq.s32.totalorder %s18, 3
      %p97 = por %p95, %p96
      %p98 = scmp.ne.s32.totalorder %s89, %s90
      %p99 = scmp.eq.s32.totalorder %s18, 0
      %p100 = por %p98, %p99
      %p101 = scmp.ne.s32.totalorder %s89, %s90
      %p102 = scmp.eq.s32.totalorder %s19, 3
      %p103 = por %p101, %p102
      %p105 = scmp.ne.s32.totalorder %s90, %s104
      %p106 = scmp.eq.s32.totalorder %s19, 0
      %p107 = por %p105, %p106
      %s108 = ssub.s32 %s20, %s32
      %p109 = scmp.eq.s32.totalorder %s108, 0
      %s111 = sadd.s32 %s110, 1
      %s112 = scalar_select %p109, %s110, %s111
      %p115 = pneg %p109
      %p116 = scmp.eq.s32.totalorder %s13, 3
      %p117 = por %p115, %p116
      %p118 = scmp.ne.s32.totalorder %s110, %s113
      %p119 = scmp.eq.s32.totalorder %s13, 0
      %p120 = por %p118, %p119
      %p121 = scmp.ne.s32.totalorder %s110, %s113
      %p122 = scmp.eq.s32.totalorder %s18, 3
      %p123 = por %p121, %p122
      %p124 = scmp.ne.s32.totalorder %s113, %s114
      %p125 = scmp.eq.s32.totalorder %s18, 0
      %p126 = por %p124, %p125
      %p127 = scmp.ne.s32.totalorder %s113, %s114
      %p128 = scmp.eq.s32.totalorder %s19, 3
      %p129 = por %p127, %p128
      %p131 = scmp.ne.s32.totalorder %s114, %s130
      %p132 = scmp.eq.s32.totalorder %s19, 0
      %p133 = por %p131, %p132
      %s135 = sadd.s32 %s134, 1
      %p138 = scmp.eq.s32.totalorder %s13, 3
      %p139 = scmp.ne.s32.totalorder %s134, %s136
      %p140 = scmp.eq.s32.totalorder %s13, 0
      %p141 = por %p139, %p140
      %p142 = scmp.ne.s32.totalorder %s134, %s136
      %p143 = scmp.eq.s32.totalorder %s18, 3
      %p144 = por %p142, %p143
      %p145 = scmp.ne.s32.totalorder %s136, %s137
      %p146 = scmp.eq.s32.totalorder %s18, 0
      %p147 = por %p145, %p146
      %p148 = scmp.ne.s32.totalorder %s136, %s137
      %p149 = scmp.eq.s32.totalorder %s19, 3
      %p150 = por %p148, %p149
      %p152 = scmp.ne.s32.totalorder %s137, %s151
      %p153 = scmp.eq.s32.totalorder %s19, 0
      %p154 = por %p152, %p153
      %s156 = sadd.s32 %s155, 1
      %p159 = scmp.eq.s32.totalorder %s13, 3
      %p160 = scmp.ne.s32.totalorder %s155, %s157
      %p161 = scmp.eq.s32.totalorder %s13, 0
      %p162 = por %p160, %p161
      %p163 = scmp.ne.s32.totalorder %s155, %s157
      %p164 = scmp.eq.s32.totalorder %s18, 3
      %p165 = por %p163, %p164
      %p166 = scmp.ne.s32.totalorder %s157, %s158
      %p167 = scmp.eq.s32.totalorder %s18, 0
      %p168 = por %p166, %p167
      %p169 = scmp.ne.s32.totalorder %s157, %s158
      %p170 = scmp.eq.s32.totalorder %s19, 3
      %p171 = por %p169, %p170
      %p173 = scmp.ne.s32.totalorder %s158, %s172
      %p174 = scmp.eq.s32.totalorder %s19, 0
      %p175 = por %p173, %p174
      %s176 = ssub.s32 %s20, %s32
      %s177 = ssub.s32 %s21, %s28
      %s178 = sor.u32 %s176, %s177
      %p179 = scmp.eq.s32.totalorder %s178, 0
      %s181 = sadd.s32 %s180, 1
      %s182 = scalar_select %p179, %s180, %s181
      %p185 = pneg %p179
      %p186 = scmp.eq.s32.totalorder %s13, 3
      %p187 = por %p185, %p186
      %p188 = scmp.ne.s32.totalorder %s180, %s183
      %p189 = scmp.eq.s32.totalorder %s13, 0
      %p190 = por %p188, %p189
      %p191 = scmp.ne.s32.totalorder %s180, %s183
      %p192 = scmp.eq.s32.totalorder %s18, 3
      %p193 = por %p191, %p192
      %p194 = scmp.ne.s32.totalorder %s183, %s184
      %p195 = scmp.eq.s32.totalorder %s18, 0
      %p196 = por %p194, %p195
      %p197 = scmp.ne.s32.totalorder %s183, %s184
      %p198 = scmp.eq.s32.totalorder %s19, 3
      %p199 = por %p197, %p198
      %p201 = scmp.ne.s32.totalorder %s184, %s200
      %p202 = scmp.eq.s32.totalorder %s19, 0
      %p203 = por %p201, %p202
      %p204 = scmp.le.s32.totalorder 1, %s13
      %p205 = scmp.lt.s32.totalorder %s13, 5
      %p206 = pnand %p204, %p205
      %p207 = pneg %p206
      // Predicated region
      $region9: #{stylegan2_block_forward.5} parent=5 // pred_check
        _
      $region10: #{stylegan2_block_forward.5} parent=5 // pred_check_branch
        %209 = sbr.rel (%p206) target = $region12
      $region11: #{stylegan2_block_forward.5} parent=5 // pred_region
        %s210 = ssub.s32 %s13, 1
        // Predicated region
        $region13: #{stylegan2_block_forward.5} parent=11 // pred_check
          %p211 = pneg %p100
        $region14: #{stylegan2_block_forward.5} parent=11 // pred_check_branch
          %213 = sbr.rel (%p211) target = $region16
        $region15: #{stylegan2_block_forward.5} parent=11 // pred_region
          _
        $region16: #{stylegan2_block_forward.5} parent=11 // pred_fallthru
          _
        // Predicated region
        $region17: #{stylegan2_block_forward.5} parent=11 // pred_check
          %p214 = pneg %p147
        $region18: #{stylegan2_block_forward.5} parent=11 // pred_check_branch
          %216 = sbr.rel (%p214) target = $region20
        $region19: #{stylegan2_block_forward.5} parent=11 // pred_region
          %218 = vsyncadd [#allocation3], 0
          %s220 = sshll.u32 %s4, 4
          %s221 = int_to_ptr.vmem [resolvable:$true] %s220
          %223 = dma.vmem_to_smem %s221, 16, [#allocation2], [#allocation3]
        $region20: #{stylegan2_block_forward.5} parent=11 // pred_fallthru
          _
        // Predicated region
        $region21: #{stylegan2_block_forward.5} parent=11 // pred_check
          %p224 = pneg %p168
        $region22: #{stylegan2_block_forward.5} parent=11 // pred_check_branch
          %226 = sbr.rel (%p224) target = $region24
        $region23: #{stylegan2_block_forward.5} parent=11 // pred_region
          _
        $region24: #{stylegan2_block_forward.5} parent=11 // pred_fallthru
          _
      $region12: #{stylegan2_block_forward.5} parent=5 // pred_fallthru
        _
      %p227 = scmp.lt.s32.totalorder %s13, 4
      // Predicated region
      $region25: #{stylegan2_block_forward.5} parent=5 // pred_check
        %p228 = pneg %p227
      $region26: #{stylegan2_block_forward.5} parent=5 // pred_check_branch
        %230 = sbr.rel (%p228) target = $region28
      $region27: #{stylegan2_block_forward.5} parent=5 // pred_region
        // Predicated region
        $region29: #{stylegan2_block_forward.5} parent=27 // pred_check
          %p231 = pneg %p47
        $region30: #{stylegan2_block_forward.5} parent=27 // pred_check_branch
          %233 = sbr.rel (%p231) target = $region32
        $region31: #{stylegan2_block_forward.5} parent=27 // pred_region
          %s234 = smul.u32 8, %s21
          %p235 = scmp.lt.s32.totalorder %s20, 1
          %s236 = scalar_select %p235, %s20, 1
          %p237 = scmp.lt.s32.totalorder %s234, 15
          %s238 = scalar_select %p237, %s234, 15
          %s239 = smul.addr %s238, 2
          %s240 = smul.addr %s236, 32
          %s241 = sadd.s32 %s239, %s240
          %s242 = smul.addr %s241, 8
          %s243 = scalar_lea.vmem %s0, %s242
          %s244 = smul.u32 8, %s21
        $region32: #{stylegan2_block_forward.5} parent=27 // pred_fallthru
          _
        // Predicated region
        $region33: #{stylegan2_block_forward.5} parent=27 // pred_check
          %p245 = pneg %p73
        $region34: #{stylegan2_block_forward.5} parent=27 // pred_check_branch
          %247 = sbr.rel (%p245) target = $region36
        $region35: #{stylegan2_block_forward.5} parent=27 // pred_region
          %p248 = scmp.lt.s32.totalorder %s20, 1
          %s249 = scalar_select %p248, %s20, 1
          %s250 = smul.addr %s249, 8
          %s251 = scalar_lea.vmem %s1, %s250
        $region36: #{stylegan2_block_forward.5} parent=27 // pred_fallthru
          _
        // Predicated region
        $region37: #{stylegan2_block_forward.5} parent=27 // pred_check
          %p252 = pneg %p120
        $region38: #{stylegan2_block_forward.5} parent=27 // pred_check_branch
          %254 = sbr.rel (%p252) target = $region40
        $region39: #{stylegan2_block_forward.5} parent=27 // pred_region
          %p255 = scmp.lt.s32.totalorder %s20, 1
          %s256 = scalar_select %p255, %s20, 1
          %s257 = smul.addr %s256, 57
          %s258 = smul.addr %s257, 8
          %s259 = scalar_lea.vmem %s3, %s258
        $region40: #{stylegan2_block_forward.5} parent=27 // pred_fallthru
          _
      $region28: #{stylegan2_block_forward.5} parent=5 // pred_fallthru
        _
      %p260 = scmp.le.s32.totalorder 1, %s13
      %p261 = scmp.lt.s32.totalorder %s13, 5
      %p262 = pnand %p260, %p261
      %p263 = pneg %p262
      // Predicated region
      $region41: #{stylegan2_block_forward.5} parent=5 // pred_check
        _
      $region42: #{stylegan2_block_forward.5} parent=5 // pred_check_branch
        %265 = sbr.rel (%p262) target = $region44
      $region43: #{stylegan2_block_forward.5} parent=5 // pred_region
        %s266 = ssub.s32 %s13, 1
        // Predicated region
        $region45: #{stylegan2_block_forward.5} parent=43 // pred_check
          %p267 = pneg %p147
        $region46: #{stylegan2_block_forward.5} parent=43 // pred_check_branch
          %269 = sbr.rel (%p267) target = $region48
        $region47: #{stylegan2_block_forward.5} parent=43 // pred_region
          %271 = dma.done [#allocation3], 16
        $region48: #{stylegan2_block_forward.5} parent=43 // pred_fallthru
          _
        %272 = sfence
        %s273 = smul.u32 8, %s23
        %p274 = scmp.lt.s32.totalorder %s22, 1
        %s275 = scalar_select %p274, %s22, 1
        %p276 = scmp.lt.s32.totalorder %s273, 15
        %s277 = scalar_select %p276, %s273, 15
        %s278 = smul.addr %s277, 2
        %s279 = smul.addr %s275, 32
        %s280 = sadd.s32 %s278, %s279
        %s281 = smul.addr %s280, 8
        %s282 = scalar_lea.vmem %s0, %s281
        %p283 = pneg %p53
        %p284 = pneg %p50
        %p285 = scmp.lt.s32.totalorder %s22, 1
        %s286 = scalar_select %p285, %s22, 1
        %s287 = smul.addr %s286, 8
        %s288 = scalar_lea.vmem %s1, %s287
        %p289 = pneg %p79
        %p290 = pneg %p76
        %p291 = pneg %p100
        %p292 = pneg %p97
        %p293 = scmp.lt.s32.totalorder %s22, 1
        %s294 = scalar_select %p293, %s22, 1
        %s295 = smul.addr %s294, 57
        %s296 = smul.addr %s295, 8
        %s297 = scalar_lea.vmem %s3, %s296
        %p298 = pneg %p126
        %p299 = pneg %p123
        %p300 = pneg %p147
        %p301 = pneg %p144
        %p302 = pneg %p168
        %p303 = pneg %p165
        %p304 = pneg %p196
        %p305 = pneg %p193
        %s306 = smul.u32 8, %s23
        %p307 = scmp.lt.s32.totalorder %s22, 1
        %s308 = scalar_select %p307, %s22, 1
        %p309 = scmp.lt.s32.totalorder %s306, 15
        %s310 = scalar_select %p309, %s306, 15
        %s311 = smul.addr %s310, 2
        %s312 = smul.addr %s308, 32
        %s313 = sadd.s32 %s311, %s312
        %s314 = smul.addr %s313, 8
        %s315 = scalar_lea.vmem %s6, %s314
        %s316 = smul.u32 8, %s23
        %p317 = scmp.lt.s32.totalorder %s22, 1
        %s318 = scalar_select %p317, %s22, 1
        %p319 = scmp.lt.s32.totalorder %s316, 15
        %s320 = scalar_select %p319, %s316, 15
        %s321 = smul.addr %s320, 2
        %s322 = smul.addr %s318, 32
        %s323 = sadd.s32 %s321, %s322
        %s324 = smul.addr %s323, 8
        %s325 = scalar_lea.vmem %s0, %s324
        %s326 = smul.u32 8, %s23
        %p327 = scmp.lt.s32.totalorder %s22, 1
        %s328 = scalar_select %p327, %s22, 1
        %s329 = smul.addr %s328, 8
        %s330 = scalar_lea.vmem %s1, %s329
        %p331 = scmp.lt.s32.totalorder %s22, 1
        %s332 = scalar_select %p331, %s22, 1
        %s333 = smul.addr %s332, 57
        %s334 = smul.addr %s333, 8
        %s335 = scalar_lea.vmem %s3, %s334
        %s336 = smul.u32 8, %s23
        %p337 = scmp.lt.s32.totalorder %s22, 1
        %s338 = scalar_select %p337, %s22, 1
        %p339 = scmp.lt.s32.totalorder %s336, 15
        %s340 = scalar_select %p339, %s336, 15
        %s341 = smul.addr %s340, 2
        %s342 = smul.addr %s338, 32
        %s343 = sadd.s32 %s341, %s342
        %s344 = smul.addr %s343, 8
        %s345 = scalar_lea.vmem %s6, %s344
        %s346 = smul.u32 8, %s23
        %s347 = smul.u32 %s23, 8
        %s348 = smul.u32 %s347, 24
        %s349 = scalar_lea.vmem %s335, %s348
        %v350 = vld [vmem:[%s349] sm:$0xff]
        %v351 = vld [vmem:[%s349 + $0x8] sm:$0xff]
        %v352 = vld [vmem:[%s349 + $0x10] sm:$0x7]
        %v353 = vld [vmem:[%s349 + $0x18] sm:$0xff]
        %v354 = vld [vmem:[%s349 + $0x20] sm:$0xff]
        %v355 = vld [vmem:[%s349 + $0x28] sm:$0x7]
        %v356 = vld [vmem:[%s349 + $0x30] sm:$0xff]
        %v357 = vld [vmem:[%s349 + $0x38] sm:$0xff]
        %v358 = vld [vmem:[%s349 + $0x40] sm:$0x7]
        %v359 = vld [vmem:[%s349 + $0x48] sm:$0xff]
        %v360 = vld [vmem:[%s349 + $0x50] sm:$0xff]
        %v361 = vld [vmem:[%s349 + $0x58] sm:$0x7]
        %v362 = vld [vmem:[%s349 + $0x60] sm:$0xff]
        %v363 = vld [vmem:[%s349 + $0x68] sm:$0xff]
        %v364 = vld [vmem:[%s349 + $0x70] sm:$0x7]
        %v365 = vld [vmem:[%s349 + $0x78] sm:$0xff]
        %v366 = vld [vmem:[%s349 + $0x80] sm:$0xff]
        %v367 = vld [vmem:[%s349 + $0x88] sm:$0x7]
        %v368 = vld [vmem:[%s349 + $0x90] sm:$0xff]
        %v369 = vld [vmem:[%s349 + $0x98] sm:$0xff]
        %v370 = vld [vmem:[%s349 + $0xa0] sm:$0x7]
        %v371 = vld [vmem:[%s349 + $0xa8] sm:$0xff]
        %v372 = vld [vmem:[%s349 + $0xb0] sm:$0xff]
        %v373 = vld [vmem:[%s349 + $0xb8] sm:$0x7]
        %v374 = vld [vmem:[%s349 + $0xc0] sm:$0xff]
        %v375 = vld [vmem:[%s349 + $0xc8] sm:$0xff]
        %v376 = vld [vmem:[%s349 + $0xd0] sm:$0x7]
        %v377 = vld [vmem:[%s349 + $0xd8] sm:$0xff]
        %v378 = vld [vmem:[%s349 + $0xe0] sm:$0xff]
        %v379 = vld [vmem:[%s349 + $0xe8] sm:$0x7]
        %v380 = vld [vmem:[%s349 + $0xf0] sm:$0xff]
        %v381 = vld [vmem:[%s349 + $0xf8] sm:$0xff]
        %v382 = vld [vmem:[%s349 + $0x100] sm:$0x7]
        %s383 = sld [smem:[#allocation2]]
        %v384 = vstv %s383
        %v385 = vmul.f32 %v350, %v384
        %v386 = vmul.f32 %v351, %v384
        %v387 = vmul.f32 %v353, %v384
        %v388 = vmul.f32 %v354, %v384
        %v389 = vmul.f32 %v356, %v384
        %v390 = vmul.f32 %v357, %v384
        %v391 = vmul.f32 %v359, %v384
        %v392 = vmul.f32 %v360, %v384
        %v393 = vmul.f32 %v362, %v384
        %v394 = vmul.f32 %v363, %v384
        %v395 = vmul.f32 %v365, %v384
        %v396 = vmul.f32 %v366, %v384
        %v397 = vmul.f32 %v368, %v384
        %v398 = vmul.f32 %v369, %v384
        %v399 = vmul.f32 %v371, %v384
        %v400 = vmul.f32 %v372, %v384
        %v401 = vmul.f32 %v374, %v384
        %v402 = vmul.f32 %v375, %v384
        %v403 = vmul.f32 %v377, %v384
        %v404 = vmul.f32 %v378, %v384
        %v405 = vmul.f32 %v380, %v384
        %v406 = vmul.f32 %v381, %v384
        %s407 = sld [smem:[#allocation2 + $0x1]]
        %v408 = vstv %s407
        %v409 = vmul.f32 %v350, %v408
        %v410 = vmul.f32 %v351, %v408
        %v411 = vmul.f32 %v352, %v408
        %v412 = vmul.f32 %v353, %v408
        %v413 = vmul.f32 %v354, %v408
        %v414 = vmul.f32 %v355, %v408
        %v415 = vmul.f32 %v356, %v408
        %v416 = vmul.f32 %v357, %v408
        %v417 = vmul.f32 %v358, %v408
        %v418 = vmul.f32 %v359, %v408
        %v419 = vmul.f32 %v360, %v408
        %v420 = vmul.f32 %v361, %v408
        %v421 = vmul.f32 %v362, %v408
        %v422 = vmul.f32 %v363, %v408
        %v423 = vmul.f32 %v364, %v408
        %v424 = vmul.f32 %v365, %v408
        %v425 = vmul.f32 %v366, %v408
        %v426 = vmul.f32 %v367, %v408
        %v427 = vmul.f32 %v368, %v408
        %v428 = vmul.f32 %v369, %v408
        %v429 = vmul.f32 %v370, %v408
        %v430 = vmul.f32 %v371, %v408
        %v431 = vmul.f32 %v372, %v408
        %v432 = vmul.f32 %v373, %v408
        %v433 = vmul.f32 %v374, %v408
        %v434 = vmul.f32 %v375, %v408
        %v435 = vmul.f32 %v376, %v408
        %v436 = vmul.f32 %v377, %v408
        %v437 = vmul.f32 %v378, %v408
        %v438 = vmul.f32 %v379, %v408
        %v439 = vmul.f32 %v380, %v408
        %v440 = vmul.f32 %v381, %v408
        %v441 = vmul.f32 %v382, %v408
        %vm475 = vcmask 1046528
        %v476 = vrot.slane %v409, 1
        %v477 = vrot.slane %v410, 1
        %v478 = vsel %vm475, %v476, %v477
        %v479 = vrot.slane %v411, 1
        %v480 = vsel %vm475, %v477, %v479
        %v481 = vrot.slane %v412, 1
        %v482 = vrot.slane %v413, 1
        %v483 = vsel %vm475, %v481, %v482
        %v484 = vrot.slane %v414, 1
        %v485 = vsel %vm475, %v482, %v484
        %v486 = vrot.slane %v415, 1
        %v487 = vrot.slane %v416, 1
        %v488 = vsel %vm475, %v486, %v487
        %v489 = vrot.slane %v417, 1
        %v490 = vsel %vm475, %v487, %v489
        %v491 = vrot.slane %v418, 1
        %v492 = vrot.slane %v419, 1
        %v493 = vsel %vm475, %v491, %v492
        %v494 = vrot.slane %v420, 1
        %v495 = vsel %vm475, %v492, %v494
        %v496 = vrot.slane %v421, 1
        %v497 = vrot.slane %v422, 1
        %v498 = vsel %vm475, %v496, %v497
        %v499 = vrot.slane %v423, 1
        %v500 = vsel %vm475, %v497, %v499
        %v501 = vrot.slane %v424, 1
        %v502 = vrot.slane %v425, 1
        %v503 = vsel %vm475, %v501, %v502
        %v504 = vrot.slane %v426, 1
        %v505 = vsel %vm475, %v502, %v504
        %v506 = vrot.slane %v427, 1
        %v507 = vrot.slane %v428, 1
        %v508 = vsel %vm475, %v506, %v507
        %v509 = vrot.slane %v429, 1
        %v510 = vsel %vm475, %v507, %v509
        %v511 = vrot.slane %v430, 1
        %v512 = vrot.slane %v431, 1
        %v513 = vsel %vm475, %v511, %v512
        %v514 = vrot.slane %v432, 1
        %v515 = vsel %vm475, %v512, %v514
        %v516 = vrot.slane %v433, 1
        %v517 = vrot.slane %v434, 1
        %v518 = vsel %vm475, %v516, %v517
        %v519 = vrot.slane %v435, 1
        %v520 = vsel %vm475, %v517, %v519
        %v521 = vrot.slane %v436, 1
        %v522 = vrot.slane %v437, 1
        %v523 = vsel %vm475, %v521, %v522
        %v524 = vrot.slane %v438, 1
        %v525 = vsel %vm475, %v522, %v524
        %v526 = vrot.slane %v439, 1
        %v527 = vrot.slane %v440, 1
        %v528 = vsel %vm475, %v526, %v527
        %v529 = vrot.slane %v441, 1
        %v530 = vsel %vm475, %v527, %v529
        %v553 = vadd.f32 %v385, %v478
        %v554 = vadd.f32 %v386, %v480
        %v555 = vadd.f32 %v387, %v483
        %v556 = vadd.f32 %v388, %v485
        %v557 = vadd.f32 %v389, %v488
        %v558 = vadd.f32 %v390, %v490
        %v559 = vadd.f32 %v391, %v493
        %v560 = vadd.f32 %v392, %v495
        %v561 = vadd.f32 %v393, %v498
        %v562 = vadd.f32 %v394, %v500
        %v563 = vadd.f32 %v395, %v503
        %v564 = vadd.f32 %v396, %v505
        %v565 = vadd.f32 %v397, %v508
        %v566 = vadd.f32 %v398, %v510
        %v567 = vadd.f32 %v399, %v513
        %v568 = vadd.f32 %v400, %v515
        %v569 = vadd.f32 %v401, %v518
        %v570 = vadd.f32 %v402, %v520
        %v571 = vadd.f32 %v403, %v523
        %v572 = vadd.f32 %v404, %v525
        %v573 = vadd.f32 %v405, %v528
        %v574 = vadd.f32 %v406, %v530
        %s575 = sld [smem:[#allocation2 + $0x2]]
        %v576 = vstv %s575
        %v577 = vmul.f32 %v350, %v576
        %v578 = vmul.f32 %v351, %v576
        %v579 = vmul.f32 %v352, %v576
        %v580 = vmul.f32 %v353, %v576
        %v581 = vmul.f32 %v354, %v576
        %v582 = vmul.f32 %v355, %v576
        %v583 = vmul.f32 %v356, %v576
        %v584 = vmul.f32 %v357, %v576
        %v585 = vmul.f32 %v358, %v576
        %v586 = vmul.f32 %v359, %v576
        %v587 = vmul.f32 %v360, %v576
        %v588 = vmul.f32 %v361, %v576
        %v589 = vmul.f32 %v362, %v576
        %v590 = vmul.f32 %v363, %v576
        %v591 = vmul.f32 %v364, %v576
        %v592 = vmul.f32 %v365, %v576
        %v593 = vmul.f32 %v366, %v576
        %v594 = vmul.f32 %v367, %v576
        %v595 = vmul.f32 %v368, %v576
        %v596 = vmul.f32 %v369, %v576
        %v597 = vmul.f32 %v370, %v576
        %v598 = vmul.f32 %v371, %v576
        %v599 = vmul.f32 %v372, %v576
        %v600 = vmul.f32 %v373, %v576
        %v601 = vmul.f32 %v374, %v576
        %v602 = vmul.f32 %v375, %v576
        %v603 = vmul.f32 %v376, %v576
        %v604 = vmul.f32 %v377, %v576
        %v605 = vmul.f32 %v378, %v576
        %v606 = vmul.f32 %v379, %v576
        %v607 = vmul.f32 %v380, %v576
        %v608 = vmul.f32 %v381, %v576
        %v609 = vmul.f32 %v382, %v576
        %vm643 = vcmask 1045504
        %v644 = vrot.slane %v577, 2
        %v645 = vrot.slane %v578, 2
        %v646 = vsel %vm643, %v644, %v645
        %v647 = vrot.slane %v579, 2
        %v648 = vsel %vm643, %v645, %v647
        %v649 = vrot.slane %v580, 2
        %v650 = vrot.slane %v581, 2
        %v651 = vsel %vm643, %v649, %v650
        %v652 = vrot.slane %v582, 2
        %v653 = vsel %vm643, %v650, %v652
        %v654 = vrot.slane %v583, 2
        %v655 = vrot.slane %v584, 2
        %v656 = vsel %vm643, %v654, %v655
        %v657 = vrot.slane %v585, 2
        %v658 = vsel %vm643, %v655, %v657
        %v659 = vrot.slane %v586, 2
        %v660 = vrot.slane %v587, 2
        %v661 = vsel %vm643, %v659, %v660
        %v662 = vrot.slane %v588, 2
        %v663 = vsel %vm643, %v660, %v662
        %v664 = vrot.slane %v589, 2
        %v665 = vrot.slane %v590, 2
        %v666 = vsel %vm643, %v664, %v665
        %v667 = vrot.slane %v591, 2
        %v668 = vsel %vm643, %v665, %v667
        %v669 = vrot.slane %v592, 2
        %v670 = vrot.slane %v593, 2
        %v671 = vsel %vm643, %v669, %v670
        %v672 = vrot.slane %v594, 2
        %v673 = vsel %vm643, %v670, %v672
        %v674 = vrot.slane %v595, 2
        %v675 = vrot.slane %v596, 2
        %v676 = vsel %vm643, %v674, %v675
        %v677 = vrot.slane %v597, 2
        %v678 = vsel %vm643, %v675, %v677
        %v679 = vrot.slane %v598, 2
        %v680 = vrot.slane %v599, 2
        %v681 = vsel %vm643, %v679, %v680
        %v682 = vrot.slane %v600, 2
        %v683 = vsel %vm643, %v680, %v682
        %v684 = vrot.slane %v601, 2
        %v685 = vrot.slane %v602, 2
        %v686 = vsel %vm643, %v684, %v685
        %v687 = vrot.slane %v603, 2
        %v688 = vsel %vm643, %v685, %v687
        %v689 = vrot.slane %v604, 2
        %v690 = vrot.slane %v605, 2
        %v691 = vsel %vm643, %v689, %v690
        %v692 = vrot.slane %v606, 2
        %v693 = vsel %vm643, %v690, %v692
        %v694 = vrot.slane %v607, 2
        %v695 = vrot.slane %v608, 2
        %v696 = vsel %vm643, %v694, %v695
        %v697 = vrot.slane %v609, 2
        %v698 = vsel %vm643, %v695, %v697
        %v721 = vadd.f32 %v553, %v646
        %v722 = vadd.f32 %v554, %v648
        %v723 = vadd.f32 %v555, %v651
        %v724 = vadd.f32 %v556, %v653
        %v725 = vadd.f32 %v557, %v656
        %v726 = vadd.f32 %v558, %v658
        %v727 = vadd.f32 %v559, %v661
        %v728 = vadd.f32 %v560, %v663
        %v729 = vadd.f32 %v561, %v666
        %v730 = vadd.f32 %v562, %v668
        %v731 = vadd.f32 %v563, %v671
        %v732 = vadd.f32 %v564, %v673
        %v733 = vadd.f32 %v565, %v676
        %v734 = vadd.f32 %v566, %v678
        %v735 = vadd.f32 %v567, %v681
        %v736 = vadd.f32 %v568, %v683
        %v737 = vadd.f32 %v569, %v686
        %v738 = vadd.f32 %v570, %v688
        %v739 = vadd.f32 %v571, %v691
        %v740 = vadd.f32 %v572, %v693
        %v741 = vadd.f32 %v573, %v696
        %v742 = vadd.f32 %v574, %v698
        %s743 = sld [smem:[#allocation2 + $0x3]]
        %v744 = vstv %s743
        %v745 = vmul.f32 %v350, %v744
        %v746 = vmul.f32 %v351, %v744
        %v747 = vmul.f32 %v352, %v744
        %v748 = vmul.f32 %v353, %v744
        %v749 = vmul.f32 %v354, %v744
        %v750 = vmul.f32 %v355, %v744
        %v751 = vmul.f32 %v356, %v744
        %v752 = vmul.f32 %v357, %v744
        %v753 = vmul.f32 %v358, %v744
        %v754 = vmul.f32 %v359, %v744
        %v755 = vmul.f32 %v360, %v744
        %v756 = vmul.f32 %v361, %v744
        %v757 = vmul.f32 %v362, %v744
        %v758 = vmul.f32 %v363, %v744
        %v759 = vmul.f32 %v364, %v744
        %v760 = vmul.f32 %v365, %v744
        %v761 = vmul.f32 %v366, %v744
        %v762 = vmul.f32 %v367, %v744
        %v763 = vmul.f32 %v368, %v744
        %v764 = vmul.f32 %v369, %v744
        %v765 = vmul.f32 %v370, %v744
        %v766 = vmul.f32 %v371, %v744
        %v767 = vmul.f32 %v372, %v744
        %v768 = vmul.f32 %v373, %v744
        %v769 = vmul.f32 %v374, %v744
        %v770 = vmul.f32 %v375, %v744
        %v771 = vmul.f32 %v376, %v744
        %v772 = vmul.f32 %v377, %v744
        %v773 = vmul.f32 %v378, %v744
        %v774 = vmul.f32 %v379, %v744
        %v775 = vmul.f32 %v380, %v744
        %v776 = vmul.f32 %v381, %v744
        %v777 = vmul.f32 %v382, %v744
        %vm811 = vcmask 1044480
        %v812 = vrot.slane %v745, 3
        %v813 = vrot.slane %v746, 3
        %v814 = vsel %vm811, %v812, %v813
        %v815 = vrot.slane %v747, 3
        %v816 = vsel %vm811, %v813, %v815
        %v817 = vrot.slane %v748, 3
        %v818 = vrot.slane %v749, 3
        %v819 = vsel %vm811, %v817, %v818
        %v820 = vrot.slane %v750, 3
        %v821 = vsel %vm811, %v818, %v820
        %v822 = vrot.slane %v751, 3
        %v823 = vrot.slane %v752, 3
        %v824 = vsel %vm811, %v822, %v823
        %v825 = vrot.slane %v753, 3
        %v826 = vsel %vm811, %v823, %v825
        %v827 = vrot.slane %v754, 3
        %v828 = vrot.slane %v755, 3
        %v829 = vsel %vm811, %v827, %v828
        %v830 = vrot.slane %v756, 3
        %v831 = vsel %vm811, %v828, %v830
        %v832 = vrot.slane %v757, 3
        %v833 = vrot.slane %v758, 3
        %v834 = vsel %vm811, %v832, %v833
        %v835 = vrot.slane %v759, 3
        %v836 = vsel %vm811, %v833, %v835
        %v837 = vrot.slane %v760, 3
        %v838 = vrot.slane %v761, 3
        %v839 = vsel %vm811, %v837, %v838
        %v840 = vrot.slane %v762, 3
        %v841 = vsel %vm811, %v838, %v840
        %v842 = vrot.slane %v763, 3
        %v843 = vrot.slane %v764, 3
        %v844 = vsel %vm811, %v842, %v843
        %v845 = vrot.slane %v765, 3
        %v846 = vsel %vm811, %v843, %v845
        %v847 = vrot.slane %v766, 3
        %v848 = vrot.slane %v767, 3
        %v849 = vsel %vm811, %v847, %v848
        %v850 = vrot.slane %v768, 3
        %v851 = vsel %vm811, %v848, %v850
        %v852 = vrot.slane %v769, 3
        %v853 = vrot.slane %v770, 3
        %v854 = vsel %vm811, %v852, %v853
        %v855 = vrot.slane %v771, 3
        %v856 = vsel %vm811, %v853, %v855
        %v857 = vrot.slane %v772, 3
        %v858 = vrot.slane %v773, 3
        %v859 = vsel %vm811, %v857, %v858
        %v860 = vrot.slane %v774, 3
        %v861 = vsel %vm811, %v858, %v860
        %v862 = vrot.slane %v775, 3
        %v863 = vrot.slane %v776, 3
        %v864 = vsel %vm811, %v862, %v863
        %v865 = vrot.slane %v777, 3
        %v866 = vsel %vm811, %v863, %v865
        %v889 = vadd.f32 %v721, %v814
        %v890 = vadd.f32 %v722, %v816
        %v891 = vadd.f32 %v723, %v819
        %v892 = vadd.f32 %v724, %v821
        %v893 = vadd.f32 %v725, %v824
        %v894 = vadd.f32 %v726, %v826
        %v895 = vadd.f32 %v727, %v829
        %v896 = vadd.f32 %v728, %v831
        %v897 = vadd.f32 %v729, %v834
        %v898 = vadd.f32 %v730, %v836
        %v899 = vadd.f32 %v731, %v839
        %v900 = vadd.f32 %v732, %v841
        %v901 = vadd.f32 %v733, %v844
        %v902 = vadd.f32 %v734, %v846
        %v903 = vadd.f32 %v735, %v849
        %v904 = vadd.f32 %v736, %v851
        %v905 = vadd.f32 %v737, %v854
        %v906 = vadd.f32 %v738, %v856
        %v907 = vadd.f32 %v739, %v859
        %v908 = vadd.f32 %v740, %v861
        %v909 = vadd.f32 %v741, %v864
        %v910 = vadd.f32 %v742, %v866
        %v911 = vmul.f32 %v889, %v384
        %v912 = vmul.f32 %v890, %v384
        %v913 = vmul.f32 %v891, %v384
        %v914 = vmul.f32 %v892, %v384
        %v915 = vmul.f32 %v893, %v384
        %v916 = vmul.f32 %v894, %v384
        %v917 = vmul.f32 %v895, %v384
        %v918 = vmul.f32 %v896, %v384
        %v919 = vmul.f32 %v897, %v384
        %v920 = vmul.f32 %v898, %v384
        %v921 = vmul.f32 %v899, %v384
        %v922 = vmul.f32 %v900, %v384
        %v923 = vmul.f32 %v901, %v384
        %v924 = vmul.f32 %v902, %v384
        %v925 = vmul.f32 %v903, %v384
        %v926 = vmul.f32 %v904, %v384
        %v927 = vmul.f32 %v891, %v408
        %v928 = vmul.f32 %v892, %v408
        %v929 = vmul.f32 %v893, %v408
        %v930 = vmul.f32 %v894, %v408
        %v931 = vmul.f32 %v895, %v408
        %v932 = vmul.f32 %v896, %v408
        %v933 = vmul.f32 %v897, %v408
        %v934 = vmul.f32 %v898, %v408
        %v935 = vmul.f32 %v899, %v408
        %v936 = vmul.f32 %v900, %v408
        %v937 = vmul.f32 %v901, %v408
        %v938 = vmul.f32 %v902, %v408
        %v939 = vmul.f32 %v903, %v408
        %v940 = vmul.f32 %v904, %v408
        %v941 = vmul.f32 %v905, %v408
        %v942 = vmul.f32 %v906, %v408
        %v943 = vadd.f32 %v911, %v927
        %v944 = vadd.f32 %v912, %v928
        %v945 = vadd.f32 %v913, %v929
        %v946 = vadd.f32 %v914, %v930
        %v947 = vadd.f32 %v915, %v931
        %v948 = vadd.f32 %v916, %v932
        %v949 = vadd.f32 %v917, %v933
        %v950 = vadd.f32 %v918, %v934
        %v951 = vadd.f32 %v919, %v935
        %v952 = vadd.f32 %v920, %v936
        %v953 = vadd.f32 %v921, %v937
        %v954 = vadd.f32 %v922, %v938
        %v955 = vadd.f32 %v923, %v939
        %v956 = vadd.f32 %v924, %v940
        %v957 = vadd.f32 %v925, %v941
        %v958 = vadd.f32 %v926, %v942
        %v959 = vmul.f32 %v893, %v576
        %v960 = vmul.f32 %v894, %v576
        %v961 = vmul.f32 %v895, %v576
        %v962 = vmul.f32 %v896, %v576
        %v963 = vmul.f32 %v897, %v576
        %v964 = vmul.f32 %v898, %v576
        %v965 = vmul.f32 %v899, %v576
        %v966 = vmul.f32 %v900, %v576
        %v967 = vmul.f32 %v901, %v576
        %v968 = vmul.f32 %v902, %v576
        %v969 = vmul.f32 %v903, %v576
        %v970 = vmul.f32 %v904, %v576
        %v971 = vmul.f32 %v905, %v576
        %v972 = vmul.f32 %v906, %v576
        %v973 = vmul.f32 %v907, %v576
        %v974 = vmul.f32 %v908, %v576
        %v975 = vadd.f32 %v943, %v959
        %v976 = vadd.f32 %v944, %v960
        %v977 = vadd.f32 %v945, %v961
        %v978 = vadd.f32 %v946, %v962
        %v979 = vadd.f32 %v947, %v963
        %v980 = vadd.f32 %v948, %v964
        %v981 = vadd.f32 %v949, %v965
        %v982 = vadd.f32 %v950, %v966
        %v983 = vadd.f32 %v951, %v967
        %v984 = vadd.f32 %v952, %v968
        %v985 = vadd.f32 %v953, %v969
        %v986 = vadd.f32 %v954, %v970
        %v987 = vadd.f32 %v955, %v971
        %v988 = vadd.f32 %v956, %v972
        %v989 = vadd.f32 %v957, %v973
        %v990 = vadd.f32 %v958, %v974
        %v991 = vmul.f32 %v895, %v744
        %v992 = vmul.f32 %v896, %v744
        %v993 = vmul.f32 %v897, %v744
        %v994 = vmul.f32 %v898, %v744
        %v995 = vmul.f32 %v899, %v744
        %v996 = vmul.f32 %v900, %v744
        %v997 = vmul.f32 %v901, %v744
        %v998 = vmul.f32 %v902, %v744
        %v999 = vmul.f32 %v903, %v744
        %v1000 = vmul.f32 %v904, %v744
        %v1001 = vmul.f32 %v905, %v744
        %v1002 = vmul.f32 %v906, %v744
        %v1003 = vmul.f32 %v907, %v744
        %v1004 = vmul.f32 %v908, %v744
        %v1005 = vmul.f32 %v909, %v744
        %v1006 = vmul.f32 %v910, %v744
        %v1007 = vadd.f32 %v975, %v991
        %v1008 = vadd.f32 %v976, %v992
        %v1009 = vadd.f32 %v977, %v993
        %v1010 = vadd.f32 %v978, %v994
        %v1011 = vadd.f32 %v979, %v995
        %v1012 = vadd.f32 %v980, %v996
        %v1013 = vadd.f32 %v981, %v997
        %v1014 = vadd.f32 %v982, %v998
        %v1015 = vadd.f32 %v983, %v999
        %v1016 = vadd.f32 %v984, %v1000
        %v1017 = vadd.f32 %v985, %v1001
        %v1018 = vadd.f32 %v986, %v1002
        %v1019 = vadd.f32 %v987, %v1003
        %v1020 = vadd.f32 %v988, %v1004
        %v1021 = vadd.f32 %v989, %v1005
        %v1022 = vadd.f32 %v990, %v1006
        %v1023 = vld [vmem:[%s2] sm:$0xff]
        %v1024 = vld [vmem:[%s330] sm:$0xff]
        %1026 = vset.pattern.permute.xlu0 0
        %1027 = vperm.xlu0 %1026, %v1024
        %v1028 = vpop.permute.xlu0 %1027
        %v1030 = vmul.f32 %v1023, %v1028
        %v1031 = vld [vmem:[%s325] sm:$0xff]
        %v1032 = vld [vmem:[%s325 + $0x8] sm:$0xff]
        %v1033 = vld [vmem:[%s325 + $0x10] sm:$0xff]
        %v1034 = vld [vmem:[%s325 + $0x18] sm:$0xff]
        %v1035 = vld [vmem:[%s325 + $0x20] sm:$0xff]
        %v1036 = vld [vmem:[%s325 + $0x28] sm:$0xff]
        %v1037 = vld [vmem:[%s325 + $0x30] sm:$0xff]
        %v1038 = vld [vmem:[%s325 + $0x38] sm:$0xff]
        %v1039 = vld [vmem:[%s325 + $0x40] sm:$0xff]
        %v1040 = vld [vmem:[%s325 + $0x48] sm:$0xff]
        %v1041 = vld [vmem:[%s325 + $0x50] sm:$0xff]
        %v1042 = vld [vmem:[%s325 + $0x58] sm:$0xff]
        %v1043 = vld [vmem:[%s325 + $0x60] sm:$0xff]
        %v1044 = vld [vmem:[%s325 + $0x68] sm:$0xff]
        %v1045 = vld [vmem:[%s325 + $0x70] sm:$0xff]
        %v1046 = vld [vmem:[%s325 + $0x78] sm:$0xff]
        %vm1047 = vcmask 64512
        %v1049 = vsel %vm1047, %v1031, 0
        %v1052 = vsel %vm1047, %v1032, 0
        %v1055 = vsel %vm1047, %v1033, 0
        %v1058 = vsel %vm1047, %v1034, 0
        %v1061 = vsel %vm1047, %v1035, 0
        %v1064 = vsel %vm1047, %v1036, 0
        %v1067 = vsel %vm1047, %v1037, 0
        %v1070 = vsel %vm1047, %v1038, 0
        %v1073 = vsel %vm1047, %v1039, 0
        %v1076 = vsel %vm1047, %v1040, 0
        %v1079 = vsel %vm1047, %v1041, 0
        %v1082 = vsel %vm1047, %v1042, 0
        %v1085 = vsel %vm1047, %v1043, 0
        %v1088 = vsel %vm1047, %v1044, 0
        %v1091 = vsel %vm1047, %v1045, 0
        %v1094 = vsel %vm1047, %v1046, 0
        %1096 = vmatpush.msra.mxu0 0.0
        %1097 = vmatpush.msra.mxu0 0.0
        %1098 = vmatpush.msra.mxu0 0.0
        %1099 = vmatpush.msra.mxu0 0.0
        %1100 = vmatpush.msra.mxu0 0.0
        %1101 = vmatpush.msra.mxu0 0.0
        %1102 = vmatpush.msra.mxu0 0.0
        %1103 = vmatpush.msra.mxu0 0.0
        %1104 = vmatpush.msra.mxu0 0.0
        %1105 = vmatpush.msra.mxu0 0.0
        %1106 = vmatpush.msra.mxu0 0.0
        %1107 = vmatpush.msra.mxu0 0.0
        %1108 = vmatpush.msra.mxu0 0.0
        %1109 = vmatpush.msra.mxu0 0.0
        %1110 = vmatpush.msra.mxu0 0.0
        %1111 = vmatpush.msra.mxu0 %v1030
        %1112 = vmatmul.f32.gmra.mxu0 %v1049
        %v1113 = vpop.f32.mrf.mxu0
        %v1114 = vadd.f32 0.0, %v1113
        %1115 = vmatmul.f32.gmra.mxu0 %v1052
        %v1116 = vpop.f32.mrf.mxu0
        %v1117 = vadd.f32 0.0, %v1116
        %1118 = vmatmul.f32.gmra.mxu0 %v1055
        %v1119 = vpop.f32.mrf.mxu0
        %v1120 = vadd.f32 0.0, %v1119
        %1121 = vmatmul.f32.gmra.mxu0 %v1058
        %v1122 = vpop.f32.mrf.mxu0
        %v1123 = vadd.f32 0.0, %v1122
        %1124 = vmatmul.f32.gmra.mxu0 %v1061
        %v1125 = vpop.f32.mrf.mxu0
        %v1126 = vadd.f32 0.0, %v1125
        %1127 = vmatmul.f32.gmra.mxu0 %v1064
        %v1128 = vpop.f32.mrf.mxu0
        %v1129 = vadd.f32 0.0, %v1128
        %1130 = vmatmul.f32.gmra.mxu0 %v1067
        %v1131 = vpop.f32.mrf.mxu0
        %v1132 = vadd.f32 0.0, %v1131
        %1133 = vmatmul.f32.gmra.mxu0 %v1070
        %v1134 = vpop.f32.mrf.mxu0
        %v1135 = vadd.f32 0.0, %v1134
        %1136 = vmatmul.f32.gmra.mxu0 %v1073
        %v1137 = vpop.f32.mrf.mxu0
        %v1138 = vadd.f32 0.0, %v1137
        %1139 = vmatmul.f32.gmra.mxu0 %v1076
        %v1140 = vpop.f32.mrf.mxu0
        %v1141 = vadd.f32 0.0, %v1140
        %1142 = vmatmul.f32.gmra.mxu0 %v1079
        %v1143 = vpop.f32.mrf.mxu0
        %v1144 = vadd.f32 0.0, %v1143
        %1145 = vmatmul.f32.gmra.mxu0 %v1082
        %v1146 = vpop.f32.mrf.mxu0
        %v1147 = vadd.f32 0.0, %v1146
        %1148 = vmatmul.f32.gmra.mxu0 %v1085
        %v1149 = vpop.f32.mrf.mxu0
        %v1150 = vadd.f32 0.0, %v1149
        %1151 = vmatmul.f32.gmra.mxu0 %v1088
        %v1152 = vpop.f32.mrf.mxu0
        %v1153 = vadd.f32 0.0, %v1152
        %1154 = vmatmul.f32.gmra.mxu0 %v1091
        %v1155 = vpop.f32.mrf.mxu0
        %v1156 = vadd.f32 0.0, %v1155
        %1157 = vmatmul.f32.gmra.mxu0 %v1094
        %v1158 = vpop.f32.mrf.mxu0
        %v1159 = vadd.f32 0.0, %v1158
        %1160 = vdwg.mxu0
        %v1161 = vadd.f32 %v1007, %v1114
        %v1162 = vadd.f32 %v1008, %v1117
        %v1163 = vadd.f32 %v1009, %v1120
        %v1164 = vadd.f32 %v1010, %v1123
        %v1165 = vadd.f32 %v1011, %v1126
        %v1166 = vadd.f32 %v1012, %v1129
        %v1167 = vadd.f32 %v1013, %v1132
        %v1168 = vadd.f32 %v1014, %v1135
        %v1169 = vadd.f32 %v1015, %v1138
        %v1170 = vadd.f32 %v1016, %v1141
        %v1171 = vadd.f32 %v1017, %v1144
        %v1172 = vadd.f32 %v1018, %v1147
        %v1173 = vadd.f32 %v1019, %v1150
        %v1174 = vadd.f32 %v1020, %v1153
        %v1175 = vadd.f32 %v1021, %v1156
        %v1176 = vadd.f32 %v1022, %v1159
        %v1177 = vld [vmem:[%s5] sm:$0x1]
        %v1179 = vperm.slane %v1177, 0
        %v1181 = vadd.f32 %v1161, %v1179
        %v1182 = vadd.f32 %v1162, %v1179
        %v1183 = vadd.f32 %v1163, %v1179
        %v1184 = vadd.f32 %v1164, %v1179
        %v1185 = vadd.f32 %v1165, %v1179
        %v1186 = vadd.f32 %v1166, %v1179
        %v1187 = vadd.f32 %v1167, %v1179
        %v1188 = vadd.f32 %v1168, %v1179
        %v1189 = vadd.f32 %v1169, %v1179
        %v1190 = vadd.f32 %v1170, %v1179
        %v1191 = vadd.f32 %v1171, %v1179
        %v1192 = vadd.f32 %v1172, %v1179
        %v1193 = vadd.f32 %v1173, %v1179
        %v1194 = vadd.f32 %v1174, %v1179
        %v1195 = vadd.f32 %v1175, %v1179
        %v1196 = vadd.f32 %v1176, %v1179
        %vm1197 = vcmask 23552
        %1198 = vst.msk [vmem:[%s345] sm:$0xff] %vm1197, %v1181
        %1199 = vst.msk [vmem:[%s345 + $0x8] sm:$0xff] %vm1197, %v1182
        %1200 = vst.msk [vmem:[%s345 + $0x10] sm:$0xff] %vm1197, %v1183
        %1201 = vst.msk [vmem:[%s345 + $0x18] sm:$0xff] %vm1197, %v1184
        %1202 = vst.msk [vmem:[%s345 + $0x20] sm:$0xff] %vm1197, %v1185
        %1203 = vst.msk [vmem:[%s345 + $0x28] sm:$0xff] %vm1197, %v1186
        %1204 = vst.msk [vmem:[%s345 + $0x30] sm:$0xff] %vm1197, %v1187
        %1205 = vst.msk [vmem:[%s345 + $0x38] sm:$0xff] %vm1197, %v1188
        %1206 = vst.msk [vmem:[%s345 + $0x40] sm:$0xff] %vm1197, %v1189
        %1207 = vst.msk [vmem:[%s345 + $0x48] sm:$0xff] %vm1197, %v1190
        %1208 = vst.msk [vmem:[%s345 + $0x50] sm:$0xff] %vm1197, %v1191
        %1209 = vst.msk [vmem:[%s345 + $0x58] sm:$0xff] %vm1197, %v1192
        %1210 = vst.msk [vmem:[%s345 + $0x60] sm:$0xff] %vm1197, %v1193
        %1211 = vst.msk [vmem:[%s345 + $0x68] sm:$0xff] %vm1197, %v1194
        %1212 = vst.msk [vmem:[%s345 + $0x70] sm:$0xff] %vm1197, %v1195
        %1213 = vst.msk [vmem:[%s345 + $0x78] sm:$0xff] %vm1197, %v1196
        %s1214 = smul.u32 8, %s23
        %p1215 = scmp.lt.s32.totalorder %s22, 1
        %s1216 = scalar_select %p1215, %s22, 1
        %p1217 = scmp.lt.s32.totalorder %s1214, 15
        %s1218 = scalar_select %p1217, %s1214, 15
        %s1219 = smul.addr %s1218, 2
        %s1220 = smul.addr %s1216, 32
        %s1221 = sadd.s32 %s1219, %s1220
        %s1222 = smul.addr %s1221, 8
        %s1223 = scalar_lea.vmem %s6, %s1222
        // Predicated region
        $region49: #{stylegan2_block_forward.5} parent=43 // pred_check
          %p1224 = pneg %p193
        $region50: #{stylegan2_block_forward.5} parent=43 // pred_check_branch
          %1226 = sbr.rel (%p1224) target = $region52
        $region51: #{stylegan2_block_forward.5} parent=43 // pred_region
          %s1227 = smul.u32 8, %s23
        $region52: #{stylegan2_block_forward.5} parent=43 // pred_fallthru
          _
      $region44: #{stylegan2_block_forward.5} parent=5 // pred_fallthru
        _
      %p1228 = scmp.le.s32.totalorder 2, %s13
      // Predicated region
      $region53: #{stylegan2_block_forward.5} parent=5 // pred_check
        %p1229 = pneg %p1228
      $region54: #{stylegan2_block_forward.5} parent=5 // pred_check_branch
        %1231 = sbr.rel (%p1229) target = $region56
      $region55: #{stylegan2_block_forward.5} parent=5 // pred_region
        %s1232 = ssub.s32 %s13, 2
        // Predicated region
        $region57: #{stylegan2_block_forward.5} parent=55 // pred_check
          %p1233 = pneg %p199
        $region58: #{stylegan2_block_forward.5} parent=55 // pred_check_branch
          %1235 = sbr.rel (%p1233) target = $region60
        $region59: #{stylegan2_block_forward.5} parent=55 // pred_region
          %s1236 = smul.u32 8, %s25
          %p1237 = scmp.lt.s32.totalorder %s24, 1
          %s1238 = scalar_select %p1237, %s24, 1
          %p1239 = scmp.lt.s32.totalorder %s1236, 15
          %s1240 = scalar_select %p1239, %s1236, 15
          %s1241 = smul.addr %s1240, 2
          %s1242 = smul.addr %s1238, 32
          %s1243 = sadd.s32 %s1241, %s1242
          %s1244 = smul.addr %s1243, 8
          %s1245 = scalar_lea.vmem %s6, %s1244
        $region60: #{stylegan2_block_forward.5} parent=55 // pred_fallthru
          _
      $region56: #{stylegan2_block_forward.5} parent=5 // pred_fallthru
        _
    $region6: #{stylegan2_block_forward.5} parent=1 // loop_footer
      %s17 = sadd.s32 1, %s13
    $region7: #{stylegan2_block_forward.5} parent=1 // loop_footer_branch
      %12 = sbr.rel target = $region3
    $region8: #{stylegan2_block_forward.5} parent=1 // loop_exit
      _
    %1246 = vsyncpa [#allocation3], 1
    %s1247 = scalar_lea.sflag [#allocation3], 1
    %1248 = vsyncpa %s1247, 1

</llo_original>
